<compile_context>
chip_gen: v6e
topology: v6e:2x2x1
jax: 0.10.0
libtpu: 0.0.40
codegen_flags: <defaults>
</compile_context>

<pallas_src>
import jax
import jax.numpy as jnp
from jax import lax
from jax.experimental import pallas as pl
from jax.experimental.pallas import tpu as pltpu

LEAKY_SLOPE = 0.01   # nn.LeakyReLU default negative_slope
BN_EPS = 1e-5        # nn.BatchNorm2d default eps
CPAD = 128           # pad Cout to 128 lanes (lane-dense MXU output / stores)
TM = 512             # output-pixel rows per grid step (512-1024 recommended)


# ----------------------------- Pallas kernels ------------------------------

def conv_mm_kernel(p_ref, w_ref, o_ref):
    """One M-tile of an im2col conv: o = p @ w (bf16 operands, f32 accumulation)."""
    o_ref[...] = jnp.dot(p_ref[...], w_ref[...], preferred_element_type=jnp.float32)


def conv_stats_kernel(p_ref, w_ref, conv_ref, stat_ref):
    """DisBlock pass 1: conv tile + per-channel partial sum / sum-of-squares."""
    acc = jnp.dot(p_ref[...], w_ref[...], preferred_element_type=jnp.float32)  # [TM, CPAD] f32
    conv_ref[...] = acc
    s = jnp.sum(acc, axis=0, keepdims=True)            # [1, CPAD]
    s2 = jnp.sum(acc * acc, axis=0, keepdims=True)     # [1, CPAD]
    pad = jnp.zeros((6, acc.shape[1]), jnp.float32)
    stat_ref[...] = jnp.concatenate([s, s2, pad], axis=0)[None]   # [1, 8, CPAD]


def bn_lrelu_kernel(conv_ref, scale_ref, shift_ref, o_ref):
    """DisBlock pass 2: y = conv * scale + shift ; LeakyReLU(y)."""
    y = conv_ref[...] * scale_ref[...] + shift_ref[...]
    o_ref[...] = jnp.where(y > 0, y, LEAKY_SLOPE * y)


def head_kernel(x_ref, w_ref, b_ref, o_ref):
    """Classifier head: sigmoid(x @ w + b); single logit padded to 128 lanes."""
    y = jnp.dot(x_ref[...], w_ref[...], preferred_element_type=jnp.float32) + b_ref[...]
    o_ref[...] = 1.0 / (1.0 + jnp.exp(-y))


# ------------------------------ helpers ------------------------------------

def _round_up(n, m):
    return ((n + m - 1) // m) * m


def _compiler_params(n_axes):
    cp_cls = getattr(pltpu, "CompilerParams", None)
    if cp_cls is None:   # fall back for older JAX releases
        cp_cls = getattr(pltpu, "TPUCompilerParams")
    return cp_cls(dimension_semantics=("parallel",) * n_axes)


def _im2col(x_nhwc, ksize, stride, pad):
    """Layout-only glue: [N,H,W,C] -> ([N*Hout*Wout, k*k*C], Hout, Wout)."""
    N, H, W, C = x_nhwc.shape
    Hout = (H + 2 * pad - ksize) // stride + 1
    Wout = (W + 2 * pad - ksize) // stride + 1
    xp = jnp.pad(x_nhwc, ((0, 0), (pad, pad), (pad, pad), (0, 0)))
    taps = []
    for kh in range(ksize):
        for kw in range(ksize):
            taps.append(xp[:, kh:kh + stride * Hout:stride,
                           kw:kw + stride * Wout:stride, :])
    patches = jnp.stack(taps, axis=3)                       # [N, Hout, Wout, k*k, C]
    return patches.reshape(N * Hout * Wout, ksize * ksize * C), Hout, Wout


def _conv_im2col_matmul(x_nhwc, conv_w, *, ksize, stride, pad, with_stats, tm=TM):
    """Tiled im2col conv. Returns (conv [Mpad, CPAD] f32, stats|None, (M, Hout, Wout, Cout))."""
    Cout, Cin = conv_w.shape[0], conv_w.shape[1]
    P, Hout, Wout = _im2col(x_nhwc, ksize, stride, pad)
    M, K = P.shape
    Kpad = _round_up(K, 128)                 # full-width MXU contraction
    tm = min(tm, _round_up(M, 8))
    Mpad = _round_up(M, tm)
    G = Mpad // tm

    # bf16 operands for the MXU, f32 accumulation inside the kernel.
    P = jnp.pad(P, ((0, Mpad - M), (0, Kpad - K))).astype(jnp.bfloat16)
    Wm = jnp.transpose(conv_w, (2, 3, 1, 0)).reshape(ksize * ksize * Cin, Cout)
    Wm = jnp.pad(Wm, ((0, Kpad - K), (0, CPAD - Cout))).astype(jnp.bfloat16)

    in_specs = [pl.BlockSpec((tm, Kpad), lambda i: (i, 0)),
                pl.BlockSpec((Kpad, CPAD), lambda i: (0, 0))]   # weights stay resident
    conv_spec = pl.BlockSpec((tm, CPAD), lambda i: (i, 0))
    cparams = _compiler_params(1)

    if with_stats:
        conv, stats = pl.pallas_call(
            conv_stats_kernel,
            out_shape=(jax.ShapeDtypeStruct((Mpad, CPAD), jnp.float32),
                       jax.ShapeDtypeStruct((G, 8, CPAD), jnp.float32)),
            grid=(G,),
            in_specs=in_specs,
            out_specs=(conv_spec, pl.BlockSpec((1, 8, CPAD), lambda i: (i, 0, 0))),
            compiler_params=cparams,
        )(P, Wm)
    else:
        conv = pl.pallas_call(
            conv_mm_kernel,
            out_shape=jax.ShapeDtypeStruct((Mpad, CPAD), jnp.float32),
            grid=(G,),
            in_specs=in_specs,
            out_specs=conv_spec,
            compiler_params=cparams,
        )(P, Wm)
        stats = None
    return conv, stats, (M, Hout, Wout, Cout)


# --------------------------- module building blocks ------------------------

def conv2d_pallas(x_nhwc, conv_w, *, ksize, stride, pad):
    """Plain Conv2d (no bias) -> NHWC output."""
    conv, _, (M, Hout, Wout, Cout) = _conv_im2col_matmul(
        x_nhwc, conv_w, ksize=ksize, stride=stride, pad=pad, with_stats=False)
    N = x_nhwc.shape[0]
    return conv[:M, :Cout].reshape(N, Hout, Wout, Cout)


def disblock_pallas(x_nhwc, conv_w, gamma, beta):
    """DisBlock: Conv2d(k=3,s=2,p=1,no bias) -> BatchNorm2d (batch stats) -> LeakyReLU."""
    N = x_nhwc.shape[0]
    conv, stats, (M, Hout, Wout, Cout) = _conv_im2col_matmul(
        x_nhwc, conv_w, ksize=3, stride=2, pad=1, with_stats=True)

    # Tiny per-channel combine of the per-tile partials (length-128 vectors, wrapper glue).
    s = jnp.sum(stats[:, 0, :], axis=0)
    s2 = jnp.sum(stats[:, 1, :], axis=0)
    mean = s / M
    var = s2 / M - mean * mean               # biased variance == PyTorch train-mode BN
    gamma_p = jnp.pad(gamma.astype(jnp.float32), (0, CPAD - Cout))
    beta_p = jnp.pad(beta.astype(jnp.float32), (0, CPAD - Cout))
    scale = gamma_p * lax.rsqrt(var + BN_EPS)
    shift = beta_p - mean * scale

    Mpad = conv.shape[0]
    tm = min(TM, Mpad)
    G = Mpad // tm
    out = pl.pallas_call(
        bn_lrelu_kernel,
        out_shape=jax.ShapeDtypeStruct((Mpad, CPAD), jnp.float32),
        grid=(G,),
        in_specs=[pl.BlockSpec((tm, CPAD), lambda i: (i, 0)),
                  pl.BlockSpec((1, CPAD), lambda i: (0, 0)),
                  pl.BlockSpec((1, CPAD), lambda i: (0, 0))],
        out_specs=pl.BlockSpec((tm, CPAD), lambda i: (i, 0)),
        compiler_params=_compiler_params(1),
    )(conv, scale.reshape(1, CPAD), shift.reshape(1, CPAD))
    return out[:M, :Cout].reshape(N, Hout, Wout, Cout)


def discriminator_forward(img, params):
    """img: [N, in_nc, H, W] f32 (NCHW).  Returns sigmoid logits [N, 1]."""
    x = jnp.transpose(img, (0, 2, 3, 1))                                   # NHWC
    x = conv2d_pallas(x, params["conv_w"], ksize=5, stride=1, pad=2)
    x = disblock_pallas(x, params["g1_w"], params["g1_gamma"], params["g1_beta"])
    x = disblock_pallas(x, params["g2_w"], params["g2_gamma"], params["g2_beta"])
    x = disblock_pallas(x, params["g3_w"], params["g3_gamma"], params["g3_beta"])
    x = disblock_pallas(x, params["g4_w"], params["g4_gamma"], params["g4_beta"])

    N, Hf, Wf, C = x.shape
    # AvgPool2d(8, 8) + flatten in the PyTorch (c, i, j) order: layout glue + tiny mean.
    pooled = x.reshape(N, Hf // 8, 8, Wf // 8, 8, C).mean(axis=(2, 4))     # [N, Hf//8, Wf//8, C]
    feat = jnp.transpose(pooled, (0, 3, 1, 2)).reshape(N, -1)              # [N, C*(Hf//8)*(Wf//8)]

    # Linear(128*4, 1) + Sigmoid as a small single-block Pallas kernel (output padded to 128 lanes).
    fdim = feat.shape[1]
    w_pad = jnp.zeros((fdim, CPAD), jnp.float32).at[:, 0].set(params["lin_w"][0].astype(jnp.float32))
    b_pad = jnp.zeros((1, CPAD), jnp.float32).at[0, 0].set(params["lin_b"][0].astype(jnp.float32))
    out = pl.pallas_call(
        head_kernel,
        out_shape=jax.ShapeDtypeStruct((N, CPAD), jnp.float32),
    )(feat.astype(jnp.float32), w_pad, b_pad)
    return out[:, :1]


# ------------------------------ reference ----------------------------------

def discriminator_reference(img, params):
    """Pure-JAX reference matching PyTorch Discriminator.forward (train-mode BN).
    Conv operands are cast to bf16 (f32 accumulation) to mirror the MXU feed precision
    used by the Pallas kernels, so the comparison is tight; all other math is f32."""
    def conv(x, w, stride, pad):
        return lax.conv_general_dilated(
            x.astype(jnp.bfloat16), w.astype(jnp.bfloat16),
            window_strides=(stride, stride), padding=((pad, pad), (pad, pad)),
            dimension_numbers=("NCHW", "OIHW", "NCHW"),
            preferred_element_type=jnp.float32)

    def disblock(x, w, gamma, beta):
        c = conv(x, w, 2, 1)
        mean = jnp.mean(c, axis=(0, 2, 3), keepdims=True)
        var = jnp.mean((c - mean) ** 2, axis=(0, 2, 3), keepdims=True)
        y = (c - mean) * lax.rsqrt(var + BN_EPS) * gamma[None, :, None, None] \
            + beta[None, :, None, None]
        return jnp.where(y > 0, y, LEAKY_SLOPE * y)

    x = conv(img, params["conv_w"], 1, 2)
    x = disblock(x, params["g1_w"], params["g1_gamma"], params["g1_beta"])
    x = disblock(x, params["g2_w"], params["g2_gamma"], params["g2_beta"])
    x = disblock(x, params["g3_w"], params["g3_gamma"], params["g3_beta"])
    x = disblock(x, params["g4_w"], params["g4_gamma"], params["g4_beta"])
    N, C, Hh, Ww = x.shape
    x = x.reshape(N, C, Hh // 8, 8, Ww // 8, 8).mean(axis=(3, 5))
    feat = x.reshape(N, -1)
    logit = feat @ params["lin_w"].T + params["lin_b"][None, :]
    return 1.0 / (1.0 + jnp.exp(-logit))


# -------------------------------- main --------------------------------------

if __name__ == "__main__":
    # Linear(128*4, 1) implies a 2x2 map after AvgPool2d(8,8): input spatial must be 256.
    N, IN_NC, H, W = 2, 2, 256, 256

    key = jax.random.PRNGKey(0)
    ks = jax.random.split(key, 16)
    img = jax.random.normal(ks[0], (N, IN_NC, H, W), dtype=jnp.float32)

    def conv_init(k, cout, cin, ksz):
        # mirrors Discriminator.normal_weight_init(mean=0, std=0.02)
        return 0.02 * jax.random.normal(k, (cout, cin, ksz, ksz), dtype=jnp.float32)

    params = {
        "conv_w": conv_init(ks[1], 3, IN_NC, 5),
        "g1_w": conv_init(ks[2], 16, 3, 3),
        "g1_gamma": 1.0 + 0.1 * jax.random.normal(ks[3], (16,), jnp.float32),
        "g1_beta": 0.1 * jax.random.normal(ks[4], (16,), jnp.float32),
        "g2_w": conv_init(ks[5], 32, 16, 3),
        "g2_gamma": 1.0 + 0.1 * jax.random.normal(ks[6], (32,), jnp.float32),
        "g2_beta": 0.1 * jax.random.normal(ks[7], (32,), jnp.float32),
        "g3_w": conv_init(ks[8], 64, 32, 3),
        "g3_gamma": 1.0 + 0.1 * jax.random.normal(ks[9], (64,), jnp.float32),
        "g3_beta": 0.1 * jax.random.normal(ks[10], (64,), jnp.float32),
        "g4_w": conv_init(ks[11], 128, 64, 3),
        "g4_gamma": 1.0 + 0.1 * jax.random.normal(ks[12], (128,), jnp.float32),
        "g4_beta": 0.1 * jax.random.normal(ks[13], (128,), jnp.float32),
        "lin_w": jax.random.uniform(ks[14], (1, 512), jnp.float32, -1.0, 1.0) / jnp.sqrt(512.0),
        "lin_b": jax.random.uniform(ks[15], (1,), jnp.float32, -1.0, 1.0) / jnp.sqrt(512.0),
    }

    out = jax.jit(discriminator_forward)(img, params)
    out = jax.block_until_ready(out)
    ref = jax.block_until_ready(jax.jit(discriminator_reference)(img, params))

    assert out.shape == (N, 1), out.shape
    err = float(jnp.max(jnp.abs(out - ref)))
    assert err < 5e-3, err
    print("KERNEL_OK")
</pallas_src>

<mosaic_0001>
module attributes {stable_mosaic.version = 11 : i64} {
  func.func @conv_mm_kernel(%arg0: i32, %arg1: memref<512x128xbf16, #tpu.memory_space<vmem>>, %arg2: memref<128x128xbf16, #tpu.memory_space<vmem>>, %arg3: memref<512x128xf32, #tpu.memory_space<vmem>>) attributes {dimension_semantics = [#tpu.dimension_semantics<parallel>], iteration_bounds = array<i64: 256>, scalar_prefetch = 0 : i64, scratch_operands = 0 : i64, tpu.core_type = #tpu.core_type<tc>, window_params = [{transform_indices = @transform_0, window_bounds = array<i64: 512, 128>}, {pipeline_mode = #tpu.pipeline_mode<synchronous>, transform_indices = @transform_1, window_bounds = array<i64: 128, 128>}, {transform_indices = @transform_2, window_bounds = array<i64: 512, 128>}]} {
    %c0 = arith.constant 0 : index
    %c0_0 = arith.constant 0 : index
    %0 = vector.load %arg1[%c0, %c0_0] : memref<512x128xbf16, #tpu.memory_space<vmem>>, vector<512x128xbf16>
    %c0_1 = arith.constant 0 : index
    %c0_2 = arith.constant 0 : index
    %1 = vector.load %arg2[%c0_1, %c0_2] : memref<128x128xbf16, #tpu.memory_space<vmem>>, vector<128x128xbf16>
    %cst = arith.constant dense<0.000000e+00> : vector<512x128xf32>
    %2 = tpu.matmul %0, %1, %cst {dimension_numbers = #tpu.dot_dimension_numbers<[1], [0], [0], [1], [0, 0, 1, 1], [], []>} : vector<512x128xbf16>, vector<128x128xbf16>, vector<512x128xf32> -> vector<512x128xf32>
    %c0_3 = arith.constant 0 : index
    %c0_4 = arith.constant 0 : index
    %3 = vector.load %arg3[%c0_3, %c0_4] : memref<512x128xf32, #tpu.memory_space<vmem>>, vector<512x128xf32>
    tpu.vector_store %arg3[%c0_3, %c0_4], %2 {strides = array<i32>} : memref<512x128xf32, #tpu.memory_space<vmem>>, vector<512x128xf32>,
    return
  }
  func.func @transform_0(%arg0: i32) -> (i32, i32) {
    %c0_i32 = arith.constant 0 : i32
    %c0_i32_0 = arith.constant 0 : i32
    return %arg0, %c0_i32 : i32, i32
  }
  func.func @transform_1(%arg0: i32) -> (i32, i32) {
    %c0_i32 = arith.constant 0 : i32
    %c0_i32_0 = arith.constant 0 : i32
    %c0_i32_1 = arith.constant 0 : i32
    return %c0_i32, %c0_i32_0 : i32, i32
  }
  func.func @transform_2(%arg0: i32) -> (i32, i32) {
    %c0_i32 = arith.constant 0 : i32
    %c0_i32_0 = arith.constant 0 : i32
    return %arg0, %c0_i32 : i32, i32
  }
}

module attributes {stable_mosaic.version = 11 : i64} {
  func.func @conv_stats_kernel(%arg0: i32, %arg1: memref<512x128xbf16, #tpu.memory_space<vmem>>, %arg2: memref<128x128xbf16, #tpu.memory_space<vmem>>, %arg3: memref<512x128xf32, #tpu.memory_space<vmem>>, %arg4: memref<1x8x128xf32, #tpu.memory_space<vmem>>) attributes {dimension_semantics = [#tpu.dimension_semantics<parallel>], iteration_bounds = array<i64: 64>, scalar_prefetch = 0 : i64, scratch_operands = 0 : i64, tpu.core_type = #tpu.core_type<tc>, window_params = [{transform_indices = @transform_0, window_bounds = array<i64: 512, 128>}, {pipeline_mode = #tpu.pipeline_mode<synchronous>, transform_indices = @transform_1, window_bounds = array<i64: 128, 128>}, {transform_indices = @transform_2, window_bounds = array<i64: 512, 128>}, {transform_indices = @transform_3, window_bounds = array<i64: 1, 8, 128>}]} {
    %c0 = arith.constant 0 : index
    %c0_0 = arith.constant 0 : index
    %0 = vector.load %arg1[%c0, %c0_0] : memref<512x128xbf16, #tpu.memory_space<vmem>>, vector<512x128xbf16>
    %c0_1 = arith.constant 0 : index
    %c0_2 = arith.constant 0 : index
    %1 = vector.load %arg2[%c0_1, %c0_2] : memref<128x128xbf16, #tpu.memory_space<vmem>>, vector<128x128xbf16>
    %cst = arith.constant dense<0.000000e+00> : vector<512x128xf32>
    %2 = tpu.matmul %0, %1, %cst {dimension_numbers = #tpu.dot_dimension_numbers<[1], [0], [0], [1], [0, 0, 1, 1], [], []>} : vector<512x128xbf16>, vector<128x128xbf16>, vector<512x128xf32> -> vector<512x128xf32>
    %c0_3 = arith.constant 0 : index
    %c0_4 = arith.constant 0 : index
    %3 = vector.load %arg3[%c0_3, %c0_4] : memref<512x128xf32, #tpu.memory_space<vmem>>, vector<512x128xf32>
    tpu.vector_store %arg3[%c0_3, %c0_4], %2 {strides = array<i32>} : memref<512x128xf32, #tpu.memory_space<vmem>>, vector<512x128xf32>,
    %cst_5 = arith.constant dense<0.000000e+00> : vector<128xf32>
    %4 = vector.multi_reduction <add>, %2, %cst_5 [0] : vector<512x128xf32> to vector<128xf32>
    %5 = vector.shape_cast %4 : vector<128xf32> to vector<1x128xf32>
    %6 = arith.mulf %2, %2 : vector<512x128xf32>
    %cst_6 = arith.constant dense<0.000000e+00> : vector<128xf32>
    %7 = vector.multi_reduction <add>, %6, %cst_6 [0] : vector<512x128xf32> to vector<128xf32>
    %8 = vector.shape_cast %7 : vector<128xf32> to vector<1x128xf32>
    %cst_7 = arith.constant 0.000000e+00 : f32
    %9 = vector.broadcast %cst_7 : f32 to vector<6x128xf32>
    %10 = tpu.concatenate %5, %8, %9 in 0 : vector<1x128xf32>, vector<1x128xf32>, vector<6x128xf32> -> vector<8x128xf32>
    %11 = vector.shape_cast %10 : vector<8x128xf32> to vector<1x8x128xf32>
    %c0_8 = arith.constant 0 : index
    %c0_9 = arith.constant 0 : index
    %c0_10 = arith.constant 0 : index
    %12 = vector.load %arg4[%c0_8, %c0_9, %c0_10] : memref<1x8x128xf32, #tpu.memory_space<vmem>>, vector<1x8x128xf32>
    tpu.vector_store %arg4[%c0_8, %c0_9, %c0_10], %11 {strides = array<i32>} : memref<1x8x128xf32, #tpu.memory_space<vmem>>, vector<1x8x128xf32>,
    return
  }
  func.func @transform_0(%arg0: i32) -> (i32, i32) {
    %c0_i32 = arith.constant 0 : i32
    %c0_i32_0 = arith.constant 0 : i32
    return %arg0, %c0_i32 : i32, i32
  }
  func.func @transform_1(%arg0: i32) -> (i32, i32) {
    %c0_i32 = arith.constant 0 : i32
    %c0_i32_0 = arith.constant 0 : i32
    %c0_i32_1 = arith.constant 0 : i32
    return %c0_i32, %c0_i32_0 : i32, i32
  }
  func.func @transform_2(%arg0: i32) -> (i32, i32) {
    %c0_i32 = arith.constant 0 : i32
    %c0_i32_0 = arith.constant 0 : i32
    return %arg0, %c0_i32 : i32, i32
  }
  func.func @transform_3(%arg0: i32) -> (i32, i32, i32) {
    %c0_i32 = arith.constant 0 : i32
    %c0_i32_0 = arith.constant 0 : i32
    %c0_i32_1 = arith.constant 0 : i32
    return %arg0, %c0_i32, %c0_i32_0 : i32, i32, i32
  }
}

module attributes {stable_mosaic.version = 11 : i64} {
  func.func @bn_lrelu_kernel(%arg0: i32, %arg1: memref<512x128xf32, #tpu.memory_space<vmem>>, %arg2: memref<1x128xf32, #tpu.memory_space<vmem>>, %arg3: memref<1x128xf32, #tpu.memory_space<vmem>>, %arg4: memref<512x128xf32, #tpu.memory_space<vmem>>) attributes {dimension_semantics = [#tpu.dimension_semantics<parallel>], iteration_bounds = array<i64: 64>, scalar_prefetch = 0 : i64, scratch_operands = 0 : i64, tpu.core_type = #tpu.core_type<tc>, window_params = [{transform_indices = @transform_0, window_bounds = array<i64: 512, 128>}, {pipeline_mode = #tpu.pipeline_mode<synchronous>, transform_indices = @transform_1, window_bounds = array<i64: 1, 128>}, {pipeline_mode = #tpu.pipeline_mode<synchronous>, transform_indices = @transform_2, window_bounds = array<i64: 1, 128>}, {transform_indices = @transform_3, window_bounds = array<i64: 512, 128>}]} {
    %c0 = arith.constant 0 : index
    %c0_0 = arith.constant 0 : index
    %0 = vector.load %arg1[%c0, %c0_0] : memref<512x128xf32, #tpu.memory_space<vmem>>, vector<512x128xf32>
    %c0_1 = arith.constant 0 : index
    %c0_2 = arith.constant 0 : index
    %1 = vector.load %arg2[%c0_1, %c0_2] : memref<1x128xf32, #tpu.memory_space<vmem>>, vector<1x128xf32>
    %2 = vector.broadcast %1 : vector<1x128xf32> to vector<512x128xf32>
    %3 = arith.mulf %0, %2 : vector<512x128xf32>
    %c0_3 = arith.constant 0 : index
    %c0_4 = arith.constant 0 : index
    %4 = vector.load %arg3[%c0_3, %c0_4] : memref<1x128xf32, #tpu.memory_space<vmem>>, vector<1x128xf32>
    %5 = vector.broadcast %4 : vector<1x128xf32> to vector<512x128xf32>
    %6 = arith.addf %3, %5 : vector<512x128xf32>
    %cst = arith.constant 0.000000e+00 : f32
    %7 = vector.broadcast %cst : f32 to vector<512x128xf32>
    %8 = arith.cmpf ogt, %6, %7 : vector<512x128xf32>
    %cst_5 = arith.constant 0.00999999977 : f32
    %9 = vector.broadcast %cst_5 : f32 to vector<512x128xf32>
    %10 = arith.mulf %9, %6 : vector<512x128xf32>
    %11 = arith.select %8, %6, %10 : vector<512x128xi1>, vector<512x128xf32>
    %c0_6 = arith.constant 0 : index
    %c0_7 = arith.constant 0 : index
    %12 = vector.load %arg4[%c0_6, %c0_7] : memref<512x128xf32, #tpu.memory_space<vmem>>, vector<512x128xf32>
    tpu.vector_store %arg4[%c0_6, %c0_7], %11 {strides = array<i32>} : memref<512x128xf32, #tpu.memory_space<vmem>>, vector<512x128xf32>,
    return
  }
  func.func @transform_0(%arg0: i32) -> (i32, i32) {
    %c0_i32 = arith.constant 0 : i32
    %c0_i32_0 = arith.constant 0 : i32
    return %arg0, %c0_i32 : i32, i32
  }
  func.func @transform_1(%arg0: i32) -> (i32, i32) {
    %c0_i32 = arith.constant 0 : i32
    %c0_i32_0 = arith.constant 0 : i32
    %c0_i32_1 = arith.constant 0 : i32
    return %c0_i32, %c0_i32_0 : i32, i32
  }
  func.func @transform_2(%arg0: i32) -> (i32, i32) {
    %c0_i32 = arith.constant 0 : i32
    %c0_i32_0 = arith.constant 0 : i32
    %c0_i32_1 = arith.constant 0 : i32
    return %c0_i32, %c0_i32_0 : i32, i32
  }
  func.func @transform_3(%arg0: i32) -> (i32, i32) {
    %c0_i32 = arith.constant 0 : i32
    %c0_i32_0 = arith.constant 0 : i32
    return %arg0, %c0_i32 : i32, i32
  }
}

module attributes {stable_mosaic.version = 11 : i64} {
  func.func @conv_stats_kernel(%arg0: i32, %arg1: memref<512x256xbf16, #tpu.memory_space<vmem>>, %arg2: memref<256x128xbf16, #tpu.memory_space<vmem>>, %arg3: memref<512x128xf32, #tpu.memory_space<vmem>>, %arg4: memref<1x8x128xf32, #tpu.memory_space<vmem>>) attributes {dimension_semantics = [#tpu.dimension_semantics<parallel>], iteration_bounds = array<i64: 16>, scalar_prefetch = 0 : i64, scratch_operands = 0 : i64, tpu.core_type = #tpu.core_type<tc>, window_params = [{transform_indices = @transform_0, window_bounds = array<i64: 512, 256>}, {pipeline_mode = #tpu.pipeline_mode<synchronous>, transform_indices = @transform_1, window_bounds = array<i64: 256, 128>}, {transform_indices = @transform_2, window_bounds = array<i64: 512, 128>}, {transform_indices = @transform_3, window_bounds = array<i64: 1, 8, 128>}]} {
    %c0 = arith.constant 0 : index
    %c0_0 = arith.constant 0 : index
    %0 = vector.load %arg1[%c0, %c0_0] : memref<512x256xbf16, #tpu.memory_space<vmem>>, vector<512x256xbf16>
    %c0_1 = arith.constant 0 : index
    %c0_2 = arith.constant 0 : index
    %1 = vector.load %arg2[%c0_1, %c0_2] : memref<256x128xbf16, #tpu.memory_space<vmem>>, vector<256x128xbf16>
    %cst = arith.constant dense<0.000000e+00> : vector<512x128xf32>
    %2 = tpu.matmul %0, %1, %cst {dimension_numbers = #tpu.dot_dimension_numbers<[1], [0], [0], [1], [0, 0, 1, 1], [], []>} : vector<512x256xbf16>, vector<256x128xbf16>, vector<512x128xf32> -> vector<512x128xf32>
    %c0_3 = arith.constant 0 : index
    %c0_4 = arith.constant 0 : index
    %3 = vector.load %arg3[%c0_3, %c0_4] : memref<512x128xf32, #tpu.memory_space<vmem>>, vector<512x128xf32>
    tpu.vector_store %arg3[%c0_3, %c0_4], %2 {strides = array<i32>} : memref<512x128xf32, #tpu.memory_space<vmem>>, vector<512x128xf32>,
    %cst_5 = arith.constant dense<0.000000e+00> : vector<128xf32>
    %4 = vector.multi_reduction <add>, %2, %cst_5 [0] : vector<512x128xf32> to vector<128xf32>
    %5 = vector.shape_cast %4 : vector<128xf32> to vector<1x128xf32>
    %6 = arith.mulf %2, %2 : vector<512x128xf32>
    %cst_6 = arith.constant dense<0.000000e+00> : vector<128xf32>
    %7 = vector.multi_reduction <add>, %6, %cst_6 [0] : vector<512x128xf32> to vector<128xf32>
    %8 = vector.shape_cast %7 : vector<128xf32> to vector<1x128xf32>
    %cst_7 = arith.constant 0.000000e+00 : f32
    %9 = vector.broadcast %cst_7 : f32 to vector<6x128xf32>
    %10 = tpu.concatenate %5, %8, %9 in 0 : vector<1x128xf32>, vector<1x128xf32>, vector<6x128xf32> -> vector<8x128xf32>
    %11 = vector.shape_cast %10 : vector<8x128xf32> to vector<1x8x128xf32>
    %c0_8 = arith.constant 0 : index
    %c0_9 = arith.constant 0 : index
    %c0_10 = arith.constant 0 : index
    %12 = vector.load %arg4[%c0_8, %c0_9, %c0_10] : memref<1x8x128xf32, #tpu.memory_space<vmem>>, vector<1x8x128xf32>
    tpu.vector_store %arg4[%c0_8, %c0_9, %c0_10], %11 {strides = array<i32>} : memref<1x8x128xf32, #tpu.memory_space<vmem>>, vector<1x8x128xf32>,
    return
  }
  func.func @transform_0(%arg0: i32) -> (i32, i32) {
    %c0_i32 = arith.constant 0 : i32
    %c0_i32_0 = arith.constant 0 : i32
    return %arg0, %c0_i32 : i32, i32
  }
  func.func @transform_1(%arg0: i32) -> (i32, i32) {
    %c0_i32 = arith.constant 0 : i32
    %c0_i32_0 = arith.constant 0 : i32
    %c0_i32_1 = arith.constant 0 : i32
    return %c0_i32, %c0_i32_0 : i32, i32
  }
  func.func @transform_2(%arg0: i32) -> (i32, i32) {
    %c0_i32 = arith.constant 0 : i32
    %c0_i32_0 = arith.constant 0 : i32
    return %arg0, %c0_i32 : i32, i32
  }
  func.func @transform_3(%arg0: i32) -> (i32, i32, i32) {
    %c0_i32 = arith.constant 0 : i32
    %c0_i32_0 = arith.constant 0 : i32
    %c0_i32_1 = arith.constant 0 : i32
    return %arg0, %c0_i32, %c0_i32_0 : i32, i32, i32
  }
}

module attributes {stable_mosaic.version = 11 : i64} {
  func.func @bn_lrelu_kernel(%arg0: i32, %arg1: memref<512x128xf32, #tpu.memory_space<vmem>>, %arg2: memref<1x128xf32, #tpu.memory_space<vmem>>, %arg3: memref<1x128xf32, #tpu.memory_space<vmem>>, %arg4: memref<512x128xf32, #tpu.memory_space<vmem>>) attributes {dimension_semantics = [#tpu.dimension_semantics<parallel>], iteration_bounds = array<i64: 16>, scalar_prefetch = 0 : i64, scratch_operands = 0 : i64, tpu.core_type = #tpu.core_type<tc>, window_params = [{transform_indices = @transform_0, window_bounds = array<i64: 512, 128>}, {pipeline_mode = #tpu.pipeline_mode<synchronous>, transform_indices = @transform_1, window_bounds = array<i64: 1, 128>}, {pipeline_mode = #tpu.pipeline_mode<synchronous>, transform_indices = @transform_2, window_bounds = array<i64: 1, 128>}, {transform_indices = @transform_3, window_bounds = array<i64: 512, 128>}]} {
    %c0 = arith.constant 0 : index
    %c0_0 = arith.constant 0 : index
    %0 = vector.load %arg1[%c0, %c0_0] : memref<512x128xf32, #tpu.memory_space<vmem>>, vector<512x128xf32>
    %c0_1 = arith.constant 0 : index
    %c0_2 = arith.constant 0 : index
    %1 = vector.load %arg2[%c0_1, %c0_2] : memref<1x128xf32, #tpu.memory_space<vmem>>, vector<1x128xf32>
    %2 = vector.broadcast %1 : vector<1x128xf32> to vector<512x128xf32>
    %3 = arith.mulf %0, %2 : vector<512x128xf32>
    %c0_3 = arith.constant 0 : index
    %c0_4 = arith.constant 0 : index
    %4 = vector.load %arg3[%c0_3, %c0_4] : memref<1x128xf32, #tpu.memory_space<vmem>>, vector<1x128xf32>
    %5 = vector.broadcast %4 : vector<1x128xf32> to vector<512x128xf32>
    %6 = arith.addf %3, %5 : vector<512x128xf32>
    %cst = arith.constant 0.000000e+00 : f32
    %7 = vector.broadcast %cst : f32 to vector<512x128xf32>
    %8 = arith.cmpf ogt, %6, %7 : vector<512x128xf32>
    %cst_5 = arith.constant 0.00999999977 : f32
    %9 = vector.broadcast %cst_5 : f32 to vector<512x128xf32>
    %10 = arith.mulf %9, %6 : vector<512x128xf32>
    %11 = arith.select %8, %6, %10 : vector<512x128xi1>, vector<512x128xf32>
    %c0_6 = arith.constant 0 : index
    %c0_7 = arith.constant 0 : index
    %12 = vector.load %arg4[%c0_6, %c0_7] : memref<512x128xf32, #tpu.memory_space<vmem>>, vector<512x128xf32>
    tpu.vector_store %arg4[%c0_6, %c0_7], %11 {strides = array<i32>} : memref<512x128xf32, #tpu.memory_space<vmem>>, vector<512x128xf32>,
    return
  }
  func.func @transform_0(%arg0: i32) -> (i32, i32) {
    %c0_i32 = arith.constant 0 : i32
    %c0_i32_0 = arith.constant 0 : i32
    return %arg0, %c0_i32 : i32, i32
  }
  func.func @transform_1(%arg0: i32) -> (i32, i32) {
    %c0_i32 = arith.constant 0 : i32
    %c0_i32_0 = arith.constant 0 : i32
    %c0_i32_1 = arith.constant 0 : i32
    return %c0_i32, %c0_i32_0 : i32, i32
  }
  func.func @transform_2(%arg0: i32) -> (i32, i32) {
    %c0_i32 = arith.constant 0 : i32
    %c0_i32_0 = arith.constant 0 : i32
    %c0_i32_1 = arith.constant 0 : i32
    return %c0_i32, %c0_i32_0 : i32, i32
  }
  func.func @transform_3(%arg0: i32) -> (i32, i32) {
    %c0_i32 = arith.constant 0 : i32
    %c0_i32_0 = arith.constant 0 : i32
    return %arg0, %c0_i32 : i32, i32
  }
}

module attributes {stable_mosaic.version = 11 : i64} {
  func.func @conv_stats_kernel(%arg0: i32, %arg1: memref<512x384xbf16, #tpu.memory_space<vmem>>, %arg2: memref<384x128xbf16, #tpu.memory_space<vmem>>, %arg3: memref<512x128xf32, #tpu.memory_space<vmem>>, %arg4: memref<1x8x128xf32, #tpu.memory_space<vmem>>) attributes {dimension_semantics = [#tpu.dimension_semantics<parallel>], iteration_bounds = array<i64: 4>, scalar_prefetch = 0 : i64, scratch_operands = 0 : i64, tpu.core_type = #tpu.core_type<tc>, window_params = [{transform_indices = @transform_0, window_bounds = array<i64: 512, 384>}, {pipeline_mode = #tpu.pipeline_mode<synchronous>, transform_indices = @transform_1, window_bounds = array<i64: 384, 128>}, {transform_indices = @transform_2, window_bounds = array<i64: 512, 128>}, {transform_indices = @transform_3, window_bounds = array<i64: 1, 8, 128>}]} {
    %c0 = arith.constant 0 : index
    %c0_0 = arith.constant 0 : index
    %0 = vector.load %arg1[%c0, %c0_0] : memref<512x384xbf16, #tpu.memory_space<vmem>>, vector<512x384xbf16>
    %c0_1 = arith.constant 0 : index
    %c0_2 = arith.constant 0 : index
    %1 = vector.load %arg2[%c0_1, %c0_2] : memref<384x128xbf16, #tpu.memory_space<vmem>>, vector<384x128xbf16>
    %cst = arith.constant dense<0.000000e+00> : vector<512x128xf32>
    %2 = tpu.matmul %0, %1, %cst {dimension_numbers = #tpu.dot_dimension_numbers<[1], [0], [0], [1], [0, 0, 1, 1], [], []>} : vector<512x384xbf16>, vector<384x128xbf16>, vector<512x128xf32> -> vector<512x128xf32>
    %c0_3 = arith.constant 0 : index
    %c0_4 = arith.constant 0 : index
    %3 = vector.load %arg3[%c0_3, %c0_4] : memref<512x128xf32, #tpu.memory_space<vmem>>, vector<512x128xf32>
    tpu.vector_store %arg3[%c0_3, %c0_4], %2 {strides = array<i32>} : memref<512x128xf32, #tpu.memory_space<vmem>>, vector<512x128xf32>,
    %cst_5 = arith.constant dense<0.000000e+00> : vector<128xf32>
    %4 = vector.multi_reduction <add>, %2, %cst_5 [0] : vector<512x128xf32> to vector<128xf32>
    %5 = vector.shape_cast %4 : vector<128xf32> to vector<1x128xf32>
    %6 = arith.mulf %2, %2 : vector<512x128xf32>
    %cst_6 = arith.constant dense<0.000000e+00> : vector<128xf32>
    %7 = vector.multi_reduction <add>, %6, %cst_6 [0] : vector<512x128xf32> to vector<128xf32>
    %8 = vector.shape_cast %7 : vector<128xf32> to vector<1x128xf32>
    %cst_7 = arith.constant 0.000000e+00 : f32
    %9 = vector.broadcast %cst_7 : f32 to vector<6x128xf32>
    %10 = tpu.concatenate %5, %8, %9 in 0 : vector<1x128xf32>, vector<1x128xf32>, vector<6x128xf32> -> vector<8x128xf32>
    %11 = vector.shape_cast %10 : vector<8x128xf32> to vector<1x8x128xf32>
    %c0_8 = arith.constant 0 : index
    %c0_9 = arith.constant 0 : index
    %c0_10 = arith.constant 0 : index
    %12 = vector.load %arg4[%c0_8, %c0_9, %c0_10] : memref<1x8x128xf32, #tpu.memory_space<vmem>>, vector<1x8x128xf32>
    tpu.vector_store %arg4[%c0_8, %c0_9, %c0_10], %11 {strides = array<i32>} : memref<1x8x128xf32, #tpu.memory_space<vmem>>, vector<1x8x128xf32>,
    return
  }
  func.func @transform_0(%arg0: i32) -> (i32, i32) {
    %c0_i32 = arith.constant 0 : i32
    %c0_i32_0 = arith.constant 0 : i32
    return %arg0, %c0_i32 : i32, i32
  }
  func.func @transform_1(%arg0: i32) -> (i32, i32) {
    %c0_i32 = arith.constant 0 : i32
    %c0_i32_0 = arith.constant 0 : i32
    %c0_i32_1 = arith.constant 0 : i32
    return %c0_i32, %c0_i32_0 : i32, i32
  }
  func.func @transform_2(%arg0: i32) -> (i32, i32) {
    %c0_i32 = arith.constant 0 : i32
    %c0_i32_0 = arith.constant 0 : i32
    return %arg0, %c0_i32 : i32, i32
  }
  func.func @transform_3(%arg0: i32) -> (i32, i32, i32) {
    %c0_i32 = arith.constant 0 : i32
    %c0_i32_0 = arith.constant 0 : i32
    %c0_i32_1 = arith.constant 0 : i32
    return %arg0, %c0_i32, %c0_i32_0 : i32, i32, i32
  }
}

module attributes {stable_mosaic.version = 11 : i64} {
  func.func @bn_lrelu_kernel(%arg0: i32, %arg1: memref<512x128xf32, #tpu.memory_space<vmem>>, %arg2: memref<1x128xf32, #tpu.memory_space<vmem>>, %arg3: memref<1x128xf32, #tpu.memory_space<vmem>>, %arg4: memref<512x128xf32, #tpu.memory_space<vmem>>) attributes {dimension_semantics = [#tpu.dimension_semantics<parallel>], iteration_bounds = array<i64: 4>, scalar_prefetch = 0 : i64, scratch_operands = 0 : i64, tpu.core_type = #tpu.core_type<tc>, window_params = [{transform_indices = @transform_0, window_bounds = array<i64: 512, 128>}, {pipeline_mode = #tpu.pipeline_mode<synchronous>, transform_indices = @transform_1, window_bounds = array<i64: 1, 128>}, {pipeline_mode = #tpu.pipeline_mode<synchronous>, transform_indices = @transform_2, window_bounds = array<i64: 1, 128>}, {transform_indices = @transform_3, window_bounds = array<i64: 512, 128>}]} {
    %c0 = arith.constant 0 : index
    %c0_0 = arith.constant 0 : index
    %0 = vector.load %arg1[%c0, %c0_0] : memref<512x128xf32, #tpu.memory_space<vmem>>, vector<512x128xf32>
    %c0_1 = arith.constant 0 : index
    %c0_2 = arith.constant 0 : index
    %1 = vector.load %arg2[%c0_1, %c0_2] : memref<1x128xf32, #tpu.memory_space<vmem>>, vector<1x128xf32>
    %2 = vector.broadcast %1 : vector<1x128xf32> to vector<512x128xf32>
    %3 = arith.mulf %0, %2 : vector<512x128xf32>
    %c0_3 = arith.constant 0 : index
    %c0_4 = arith.constant 0 : index
    %4 = vector.load %arg3[%c0_3, %c0_4] : memref<1x128xf32, #tpu.memory_space<vmem>>, vector<1x128xf32>
    %5 = vector.broadcast %4 : vector<1x128xf32> to vector<512x128xf32>
    %6 = arith.addf %3, %5 : vector<512x128xf32>
    %cst = arith.constant 0.000000e+00 : f32
    %7 = vector.broadcast %cst : f32 to vector<512x128xf32>
    %8 = arith.cmpf ogt, %6, %7 : vector<512x128xf32>
    %cst_5 = arith.constant 0.00999999977 : f32
    %9 = vector.broadcast %cst_5 : f32 to vector<512x128xf32>
    %10 = arith.mulf %9, %6 : vector<512x128xf32>
    %11 = arith.select %8, %6, %10 : vector<512x128xi1>, vector<512x128xf32>
    %c0_6 = arith.constant 0 : index
    %c0_7 = arith.constant 0 : index
    %12 = vector.load %arg4[%c0_6, %c0_7] : memref<512x128xf32, #tpu.memory_space<vmem>>, vector<512x128xf32>
    tpu.vector_store %arg4[%c0_6, %c0_7], %11 {strides = array<i32>} : memref<512x128xf32, #tpu.memory_space<vmem>>, vector<512x128xf32>,
    return
  }
  func.func @transform_0(%arg0: i32) -> (i32, i32) {
    %c0_i32 = arith.constant 0 : i32
    %c0_i32_0 = arith.constant 0 : i32
    return %arg0, %c0_i32 : i32, i32
  }
  func.func @transform_1(%arg0: i32) -> (i32, i32) {
    %c0_i32 = arith.constant 0 : i32
    %c0_i32_0 = arith.constant 0 : i32
    %c0_i32_1 = arith.constant 0 : i32
    return %c0_i32, %c0_i32_0 : i32, i32
  }
  func.func @transform_2(%arg0: i32) -> (i32, i32) {
    %c0_i32 = arith.constant 0 : i32
    %c0_i32_0 = arith.constant 0 : i32
    %c0_i32_1 = arith.constant 0 : i32
    return %c0_i32, %c0_i32_0 : i32, i32
  }
  func.func @transform_3(%arg0: i32) -> (i32, i32) {
    %c0_i32 = arith.constant 0 : i32
    %c0_i32_0 = arith.constant 0 : i32
    return %arg0, %c0_i32 : i32, i32
  }
}

module attributes {stable_mosaic.version = 11 : i64} {
  func.func @conv_stats_kernel(%arg0: i32, %arg1: memref<512x640xbf16, #tpu.memory_space<vmem>>, %arg2: memref<640x128xbf16, #tpu.memory_space<vmem>>, %arg3: memref<512x128xf32, #tpu.memory_space<vmem>>, %arg4: memref<1x8x128xf32, #tpu.memory_space<vmem>>) attributes {dimension_semantics = [#tpu.dimension_semantics<parallel>], iteration_bounds = array<i64: 1>, scalar_prefetch = 0 : i64, scratch_operands = 0 : i64, tpu.core_type = #tpu.core_type<tc>, window_params = [{transform_indices = @transform_0, window_bounds = array<i64: 512, 640>}, {pipeline_mode = #tpu.pipeline_mode<synchronous>, transform_indices = @transform_1, window_bounds = array<i64: 640, 128>}, {transform_indices = @transform_2, window_bounds = array<i64: 512, 128>}, {transform_indices = @transform_3, window_bounds = array<i64: 1, 8, 128>}]} {
    %c0 = arith.constant 0 : index
    %c0_0 = arith.constant 0 : index
    %0 = vector.load %arg1[%c0, %c0_0] : memref<512x640xbf16, #tpu.memory_space<vmem>>, vector<512x640xbf16>
    %c0_1 = arith.constant 0 : index
    %c0_2 = arith.constant 0 : index
    %1 = vector.load %arg2[%c0_1, %c0_2] : memref<640x128xbf16, #tpu.memory_space<vmem>>, vector<640x128xbf16>
    %cst = arith.constant dense<0.000000e+00> : vector<512x128xf32>
    %2 = tpu.matmul %0, %1, %cst {dimension_numbers = #tpu.dot_dimension_numbers<[1], [0], [0], [1], [0, 0, 1, 1], [], []>} : vector<512x640xbf16>, vector<640x128xbf16>, vector<512x128xf32> -> vector<512x128xf32>
    %c0_3 = arith.constant 0 : index
    %c0_4 = arith.constant 0 : index
    %3 = vector.load %arg3[%c0_3, %c0_4] : memref<512x128xf32, #tpu.memory_space<vmem>>, vector<512x128xf32>
    tpu.vector_store %arg3[%c0_3, %c0_4], %2 {strides = array<i32>} : memref<512x128xf32, #tpu.memory_space<vmem>>, vector<512x128xf32>,
    %cst_5 = arith.constant dense<0.000000e+00> : vector<128xf32>
    %4 = vector.multi_reduction <add>, %2, %cst_5 [0] : vector<512x128xf32> to vector<128xf32>
    %5 = vector.shape_cast %4 : vector<128xf32> to vector<1x128xf32>
    %6 = arith.mulf %2, %2 : vector<512x128xf32>
    %cst_6 = arith.constant dense<0.000000e+00> : vector<128xf32>
    %7 = vector.multi_reduction <add>, %6, %cst_6 [0] : vector<512x128xf32> to vector<128xf32>
    %8 = vector.shape_cast %7 : vector<128xf32> to vector<1x128xf32>
    %cst_7 = arith.constant 0.000000e+00 : f32
    %9 = vector.broadcast %cst_7 : f32 to vector<6x128xf32>
    %10 = tpu.concatenate %5, %8, %9 in 0 : vector<1x128xf32>, vector<1x128xf32>, vector<6x128xf32> -> vector<8x128xf32>
    %11 = vector.shape_cast %10 : vector<8x128xf32> to vector<1x8x128xf32>
    %c0_8 = arith.constant 0 : index
    %c0_9 = arith.constant 0 : index
    %c0_10 = arith.constant 0 : index
    %12 = vector.load %arg4[%c0_8, %c0_9, %c0_10] : memref<1x8x128xf32, #tpu.memory_space<vmem>>, vector<1x8x128xf32>
    tpu.vector_store %arg4[%c0_8, %c0_9, %c0_10], %11 {strides = array<i32>} : memref<1x8x128xf32, #tpu.memory_space<vmem>>, vector<1x8x128xf32>,
    return
  }
  func.func @transform_0(%arg0: i32) -> (i32, i32) {
    %c0_i32 = arith.constant 0 : i32
    %c0_i32_0 = arith.constant 0 : i32
    return %arg0, %c0_i32 : i32, i32
  }
  func.func @transform_1(%arg0: i32) -> (i32, i32) {
    %c0_i32 = arith.constant 0 : i32
    %c0_i32_0 = arith.constant 0 : i32
    %c0_i32_1 = arith.constant 0 : i32
    return %c0_i32, %c0_i32_0 : i32, i32
  }
  func.func @transform_2(%arg0: i32) -> (i32, i32) {
    %c0_i32 = arith.constant 0 : i32
    %c0_i32_0 = arith.constant 0 : i32
    return %arg0, %c0_i32 : i32, i32
  }
  func.func @transform_3(%arg0: i32) -> (i32, i32, i32) {
    %c0_i32 = arith.constant 0 : i32
    %c0_i32_0 = arith.constant 0 : i32
    %c0_i32_1 = arith.constant 0 : i32
    return %arg0, %c0_i32, %c0_i32_0 : i32, i32, i32
  }
}

module attributes {stable_mosaic.version = 11 : i64} {
  func.func @bn_lrelu_kernel(%arg0: i32, %arg1: memref<512x128xf32, #tpu.memory_space<vmem>>, %arg2: memref<1x128xf32, #tpu.memory_space<vmem>>, %arg3: memref<1x128xf32, #tpu.memory_space<vmem>>, %arg4: memref<512x128xf32, #tpu.memory_space<vmem>>) attributes {dimension_semantics = [#tpu.dimension_semantics<parallel>], iteration_bounds = array<i64: 1>, scalar_prefetch = 0 : i64, scratch_operands = 0 : i64, tpu.core_type = #tpu.core_type<tc>, window_params = [{transform_indices = @transform_0, window_bounds = array<i64: 512, 128>}, {pipeline_mode = #tpu.pipeline_mode<synchronous>, transform_indices = @transform_1, window_bounds = array<i64: 1, 128>}, {pipeline_mode = #tpu.pipeline_mode<synchronous>, transform_indices = @transform_2, window_bounds = array<i64: 1, 128>}, {transform_indices = @transform_3, window_bounds = array<i64: 512, 128>}]} {
    %c0 = arith.constant 0 : index
    %c0_0 = arith.constant 0 : index
    %0 = vector.load %arg1[%c0, %c0_0] : memref<512x128xf32, #tpu.memory_space<vmem>>, vector<512x128xf32>
    %c0_1 = arith.constant 0 : index
    %c0_2 = arith.constant 0 : index
    %1 = vector.load %arg2[%c0_1, %c0_2] : memref<1x128xf32, #tpu.memory_space<vmem>>, vector<1x128xf32>
    %2 = vector.broadcast %1 : vector<1x128xf32> to vector<512x128xf32>
    %3 = arith.mulf %0, %2 : vector<512x128xf32>
    %c0_3 = arith.constant 0 : index
    %c0_4 = arith.constant 0 : index
    %4 = vector.load %arg3[%c0_3, %c0_4] : memref<1x128xf32, #tpu.memory_space<vmem>>, vector<1x128xf32>
    %5 = vector.broadcast %4 : vector<1x128xf32> to vector<512x128xf32>
    %6 = arith.addf %3, %5 : vector<512x128xf32>
    %cst = arith.constant 0.000000e+00 : f32
    %7 = vector.broadcast %cst : f32 to vector<512x128xf32>
    %8 = arith.cmpf ogt, %6, %7 : vector<512x128xf32>
    %cst_5 = arith.constant 0.00999999977 : f32
    %9 = vector.broadcast %cst_5 : f32 to vector<512x128xf32>
    %10 = arith.mulf %9, %6 : vector<512x128xf32>
    %11 = arith.select %8, %6, %10 : vector<512x128xi1>, vector<512x128xf32>
    %c0_6 = arith.constant 0 : index
    %c0_7 = arith.constant 0 : index
    %12 = vector.load %arg4[%c0_6, %c0_7] : memref<512x128xf32, #tpu.memory_space<vmem>>, vector<512x128xf32>
    tpu.vector_store %arg4[%c0_6, %c0_7], %11 {strides = array<i32>} : memref<512x128xf32, #tpu.memory_space<vmem>>, vector<512x128xf32>,
    return
  }
  func.func @transform_0(%arg0: i32) -> (i32, i32) {
    %c0_i32 = arith.constant 0 : i32
    %c0_i32_0 = arith.constant 0 : i32
    return %arg0, %c0_i32 : i32, i32
  }
  func.func @transform_1(%arg0: i32) -> (i32, i32) {
    %c0_i32 = arith.constant 0 : i32
    %c0_i32_0 = arith.constant 0 : i32
    %c0_i32_1 = arith.constant 0 : i32
    return %c0_i32, %c0_i32_0 : i32, i32
  }
  func.func @transform_2(%arg0: i32) -> (i32, i32) {
    %c0_i32 = arith.constant 0 : i32
    %c0_i32_0 = arith.constant 0 : i32
    %c0_i32_1 = arith.constant 0 : i32
    return %c0_i32, %c0_i32_0 : i32, i32
  }
  func.func @transform_3(%arg0: i32) -> (i32, i32) {
    %c0_i32 = arith.constant 0 : i32
    %c0_i32_0 = arith.constant 0 : i32
    return %arg0, %c0_i32 : i32, i32
  }
}

module attributes {stable_mosaic.version = 11 : i64} {
  func.func @head_kernel(%arg0: memref<2x512xf32, #tpu.memory_space<vmem>>, %arg1: memref<512x128xf32, #tpu.memory_space<vmem>>, %arg2: memref<1x128xf32, #tpu.memory_space<vmem>>, %arg3: memref<2x128xf32, #tpu.memory_space<vmem>>) attributes {dimension_semantics = [], scalar_prefetch = 0 : i64, scratch_operands = 0 : i64, tpu.core_type = #tpu.core_type<tc>} {
    %c0 = arith.constant 0 : index
    %c0_0 = arith.constant 0 : index
    %0 = vector.load %arg0[%c0, %c0_0] : memref<2x512xf32, #tpu.memory_space<vmem>>, vector<2x512xf32>
    %c0_1 = arith.constant 0 : index
    %c0_2 = arith.constant 0 : index
    %1 = vector.load %arg1[%c0_1, %c0_2] : memref<512x128xf32, #tpu.memory_space<vmem>>, vector<512x128xf32>
    %cst = arith.constant dense<0.000000e+00> : vector<2x128xf32>
    %2 = tpu.matmul %0, %1, %cst {dimension_numbers = #tpu.dot_dimension_numbers<[1], [0], [0], [1], [0, 0, 1, 1], [], []>} : vector<2x512xf32>, vector<512x128xf32>, vector<2x128xf32> -> vector<2x128xf32>
    %c0_3 = arith.constant 0 : index
    %c0_4 = arith.constant 0 : index
    %3 = vector.load %arg2[%c0_3, %c0_4] : memref<1x128xf32, #tpu.memory_space<vmem>>, vector<1x128xf32>
    %4 = vector.broadcast %3 : vector<1x128xf32> to vector<2x128xf32>
    %5 = arith.addf %2, %4 : vector<2x128xf32>
    %cst_5 = arith.constant 0.000000e+00 : f32
    %6 = vector.broadcast %cst_5 : f32 to vector<2x128xf32>
    %7 = arith.subf %6, %5 : vector<2x128xf32>
    %8 = math.exp %7 : vector<2x128xf32>
    %cst_6 = arith.constant 1.000000e+00 : f32
    %9 = vector.broadcast %cst_6 : f32 to vector<2x128xf32>
    %10 = arith.addf %9, %8 : vector<2x128xf32>
    %cst_7 = arith.constant 1.000000e+00 : f32
    %11 = vector.broadcast %cst_7 : f32 to vector<2x128xf32>
    %12 = arith.divf %11, %10 : vector<2x128xf32>
    %c0_8 = arith.constant 0 : index
    %c0_9 = arith.constant 0 : index
    %13 = vector.load %arg3[%c0_8, %c0_9] : memref<2x128xf32, #tpu.memory_space<vmem>>, vector<2x128xf32>
    tpu.vector_store %arg3[%c0_8, %c0_9], %12 {strides = array<i32>} : memref<2x128xf32, #tpu.memory_space<vmem>>, vector<2x128xf32>,
    return
  }
}

</mosaic_0001>

<llo_original>
// kernel: discriminator_forward.10
$region0: #{discriminator_forward.10}
  #allocation0 [shape = 'u32[]', space=smem, size = 0x4, offset = 0x4, fixed_abs, tag = 'smem constant byte address 0x4 - core index']
  #allocation1 [shape = 'u32[144,128]{1,0:T(1,128)}', space=vmem, size = 0x12000, scoped, tag = 'internal scratch']
  %s0 = inlined_call_operand.hbm [shape: bf16[131072,128], index: 0, kind: input, shape index: {}]
  %s1 = inlined_call_operand.vmem [shape: bf16[128,128], index: 1, kind: input, shape index: {}]
  %s2 = inlined_call_operand.vmem [shape: f32[131072,128], index: 2, kind: output, shape index: {}]
  %s3 = sld [smem:[#allocation0]]
  $region45: #{discriminator_forward.10} parent=0
    _
  %s5 = ssub.s32 1, %s3
  %s6 = scalar_select 0, %s5, %s3
  $region1: #{discriminator_forward.10} parent=0
    #allocation2 [shape = 'u8[262144]{0}', space=vmem, size = 0x40000, scoped, tag = 'input window, operand 0']
    #allocation3 [shape = 's32[2]{0}', space=sflag, size = 0x8, scoped, tag = 'scoped memory for discriminator_forward.10']
    %7 = vsyncpa [#allocation3], 0
    %s8 = scalar_lea.sflag [#allocation3], 1
    %9 = vsyncpa %s8, 0
    loop: start=0, step=1, limit=258
    $region2: #{discriminator_forward.10} parent=1 // loop_pre_header
      _
    $region3: #{discriminator_forward.10} parent=1 // loop_header
      %s11 = sphi 0, %s15
      %p12 = scmp.ge.s32.totalorder %s11, 258
      %s21 = sphi 0, %s23
      %s24 = sphi 0, %s21
      %s25 = sphi 0, %s24
      %s41 = sphi 0, %s25
      %s45 = sphi 0, %s45
      %s47 = sphi 0, %s45
      %s48 = sphi 0, %s47
      %s62 = sphi 0, %s48
      %s68 = sphi 0, %s70
      %s71 = sphi 0, %s68
      %s72 = sphi 0, %s71
      %s88 = sphi 0, %s72
    $region4: #{discriminator_forward.10} parent=1 // loop_header_branch
      %14 = sbr.rel (%p12) target = $region8
    $region5: #{discriminator_forward.10} parent=1 // loop_body
      %s16 = ssub.s32 %s11, 1
      %s17 = ssub.s32 %s11, 2
      %s18 = sadd.s32 %s11, 1
      %s19 = ssub.s32 %s11, %s18
      %p20 = scmp.eq.s32.totalorder %s19, 0
      %s22 = sadd.s32 %s21, 1
      %s23 = scalar_select %p20, %s21, %s22
      %p26 = pneg %p20
      %p27 = scmp.eq.s32.totalorder %s11, 255
      %p28 = por %p26, %p27
      %p29 = scmp.ne.s32.totalorder %s21, %s24
      %p30 = scmp.eq.s32.totalorder %s11, 0
      %p31 = por %p29, %p30
      %p32 = scmp.ne.s32.totalorder %s21, %s24
      %p33 = scmp.eq.s32.totalorder %s16, 255
      %p34 = por %p32, %p33
      %p35 = scmp.ne.s32.totalorder %s24, %s25
      %p36 = scmp.eq.s32.totalorder %s16, 0
      %p37 = por %p35, %p36
      %p38 = scmp.ne.s32.totalorder %s24, %s25
      %p39 = scmp.eq.s32.totalorder %s17, 255
      %p40 = por %p38, %p39
      %p42 = scmp.ne.s32.totalorder %s25, %s41
      %p43 = scmp.eq.s32.totalorder %s17, 0
      %p44 = por %p42, %p43
      %s46 = sadd.s32 %s45, 1
      %p49 = scmp.eq.s32.totalorder %s11, 255
      %p50 = scmp.ne.s32.totalorder %s45, %s47
      %p51 = scmp.eq.s32.totalorder %s11, 0
      %p52 = por %p50, %p51
      %p53 = scmp.ne.s32.totalorder %s45, %s47
      %p54 = scmp.eq.s32.totalorder %s16, 255
      %p55 = por %p53, %p54
      %p56 = scmp.ne.s32.totalorder %s47, %s48
      %p57 = scmp.eq.s32.totalorder %s16, 0
      %p58 = por %p56, %p57
      %p59 = scmp.ne.s32.totalorder %s47, %s48
      %p60 = scmp.eq.s32.totalorder %s17, 255
      %p61 = por %p59, %p60
      %p63 = scmp.ne.s32.totalorder %s48, %s62
      %p64 = scmp.eq.s32.totalorder %s17, 0
      %p65 = por %p63, %p64
      %s66 = ssub.s32 %s11, %s18
      %p67 = scmp.eq.s32.totalorder %s66, 0
      %s69 = sadd.s32 %s68, 1
      %s70 = scalar_select %p67, %s68, %s69
      %p73 = pneg %p67
      %p74 = scmp.eq.s32.totalorder %s11, 255
      %p75 = por %p73, %p74
      %p76 = scmp.ne.s32.totalorder %s68, %s71
      %p77 = scmp.eq.s32.totalorder %s11, 0
      %p78 = por %p76, %p77
      %p79 = scmp.ne.s32.totalorder %s68, %s71
      %p80 = scmp.eq.s32.totalorder %s16, 255
      %p81 = por %p79, %p80
      %p82 = scmp.ne.s32.totalorder %s71, %s72
      %p83 = scmp.eq.s32.totalorder %s16, 0
      %p84 = por %p82, %p83
      %p85 = scmp.ne.s32.totalorder %s71, %s72
      %p86 = scmp.eq.s32.totalorder %s17, 255
      %p87 = por %p85, %p86
      %p89 = scmp.ne.s32.totalorder %s72, %s88
      %p90 = scmp.eq.s32.totalorder %s17, 0
      %p91 = por %p89, %p90
      %p92 = scmp.le.s32.totalorder 1, %s11
      %p93 = scmp.lt.s32.totalorder %s11, 257
      %p94 = pnand %p92, %p93
      %p95 = pneg %p94
      // Predicated region
      $region9: #{discriminator_forward.10} parent=5 // pred_check
        _
      $region10: #{discriminator_forward.10} parent=5 // pred_check_branch
        %97 = sbr.rel (%p94) target = $region12
      $region11: #{discriminator_forward.10} parent=5 // pred_region
        %s98 = ssub.s32 %s11, 1
        // Predicated region
        $region13: #{discriminator_forward.10} parent=11 // pred_check
          %p99 = pneg %p58
        $region14: #{discriminator_forward.10} parent=11 // pred_check_branch
          %101 = sbr.rel (%p99) target = $region16
        $region15: #{discriminator_forward.10} parent=11 // pred_region
          _
        $region16: #{discriminator_forward.10} parent=11 // pred_fallthru
          _
      $region12: #{discriminator_forward.10} parent=5 // pred_fallthru
        _
      %p102 = scmp.lt.s32.totalorder %s11, 256
      // Predicated region
      $region17: #{discriminator_forward.10} parent=5 // pred_check
        %p103 = pneg %p102
      $region18: #{discriminator_forward.10} parent=5 // pred_check_branch
        %105 = sbr.rel (%p103) target = $region20
      $region19: #{discriminator_forward.10} parent=5 // pred_region
        // Predicated region
        $region21: #{discriminator_forward.10} parent=19 // pred_check
          %p106 = pneg %p31
        $region22: #{discriminator_forward.10} parent=19 // pred_check_branch
          %108 = sbr.rel (%p106) target = $region24
        $region23: #{discriminator_forward.10} parent=19 // pred_region
          %s109 = sand.u32 %s21, 1
          %s110 = scalar_lea.sflag [#allocation3], %s109
          %s111 = sand.u32 %s21, 1
          %s112 = smul.addr %s111, 256
          %s113 = scalar_lea.vmem [#allocation2], %s112
          %s114 = smul.u32 64, %s11
          %s116 = ssub.s32 4096, 4096
          %117 = vsyncadd %s110, %s116
          %s118 = smul.addr %s114, 64
          %s119 = scalar_lea.hbm %s0, %s118
          %s120 = sshll.u32 %s113, 4
          %s121 = int_to_ptr.vmem [resolvable:$true] %s120
          %126 = dma.hbm_to_vmem [thread:$0]  %s119, 4096, %s121, %s110, 64, 64, 4
        $region24: #{discriminator_forward.10} parent=19 // pred_fallthru
          _
      $region20: #{discriminator_forward.10} parent=5 // pred_fallthru
        _
      %p127 = scmp.le.s32.totalorder 1, %s11
      %p128 = scmp.lt.s32.totalorder %s11, 257
      %p129 = pnand %p127, %p128
      %p130 = pneg %p129
      // Predicated region
      $region25: #{discriminator_forward.10} parent=5 // pred_check
        _
      $region26: #{discriminator_forward.10} parent=5 // pred_check_branch
        %132 = sbr.rel (%p129) target = $region28
      $region27: #{discriminator_forward.10} parent=5 // pred_region
        %s133 = ssub.s32 %s11, 1
        %s134 = sand.u32 %s24, 1
        %s135 = scalar_lea.sflag [#allocation3], %s134
        %s136 = sand.u32 %s24, 1
        %s137 = smul.addr %s136, 256
        %s138 = scalar_lea.vmem [#allocation2], %s137
        // Predicated region
        $region29: #{discriminator_forward.10} parent=27 // pred_check
          %p139 = pneg %p37
        $region30: #{discriminator_forward.10} parent=27 // pred_check_branch
          %141 = sbr.rel (%p139) target = $region32
        $region31: #{discriminator_forward.10} parent=27 // pred_region
          %142 = dma.done %s135, 4096
        $region32: #{discriminator_forward.10} parent=27 // pred_fallthru
          _
        %s143 = sand.u32 %s24, 1
        %s144 = scalar_lea.sflag [#allocation3], %s143
        %s145 = sand.u32 %s24, 1
        %s146 = smul.addr %s145, 256
        %s147 = scalar_lea.vmem [#allocation2], %s146
        %p148 = pneg %p37
        %p149 = pneg %p34
        %p150 = pneg %p58
        %p151 = pneg %p55
        %p152 = pneg %p84
        %p153 = pneg %p81
        %s154 = smul.u32 64, %s16
        %p155 = scmp.lt.s32.totalorder %s154, 16383
        %s156 = scalar_select %p155, %s154, 16383
        %s157 = smul.addr %s156, 8
        %s158 = scalar_lea.vmem %s2, %s157
        %s159 = smul.u32 64, %s16
        %s160 = smul.u32 64, %s16
        %p161 = scmp.lt.s32.totalorder %s160, 16383
        %s162 = scalar_select %p161, %s160, 16383
        %s163 = smul.addr %s162, 8
        %s164 = scalar_lea.vmem %s2, %s163
        %s165 = smul.u32 64, %s16
        %v167 = vld [vmem:[%s138] sm:$0xf]
        %v168 = vld [vmem:[%s138 + $0x4] sm:$0xf]
        %v169 = vld [vmem:[%s138 + $0x8] sm:$0xf]
        %v170 = vld [vmem:[%s138 + $0xc] sm:$0xf]
        %v171 = vld [vmem:[%s138 + $0x10] sm:$0xf]
        %v172 = vld [vmem:[%s138 + $0x14] sm:$0xf]
        %v173 = vld [vmem:[%s138 + $0x18] sm:$0xf]
        %v174 = vld [vmem:[%s138 + $0x1c] sm:$0xf]
        %v175 = vld [vmem:[%s138 + $0x20] sm:$0xf]
        %v176 = vld [vmem:[%s138 + $0x24] sm:$0xf]
        %v177 = vld [vmem:[%s138 + $0x28] sm:$0xf]
        %v178 = vld [vmem:[%s138 + $0x2c] sm:$0xf]
        %v179 = vld [vmem:[%s138 + $0x30] sm:$0xf]
        %v180 = vld [vmem:[%s138 + $0x34] sm:$0xf]
        %v181 = vld [vmem:[%s138 + $0x38] sm:$0xf]
        %v182 = vld [vmem:[%s138 + $0x3c] sm:$0xf]
        %v183 = vld [vmem:[%s138 + $0x40] sm:$0xf]
        %v184 = vld [vmem:[%s138 + $0x44] sm:$0xf]
        %v185 = vld [vmem:[%s138 + $0x48] sm:$0xf]
        %v186 = vld [vmem:[%s138 + $0x4c] sm:$0xf]
        %v187 = vld [vmem:[%s138 + $0x50] sm:$0xf]
        %v188 = vld [vmem:[%s138 + $0x54] sm:$0xf]
        %v189 = vld [vmem:[%s138 + $0x58] sm:$0xf]
        %v190 = vld [vmem:[%s138 + $0x5c] sm:$0xf]
        %v191 = vld [vmem:[%s138 + $0x60] sm:$0xf]
        %v192 = vld [vmem:[%s138 + $0x64] sm:$0xf]
        %v193 = vld [vmem:[%s138 + $0x68] sm:$0xf]
        %v194 = vld [vmem:[%s138 + $0x6c] sm:$0xf]
        %v195 = vld [vmem:[%s138 + $0x70] sm:$0xf]
        %v196 = vld [vmem:[%s138 + $0x74] sm:$0xf]
        %v197 = vld [vmem:[%s138 + $0x78] sm:$0xf]
        %v198 = vld [vmem:[%s138 + $0x7c] sm:$0xf]
        %v199 = vld [vmem:[%s138 + $0x80] sm:$0xf]
        %v200 = vld [vmem:[%s138 + $0x84] sm:$0xf]
        %v201 = vld [vmem:[%s138 + $0x88] sm:$0xf]
        %v202 = vld [vmem:[%s138 + $0x8c] sm:$0xf]
        %v203 = vld [vmem:[%s138 + $0x90] sm:$0xf]
        %v204 = vld [vmem:[%s138 + $0x94] sm:$0xf]
        %v205 = vld [vmem:[%s138 + $0x98] sm:$0xf]
        %v206 = vld [vmem:[%s138 + $0x9c] sm:$0xf]
        %v207 = vld [vmem:[%s138 + $0xa0] sm:$0xf]
        %v208 = vld [vmem:[%s138 + $0xa4] sm:$0xf]
        %v209 = vld [vmem:[%s138 + $0xa8] sm:$0xf]
        %v210 = vld [vmem:[%s138 + $0xac] sm:$0xf]
        %v211 = vld [vmem:[%s138 + $0xb0] sm:$0xf]
        %v212 = vld [vmem:[%s138 + $0xb4] sm:$0xf]
        %v213 = vld [vmem:[%s138 + $0xb8] sm:$0xf]
        %v214 = vld [vmem:[%s138 + $0xbc] sm:$0xf]
        %v215 = vld [vmem:[%s138 + $0xc0] sm:$0xf]
        %v216 = vld [vmem:[%s138 + $0xc4] sm:$0xf]
        %v217 = vld [vmem:[%s138 + $0xc8] sm:$0xf]
        %v218 = vld [vmem:[%s138 + $0xcc] sm:$0xf]
        %v219 = vld [vmem:[%s138 + $0xd0] sm:$0xf]
        %v220 = vld [vmem:[%s138 + $0xd4] sm:$0xf]
        %v221 = vld [vmem:[%s138 + $0xd8] sm:$0xf]
        %v222 = vld [vmem:[%s138 + $0xdc] sm:$0xf]
        %v223 = vld [vmem:[%s138 + $0xe0] sm:$0xf]
        %v224 = vld [vmem:[%s138 + $0xe4] sm:$0xf]
        %v225 = vld [vmem:[%s138 + $0xe8] sm:$0xf]
        %v226 = vld [vmem:[%s138 + $0xec] sm:$0xf]
        %v227 = vld [vmem:[%s138 + $0xf0] sm:$0xf]
        %v228 = vld [vmem:[%s138 + $0xf4] sm:$0xf]
        %v229 = vld [vmem:[%s138 + $0xf8] sm:$0xf]
        %v230 = vld [vmem:[%s138 + $0xfc] sm:$0xf]
        %v231 = vld [vmem:[%s1] sm:$0xf]
        %v232 = vld [vmem:[%s1 + $0x4] sm:$0xf]
        %v233 = vld [vmem:[%s1 + $0x8] sm:$0xf]
        %v234 = vld [vmem:[%s1 + $0xc] sm:$0xf]
        %v235 = vld [vmem:[%s1 + $0x10] sm:$0xf]
        %v236 = vld [vmem:[%s1 + $0x14] sm:$0xf]
        %v237 = vld [vmem:[%s1 + $0x18] sm:$0xf]
        %v238 = vld [vmem:[%s1 + $0x1c] sm:$0xf]
        %v239 = vld [vmem:[%s1 + $0x20] sm:$0xf]
        %v240 = vld [vmem:[%s1 + $0x24] sm:$0xf]
        %v241 = vld [vmem:[%s1 + $0x28] sm:$0xf]
        %v242 = vld [vmem:[%s1 + $0x2c] sm:$0xf]
        %v243 = vld [vmem:[%s1 + $0x30] sm:$0xf]
        %v244 = vld [vmem:[%s1 + $0x34] sm:$0xf]
        %v245 = vld [vmem:[%s1 + $0x38] sm:$0xf]
        %v246 = vld [vmem:[%s1 + $0x3c] sm:$0xf]
        %v311 = vunpack.c.l.b16 %v167
        %v312 = vunpack.c.l.b16 %v168
        %v313 = vunpack.c.l.b16 %v169
        %v314 = vunpack.c.l.b16 %v170
        %v315 = vunpack.c.l.b16 %v171
        %v316 = vunpack.c.l.b16 %v172
        %v317 = vunpack.c.l.b16 %v173
        %v318 = vunpack.c.l.b16 %v174
        %v319 = vunpack.c.l.b16 %v175
        %v320 = vunpack.c.l.b16 %v176
        %v321 = vunpack.c.l.b16 %v177
        %v322 = vunpack.c.l.b16 %v178
        %v323 = vunpack.c.l.b16 %v179
        %v324 = vunpack.c.l.b16 %v180
        %v325 = vunpack.c.l.b16 %v181
        %v326 = vunpack.c.l.b16 %v182
        %v327 = vunpack.c.l.b16 %v183
        %v328 = vunpack.c.l.b16 %v184
        %v329 = vunpack.c.l.b16 %v185
        %v330 = vunpack.c.l.b16 %v186
        %v331 = vunpack.c.l.b16 %v187
        %v332 = vunpack.c.l.b16 %v188
        %v333 = vunpack.c.l.b16 %v189
        %v334 = vunpack.c.l.b16 %v190
        %v335 = vunpack.c.l.b16 %v191
        %v336 = vunpack.c.l.b16 %v192
        %v337 = vunpack.c.l.b16 %v193
        %v338 = vunpack.c.l.b16 %v194
        %v339 = vunpack.c.l.b16 %v195
        %v340 = vunpack.c.l.b16 %v196
        %v341 = vunpack.c.l.b16 %v197
        %v342 = vunpack.c.l.b16 %v198
        %v343 = vunpack.c.l.b16 %v199
        %v344 = vunpack.c.l.b16 %v200
        %v345 = vunpack.c.l.b16 %v201
        %v346 = vunpack.c.l.b16 %v202
        %v347 = vunpack.c.l.b16 %v203
        %v348 = vunpack.c.l.b16 %v204
        %v349 = vunpack.c.l.b16 %v205
        %v350 = vunpack.c.l.b16 %v206
        %v351 = vunpack.c.l.b16 %v207
        %v352 = vunpack.c.l.b16 %v208
        %v353 = vunpack.c.l.b16 %v209
        %v354 = vunpack.c.l.b16 %v210
        %v355 = vunpack.c.l.b16 %v211
        %v356 = vunpack.c.l.b16 %v212
        %v357 = vunpack.c.l.b16 %v213
        %v358 = vunpack.c.l.b16 %v214
        %v359 = vunpack.c.l.b16 %v215
        %v360 = vunpack.c.l.b16 %v216
        %v361 = vunpack.c.l.b16 %v217
        %v362 = vunpack.c.l.b16 %v218
        %v363 = vunpack.c.l.b16 %v219
        %v364 = vunpack.c.l.b16 %v220
        %v365 = vunpack.c.l.b16 %v221
        %v366 = vunpack.c.l.b16 %v222
        %v367 = vunpack.c.l.b16 %v223
        %v368 = vunpack.c.l.b16 %v224
        %v369 = vunpack.c.l.b16 %v225
        %v370 = vunpack.c.l.b16 %v226
        %v371 = vunpack.c.l.b16 %v227
        %v372 = vunpack.c.l.b16 %v228
        %v373 = vunpack.c.l.b16 %v229
        %v374 = vunpack.c.l.b16 %v230
        %v375 = vpack.c.b16 %v312, %v311
        %v376 = vpack.c.b16 %v314, %v313
        %v377 = vpack.c.b16 %v316, %v315
        %v378 = vpack.c.b16 %v318, %v317
        %v379 = vpack.c.b16 %v320, %v319
        %v380 = vpack.c.b16 %v322, %v321
        %v381 = vpack.c.b16 %v324, %v323
        %v382 = vpack.c.b16 %v326, %v325
        %v383 = vpack.c.b16 %v328, %v327
        %v384 = vpack.c.b16 %v330, %v329
        %v385 = vpack.c.b16 %v332, %v331
        %v386 = vpack.c.b16 %v334, %v333
        %v387 = vpack.c.b16 %v336, %v335
        %v388 = vpack.c.b16 %v338, %v337
        %v389 = vpack.c.b16 %v340, %v339
        %v390 = vpack.c.b16 %v342, %v341
        %v391 = vpack.c.b16 %v344, %v343
        %v392 = vpack.c.b16 %v346, %v345
        %v393 = vpack.c.b16 %v348, %v347
        %v394 = vpack.c.b16 %v350, %v349
        %v395 = vpack.c.b16 %v352, %v351
        %v396 = vpack.c.b16 %v354, %v353
        %v397 = vpack.c.b16 %v356, %v355
        %v398 = vpack.c.b16 %v358, %v357
        %v399 = vpack.c.b16 %v360, %v359
        %v400 = vpack.c.b16 %v362, %v361
        %v401 = vpack.c.b16 %v364, %v363
        %v402 = vpack.c.b16 %v366, %v365
        %v403 = vpack.c.b16 %v368, %v367
        %v404 = vpack.c.b16 %v370, %v369
        %v405 = vpack.c.b16 %v372, %v371
        %v406 = vpack.c.b16 %v374, %v373
        %v455 = vunpack.c.l.b16 %v231
        %v456 = vunpack.c.l.b16 %v232
        %v457 = vunpack.c.l.b16 %v233
        %v458 = vunpack.c.l.b16 %v234
        %v459 = vunpack.c.l.b16 %v235
        %v460 = vunpack.c.l.b16 %v236
        %v461 = vunpack.c.l.b16 %v237
        %v462 = vunpack.c.l.b16 %v238
        %v463 = vunpack.c.l.b16 %v239
        %v464 = vunpack.c.l.b16 %v240
        %v465 = vunpack.c.l.b16 %v241
        %v466 = vunpack.c.l.b16 %v242
        %v467 = vunpack.c.l.b16 %v243
        %v468 = vunpack.c.l.b16 %v244
        %v469 = vunpack.c.l.b16 %v245
        %v470 = vunpack.c.l.b16 %v246
        %v471 = vpack.c.b16 %v456, %v455
        %v472 = vpack.c.b16 %v458, %v457
        %v473 = vpack.c.b16 %v460, %v459
        %v474 = vpack.c.b16 %v462, %v461
        %v475 = vpack.c.b16 %v464, %v463
        %v476 = vpack.c.b16 %v466, %v465
        %v477 = vpack.c.b16 %v468, %v467
        %v478 = vpack.c.b16 %v470, %v469
        %487 = vmatprep.subr.bf16.mxu0 0
        %488 = vmatpush1.bf16.msra.mxu0 %v478
        %489 = vmatprep.subr.bf16.mxu0 0
        %490 = vmatpush1.bf16.msra.mxu0 %v477
        %491 = vmatprep.subr.bf16.mxu0 0
        %492 = vmatpush1.bf16.msra.mxu0 %v476
        %493 = vmatprep.subr.bf16.mxu0 0
        %494 = vmatpush1.bf16.msra.mxu0 %v475
        %495 = vmatprep.subr.bf16.mxu0 0
        %496 = vmatpush1.bf16.msra.mxu0 %v474
        %497 = vmatprep.subr.bf16.mxu0 0
        %498 = vmatpush1.bf16.msra.mxu0 %v473
        %499 = vmatprep.subr.bf16.mxu0 0
        %500 = vmatpush1.bf16.msra.mxu0 %v472
        %501 = vmatprep.subr.bf16.mxu0 0
        %502 = vmatpush1.bf16.msra.mxu0 %v471
        %503 = vmatprep.subr.bf16.mxu0 0
        %504 = vmatpush2.bf16.msra.mxu0 0
        %505 = vmatprep.subr.bf16.mxu0 0
        %506 = vmatpush2.bf16.msra.mxu0 0
        %507 = vmatprep.subr.bf16.mxu0 0
        %508 = vmatpush2.bf16.msra.mxu0 0
        %509 = vmatprep.subr.bf16.mxu0 0
        %510 = vmatpush2.bf16.msra.mxu0 0
        %511 = vmatprep.subr.bf16.mxu0 0
        %512 = vmatpush2.bf16.msra.mxu0 0
        %513 = vmatprep.subr.bf16.mxu0 0
        %514 = vmatpush2.bf16.msra.mxu0 0
        %515 = vmatprep.subr.bf16.mxu0 0
        %516 = vmatpush2.bf16.msra.mxu0 0
        %517 = vmatprep.subr.bf16.mxu0 0
        %518 = vmatpush2.bf16.msra.mxu0 0
        %519 = vmatprep.mubr.bf16.mxu0 0
        %520 = vmatmul.mubr.bf16.gmra.mxu0 %v375
        %v521 = vpop.f32.mrf.mxu0
        %v522 = vadd.f32 0.0, %v521
        %v523 = vpop.f32.mrf.mxu0
        %v524 = vpop.f32.mrf.mxu0
        %v525 = vadd.f32 0.0, %v524
        %v526 = vpop.f32.mrf.mxu0
        %527 = vmatprep.mubr.bf16.mxu0 0
        %528 = vmatmul.mubr.bf16.gmra.mxu0 %v376
        %v529 = vpop.f32.mrf.mxu0
        %v530 = vadd.f32 0.0, %v529
        %v531 = vpop.f32.mrf.mxu0
        %v532 = vpop.f32.mrf.mxu0
        %v533 = vadd.f32 0.0, %v532
        %v534 = vpop.f32.mrf.mxu0
        %535 = vmatprep.mubr.bf16.mxu0 0
        %536 = vmatmul.mubr.bf16.gmra.mxu0 %v377
        %v537 = vpop.f32.mrf.mxu0
        %v538 = vadd.f32 0.0, %v537
        %v539 = vpop.f32.mrf.mxu0
        %v540 = vpop.f32.mrf.mxu0
        %v541 = vadd.f32 0.0, %v540
        %v542 = vpop.f32.mrf.mxu0
        %543 = vmatprep.mubr.bf16.mxu0 0
        %544 = vmatmul.mubr.bf16.gmra.mxu0 %v378
        %v545 = vpop.f32.mrf.mxu0
        %v546 = vadd.f32 0.0, %v545
        %v547 = vpop.f32.mrf.mxu0
        %v548 = vpop.f32.mrf.mxu0
        %v549 = vadd.f32 0.0, %v548
        %v550 = vpop.f32.mrf.mxu0
        %551 = vmatprep.mubr.bf16.mxu0 0
        %552 = vmatmul.mubr.bf16.gmra.mxu0 %v379
        %v553 = vpop.f32.mrf.mxu0
        %v554 = vadd.f32 0.0, %v553
        %v555 = vpop.f32.mrf.mxu0
        %v556 = vpop.f32.mrf.mxu0
        %v557 = vadd.f32 0.0, %v556
        %v558 = vpop.f32.mrf.mxu0
        %559 = vmatprep.mubr.bf16.mxu0 0
        %560 = vmatmul.mubr.bf16.gmra.mxu0 %v380
        %v561 = vpop.f32.mrf.mxu0
        %v562 = vadd.f32 0.0, %v561
        %v563 = vpop.f32.mrf.mxu0
        %v564 = vpop.f32.mrf.mxu0
        %v565 = vadd.f32 0.0, %v564
        %v566 = vpop.f32.mrf.mxu0
        %567 = vmatprep.mubr.bf16.mxu0 0
        %568 = vmatmul.mubr.bf16.gmra.mxu0 %v381
        %v569 = vpop.f32.mrf.mxu0
        %v570 = vadd.f32 0.0, %v569
        %v571 = vpop.f32.mrf.mxu0
        %v572 = vpop.f32.mrf.mxu0
        %v573 = vadd.f32 0.0, %v572
        %v574 = vpop.f32.mrf.mxu0
        %575 = vmatprep.mubr.bf16.mxu0 0
        %576 = vmatmul.mubr.bf16.gmra.mxu0 %v382
        %v577 = vpop.f32.mrf.mxu0
        %v578 = vadd.f32 0.0, %v577
        %v579 = vpop.f32.mrf.mxu0
        %v580 = vpop.f32.mrf.mxu0
        %v581 = vadd.f32 0.0, %v580
        %v582 = vpop.f32.mrf.mxu0
        %583 = vmatprep.mubr.bf16.mxu0 0
        %584 = vmatmul.mubr.bf16.gmra.mxu0 %v383
        %v585 = vpop.f32.mrf.mxu0
        %v586 = vadd.f32 0.0, %v585
        %v587 = vpop.f32.mrf.mxu0
        %v588 = vpop.f32.mrf.mxu0
        %v589 = vadd.f32 0.0, %v588
        %v590 = vpop.f32.mrf.mxu0
        %591 = vmatprep.mubr.bf16.mxu0 0
        %592 = vmatmul.mubr.bf16.gmra.mxu0 %v384
        %v593 = vpop.f32.mrf.mxu0
        %v594 = vadd.f32 0.0, %v593
        %v595 = vpop.f32.mrf.mxu0
        %v596 = vpop.f32.mrf.mxu0
        %v597 = vadd.f32 0.0, %v596
        %v598 = vpop.f32.mrf.mxu0
        %599 = vmatprep.mubr.bf16.mxu0 0
        %600 = vmatmul.mubr.bf16.gmra.mxu0 %v385
        %v601 = vpop.f32.mrf.mxu0
        %v602 = vadd.f32 0.0, %v601
        %v603 = vpop.f32.mrf.mxu0
        %v604 = vpop.f32.mrf.mxu0
        %v605 = vadd.f32 0.0, %v604
        %v606 = vpop.f32.mrf.mxu0
        %607 = vmatprep.mubr.bf16.mxu0 0
        %608 = vmatmul.mubr.bf16.gmra.mxu0 %v386
        %v609 = vpop.f32.mrf.mxu0
        %v610 = vadd.f32 0.0, %v609
        %v611 = vpop.f32.mrf.mxu0
        %v612 = vpop.f32.mrf.mxu0
        %v613 = vadd.f32 0.0, %v612
        %v614 = vpop.f32.mrf.mxu0
        %615 = vmatprep.mubr.bf16.mxu0 0
        %616 = vmatmul.mubr.bf16.gmra.mxu0 %v387
        %v617 = vpop.f32.mrf.mxu0
        %v618 = vadd.f32 0.0, %v617
        %v619 = vpop.f32.mrf.mxu0
        %v620 = vpop.f32.mrf.mxu0
        %v621 = vadd.f32 0.0, %v620
        %v622 = vpop.f32.mrf.mxu0
        %623 = vmatprep.mubr.bf16.mxu0 0
        %624 = vmatmul.mubr.bf16.gmra.mxu0 %v388
        %v625 = vpop.f32.mrf.mxu0
        %v626 = vadd.f32 0.0, %v625
        %v627 = vpop.f32.mrf.mxu0
        %v628 = vpop.f32.mrf.mxu0
        %v629 = vadd.f32 0.0, %v628
        %v630 = vpop.f32.mrf.mxu0
        %631 = vmatprep.mubr.bf16.mxu0 0
        %632 = vmatmul.mubr.bf16.gmra.mxu0 %v389
        %v633 = vpop.f32.mrf.mxu0
        %v634 = vadd.f32 0.0, %v633
        %v635 = vpop.f32.mrf.mxu0
        %v636 = vpop.f32.mrf.mxu0
        %v637 = vadd.f32 0.0, %v636
        %v638 = vpop.f32.mrf.mxu0
        %639 = vmatprep.mubr.bf16.mxu0 0
        %640 = vmatmul.mubr.bf16.gmra.mxu0 %v390
        %v641 = vpop.f32.mrf.mxu0
        %v642 = vadd.f32 0.0, %v641
        %v643 = vpop.f32.mrf.mxu0
        %v644 = vpop.f32.mrf.mxu0
        %v645 = vadd.f32 0.0, %v644
        %v646 = vpop.f32.mrf.mxu0
        %647 = vmatprep.mubr.bf16.mxu0 0
        %648 = vmatmul.mubr.bf16.gmra.mxu0 %v391
        %v649 = vpop.f32.mrf.mxu0
        %v650 = vadd.f32 0.0, %v649
        %v651 = vpop.f32.mrf.mxu0
        %v652 = vpop.f32.mrf.mxu0
        %v653 = vadd.f32 0.0, %v652
        %v654 = vpop.f32.mrf.mxu0
        %655 = vmatprep.mubr.bf16.mxu0 0
        %656 = vmatmul.mubr.bf16.gmra.mxu0 %v392
        %v657 = vpop.f32.mrf.mxu0
        %v658 = vadd.f32 0.0, %v657
        %v659 = vpop.f32.mrf.mxu0
        %v660 = vpop.f32.mrf.mxu0
        %v661 = vadd.f32 0.0, %v660
        %v662 = vpop.f32.mrf.mxu0
        %663 = vmatprep.mubr.bf16.mxu0 0
        %664 = vmatmul.mubr.bf16.gmra.mxu0 %v393
        %v665 = vpop.f32.mrf.mxu0
        %v666 = vadd.f32 0.0, %v665
        %v667 = vpop.f32.mrf.mxu0
        %v668 = vpop.f32.mrf.mxu0
        %v669 = vadd.f32 0.0, %v668
        %v670 = vpop.f32.mrf.mxu0
        %671 = vmatprep.mubr.bf16.mxu0 0
        %672 = vmatmul.mubr.bf16.gmra.mxu0 %v394
        %v673 = vpop.f32.mrf.mxu0
        %v674 = vadd.f32 0.0, %v673
        %v675 = vpop.f32.mrf.mxu0
        %v676 = vpop.f32.mrf.mxu0
        %v677 = vadd.f32 0.0, %v676
        %v678 = vpop.f32.mrf.mxu0
        %679 = vmatprep.mubr.bf16.mxu0 0
        %680 = vmatmul.mubr.bf16.gmra.mxu0 %v395
        %v681 = vpop.f32.mrf.mxu0
        %v682 = vadd.f32 0.0, %v681
        %v683 = vpop.f32.mrf.mxu0
        %v684 = vpop.f32.mrf.mxu0
        %v685 = vadd.f32 0.0, %v684
        %v686 = vpop.f32.mrf.mxu0
        %687 = vmatprep.mubr.bf16.mxu0 0
        %688 = vmatmul.mubr.bf16.gmra.mxu0 %v396
        %v689 = vpop.f32.mrf.mxu0
        %v690 = vadd.f32 0.0, %v689
        %v691 = vpop.f32.mrf.mxu0
        %v692 = vpop.f32.mrf.mxu0
        %v693 = vadd.f32 0.0, %v692
        %v694 = vpop.f32.mrf.mxu0
        %695 = vmatprep.mubr.bf16.mxu0 0
        %696 = vmatmul.mubr.bf16.gmra.mxu0 %v397
        %v697 = vpop.f32.mrf.mxu0
        %v698 = vadd.f32 0.0, %v697
        %v699 = vpop.f32.mrf.mxu0
        %v700 = vpop.f32.mrf.mxu0
        %v701 = vadd.f32 0.0, %v700
        %v702 = vpop.f32.mrf.mxu0
        %703 = vmatprep.mubr.bf16.mxu0 0
        %704 = vmatmul.mubr.bf16.gmra.mxu0 %v398
        %v705 = vpop.f32.mrf.mxu0
        %v706 = vadd.f32 0.0, %v705
        %v707 = vpop.f32.mrf.mxu0
        %v708 = vpop.f32.mrf.mxu0
        %v709 = vadd.f32 0.0, %v708
        %v710 = vpop.f32.mrf.mxu0
        %711 = vmatprep.mubr.bf16.mxu0 0
        %712 = vmatmul.mubr.bf16.gmra.mxu0 %v399
        %v713 = vpop.f32.mrf.mxu0
        %v714 = vadd.f32 0.0, %v713
        %v715 = vpop.f32.mrf.mxu0
        %v716 = vpop.f32.mrf.mxu0
        %v717 = vadd.f32 0.0, %v716
        %v718 = vpop.f32.mrf.mxu0
        %719 = vmatprep.mubr.bf16.mxu0 0
        %720 = vmatmul.mubr.bf16.gmra.mxu0 %v400
        %v721 = vpop.f32.mrf.mxu0
        %v722 = vadd.f32 0.0, %v721
        %v723 = vpop.f32.mrf.mxu0
        %v724 = vpop.f32.mrf.mxu0
        %v725 = vadd.f32 0.0, %v724
        %v726 = vpop.f32.mrf.mxu0
        %727 = vmatprep.mubr.bf16.mxu0 0
        %728 = vmatmul.mubr.bf16.gmra.mxu0 %v401
        %v729 = vpop.f32.mrf.mxu0
        %v730 = vadd.f32 0.0, %v729
        %v731 = vpop.f32.mrf.mxu0
        %v732 = vpop.f32.mrf.mxu0
        %v733 = vadd.f32 0.0, %v732
        %v734 = vpop.f32.mrf.mxu0
        %735 = vmatprep.mubr.bf16.mxu0 0
        %736 = vmatmul.mubr.bf16.gmra.mxu0 %v402
        %v737 = vpop.f32.mrf.mxu0
        %v738 = vadd.f32 0.0, %v737
        %v739 = vpop.f32.mrf.mxu0
        %v740 = vpop.f32.mrf.mxu0
        %v741 = vadd.f32 0.0, %v740
        %v742 = vpop.f32.mrf.mxu0
        %743 = vmatprep.mubr.bf16.mxu0 0
        %744 = vmatmul.mubr.bf16.gmra.mxu0 %v403
        %v745 = vpop.f32.mrf.mxu0
        %v746 = vadd.f32 0.0, %v745
        %v747 = vpop.f32.mrf.mxu0
        %v748 = vpop.f32.mrf.mxu0
        %v749 = vadd.f32 0.0, %v748
        %v750 = vpop.f32.mrf.mxu0
        %751 = vmatprep.mubr.bf16.mxu0 0
        %752 = vmatmul.mubr.bf16.gmra.mxu0 %v404
        %v753 = vpop.f32.mrf.mxu0
        %v754 = vadd.f32 0.0, %v753
        %v755 = vpop.f32.mrf.mxu0
        %v756 = vpop.f32.mrf.mxu0
        %v757 = vadd.f32 0.0, %v756
        %v758 = vpop.f32.mrf.mxu0
        %759 = vmatprep.mubr.bf16.mxu0 0
        %760 = vmatmul.mubr.bf16.gmra.mxu0 %v405
        %v761 = vpop.f32.mrf.mxu0
        %v762 = vadd.f32 0.0, %v761
        %v763 = vpop.f32.mrf.mxu0
        %v764 = vpop.f32.mrf.mxu0
        %v765 = vadd.f32 0.0, %v764
        %v766 = vpop.f32.mrf.mxu0
        %767 = vmatprep.mubr.bf16.mxu0 0
        %768 = vmatmul.mubr.bf16.gmra.mxu0 %v406
        %v769 = vpop.f32.mrf.mxu0
        %v770 = vadd.f32 0.0, %v769
        %v771 = vpop.f32.mrf.mxu0
        %v772 = vpop.f32.mrf.mxu0
        %v773 = vadd.f32 0.0, %v772
        %v774 = vpop.f32.mrf.mxu0
        %775 = vdwg.mxu0
        %776 = vst [vmem:[%s164] sm:$0xff] %v522
        %777 = vst [vmem:[%s164 + $0x8] sm:$0xff] %v525
        %778 = vst [vmem:[%s164 + $0x10] sm:$0xff] %v530
        %779 = vst [vmem:[%s164 + $0x18] sm:$0xff] %v533
        %780 = vst [vmem:[%s164 + $0x20] sm:$0xff] %v538
        %781 = vst [vmem:[%s164 + $0x28] sm:$0xff] %v541
        %782 = vst [vmem:[%s164 + $0x30] sm:$0xff] %v546
        %783 = vst [vmem:[%s164 + $0x38] sm:$0xff] %v549
        %784 = vst [vmem:[%s164 + $0x40] sm:$0xff] %v554
        %785 = vst [vmem:[%s164 + $0x48] sm:$0xff] %v557
        %786 = vst [vmem:[%s164 + $0x50] sm:$0xff] %v562
        %787 = vst [vmem:[%s164 + $0x58] sm:$0xff] %v565
        %788 = vst [vmem:[%s164 + $0x60] sm:$0xff] %v570
        %789 = vst [vmem:[%s164 + $0x68] sm:$0xff] %v573
        %790 = vst [vmem:[%s164 + $0x70] sm:$0xff] %v578
        %791 = vst [vmem:[%s164 + $0x78] sm:$0xff] %v581
        %792 = vst [vmem:[%s164 + $0x80] sm:$0xff] %v586
        %793 = vst [vmem:[%s164 + $0x88] sm:$0xff] %v589
        %794 = vst [vmem:[%s164 + $0x90] sm:$0xff] %v594
        %795 = vst [vmem:[%s164 + $0x98] sm:$0xff] %v597
        %796 = vst [vmem:[%s164 + $0xa0] sm:$0xff] %v602
        %797 = vst [vmem:[%s164 + $0xa8] sm:$0xff] %v605
        %798 = vst [vmem:[%s164 + $0xb0] sm:$0xff] %v610
        %799 = vst [vmem:[%s164 + $0xb8] sm:$0xff] %v613
        %800 = vst [vmem:[%s164 + $0xc0] sm:$0xff] %v618
        %801 = vst [vmem:[%s164 + $0xc8] sm:$0xff] %v621
        %802 = vst [vmem:[%s164 + $0xd0] sm:$0xff] %v626
        %803 = vst [vmem:[%s164 + $0xd8] sm:$0xff] %v629
        %804 = vst [vmem:[%s164 + $0xe0] sm:$0xff] %v634
        %805 = vst [vmem:[%s164 + $0xe8] sm:$0xff] %v637
        %806 = vst [vmem:[%s164 + $0xf0] sm:$0xff] %v642
        %807 = vst [vmem:[%s164 + $0xf8] sm:$0xff] %v645
        %808 = vst [vmem:[%s164 + $0x100] sm:$0xff] %v650
        %809 = vst [vmem:[%s164 + $0x108] sm:$0xff] %v653
        %810 = vst [vmem:[%s164 + $0x110] sm:$0xff] %v658
        %811 = vst [vmem:[%s164 + $0x118] sm:$0xff] %v661
        %812 = vst [vmem:[%s164 + $0x120] sm:$0xff] %v666
        %813 = vst [vmem:[%s164 + $0x128] sm:$0xff] %v669
        %814 = vst [vmem:[%s164 + $0x130] sm:$0xff] %v674
        %815 = vst [vmem:[%s164 + $0x138] sm:$0xff] %v677
        %816 = vst [vmem:[%s164 + $0x140] sm:$0xff] %v682
        %817 = vst [vmem:[%s164 + $0x148] sm:$0xff] %v685
        %818 = vst [vmem:[%s164 + $0x150] sm:$0xff] %v690
        %819 = vst [vmem:[%s164 + $0x158] sm:$0xff] %v693
        %820 = vst [vmem:[%s164 + $0x160] sm:$0xff] %v698
        %821 = vst [vmem:[%s164 + $0x168] sm:$0xff] %v701
        %822 = vst [vmem:[%s164 + $0x170] sm:$0xff] %v706
        %823 = vst [vmem:[%s164 + $0x178] sm:$0xff] %v709
        %824 = vst [vmem:[%s164 + $0x180] sm:$0xff] %v714
        %825 = vst [vmem:[%s164 + $0x188] sm:$0xff] %v717
        %826 = vst [vmem:[%s164 + $0x190] sm:$0xff] %v722
        %827 = vst [vmem:[%s164 + $0x198] sm:$0xff] %v725
        %828 = vst [vmem:[%s164 + $0x1a0] sm:$0xff] %v730
        %829 = vst [vmem:[%s164 + $0x1a8] sm:$0xff] %v733
        %830 = vst [vmem:[%s164 + $0x1b0] sm:$0xff] %v738
        %831 = vst [vmem:[%s164 + $0x1b8] sm:$0xff] %v741
        %832 = vst [vmem:[%s164 + $0x1c0] sm:$0xff] %v746
        %833 = vst [vmem:[%s164 + $0x1c8] sm:$0xff] %v749
        %834 = vst [vmem:[%s164 + $0x1d0] sm:$0xff] %v754
        %835 = vst [vmem:[%s164 + $0x1d8] sm:$0xff] %v757
        %836 = vst [vmem:[%s164 + $0x1e0] sm:$0xff] %v762
        %837 = vst [vmem:[%s164 + $0x1e8] sm:$0xff] %v765
        %838 = vst [vmem:[%s164 + $0x1f0] sm:$0xff] %v770
        %839 = vst [vmem:[%s164 + $0x1f8] sm:$0xff] %v773
        %s840 = smul.u32 64, %s16
        %p841 = scmp.lt.s32.totalorder %s840, 16383
        %s842 = scalar_select %p841, %s840, 16383
        %s843 = smul.addr %s842, 8
        %s844 = scalar_lea.vmem %s2, %s843
        // Predicated region
        $region33: #{discriminator_forward.10} parent=27 // pred_check
          %p845 = pneg %p81
        $region34: #{discriminator_forward.10} parent=27 // pred_check_branch
          %847 = sbr.rel (%p845) target = $region36
        $region35: #{discriminator_forward.10} parent=27 // pred_region
          %s848 = smul.u32 64, %s16
        $region36: #{discriminator_forward.10} parent=27 // pred_fallthru
          _
      $region28: #{discriminator_forward.10} parent=5 // pred_fallthru
        _
      %p849 = scmp.le.s32.totalorder 2, %s11
      // Predicated region
      $region37: #{discriminator_forward.10} parent=5 // pred_check
        %p850 = pneg %p849
      $region38: #{discriminator_forward.10} parent=5 // pred_check_branch
        %852 = sbr.rel (%p850) target = $region40
      $region39: #{discriminator_forward.10} parent=5 // pred_region
        %s853 = ssub.s32 %s11, 2
        // Predicated region
        $region41: #{discriminator_forward.10} parent=39 // pred_check
          %p854 = pneg %p87
        $region42: #{discriminator_forward.10} parent=39 // pred_check_branch
          %856 = sbr.rel (%p854) target = $region44
        $region43: #{discriminator_forward.10} parent=39 // pred_region
          %s857 = smul.u32 64, %s17
          %p858 = scmp.lt.s32.totalorder %s857, 16383
          %s859 = scalar_select %p858, %s857, 16383
          %s860 = smul.addr %s859, 8
          %s861 = scalar_lea.vmem %s2, %s860
        $region44: #{discriminator_forward.10} parent=39 // pred_fallthru
          _
      $region40: #{discriminator_forward.10} parent=5 // pred_fallthru
        _
    $region6: #{discriminator_forward.10} parent=1 // loop_footer
      %s15 = sadd.s32 1, %s11
    $region7: #{discriminator_forward.10} parent=1 // loop_footer_branch
      %10 = sbr.rel target = $region3
    $region8: #{discriminator_forward.10} parent=1 // loop_exit
      _
    %862 = vsyncpa [#allocation3], 1
    %s863 = scalar_lea.sflag [#allocation3], 1
    %864 = vsyncpa %s863, 1

// kernel: discriminator_forward.11
$region0: #{discriminator_forward.11}
  #allocation0 [shape = 'u32[]', space=smem, size = 0x4, offset = 0x4, fixed_abs, tag = 'smem constant byte address 0x4 - core index']
  #allocation1 [shape = 'u32[144,128]{1,0:T(1,128)}', space=vmem, size = 0x12000, scoped, tag = 'internal scratch']
  %s0 = inlined_call_operand.vmem [shape: bf16[32768,128], index: 0, kind: input, shape index: {}]
  %s1 = inlined_call_operand.vmem [shape: bf16[128,128], index: 1, kind: input, shape index: {}]
  %s2 = inlined_call_operand.vmem [shape: f32[32768,128], index: 2, kind: output, shape index: {0}]
  %s3 = inlined_call_operand.vmem [shape: f32[64,8,128], index: 3, kind: output, shape index: {1}]
  %4 = xla_tuple %s2, %s3
  %s5 = sld [smem:[#allocation0]]
  $region49: #{discriminator_forward.11} parent=0
    _
  %s7 = ssub.s32 1, %s5
  %s8 = scalar_select 0, %s7, %s5
  loop: start=0, step=1, limit=66
  $region2: #{discriminator_forward.11} parent=0 // loop_pre_header
    _
  $region3: #{discriminator_forward.11} parent=0 // loop_header
    %s10 = sphi 0, %s14
    %p11 = scmp.ge.s32.totalorder %s10, 66
    %s20 = sphi 0, %s22
    %s23 = sphi 0, %s20
    %s24 = sphi 0, %s23
    %s40 = sphi 0, %s24
    %s44 = sphi 0, %s44
    %s46 = sphi 0, %s44
    %s47 = sphi 0, %s46
    %s61 = sphi 0, %s47
    %s67 = sphi 0, %s69
    %s70 = sphi 0, %s67
    %s71 = sphi 0, %s70
    %s87 = sphi 0, %s71
    %s93 = sphi 0, %s95
    %s96 = sphi 0, %s93
    %s97 = sphi 0, %s96
    %s113 = sphi 0, %s97
  $region4: #{discriminator_forward.11} parent=0 // loop_header_branch
    %13 = sbr.rel (%p11) target = $region8
  $region5: #{discriminator_forward.11} parent=0 // loop_body
    %s15 = ssub.s32 %s10, 1
    %s16 = ssub.s32 %s10, 2
    %s17 = sadd.s32 %s10, 1
    %s18 = ssub.s32 %s10, %s17
    %p19 = scmp.eq.s32.totalorder %s18, 0
    %s21 = sadd.s32 %s20, 1
    %s22 = scalar_select %p19, %s20, %s21
    %p25 = pneg %p19
    %p26 = scmp.eq.s32.totalorder %s10, 63
    %p27 = por %p25, %p26
    %p28 = scmp.ne.s32.totalorder %s20, %s23
    %p29 = scmp.eq.s32.totalorder %s10, 0
    %p30 = por %p28, %p29
    %p31 = scmp.ne.s32.totalorder %s20, %s23
    %p32 = scmp.eq.s32.totalorder %s15, 63
    %p33 = por %p31, %p32
    %p34 = scmp.ne.s32.totalorder %s23, %s24
    %p35 = scmp.eq.s32.totalorder %s15, 0
    %p36 = por %p34, %p35
    %p37 = scmp.ne.s32.totalorder %s23, %s24
    %p38 = scmp.eq.s32.totalorder %s16, 63
    %p39 = por %p37, %p38
    %p41 = scmp.ne.s32.totalorder %s24, %s40
    %p42 = scmp.eq.s32.totalorder %s16, 0
    %p43 = por %p41, %p42
    %s45 = sadd.s32 %s44, 1
    %p48 = scmp.eq.s32.totalorder %s10, 63
    %p49 = scmp.ne.s32.totalorder %s44, %s46
    %p50 = scmp.eq.s32.totalorder %s10, 0
    %p51 = por %p49, %p50
    %p52 = scmp.ne.s32.totalorder %s44, %s46
    %p53 = scmp.eq.s32.totalorder %s15, 63
    %p54 = por %p52, %p53
    %p55 = scmp.ne.s32.totalorder %s46, %s47
    %p56 = scmp.eq.s32.totalorder %s15, 0
    %p57 = por %p55, %p56
    %p58 = scmp.ne.s32.totalorder %s46, %s47
    %p59 = scmp.eq.s32.totalorder %s16, 63
    %p60 = por %p58, %p59
    %p62 = scmp.ne.s32.totalorder %s47, %s61
    %p63 = scmp.eq.s32.totalorder %s16, 0
    %p64 = por %p62, %p63
    %s65 = ssub.s32 %s10, %s17
    %p66 = scmp.eq.s32.totalorder %s65, 0
    %s68 = sadd.s32 %s67, 1
    %s69 = scalar_select %p66, %s67, %s68
    %p72 = pneg %p66
    %p73 = scmp.eq.s32.totalorder %s10, 63
    %p74 = por %p72, %p73
    %p75 = scmp.ne.s32.totalorder %s67, %s70
    %p76 = scmp.eq.s32.totalorder %s10, 0
    %p77 = por %p75, %p76
    %p78 = scmp.ne.s32.totalorder %s67, %s70
    %p79 = scmp.eq.s32.totalorder %s15, 63
    %p80 = por %p78, %p79
    %p81 = scmp.ne.s32.totalorder %s70, %s71
    %p82 = scmp.eq.s32.totalorder %s15, 0
    %p83 = por %p81, %p82
    %p84 = scmp.ne.s32.totalorder %s70, %s71
    %p85 = scmp.eq.s32.totalorder %s16, 63
    %p86 = por %p84, %p85
    %p88 = scmp.ne.s32.totalorder %s71, %s87
    %p89 = scmp.eq.s32.totalorder %s16, 0
    %p90 = por %p88, %p89
    %s91 = ssub.s32 %s10, %s17
    %p92 = scmp.eq.s32.totalorder %s91, 0
    %s94 = sadd.s32 %s93, 1
    %s95 = scalar_select %p92, %s93, %s94
    %p98 = pneg %p92
    %p99 = scmp.eq.s32.totalorder %s10, 63
    %p100 = por %p98, %p99
    %p101 = scmp.ne.s32.totalorder %s93, %s96
    %p102 = scmp.eq.s32.totalorder %s10, 0
    %p103 = por %p101, %p102
    %p104 = scmp.ne.s32.totalorder %s93, %s96
    %p105 = scmp.eq.s32.totalorder %s15, 63
    %p106 = por %p104, %p105
    %p107 = scmp.ne.s32.totalorder %s96, %s97
    %p108 = scmp.eq.s32.totalorder %s15, 0
    %p109 = por %p107, %p108
    %p110 = scmp.ne.s32.totalorder %s96, %s97
    %p111 = scmp.eq.s32.totalorder %s16, 63
    %p112 = por %p110, %p111
    %p114 = scmp.ne.s32.totalorder %s97, %s113
    %p115 = scmp.eq.s32.totalorder %s16, 0
    %p116 = por %p114, %p115
    %p117 = scmp.le.s32.totalorder 1, %s10
    %p118 = scmp.lt.s32.totalorder %s10, 65
    %p119 = pnand %p117, %p118
    %p120 = pneg %p119
    // Predicated region
    $region9: #{discriminator_forward.11} parent=5 // pred_check
      _
    $region10: #{discriminator_forward.11} parent=5 // pred_check_branch
      %122 = sbr.rel (%p119) target = $region12
    $region11: #{discriminator_forward.11} parent=5 // pred_region
      %s123 = ssub.s32 %s10, 1
      // Predicated region
      $region13: #{discriminator_forward.11} parent=11 // pred_check
        %p124 = pneg %p57
      $region14: #{discriminator_forward.11} parent=11 // pred_check_branch
        %126 = sbr.rel (%p124) target = $region16
      $region15: #{discriminator_forward.11} parent=11 // pred_region
        _
      $region16: #{discriminator_forward.11} parent=11 // pred_fallthru
        _
    $region12: #{discriminator_forward.11} parent=5 // pred_fallthru
      _
    %p127 = scmp.lt.s32.totalorder %s10, 64
    // Predicated region
    $region17: #{discriminator_forward.11} parent=5 // pred_check
      %p128 = pneg %p127
    $region18: #{discriminator_forward.11} parent=5 // pred_check_branch
      %130 = sbr.rel (%p128) target = $region20
    $region19: #{discriminator_forward.11} parent=5 // pred_region
      // Predicated region
      $region21: #{discriminator_forward.11} parent=19 // pred_check
        %p131 = pneg %p30
      $region22: #{discriminator_forward.11} parent=19 // pred_check_branch
        %133 = sbr.rel (%p131) target = $region24
      $region23: #{discriminator_forward.11} parent=19 // pred_region
        %s134 = smul.u32 64, %s10
        %p135 = scmp.lt.s32.totalorder %s134, 4095
        %s136 = scalar_select %p135, %s134, 4095
        %s137 = smul.addr %s136, 4
        %s138 = scalar_lea.vmem %s0, %s137
        %s139 = smul.u32 64, %s10
      $region24: #{discriminator_forward.11} parent=19 // pred_fallthru
        _
    $region20: #{discriminator_forward.11} parent=5 // pred_fallthru
      _
    %p140 = scmp.le.s32.totalorder 1, %s10
    %p141 = scmp.lt.s32.totalorder %s10, 65
    %p142 = pnand %p140, %p141
    %p143 = pneg %p142
    // Predicated region
    $region25: #{discriminator_forward.11} parent=5 // pred_check
      _
    $region26: #{discriminator_forward.11} parent=5 // pred_check_branch
      %145 = sbr.rel (%p142) target = $region28
    $region27: #{discriminator_forward.11} parent=5 // pred_region
      %s146 = ssub.s32 %s10, 1
      %s147 = smul.u32 64, %s15
      %p148 = scmp.lt.s32.totalorder %s147, 4095
      %s149 = scalar_select %p148, %s147, 4095
      %s150 = smul.addr %s149, 4
      %s151 = scalar_lea.vmem %s0, %s150
      %p152 = pneg %p36
      %p153 = pneg %p33
      %p154 = pneg %p57
      %p155 = pneg %p54
      %p156 = pneg %p83
      %p157 = pneg %p80
      %s158 = smul.u32 64, %s15
      %p159 = scmp.lt.s32.totalorder %s158, 4095
      %s160 = scalar_select %p159, %s158, 4095
      %s161 = smul.addr %s160, 8
      %s162 = scalar_lea.vmem %s2, %s161
      %p163 = pneg %p109
      %p164 = pneg %p106
      %p165 = scmp.lt.s32.totalorder %s15, 63
      %s166 = scalar_select %p165, %s15, 63
      %s167 = smul.addr %s166, 8
      %s168 = scalar_lea.vmem %s3, %s167
      %s169 = smul.u32 64, %s15
      %p170 = scmp.lt.s32.totalorder %s169, 4095
      %s171 = scalar_select %p170, %s169, 4095
      %s172 = smul.addr %s171, 4
      %s173 = scalar_lea.vmem %s0, %s172
      %s174 = smul.u32 64, %s15
      %s175 = smul.u32 64, %s15
      %p176 = scmp.lt.s32.totalorder %s175, 4095
      %s177 = scalar_select %p176, %s175, 4095
      %s178 = smul.addr %s177, 8
      %s179 = scalar_lea.vmem %s2, %s178
      %s180 = smul.u32 64, %s15
      %p181 = scmp.lt.s32.totalorder %s15, 63
      %s182 = scalar_select %p181, %s15, 63
      %s183 = smul.addr %s182, 8
      %s184 = scalar_lea.vmem %s3, %s183
      %v186 = vld [vmem:[%s173] sm:$0xf]
      %v187 = vld [vmem:[%s173 + $0x4] sm:$0xf]
      %v188 = vld [vmem:[%s173 + $0x8] sm:$0xf]
      %v189 = vld [vmem:[%s173 + $0xc] sm:$0xf]
      %v190 = vld [vmem:[%s173 + $0x10] sm:$0xf]
      %v191 = vld [vmem:[%s173 + $0x14] sm:$0xf]
      %v192 = vld [vmem:[%s173 + $0x18] sm:$0xf]
      %v193 = vld [vmem:[%s173 + $0x1c] sm:$0xf]
      %v194 = vld [vmem:[%s173 + $0x20] sm:$0xf]
      %v195 = vld [vmem:[%s173 + $0x24] sm:$0xf]
      %v196 = vld [vmem:[%s173 + $0x28] sm:$0xf]
      %v197 = vld [vmem:[%s173 + $0x2c] sm:$0xf]
      %v198 = vld [vmem:[%s173 + $0x30] sm:$0xf]
      %v199 = vld [vmem:[%s173 + $0x34] sm:$0xf]
      %v200 = vld [vmem:[%s173 + $0x38] sm:$0xf]
      %v201 = vld [vmem:[%s173 + $0x3c] sm:$0xf]
      %v202 = vld [vmem:[%s173 + $0x40] sm:$0xf]
      %v203 = vld [vmem:[%s173 + $0x44] sm:$0xf]
      %v204 = vld [vmem:[%s173 + $0x48] sm:$0xf]
      %v205 = vld [vmem:[%s173 + $0x4c] sm:$0xf]
      %v206 = vld [vmem:[%s173 + $0x50] sm:$0xf]
      %v207 = vld [vmem:[%s173 + $0x54] sm:$0xf]
      %v208 = vld [vmem:[%s173 + $0x58] sm:$0xf]
      %v209 = vld [vmem:[%s173 + $0x5c] sm:$0xf]
      %v210 = vld [vmem:[%s173 + $0x60] sm:$0xf]
      %v211 = vld [vmem:[%s173 + $0x64] sm:$0xf]
      %v212 = vld [vmem:[%s173 + $0x68] sm:$0xf]
      %v213 = vld [vmem:[%s173 + $0x6c] sm:$0xf]
      %v214 = vld [vmem:[%s173 + $0x70] sm:$0xf]
      %v215 = vld [vmem:[%s173 + $0x74] sm:$0xf]
      %v216 = vld [vmem:[%s173 + $0x78] sm:$0xf]
      %v217 = vld [vmem:[%s173 + $0x7c] sm:$0xf]
      %v218 = vld [vmem:[%s173 + $0x80] sm:$0xf]
      %v219 = vld [vmem:[%s173 + $0x84] sm:$0xf]
      %v220 = vld [vmem:[%s173 + $0x88] sm:$0xf]
      %v221 = vld [vmem:[%s173 + $0x8c] sm:$0xf]
      %v222 = vld [vmem:[%s173 + $0x90] sm:$0xf]
      %v223 = vld [vmem:[%s173 + $0x94] sm:$0xf]
      %v224 = vld [vmem:[%s173 + $0x98] sm:$0xf]
      %v225 = vld [vmem:[%s173 + $0x9c] sm:$0xf]
      %v226 = vld [vmem:[%s173 + $0xa0] sm:$0xf]
      %v227 = vld [vmem:[%s173 + $0xa4] sm:$0xf]
      %v228 = vld [vmem:[%s173 + $0xa8] sm:$0xf]
      %v229 = vld [vmem:[%s173 + $0xac] sm:$0xf]
      %v230 = vld [vmem:[%s173 + $0xb0] sm:$0xf]
      %v231 = vld [vmem:[%s173 + $0xb4] sm:$0xf]
      %v232 = vld [vmem:[%s173 + $0xb8] sm:$0xf]
      %v233 = vld [vmem:[%s173 + $0xbc] sm:$0xf]
      %v234 = vld [vmem:[%s173 + $0xc0] sm:$0xf]
      %v235 = vld [vmem:[%s173 + $0xc4] sm:$0xf]
      %v236 = vld [vmem:[%s173 + $0xc8] sm:$0xf]
      %v237 = vld [vmem:[%s173 + $0xcc] sm:$0xf]
      %v238 = vld [vmem:[%s173 + $0xd0] sm:$0xf]
      %v239 = vld [vmem:[%s173 + $0xd4] sm:$0xf]
      %v240 = vld [vmem:[%s173 + $0xd8] sm:$0xf]
      %v241 = vld [vmem:[%s173 + $0xdc] sm:$0xf]
      %v242 = vld [vmem:[%s173 + $0xe0] sm:$0xf]
      %v243 = vld [vmem:[%s173 + $0xe4] sm:$0xf]
      %v244 = vld [vmem:[%s173 + $0xe8] sm:$0xf]
      %v245 = vld [vmem:[%s173 + $0xec] sm:$0xf]
      %v246 = vld [vmem:[%s173 + $0xf0] sm:$0xf]
      %v247 = vld [vmem:[%s173 + $0xf4] sm:$0xf]
      %v248 = vld [vmem:[%s173 + $0xf8] sm:$0xf]
      %v249 = vld [vmem:[%s173 + $0xfc] sm:$0xf]
      %v250 = vld [vmem:[%s1] sm:$0xf]
      %v251 = vld [vmem:[%s1 + $0x4] sm:$0xf]
      %v252 = vld [vmem:[%s1 + $0x8] sm:$0xf]
      %v253 = vld [vmem:[%s1 + $0xc] sm:$0xf]
      %v254 = vld [vmem:[%s1 + $0x10] sm:$0xf]
      %v255 = vld [vmem:[%s1 + $0x14] sm:$0xf]
      %v256 = vld [vmem:[%s1 + $0x18] sm:$0xf]
      %v257 = vld [vmem:[%s1 + $0x1c] sm:$0xf]
      %v258 = vld [vmem:[%s1 + $0x20] sm:$0xf]
      %v259 = vld [vmem:[%s1 + $0x24] sm:$0xf]
      %v260 = vld [vmem:[%s1 + $0x28] sm:$0xf]
      %v261 = vld [vmem:[%s1 + $0x2c] sm:$0xf]
      %v262 = vld [vmem:[%s1 + $0x30] sm:$0xf]
      %v263 = vld [vmem:[%s1 + $0x34] sm:$0xf]
      %v264 = vld [vmem:[%s1 + $0x38] sm:$0xf]
      %v265 = vld [vmem:[%s1 + $0x3c] sm:$0xf]
      %v330 = vunpack.c.l.b16 %v186
      %v331 = vunpack.c.l.b16 %v187
      %v332 = vunpack.c.l.b16 %v188
      %v333 = vunpack.c.l.b16 %v189
      %v334 = vunpack.c.l.b16 %v190
      %v335 = vunpack.c.l.b16 %v191
      %v336 = vunpack.c.l.b16 %v192
      %v337 = vunpack.c.l.b16 %v193
      %v338 = vunpack.c.l.b16 %v194
      %v339 = vunpack.c.l.b16 %v195
      %v340 = vunpack.c.l.b16 %v196
      %v341 = vunpack.c.l.b16 %v197
      %v342 = vunpack.c.l.b16 %v198
      %v343 = vunpack.c.l.b16 %v199
      %v344 = vunpack.c.l.b16 %v200
      %v345 = vunpack.c.l.b16 %v201
      %v346 = vunpack.c.l.b16 %v202
      %v347 = vunpack.c.l.b16 %v203
      %v348 = vunpack.c.l.b16 %v204
      %v349 = vunpack.c.l.b16 %v205
      %v350 = vunpack.c.l.b16 %v206
      %v351 = vunpack.c.l.b16 %v207
      %v352 = vunpack.c.l.b16 %v208
      %v353 = vunpack.c.l.b16 %v209
      %v354 = vunpack.c.l.b16 %v210
      %v355 = vunpack.c.l.b16 %v211
      %v356 = vunpack.c.l.b16 %v212
      %v357 = vunpack.c.l.b16 %v213
      %v358 = vunpack.c.l.b16 %v214
      %v359 = vunpack.c.l.b16 %v215
      %v360 = vunpack.c.l.b16 %v216
      %v361 = vunpack.c.l.b16 %v217
      %v362 = vunpack.c.l.b16 %v218
      %v363 = vunpack.c.l.b16 %v219
      %v364 = vunpack.c.l.b16 %v220
      %v365 = vunpack.c.l.b16 %v221
      %v366 = vunpack.c.l.b16 %v222
      %v367 = vunpack.c.l.b16 %v223
      %v368 = vunpack.c.l.b16 %v224
      %v369 = vunpack.c.l.b16 %v225
      %v370 = vunpack.c.l.b16 %v226
      %v371 = vunpack.c.l.b16 %v227
      %v372 = vunpack.c.l.b16 %v228
      %v373 = vunpack.c.l.b16 %v229
      %v374 = vunpack.c.l.b16 %v230
      %v375 = vunpack.c.l.b16 %v231
      %v376 = vunpack.c.l.b16 %v232
      %v377 = vunpack.c.l.b16 %v233
      %v378 = vunpack.c.l.b16 %v234
      %v379 = vunpack.c.l.b16 %v235
      %v380 = vunpack.c.l.b16 %v236
      %v381 = vunpack.c.l.b16 %v237
      %v382 = vunpack.c.l.b16 %v238
      %v383 = vunpack.c.l.b16 %v239
      %v384 = vunpack.c.l.b16 %v240
      %v385 = vunpack.c.l.b16 %v241
      %v386 = vunpack.c.l.b16 %v242
      %v387 = vunpack.c.l.b16 %v243
      %v388 = vunpack.c.l.b16 %v244
      %v389 = vunpack.c.l.b16 %v245
      %v390 = vunpack.c.l.b16 %v246
      %v391 = vunpack.c.l.b16 %v247
      %v392 = vunpack.c.l.b16 %v248
      %v393 = vunpack.c.l.b16 %v249
      %v394 = vpack.c.b16 %v331, %v330
      %v395 = vpack.c.b16 %v333, %v332
      %v396 = vpack.c.b16 %v335, %v334
      %v397 = vpack.c.b16 %v337, %v336
      %v398 = vpack.c.b16 %v339, %v338
      %v399 = vpack.c.b16 %v341, %v340
      %v400 = vpack.c.b16 %v343, %v342
      %v401 = vpack.c.b16 %v345, %v344
      %v402 = vpack.c.b16 %v347, %v346
      %v403 = vpack.c.b16 %v349, %v348
      %v404 = vpack.c.b16 %v351, %v350
      %v405 = vpack.c.b16 %v353, %v352
      %v406 = vpack.c.b16 %v355, %v354
      %v407 = vpack.c.b16 %v357, %v356
      %v408 = vpack.c.b16 %v359, %v358
      %v409 = vpack.c.b16 %v361, %v360
      %v410 = vpack.c.b16 %v363, %v362
      %v411 = vpack.c.b16 %v365, %v364
      %v412 = vpack.c.b16 %v367, %v366
      %v413 = vpack.c.b16 %v369, %v368
      %v414 = vpack.c.b16 %v371, %v370
      %v415 = vpack.c.b16 %v373, %v372
      %v416 = vpack.c.b16 %v375, %v374
      %v417 = vpack.c.b16 %v377, %v376
      %v418 = vpack.c.b16 %v379, %v378
      %v419 = vpack.c.b16 %v381, %v380
      %v420 = vpack.c.b16 %v383, %v382
      %v421 = vpack.c.b16 %v385, %v384
      %v422 = vpack.c.b16 %v387, %v386
      %v423 = vpack.c.b16 %v389, %v388
      %v424 = vpack.c.b16 %v391, %v390
      %v425 = vpack.c.b16 %v393, %v392
      %v474 = vunpack.c.l.b16 %v250
      %v475 = vunpack.c.l.b16 %v251
      %v476 = vunpack.c.l.b16 %v252
      %v477 = vunpack.c.l.b16 %v253
      %v478 = vunpack.c.l.b16 %v254
      %v479 = vunpack.c.l.b16 %v255
      %v480 = vunpack.c.l.b16 %v256
      %v481 = vunpack.c.l.b16 %v257
      %v482 = vunpack.c.l.b16 %v258
      %v483 = vunpack.c.l.b16 %v259
      %v484 = vunpack.c.l.b16 %v260
      %v485 = vunpack.c.l.b16 %v261
      %v486 = vunpack.c.l.b16 %v262
      %v487 = vunpack.c.l.b16 %v263
      %v488 = vunpack.c.l.b16 %v264
      %v489 = vunpack.c.l.b16 %v265
      %v490 = vpack.c.b16 %v475, %v474
      %v491 = vpack.c.b16 %v477, %v476
      %v492 = vpack.c.b16 %v479, %v478
      %v493 = vpack.c.b16 %v481, %v480
      %v494 = vpack.c.b16 %v483, %v482
      %v495 = vpack.c.b16 %v485, %v484
      %v496 = vpack.c.b16 %v487, %v486
      %v497 = vpack.c.b16 %v489, %v488
      %506 = vmatprep.subr.bf16.mxu0 0
      %507 = vmatpush1.bf16.msra.mxu0 %v497
      %508 = vmatprep.subr.bf16.mxu0 0
      %509 = vmatpush1.bf16.msra.mxu0 %v496
      %510 = vmatprep.subr.bf16.mxu0 0
      %511 = vmatpush1.bf16.msra.mxu0 %v495
      %512 = vmatprep.subr.bf16.mxu0 0
      %513 = vmatpush1.bf16.msra.mxu0 %v494
      %514 = vmatprep.subr.bf16.mxu0 0
      %515 = vmatpush1.bf16.msra.mxu0 %v493
      %516 = vmatprep.subr.bf16.mxu0 0
      %517 = vmatpush1.bf16.msra.mxu0 %v492
      %518 = vmatprep.subr.bf16.mxu0 0
      %519 = vmatpush1.bf16.msra.mxu0 %v491
      %520 = vmatprep.subr.bf16.mxu0 0
      %521 = vmatpush1.bf16.msra.mxu0 %v490
      %522 = vmatprep.subr.bf16.mxu0 0
      %523 = vmatpush2.bf16.msra.mxu0 0
      %524 = vmatprep.subr.bf16.mxu0 0
      %525 = vmatpush2.bf16.msra.mxu0 0
      %526 = vmatprep.subr.bf16.mxu0 0
      %527 = vmatpush2.bf16.msra.mxu0 0
      %528 = vmatprep.subr.bf16.mxu0 0
      %529 = vmatpush2.bf16.msra.mxu0 0
      %530 = vmatprep.subr.bf16.mxu0 0
      %531 = vmatpush2.bf16.msra.mxu0 0
      %532 = vmatprep.subr.bf16.mxu0 0
      %533 = vmatpush2.bf16.msra.mxu0 0
      %534 = vmatprep.subr.bf16.mxu0 0
      %535 = vmatpush2.bf16.msra.mxu0 0
      %536 = vmatprep.subr.bf16.mxu0 0
      %537 = vmatpush2.bf16.msra.mxu0 0
      %538 = vmatprep.mubr.bf16.mxu0 0
      %539 = vmatmul.mubr.bf16.gmra.mxu0 %v394
      %v540 = vpop.f32.mrf.mxu0
      %v541 = vadd.f32 0.0, %v540
      %v542 = vpop.f32.mrf.mxu0
      %v543 = vpop.f32.mrf.mxu0
      %v544 = vadd.f32 0.0, %v543
      %v545 = vpop.f32.mrf.mxu0
      %546 = vmatprep.mubr.bf16.mxu0 0
      %547 = vmatmul.mubr.bf16.gmra.mxu0 %v395
      %v548 = vpop.f32.mrf.mxu0
      %v549 = vadd.f32 0.0, %v548
      %v550 = vpop.f32.mrf.mxu0
      %v551 = vpop.f32.mrf.mxu0
      %v552 = vadd.f32 0.0, %v551
      %v553 = vpop.f32.mrf.mxu0
      %554 = vmatprep.mubr.bf16.mxu0 0
      %555 = vmatmul.mubr.bf16.gmra.mxu0 %v396
      %v556 = vpop.f32.mrf.mxu0
      %v557 = vadd.f32 0.0, %v556
      %v558 = vpop.f32.mrf.mxu0
      %v559 = vpop.f32.mrf.mxu0
      %v560 = vadd.f32 0.0, %v559
      %v561 = vpop.f32.mrf.mxu0
      %562 = vmatprep.mubr.bf16.mxu0 0
      %563 = vmatmul.mubr.bf16.gmra.mxu0 %v397
      %v564 = vpop.f32.mrf.mxu0
      %v565 = vadd.f32 0.0, %v564
      %v566 = vpop.f32.mrf.mxu0
      %v567 = vpop.f32.mrf.mxu0
      %v568 = vadd.f32 0.0, %v567
      %v569 = vpop.f32.mrf.mxu0
      %570 = vmatprep.mubr.bf16.mxu0 0
      %571 = vmatmul.mubr.bf16.gmra.mxu0 %v398
      %v572 = vpop.f32.mrf.mxu0
      %v573 = vadd.f32 0.0, %v572
      %v574 = vpop.f32.mrf.mxu0
      %v575 = vpop.f32.mrf.mxu0
      %v576 = vadd.f32 0.0, %v575
      %v577 = vpop.f32.mrf.mxu0
      %578 = vmatprep.mubr.bf16.mxu0 0
      %579 = vmatmul.mubr.bf16.gmra.mxu0 %v399
      %v580 = vpop.f32.mrf.mxu0
      %v581 = vadd.f32 0.0, %v580
      %v582 = vpop.f32.mrf.mxu0
      %v583 = vpop.f32.mrf.mxu0
      %v584 = vadd.f32 0.0, %v583
      %v585 = vpop.f32.mrf.mxu0
      %586 = vmatprep.mubr.bf16.mxu0 0
      %587 = vmatmul.mubr.bf16.gmra.mxu0 %v400
      %v588 = vpop.f32.mrf.mxu0
      %v589 = vadd.f32 0.0, %v588
      %v590 = vpop.f32.mrf.mxu0
      %v591 = vpop.f32.mrf.mxu0
      %v592 = vadd.f32 0.0, %v591
      %v593 = vpop.f32.mrf.mxu0
      %594 = vmatprep.mubr.bf16.mxu0 0
      %595 = vmatmul.mubr.bf16.gmra.mxu0 %v401
      %v596 = vpop.f32.mrf.mxu0
      %v597 = vadd.f32 0.0, %v596
      %v598 = vpop.f32.mrf.mxu0
      %v599 = vpop.f32.mrf.mxu0
      %v600 = vadd.f32 0.0, %v599
      %v601 = vpop.f32.mrf.mxu0
      %602 = vmatprep.mubr.bf16.mxu0 0
      %603 = vmatmul.mubr.bf16.gmra.mxu0 %v402
      %v604 = vpop.f32.mrf.mxu0
      %v605 = vadd.f32 0.0, %v604
      %v606 = vpop.f32.mrf.mxu0
      %v607 = vpop.f32.mrf.mxu0
      %v608 = vadd.f32 0.0, %v607
      %v609 = vpop.f32.mrf.mxu0
      %610 = vmatprep.mubr.bf16.mxu0 0
      %611 = vmatmul.mubr.bf16.gmra.mxu0 %v403
      %v612 = vpop.f32.mrf.mxu0
      %v613 = vadd.f32 0.0, %v612
      %v614 = vpop.f32.mrf.mxu0
      %v615 = vpop.f32.mrf.mxu0
      %v616 = vadd.f32 0.0, %v615
      %v617 = vpop.f32.mrf.mxu0
      %618 = vmatprep.mubr.bf16.mxu0 0
      %619 = vmatmul.mubr.bf16.gmra.mxu0 %v404
      %v620 = vpop.f32.mrf.mxu0
      %v621 = vadd.f32 0.0, %v620
      %v622 = vpop.f32.mrf.mxu0
      %v623 = vpop.f32.mrf.mxu0
      %v624 = vadd.f32 0.0, %v623
      %v625 = vpop.f32.mrf.mxu0
      %626 = vmatprep.mubr.bf16.mxu0 0
      %627 = vmatmul.mubr.bf16.gmra.mxu0 %v405
      %v628 = vpop.f32.mrf.mxu0
      %v629 = vadd.f32 0.0, %v628
      %v630 = vpop.f32.mrf.mxu0
      %v631 = vpop.f32.mrf.mxu0
      %v632 = vadd.f32 0.0, %v631
      %v633 = vpop.f32.mrf.mxu0
      %634 = vmatprep.mubr.bf16.mxu0 0
      %635 = vmatmul.mubr.bf16.gmra.mxu0 %v406
      %v636 = vpop.f32.mrf.mxu0
      %v637 = vadd.f32 0.0, %v636
      %v638 = vpop.f32.mrf.mxu0
      %v639 = vpop.f32.mrf.mxu0
      %v640 = vadd.f32 0.0, %v639
      %v641 = vpop.f32.mrf.mxu0
      %642 = vmatprep.mubr.bf16.mxu0 0
      %643 = vmatmul.mubr.bf16.gmra.mxu0 %v407
      %v644 = vpop.f32.mrf.mxu0
      %v645 = vadd.f32 0.0, %v644
      %v646 = vpop.f32.mrf.mxu0
      %v647 = vpop.f32.mrf.mxu0
      %v648 = vadd.f32 0.0, %v647
      %v649 = vpop.f32.mrf.mxu0
      %650 = vmatprep.mubr.bf16.mxu0 0
      %651 = vmatmul.mubr.bf16.gmra.mxu0 %v408
      %v652 = vpop.f32.mrf.mxu0
      %v653 = vadd.f32 0.0, %v652
      %v654 = vpop.f32.mrf.mxu0
      %v655 = vpop.f32.mrf.mxu0
      %v656 = vadd.f32 0.0, %v655
      %v657 = vpop.f32.mrf.mxu0
      %658 = vmatprep.mubr.bf16.mxu0 0
      %659 = vmatmul.mubr.bf16.gmra.mxu0 %v409
      %v660 = vpop.f32.mrf.mxu0
      %v661 = vadd.f32 0.0, %v660
      %v662 = vpop.f32.mrf.mxu0
      %v663 = vpop.f32.mrf.mxu0
      %v664 = vadd.f32 0.0, %v663
      %v665 = vpop.f32.mrf.mxu0
      %666 = vmatprep.mubr.bf16.mxu0 0
      %667 = vmatmul.mubr.bf16.gmra.mxu0 %v410
      %v668 = vpop.f32.mrf.mxu0
      %v669 = vadd.f32 0.0, %v668
      %v670 = vpop.f32.mrf.mxu0
      %v671 = vpop.f32.mrf.mxu0
      %v672 = vadd.f32 0.0, %v671
      %v673 = vpop.f32.mrf.mxu0
      %674 = vmatprep.mubr.bf16.mxu0 0
      %675 = vmatmul.mubr.bf16.gmra.mxu0 %v411
      %v676 = vpop.f32.mrf.mxu0
      %v677 = vadd.f32 0.0, %v676
      %v678 = vpop.f32.mrf.mxu0
      %v679 = vpop.f32.mrf.mxu0
      %v680 = vadd.f32 0.0, %v679
      %v681 = vpop.f32.mrf.mxu0
      %682 = vmatprep.mubr.bf16.mxu0 0
      %683 = vmatmul.mubr.bf16.gmra.mxu0 %v412
      %v684 = vpop.f32.mrf.mxu0
      %v685 = vadd.f32 0.0, %v684
      %v686 = vpop.f32.mrf.mxu0
      %v687 = vpop.f32.mrf.mxu0
      %v688 = vadd.f32 0.0, %v687
      %v689 = vpop.f32.mrf.mxu0
      %690 = vmatprep.mubr.bf16.mxu0 0
      %691 = vmatmul.mubr.bf16.gmra.mxu0 %v413
      %v692 = vpop.f32.mrf.mxu0
      %v693 = vadd.f32 0.0, %v692
      %v694 = vpop.f32.mrf.mxu0
      %v695 = vpop.f32.mrf.mxu0
      %v696 = vadd.f32 0.0, %v695
      %v697 = vpop.f32.mrf.mxu0
      %698 = vmatprep.mubr.bf16.mxu0 0
      %699 = vmatmul.mubr.bf16.gmra.mxu0 %v414
      %v700 = vpop.f32.mrf.mxu0
      %v701 = vadd.f32 0.0, %v700
      %v702 = vpop.f32.mrf.mxu0
      %v703 = vpop.f32.mrf.mxu0
      %v704 = vadd.f32 0.0, %v703
      %v705 = vpop.f32.mrf.mxu0
      %706 = vmatprep.mubr.bf16.mxu0 0
      %707 = vmatmul.mubr.bf16.gmra.mxu0 %v415
      %v708 = vpop.f32.mrf.mxu0
      %v709 = vadd.f32 0.0, %v708
      %v710 = vpop.f32.mrf.mxu0
      %v711 = vpop.f32.mrf.mxu0
      %v712 = vadd.f32 0.0, %v711
      %v713 = vpop.f32.mrf.mxu0
      %714 = vmatprep.mubr.bf16.mxu0 0
      %715 = vmatmul.mubr.bf16.gmra.mxu0 %v416
      %v716 = vpop.f32.mrf.mxu0
      %v717 = vadd.f32 0.0, %v716
      %v718 = vpop.f32.mrf.mxu0
      %v719 = vpop.f32.mrf.mxu0
      %v720 = vadd.f32 0.0, %v719
      %v721 = vpop.f32.mrf.mxu0
      %722 = vmatprep.mubr.bf16.mxu0 0
      %723 = vmatmul.mubr.bf16.gmra.mxu0 %v417
      %v724 = vpop.f32.mrf.mxu0
      %v725 = vadd.f32 0.0, %v724
      %v726 = vpop.f32.mrf.mxu0
      %v727 = vpop.f32.mrf.mxu0
      %v728 = vadd.f32 0.0, %v727
      %v729 = vpop.f32.mrf.mxu0
      %730 = vmatprep.mubr.bf16.mxu0 0
      %731 = vmatmul.mubr.bf16.gmra.mxu0 %v418
      %v732 = vpop.f32.mrf.mxu0
      %v733 = vadd.f32 0.0, %v732
      %v734 = vpop.f32.mrf.mxu0
      %v735 = vpop.f32.mrf.mxu0
      %v736 = vadd.f32 0.0, %v735
      %v737 = vpop.f32.mrf.mxu0
      %738 = vmatprep.mubr.bf16.mxu0 0
      %739 = vmatmul.mubr.bf16.gmra.mxu0 %v419
      %v740 = vpop.f32.mrf.mxu0
      %v741 = vadd.f32 0.0, %v740
      %v742 = vpop.f32.mrf.mxu0
      %v743 = vpop.f32.mrf.mxu0
      %v744 = vadd.f32 0.0, %v743
      %v745 = vpop.f32.mrf.mxu0
      %746 = vmatprep.mubr.bf16.mxu0 0
      %747 = vmatmul.mubr.bf16.gmra.mxu0 %v420
      %v748 = vpop.f32.mrf.mxu0
      %v749 = vadd.f32 0.0, %v748
      %v750 = vpop.f32.mrf.mxu0
      %v751 = vpop.f32.mrf.mxu0
      %v752 = vadd.f32 0.0, %v751
      %v753 = vpop.f32.mrf.mxu0
      %754 = vmatprep.mubr.bf16.mxu0 0
      %755 = vmatmul.mubr.bf16.gmra.mxu0 %v421
      %v756 = vpop.f32.mrf.mxu0
      %v757 = vadd.f32 0.0, %v756
      %v758 = vpop.f32.mrf.mxu0
      %v759 = vpop.f32.mrf.mxu0
      %v760 = vadd.f32 0.0, %v759
      %v761 = vpop.f32.mrf.mxu0
      %762 = vmatprep.mubr.bf16.mxu0 0
      %763 = vmatmul.mubr.bf16.gmra.mxu0 %v422
      %v764 = vpop.f32.mrf.mxu0
      %v765 = vadd.f32 0.0, %v764
      %v766 = vpop.f32.mrf.mxu0
      %v767 = vpop.f32.mrf.mxu0
      %v768 = vadd.f32 0.0, %v767
      %v769 = vpop.f32.mrf.mxu0
      %770 = vmatprep.mubr.bf16.mxu0 0
      %771 = vmatmul.mubr.bf16.gmra.mxu0 %v423
      %v772 = vpop.f32.mrf.mxu0
      %v773 = vadd.f32 0.0, %v772
      %v774 = vpop.f32.mrf.mxu0
      %v775 = vpop.f32.mrf.mxu0
      %v776 = vadd.f32 0.0, %v775
      %v777 = vpop.f32.mrf.mxu0
      %778 = vmatprep.mubr.bf16.mxu0 0
      %779 = vmatmul.mubr.bf16.gmra.mxu0 %v424
      %v780 = vpop.f32.mrf.mxu0
      %v781 = vadd.f32 0.0, %v780
      %v782 = vpop.f32.mrf.mxu0
      %v783 = vpop.f32.mrf.mxu0
      %v784 = vadd.f32 0.0, %v783
      %v785 = vpop.f32.mrf.mxu0
      %786 = vmatprep.mubr.bf16.mxu0 0
      %787 = vmatmul.mubr.bf16.gmra.mxu0 %v425
      %v788 = vpop.f32.mrf.mxu0
      %v789 = vadd.f32 0.0, %v788
      %v790 = vpop.f32.mrf.mxu0
      %v791 = vpop.f32.mrf.mxu0
      %v792 = vadd.f32 0.0, %v791
      %v793 = vpop.f32.mrf.mxu0
      %794 = vdwg.mxu0
      %795 = vst [vmem:[%s179] sm:$0xff] %v541
      %796 = vst [vmem:[%s179 + $0x8] sm:$0xff] %v544
      %797 = vst [vmem:[%s179 + $0x10] sm:$0xff] %v549
      %798 = vst [vmem:[%s179 + $0x18] sm:$0xff] %v552
      %799 = vst [vmem:[%s179 + $0x20] sm:$0xff] %v557
      %800 = vst [vmem:[%s179 + $0x28] sm:$0xff] %v560
      %801 = vst [vmem:[%s179 + $0x30] sm:$0xff] %v565
      %802 = vst [vmem:[%s179 + $0x38] sm:$0xff] %v568
      %803 = vst [vmem:[%s179 + $0x40] sm:$0xff] %v573
      %804 = vst [vmem:[%s179 + $0x48] sm:$0xff] %v576
      %805 = vst [vmem:[%s179 + $0x50] sm:$0xff] %v581
      %806 = vst [vmem:[%s179 + $0x58] sm:$0xff] %v584
      %807 = vst [vmem:[%s179 + $0x60] sm:$0xff] %v589
      %808 = vst [vmem:[%s179 + $0x68] sm:$0xff] %v592
      %809 = vst [vmem:[%s179 + $0x70] sm:$0xff] %v597
      %810 = vst [vmem:[%s179 + $0x78] sm:$0xff] %v600
      %811 = vst [vmem:[%s179 + $0x80] sm:$0xff] %v605
      %812 = vst [vmem:[%s179 + $0x88] sm:$0xff] %v608
      %813 = vst [vmem:[%s179 + $0x90] sm:$0xff] %v613
      %814 = vst [vmem:[%s179 + $0x98] sm:$0xff] %v616
      %815 = vst [vmem:[%s179 + $0xa0] sm:$0xff] %v621
      %816 = vst [vmem:[%s179 + $0xa8] sm:$0xff] %v624
      %817 = vst [vmem:[%s179 + $0xb0] sm:$0xff] %v629
      %818 = vst [vmem:[%s179 + $0xb8] sm:$0xff] %v632
      %819 = vst [vmem:[%s179 + $0xc0] sm:$0xff] %v637
      %820 = vst [vmem:[%s179 + $0xc8] sm:$0xff] %v640
      %821 = vst [vmem:[%s179 + $0xd0] sm:$0xff] %v645
      %822 = vst [vmem:[%s179 + $0xd8] sm:$0xff] %v648
      %823 = vst [vmem:[%s179 + $0xe0] sm:$0xff] %v653
      %824 = vst [vmem:[%s179 + $0xe8] sm:$0xff] %v656
      %825 = vst [vmem:[%s179 + $0xf0] sm:$0xff] %v661
      %826 = vst [vmem:[%s179 + $0xf8] sm:$0xff] %v664
      %827 = vst [vmem:[%s179 + $0x100] sm:$0xff] %v669
      %828 = vst [vmem:[%s179 + $0x108] sm:$0xff] %v672
      %829 = vst [vmem:[%s179 + $0x110] sm:$0xff] %v677
      %830 = vst [vmem:[%s179 + $0x118] sm:$0xff] %v680
      %831 = vst [vmem:[%s179 + $0x120] sm:$0xff] %v685
      %832 = vst [vmem:[%s179 + $0x128] sm:$0xff] %v688
      %833 = vst [vmem:[%s179 + $0x130] sm:$0xff] %v693
      %834 = vst [vmem:[%s179 + $0x138] sm:$0xff] %v696
      %835 = vst [vmem:[%s179 + $0x140] sm:$0xff] %v701
      %836 = vst [vmem:[%s179 + $0x148] sm:$0xff] %v704
      %837 = vst [vmem:[%s179 + $0x150] sm:$0xff] %v709
      %838 = vst [vmem:[%s179 + $0x158] sm:$0xff] %v712
      %839 = vst [vmem:[%s179 + $0x160] sm:$0xff] %v717
      %840 = vst [vmem:[%s179 + $0x168] sm:$0xff] %v720
      %841 = vst [vmem:[%s179 + $0x170] sm:$0xff] %v725
      %842 = vst [vmem:[%s179 + $0x178] sm:$0xff] %v728
      %843 = vst [vmem:[%s179 + $0x180] sm:$0xff] %v733
      %844 = vst [vmem:[%s179 + $0x188] sm:$0xff] %v736
      %845 = vst [vmem:[%s179 + $0x190] sm:$0xff] %v741
      %846 = vst [vmem:[%s179 + $0x198] sm:$0xff] %v744
      %847 = vst [vmem:[%s179 + $0x1a0] sm:$0xff] %v749
      %848 = vst [vmem:[%s179 + $0x1a8] sm:$0xff] %v752
      %849 = vst [vmem:[%s179 + $0x1b0] sm:$0xff] %v757
      %850 = vst [vmem:[%s179 + $0x1b8] sm:$0xff] %v760
      %851 = vst [vmem:[%s179 + $0x1c0] sm:$0xff] %v765
      %852 = vst [vmem:[%s179 + $0x1c8] sm:$0xff] %v768
      %853 = vst [vmem:[%s179 + $0x1d0] sm:$0xff] %v773
      %854 = vst [vmem:[%s179 + $0x1d8] sm:$0xff] %v776
      %855 = vst [vmem:[%s179 + $0x1e0] sm:$0xff] %v781
      %856 = vst [vmem:[%s179 + $0x1e8] sm:$0xff] %v784
      %857 = vst [vmem:[%s179 + $0x1f0] sm:$0xff] %v789
      %858 = vst [vmem:[%s179 + $0x1f8] sm:$0xff] %v792
      %v859 = vadd.f32 %v541, %v544
      %v860 = vadd.f32 %v859, %v549
      %v861 = vadd.f32 %v860, %v552
      %v862 = vadd.f32 %v861, %v557
      %v863 = vadd.f32 %v862, %v560
      %v864 = vadd.f32 %v863, %v565
      %v865 = vadd.f32 %v864, %v568
      %v866 = vadd.f32 %v865, %v573
      %v867 = vadd.f32 %v866, %v576
      %v868 = vadd.f32 %v867, %v581
      %v869 = vadd.f32 %v868, %v584
      %v870 = vadd.f32 %v869, %v589
      %v871 = vadd.f32 %v870, %v592
      %v872 = vadd.f32 %v871, %v597
      %v873 = vadd.f32 %v872, %v600
      %v874 = vadd.f32 %v873, %v605
      %v875 = vadd.f32 %v874, %v608
      %v876 = vadd.f32 %v875, %v613
      %v877 = vadd.f32 %v876, %v616
      %v878 = vadd.f32 %v877, %v621
      %v879 = vadd.f32 %v878, %v624
      %v880 = vadd.f32 %v879, %v629
      %v881 = vadd.f32 %v880, %v632
      %v882 = vadd.f32 %v881, %v637
      %v883 = vadd.f32 %v882, %v640
      %v884 = vadd.f32 %v883, %v645
      %v885 = vadd.f32 %v884, %v648
      %v886 = vadd.f32 %v885, %v653
      %v887 = vadd.f32 %v886, %v656
      %v888 = vadd.f32 %v887, %v661
      %v889 = vadd.f32 %v888, %v664
      %v890 = vadd.f32 %v889, %v669
      %v891 = vadd.f32 %v890, %v672
      %v892 = vadd.f32 %v891, %v677
      %v893 = vadd.f32 %v892, %v680
      %v894 = vadd.f32 %v893, %v685
      %v895 = vadd.f32 %v894, %v688
      %v896 = vadd.f32 %v895, %v693
      %v897 = vadd.f32 %v896, %v696
      %v898 = vadd.f32 %v897, %v701
      %v899 = vadd.f32 %v898, %v704
      %v900 = vadd.f32 %v899, %v709
      %v901 = vadd.f32 %v900, %v712
      %v902 = vadd.f32 %v901, %v717
      %v903 = vadd.f32 %v902, %v720
      %v904 = vadd.f32 %v903, %v725
      %v905 = vadd.f32 %v904, %v728
      %v906 = vadd.f32 %v905, %v733
      %v907 = vadd.f32 %v906, %v736
      %v908 = vadd.f32 %v907, %v741
      %v909 = vadd.f32 %v908, %v744
      %v910 = vadd.f32 %v909, %v749
      %v911 = vadd.f32 %v910, %v752
      %v912 = vadd.f32 %v911, %v757
      %v913 = vadd.f32 %v912, %v760
      %v914 = vadd.f32 %v913, %v765
      %v915 = vadd.f32 %v914, %v768
      %v916 = vadd.f32 %v915, %v773
      %v917 = vadd.f32 %v916, %v776
      %v918 = vadd.f32 %v917, %v781
      %v919 = vadd.f32 %v918, %v784
      %v920 = vadd.f32 %v919, %v789
      %v921 = vadd.f32 %v920, %v792
      %v922 = vrot.slane %v921, 4
      %v923 = vadd.f32 %v921, %v922
      %v924 = vrot.slane %v923, 2
      %v925 = vadd.f32 %v923, %v924
      %v926 = vrot.slane %v925, 1
      %v927 = vadd.f32 %v925, %v926
      %v928 = vmul.f32 %v541, %v541
      %v929 = vmul.f32 %v544, %v544
      %v930 = vmul.f32 %v549, %v549
      %v931 = vmul.f32 %v552, %v552
      %v932 = vmul.f32 %v557, %v557
      %v933 = vmul.f32 %v560, %v560
      %v934 = vmul.f32 %v565, %v565
      %v935 = vmul.f32 %v568, %v568
      %v936 = vmul.f32 %v573, %v573
      %v937 = vmul.f32 %v576, %v576
      %v938 = vmul.f32 %v581, %v581
      %v939 = vmul.f32 %v584, %v584
      %v940 = vmul.f32 %v589, %v589
      %v941 = vmul.f32 %v592, %v592
      %v942 = vmul.f32 %v597, %v597
      %v943 = vmul.f32 %v600, %v600
      %v944 = vmul.f32 %v605, %v605
      %v945 = vmul.f32 %v608, %v608
      %v946 = vmul.f32 %v613, %v613
      %v947 = vmul.f32 %v616, %v616
      %v948 = vmul.f32 %v621, %v621
      %v949 = vmul.f32 %v624, %v624
      %v950 = vmul.f32 %v629, %v629
      %v951 = vmul.f32 %v632, %v632
      %v952 = vmul.f32 %v637, %v637
      %v953 = vmul.f32 %v640, %v640
      %v954 = vmul.f32 %v645, %v645
      %v955 = vmul.f32 %v648, %v648
      %v956 = vmul.f32 %v653, %v653
      %v957 = vmul.f32 %v656, %v656
      %v958 = vmul.f32 %v661, %v661
      %v959 = vmul.f32 %v664, %v664
      %v960 = vmul.f32 %v669, %v669
      %v961 = vmul.f32 %v672, %v672
      %v962 = vmul.f32 %v677, %v677
      %v963 = vmul.f32 %v680, %v680
      %v964 = vmul.f32 %v685, %v685
      %v965 = vmul.f32 %v688, %v688
      %v966 = vmul.f32 %v693, %v693
      %v967 = vmul.f32 %v696, %v696
      %v968 = vmul.f32 %v701, %v701
      %v969 = vmul.f32 %v704, %v704
      %v970 = vmul.f32 %v709, %v709
      %v971 = vmul.f32 %v712, %v712
      %v972 = vmul.f32 %v717, %v717
      %v973 = vmul.f32 %v720, %v720
      %v974 = vmul.f32 %v725, %v725
      %v975 = vmul.f32 %v728, %v728
      %v976 = vmul.f32 %v733, %v733
      %v977 = vmul.f32 %v736, %v736
      %v978 = vmul.f32 %v741, %v741
      %v979 = vmul.f32 %v744, %v744
      %v980 = vmul.f32 %v749, %v749
      %v981 = vmul.f32 %v752, %v752
      %v982 = vmul.f32 %v757, %v757
      %v983 = vmul.f32 %v760, %v760
      %v984 = vmul.f32 %v765, %v765
      %v985 = vmul.f32 %v768, %v768
      %v986 = vmul.f32 %v773, %v773
      %v987 = vmul.f32 %v776, %v776
      %v988 = vmul.f32 %v781, %v781
      %v989 = vmul.f32 %v784, %v784
      %v990 = vmul.f32 %v789, %v789
      %v991 = vmul.f32 %v792, %v792
      %v992 = vadd.f32 %v928, %v929
      %v993 = vadd.f32 %v992, %v930
      %v994 = vadd.f32 %v993, %v931
      %v995 = vadd.f32 %v994, %v932
      %v996 = vadd.f32 %v995, %v933
      %v997 = vadd.f32 %v996, %v934
      %v998 = vadd.f32 %v997, %v935
      %v999 = vadd.f32 %v998, %v936
      %v1000 = vadd.f32 %v999, %v937
      %v1001 = vadd.f32 %v1000, %v938
      %v1002 = vadd.f32 %v1001, %v939
      %v1003 = vadd.f32 %v1002, %v940
      %v1004 = vadd.f32 %v1003, %v941
      %v1005 = vadd.f32 %v1004, %v942
      %v1006 = vadd.f32 %v1005, %v943
      %v1007 = vadd.f32 %v1006, %v944
      %v1008 = vadd.f32 %v1007, %v945
      %v1009 = vadd.f32 %v1008, %v946
      %v1010 = vadd.f32 %v1009, %v947
      %v1011 = vadd.f32 %v1010, %v948
      %v1012 = vadd.f32 %v1011, %v949
      %v1013 = vadd.f32 %v1012, %v950
      %v1014 = vadd.f32 %v1013, %v951
      %v1015 = vadd.f32 %v1014, %v952
      %v1016 = vadd.f32 %v1015, %v953
      %v1017 = vadd.f32 %v1016, %v954
      %v1018 = vadd.f32 %v1017, %v955
      %v1019 = vadd.f32 %v1018, %v956
      %v1020 = vadd.f32 %v1019, %v957
      %v1021 = vadd.f32 %v1020, %v958
      %v1022 = vadd.f32 %v1021, %v959
      %v1023 = vadd.f32 %v1022, %v960
      %v1024 = vadd.f32 %v1023, %v961
      %v1025 = vadd.f32 %v1024, %v962
      %v1026 = vadd.f32 %v1025, %v963
      %v1027 = vadd.f32 %v1026, %v964
      %v1028 = vadd.f32 %v1027, %v965
      %v1029 = vadd.f32 %v1028, %v966
      %v1030 = vadd.f32 %v1029, %v967
      %v1031 = vadd.f32 %v1030, %v968
      %v1032 = vadd.f32 %v1031, %v969
      %v1033 = vadd.f32 %v1032, %v970
      %v1034 = vadd.f32 %v1033, %v971
      %v1035 = vadd.f32 %v1034, %v972
      %v1036 = vadd.f32 %v1035, %v973
      %v1037 = vadd.f32 %v1036, %v974
      %v1038 = vadd.f32 %v1037, %v975
      %v1039 = vadd.f32 %v1038, %v976
      %v1040 = vadd.f32 %v1039, %v977
      %v1041 = vadd.f32 %v1040, %v978
      %v1042 = vadd.f32 %v1041, %v979
      %v1043 = vadd.f32 %v1042, %v980
      %v1044 = vadd.f32 %v1043, %v981
      %v1045 = vadd.f32 %v1044, %v982
      %v1046 = vadd.f32 %v1045, %v983
      %v1047 = vadd.f32 %v1046, %v984
      %v1048 = vadd.f32 %v1047, %v985
      %v1049 = vadd.f32 %v1048, %v986
      %v1050 = vadd.f32 %v1049, %v987
      %v1051 = vadd.f32 %v1050, %v988
      %v1052 = vadd.f32 %v1051, %v989
      %v1053 = vadd.f32 %v1052, %v990
      %v1054 = vadd.f32 %v1053, %v991
      %v1055 = vrot.slane %v1054, 4
      %v1056 = vadd.f32 %v1054, %v1055
      %v1057 = vrot.slane %v1056, 2
      %v1058 = vadd.f32 %v1056, %v1057
      %v1059 = vrot.slane %v1058, 1
      %v1060 = vadd.f32 %v1058, %v1059
      %vm1061 = vcmask 1040384
      %v1062 = vsel %vm1061, %v927, %v1060
      %vm1063 = vcmask 1041408
      %v1064 = vsel %vm1063, %v1062, 0.0
      %1065 = vst [vmem:[%s184] sm:$0xff] %v1064
      %s1066 = smul.u32 64, %s15
      %p1067 = scmp.lt.s32.totalorder %s1066, 4095
      %s1068 = scalar_select %p1067, %s1066, 4095
      %s1069 = smul.addr %s1068, 8
      %s1070 = scalar_lea.vmem %s2, %s1069
      %p1071 = scmp.lt.s32.totalorder %s15, 63
      %s1072 = scalar_select %p1071, %s15, 63
      %s1073 = smul.addr %s1072, 8
      %s1074 = scalar_lea.vmem %s3, %s1073
      // Predicated region
      $region29: #{discriminator_forward.11} parent=27 // pred_check
        %p1075 = pneg %p80
      $region30: #{discriminator_forward.11} parent=27 // pred_check_branch
        %1077 = sbr.rel (%p1075) target = $region32
      $region31: #{discriminator_forward.11} parent=27 // pred_region
        %s1078 = smul.u32 64, %s15
      $region32: #{discriminator_forward.11} parent=27 // pred_fallthru
        _
      // Predicated region
      $region33: #{discriminator_forward.11} parent=27 // pred_check
        %p1079 = pneg %p106
      $region34: #{discriminator_forward.11} parent=27 // pred_check_branch
        %1081 = sbr.rel (%p1079) target = $region36
      $region35: #{discriminator_forward.11} parent=27 // pred_region
        _
      $region36: #{discriminator_forward.11} parent=27 // pred_fallthru
        _
    $region28: #{discriminator_forward.11} parent=5 // pred_fallthru
      _
    %p1082 = scmp.le.s32.totalorder 2, %s10
    // Predicated region
    $region37: #{discriminator_forward.11} parent=5 // pred_check
      %p1083 = pneg %p1082
    $region38: #{discriminator_forward.11} parent=5 // pred_check_branch
      %1085 = sbr.rel (%p1083) target = $region40
    $region39: #{discriminator_forward.11} parent=5 // pred_region
      %s1086 = ssub.s32 %s10, 2
      // Predicated region
      $region41: #{discriminator_forward.11} parent=39 // pred_check
        %p1087 = pneg %p86
      $region42: #{discriminator_forward.11} parent=39 // pred_check_branch
        %1089 = sbr.rel (%p1087) target = $region44
      $region43: #{discriminator_forward.11} parent=39 // pred_region
        %s1090 = smul.u32 64, %s16
        %p1091 = scmp.lt.s32.totalorder %s1090, 4095
        %s1092 = scalar_select %p1091, %s1090, 4095
        %s1093 = smul.addr %s1092, 8
        %s1094 = scalar_lea.vmem %s2, %s1093
      $region44: #{discriminator_forward.11} parent=39 // pred_fallthru
        _
      // Predicated region
      $region45: #{discriminator_forward.11} parent=39 // pred_check
        %p1095 = pneg %p112
      $region46: #{discriminator_forward.11} parent=39 // pred_check_branch
        %1097 = sbr.rel (%p1095) target = $region48
      $region47: #{discriminator_forward.11} parent=39 // pred_region
        %p1098 = scmp.lt.s32.totalorder %s16, 63
        %s1099 = scalar_select %p1098, %s16, 63
        %s1100 = smul.addr %s1099, 8
        %s1101 = scalar_lea.vmem %s3, %s1100
      $region48: #{discriminator_forward.11} parent=39 // pred_fallthru
        _
    $region40: #{discriminator_forward.11} parent=5 // pred_fallthru
      _
  $region6: #{discriminator_forward.11} parent=0 // loop_footer
    %s14 = sadd.s32 1, %s10
  $region7: #{discriminator_forward.11} parent=0 // loop_footer_branch
    %9 = sbr.rel target = $region3
  $region8: #{discriminator_forward.11} parent=0 // loop_exit
    _

// kernel: discriminator_forward.12
$region0: #{discriminator_forward.12}
  #allocation0 [shape = 'u32[]', space=smem, size = 0x4, offset = 0x4, fixed_abs, tag = 'smem constant byte address 0x4 - core index']
  #allocation1 [shape = 'u32[144,128]{1,0:T(1,128)}', space=vmem, size = 0x12000, scoped, tag = 'internal scratch']
  %s0 = inlined_call_operand.vmem [shape: f32[32768,128], index: 0, kind: input, shape index: {}]
  %s1 = inlined_call_operand.vmem [shape: f32[1,128], index: 1, kind: input, shape index: {}]
  %s2 = inlined_call_operand.vmem [shape: f32[1,128], index: 2, kind: input, shape index: {}]
  %s3 = inlined_call_operand.vmem [shape: f32[32768,128], index: 3, kind: output, shape index: {}]
  %s4 = sld [smem:[#allocation0]]
  $region45: #{discriminator_forward.12} parent=0
    _
  %s6 = ssub.s32 1, %s4
  %s7 = scalar_select 0, %s6, %s4
  loop: start=0, step=1, limit=66
  $region2: #{discriminator_forward.12} parent=0 // loop_pre_header
    _
  $region3: #{discriminator_forward.12} parent=0 // loop_header
    %s9 = sphi 0, %s13
    %p10 = scmp.ge.s32.totalorder %s9, 66
    %s19 = sphi 0, %s21
    %s22 = sphi 0, %s19
    %s23 = sphi 0, %s22
    %s39 = sphi 0, %s23
    %s43 = sphi 0, %s43
    %s45 = sphi 0, %s43
    %s46 = sphi 0, %s45
    %s60 = sphi 0, %s46
    %s64 = sphi 0, %s64
    %s66 = sphi 0, %s64
    %s67 = sphi 0, %s66
    %s81 = sphi 0, %s67
    %s87 = sphi 0, %s89
    %s90 = sphi 0, %s87
    %s91 = sphi 0, %s90
    %s107 = sphi 0, %s91
  $region4: #{discriminator_forward.12} parent=0 // loop_header_branch
    %12 = sbr.rel (%p10) target = $region8
  $region5: #{discriminator_forward.12} parent=0 // loop_body
    %s14 = ssub.s32 %s9, 1
    %s15 = ssub.s32 %s9, 2
    %s16 = sadd.s32 %s9, 1
    %s17 = ssub.s32 %s9, %s16
    %p18 = scmp.eq.s32.totalorder %s17, 0
    %s20 = sadd.s32 %s19, 1
    %s21 = scalar_select %p18, %s19, %s20
    %p24 = pneg %p18
    %p25 = scmp.eq.s32.totalorder %s9, 63
    %p26 = por %p24, %p25
    %p27 = scmp.ne.s32.totalorder %s19, %s22
    %p28 = scmp.eq.s32.totalorder %s9, 0
    %p29 = por %p27, %p28
    %p30 = scmp.ne.s32.totalorder %s19, %s22
    %p31 = scmp.eq.s32.totalorder %s14, 63
    %p32 = por %p30, %p31
    %p33 = scmp.ne.s32.totalorder %s22, %s23
    %p34 = scmp.eq.s32.totalorder %s14, 0
    %p35 = por %p33, %p34
    %p36 = scmp.ne.s32.totalorder %s22, %s23
    %p37 = scmp.eq.s32.totalorder %s15, 63
    %p38 = por %p36, %p37
    %p40 = scmp.ne.s32.totalorder %s23, %s39
    %p41 = scmp.eq.s32.totalorder %s15, 0
    %p42 = por %p40, %p41
    %s44 = sadd.s32 %s43, 1
    %p47 = scmp.eq.s32.totalorder %s9, 63
    %p48 = scmp.ne.s32.totalorder %s43, %s45
    %p49 = scmp.eq.s32.totalorder %s9, 0
    %p50 = por %p48, %p49
    %p51 = scmp.ne.s32.totalorder %s43, %s45
    %p52 = scmp.eq.s32.totalorder %s14, 63
    %p53 = por %p51, %p52
    %p54 = scmp.ne.s32.totalorder %s45, %s46
    %p55 = scmp.eq.s32.totalorder %s14, 0
    %p56 = por %p54, %p55
    %p57 = scmp.ne.s32.totalorder %s45, %s46
    %p58 = scmp.eq.s32.totalorder %s15, 63
    %p59 = por %p57, %p58
    %p61 = scmp.ne.s32.totalorder %s46, %s60
    %p62 = scmp.eq.s32.totalorder %s15, 0
    %p63 = por %p61, %p62
    %s65 = sadd.s32 %s64, 1
    %p68 = scmp.eq.s32.totalorder %s9, 63
    %p69 = scmp.ne.s32.totalorder %s64, %s66
    %p70 = scmp.eq.s32.totalorder %s9, 0
    %p71 = por %p69, %p70
    %p72 = scmp.ne.s32.totalorder %s64, %s66
    %p73 = scmp.eq.s32.totalorder %s14, 63
    %p74 = por %p72, %p73
    %p75 = scmp.ne.s32.totalorder %s66, %s67
    %p76 = scmp.eq.s32.totalorder %s14, 0
    %p77 = por %p75, %p76
    %p78 = scmp.ne.s32.totalorder %s66, %s67
    %p79 = scmp.eq.s32.totalorder %s15, 63
    %p80 = por %p78, %p79
    %p82 = scmp.ne.s32.totalorder %s67, %s81
    %p83 = scmp.eq.s32.totalorder %s15, 0
    %p84 = por %p82, %p83
    %s85 = ssub.s32 %s9, %s16
    %p86 = scmp.eq.s32.totalorder %s85, 0
    %s88 = sadd.s32 %s87, 1
    %s89 = scalar_select %p86, %s87, %s88
    %p92 = pneg %p86
    %p93 = scmp.eq.s32.totalorder %s9, 63
    %p94 = por %p92, %p93
    %p95 = scmp.ne.s32.totalorder %s87, %s90
    %p96 = scmp.eq.s32.totalorder %s9, 0
    %p97 = por %p95, %p96
    %p98 = scmp.ne.s32.totalorder %s87, %s90
    %p99 = scmp.eq.s32.totalorder %s14, 63
    %p100 = por %p98, %p99
    %p101 = scmp.ne.s32.totalorder %s90, %s91
    %p102 = scmp.eq.s32.totalorder %s14, 0
    %p103 = por %p101, %p102
    %p104 = scmp.ne.s32.totalorder %s90, %s91
    %p105 = scmp.eq.s32.totalorder %s15, 63
    %p106 = por %p104, %p105
    %p108 = scmp.ne.s32.totalorder %s91, %s107
    %p109 = scmp.eq.s32.totalorder %s15, 0
    %p110 = por %p108, %p109
    %p111 = scmp.le.s32.totalorder 1, %s9
    %p112 = scmp.lt.s32.totalorder %s9, 65
    %p113 = pnand %p111, %p112
    %p114 = pneg %p113
    // Predicated region
    $region9: #{discriminator_forward.12} parent=5 // pred_check
      _
    $region10: #{discriminator_forward.12} parent=5 // pred_check_branch
      %116 = sbr.rel (%p113) target = $region12
    $region11: #{discriminator_forward.12} parent=5 // pred_region
      %s117 = ssub.s32 %s9, 1
      // Predicated region
      $region13: #{discriminator_forward.12} parent=11 // pred_check
        %p118 = pneg %p56
      $region14: #{discriminator_forward.12} parent=11 // pred_check_branch
        %120 = sbr.rel (%p118) target = $region16
      $region15: #{discriminator_forward.12} parent=11 // pred_region
        _
      $region16: #{discriminator_forward.12} parent=11 // pred_fallthru
        _
      // Predicated region
      $region17: #{discriminator_forward.12} parent=11 // pred_check
        %p121 = pneg %p77
      $region18: #{discriminator_forward.12} parent=11 // pred_check_branch
        %123 = sbr.rel (%p121) target = $region20
      $region19: #{discriminator_forward.12} parent=11 // pred_region
        _
      $region20: #{discriminator_forward.12} parent=11 // pred_fallthru
        _
    $region12: #{discriminator_forward.12} parent=5 // pred_fallthru
      _
    %p124 = scmp.lt.s32.totalorder %s9, 64
    // Predicated region
    $region21: #{discriminator_forward.12} parent=5 // pred_check
      %p125 = pneg %p124
    $region22: #{discriminator_forward.12} parent=5 // pred_check_branch
      %127 = sbr.rel (%p125) target = $region24
    $region23: #{discriminator_forward.12} parent=5 // pred_region
      // Predicated region
      $region25: #{discriminator_forward.12} parent=23 // pred_check
        %p128 = pneg %p29
      $region26: #{discriminator_forward.12} parent=23 // pred_check_branch
        %130 = sbr.rel (%p128) target = $region28
      $region27: #{discriminator_forward.12} parent=23 // pred_region
        %s131 = smul.u32 64, %s9
        %p132 = scmp.lt.s32.totalorder %s131, 4095
        %s133 = scalar_select %p132, %s131, 4095
        %s134 = smul.addr %s133, 8
        %s135 = scalar_lea.vmem %s0, %s134
        %s136 = smul.u32 64, %s9
      $region28: #{discriminator_forward.12} parent=23 // pred_fallthru
        _
    $region24: #{discriminator_forward.12} parent=5 // pred_fallthru
      _
    %p137 = scmp.le.s32.totalorder 1, %s9
    %p138 = scmp.lt.s32.totalorder %s9, 65
    %p139 = pnand %p137, %p138
    %p140 = pneg %p139
    // Predicated region
    $region29: #{discriminator_forward.12} parent=5 // pred_check
      _
    $region30: #{discriminator_forward.12} parent=5 // pred_check_branch
      %142 = sbr.rel (%p139) target = $region32
    $region31: #{discriminator_forward.12} parent=5 // pred_region
      %s143 = ssub.s32 %s9, 1
      %s144 = smul.u32 64, %s14
      %p145 = scmp.lt.s32.totalorder %s144, 4095
      %s146 = scalar_select %p145, %s144, 4095
      %s147 = smul.addr %s146, 8
      %s148 = scalar_lea.vmem %s0, %s147
      %p149 = pneg %p35
      %p150 = pneg %p32
      %p151 = pneg %p56
      %p152 = pneg %p53
      %p153 = pneg %p77
      %p154 = pneg %p74
      %p155 = pneg %p103
      %p156 = pneg %p100
      %s157 = smul.u32 64, %s14
      %p158 = scmp.lt.s32.totalorder %s157, 4095
      %s159 = scalar_select %p158, %s157, 4095
      %s160 = smul.addr %s159, 8
      %s161 = scalar_lea.vmem %s3, %s160
      %s162 = smul.u32 64, %s14
      %p163 = scmp.lt.s32.totalorder %s162, 4095
      %s164 = scalar_select %p163, %s162, 4095
      %s165 = smul.addr %s164, 8
      %s166 = scalar_lea.vmem %s0, %s165
      %s167 = smul.u32 64, %s14
      %s168 = smul.u32 64, %s14
      %p169 = scmp.lt.s32.totalorder %s168, 4095
      %s170 = scalar_select %p169, %s168, 4095
      %s171 = smul.addr %s170, 8
      %s172 = scalar_lea.vmem %s3, %s171
      %s173 = smul.u32 64, %s14
      %v174 = vld [vmem:[%s166] sm:$0xff]
      %v175 = vld [vmem:[%s166 + $0x8] sm:$0xff]
      %v176 = vld [vmem:[%s166 + $0x10] sm:$0xff]
      %v177 = vld [vmem:[%s166 + $0x18] sm:$0xff]
      %v178 = vld [vmem:[%s166 + $0x20] sm:$0xff]
      %v179 = vld [vmem:[%s166 + $0x28] sm:$0xff]
      %v180 = vld [vmem:[%s166 + $0x30] sm:$0xff]
      %v181 = vld [vmem:[%s166 + $0x38] sm:$0xff]
      %v182 = vld [vmem:[%s166 + $0x40] sm:$0xff]
      %v183 = vld [vmem:[%s166 + $0x48] sm:$0xff]
      %v184 = vld [vmem:[%s166 + $0x50] sm:$0xff]
      %v185 = vld [vmem:[%s166 + $0x58] sm:$0xff]
      %v186 = vld [vmem:[%s166 + $0x60] sm:$0xff]
      %v187 = vld [vmem:[%s166 + $0x68] sm:$0xff]
      %v188 = vld [vmem:[%s166 + $0x70] sm:$0xff]
      %v189 = vld [vmem:[%s166 + $0x78] sm:$0xff]
      %v190 = vld [vmem:[%s166 + $0x80] sm:$0xff]
      %v191 = vld [vmem:[%s166 + $0x88] sm:$0xff]
      %v192 = vld [vmem:[%s166 + $0x90] sm:$0xff]
      %v193 = vld [vmem:[%s166 + $0x98] sm:$0xff]
      %v194 = vld [vmem:[%s166 + $0xa0] sm:$0xff]
      %v195 = vld [vmem:[%s166 + $0xa8] sm:$0xff]
      %v196 = vld [vmem:[%s166 + $0xb0] sm:$0xff]
      %v197 = vld [vmem:[%s166 + $0xb8] sm:$0xff]
      %v198 = vld [vmem:[%s166 + $0xc0] sm:$0xff]
      %v199 = vld [vmem:[%s166 + $0xc8] sm:$0xff]
      %v200 = vld [vmem:[%s166 + $0xd0] sm:$0xff]
      %v201 = vld [vmem:[%s166 + $0xd8] sm:$0xff]
      %v202 = vld [vmem:[%s166 + $0xe0] sm:$0xff]
      %v203 = vld [vmem:[%s166 + $0xe8] sm:$0xff]
      %v204 = vld [vmem:[%s166 + $0xf0] sm:$0xff]
      %v205 = vld [vmem:[%s166 + $0xf8] sm:$0xff]
      %v206 = vld [vmem:[%s166 + $0x100] sm:$0xff]
      %v207 = vld [vmem:[%s166 + $0x108] sm:$0xff]
      %v208 = vld [vmem:[%s166 + $0x110] sm:$0xff]
      %v209 = vld [vmem:[%s166 + $0x118] sm:$0xff]
      %v210 = vld [vmem:[%s166 + $0x120] sm:$0xff]
      %v211 = vld [vmem:[%s166 + $0x128] sm:$0xff]
      %v212 = vld [vmem:[%s166 + $0x130] sm:$0xff]
      %v213 = vld [vmem:[%s166 + $0x138] sm:$0xff]
      %v214 = vld [vmem:[%s166 + $0x140] sm:$0xff]
      %v215 = vld [vmem:[%s166 + $0x148] sm:$0xff]
      %v216 = vld [vmem:[%s166 + $0x150] sm:$0xff]
      %v217 = vld [vmem:[%s166 + $0x158] sm:$0xff]
      %v218 = vld [vmem:[%s166 + $0x160] sm:$0xff]
      %v219 = vld [vmem:[%s166 + $0x168] sm:$0xff]
      %v220 = vld [vmem:[%s166 + $0x170] sm:$0xff]
      %v221 = vld [vmem:[%s166 + $0x178] sm:$0xff]
      %v222 = vld [vmem:[%s166 + $0x180] sm:$0xff]
      %v223 = vld [vmem:[%s166 + $0x188] sm:$0xff]
      %v224 = vld [vmem:[%s166 + $0x190] sm:$0xff]
      %v225 = vld [vmem:[%s166 + $0x198] sm:$0xff]
      %v226 = vld [vmem:[%s166 + $0x1a0] sm:$0xff]
      %v227 = vld [vmem:[%s166 + $0x1a8] sm:$0xff]
      %v228 = vld [vmem:[%s166 + $0x1b0] sm:$0xff]
      %v229 = vld [vmem:[%s166 + $0x1b8] sm:$0xff]
      %v230 = vld [vmem:[%s166 + $0x1c0] sm:$0xff]
      %v231 = vld [vmem:[%s166 + $0x1c8] sm:$0xff]
      %v232 = vld [vmem:[%s166 + $0x1d0] sm:$0xff]
      %v233 = vld [vmem:[%s166 + $0x1d8] sm:$0xff]
      %v234 = vld [vmem:[%s166 + $0x1e0] sm:$0xff]
      %v235 = vld [vmem:[%s166 + $0x1e8] sm:$0xff]
      %v236 = vld [vmem:[%s166 + $0x1f0] sm:$0xff]
      %v237 = vld [vmem:[%s166 + $0x1f8] sm:$0xff]
      %v238 = vld [vmem:[%s1] sm:$0x1]
      %v240 = vlaneseq
      %v241 = vshrl.u32 %v240, 7
      %v242 = vsub.s32 0, %v241
      %v243 = vrot.slane %v238, %v242
      %v245 = vmul.f32 %v174, %v243
      %v246 = vmul.f32 %v175, %v243
      %v247 = vmul.f32 %v176, %v243
      %v248 = vmul.f32 %v177, %v243
      %v249 = vmul.f32 %v178, %v243
      %v250 = vmul.f32 %v179, %v243
      %v251 = vmul.f32 %v180, %v243
      %v252 = vmul.f32 %v181, %v243
      %v253 = vmul.f32 %v182, %v243
      %v254 = vmul.f32 %v183, %v243
      %v255 = vmul.f32 %v184, %v243
      %v256 = vmul.f32 %v185, %v243
      %v257 = vmul.f32 %v186, %v243
      %v258 = vmul.f32 %v187, %v243
      %v259 = vmul.f32 %v188, %v243
      %v260 = vmul.f32 %v189, %v243
      %v261 = vmul.f32 %v190, %v243
      %v262 = vmul.f32 %v191, %v243
      %v263 = vmul.f32 %v192, %v243
      %v264 = vmul.f32 %v193, %v243
      %v265 = vmul.f32 %v194, %v243
      %v266 = vmul.f32 %v195, %v243
      %v267 = vmul.f32 %v196, %v243
      %v268 = vmul.f32 %v197, %v243
      %v269 = vmul.f32 %v198, %v243
      %v270 = vmul.f32 %v199, %v243
      %v271 = vmul.f32 %v200, %v243
      %v272 = vmul.f32 %v201, %v243
      %v273 = vmul.f32 %v202, %v243
      %v274 = vmul.f32 %v203, %v243
      %v275 = vmul.f32 %v204, %v243
      %v276 = vmul.f32 %v205, %v243
      %v277 = vmul.f32 %v206, %v243
      %v278 = vmul.f32 %v207, %v243
      %v279 = vmul.f32 %v208, %v243
      %v280 = vmul.f32 %v209, %v243
      %v281 = vmul.f32 %v210, %v243
      %v282 = vmul.f32 %v211, %v243
      %v283 = vmul.f32 %v212, %v243
      %v284 = vmul.f32 %v213, %v243
      %v285 = vmul.f32 %v214, %v243
      %v286 = vmul.f32 %v215, %v243
      %v287 = vmul.f32 %v216, %v243
      %v288 = vmul.f32 %v217, %v243
      %v289 = vmul.f32 %v218, %v243
      %v290 = vmul.f32 %v219, %v243
      %v291 = vmul.f32 %v220, %v243
      %v292 = vmul.f32 %v221, %v243
      %v293 = vmul.f32 %v222, %v243
      %v294 = vmul.f32 %v223, %v243
      %v295 = vmul.f32 %v224, %v243
      %v296 = vmul.f32 %v225, %v243
      %v297 = vmul.f32 %v226, %v243
      %v298 = vmul.f32 %v227, %v243
      %v299 = vmul.f32 %v228, %v243
      %v300 = vmul.f32 %v229, %v243
      %v301 = vmul.f32 %v230, %v243
      %v302 = vmul.f32 %v231, %v243
      %v303 = vmul.f32 %v232, %v243
      %v304 = vmul.f32 %v233, %v243
      %v305 = vmul.f32 %v234, %v243
      %v306 = vmul.f32 %v235, %v243
      %v307 = vmul.f32 %v236, %v243
      %v308 = vmul.f32 %v237, %v243
      %v309 = vld [vmem:[%s2] sm:$0x1]
      %v311 = vlaneseq
      %v312 = vshrl.u32 %v311, 7
      %v313 = vsub.s32 0, %v312
      %v314 = vrot.slane %v309, %v313
      %v316 = vadd.f32 %v245, %v314
      %v317 = vadd.f32 %v246, %v314
      %v318 = vadd.f32 %v247, %v314
      %v319 = vadd.f32 %v248, %v314
      %v320 = vadd.f32 %v249, %v314
      %v321 = vadd.f32 %v250, %v314
      %v322 = vadd.f32 %v251, %v314
      %v323 = vadd.f32 %v252, %v314
      %v324 = vadd.f32 %v253, %v314
      %v325 = vadd.f32 %v254, %v314
      %v326 = vadd.f32 %v255, %v314
      %v327 = vadd.f32 %v256, %v314
      %v328 = vadd.f32 %v257, %v314
      %v329 = vadd.f32 %v258, %v314
      %v330 = vadd.f32 %v259, %v314
      %v331 = vadd.f32 %v260, %v314
      %v332 = vadd.f32 %v261, %v314
      %v333 = vadd.f32 %v262, %v314
      %v334 = vadd.f32 %v263, %v314
      %v335 = vadd.f32 %v264, %v314
      %v336 = vadd.f32 %v265, %v314
      %v337 = vadd.f32 %v266, %v314
      %v338 = vadd.f32 %v267, %v314
      %v339 = vadd.f32 %v268, %v314
      %v340 = vadd.f32 %v269, %v314
      %v341 = vadd.f32 %v270, %v314
      %v342 = vadd.f32 %v271, %v314
      %v343 = vadd.f32 %v272, %v314
      %v344 = vadd.f32 %v273, %v314
      %v345 = vadd.f32 %v274, %v314
      %v346 = vadd.f32 %v275, %v314
      %v347 = vadd.f32 %v276, %v314
      %v348 = vadd.f32 %v277, %v314
      %v349 = vadd.f32 %v278, %v314
      %v350 = vadd.f32 %v279, %v314
      %v351 = vadd.f32 %v280, %v314
      %v352 = vadd.f32 %v281, %v314
      %v353 = vadd.f32 %v282, %v314
      %v354 = vadd.f32 %v283, %v314
      %v355 = vadd.f32 %v284, %v314
      %v356 = vadd.f32 %v285, %v314
      %v357 = vadd.f32 %v286, %v314
      %v358 = vadd.f32 %v287, %v314
      %v359 = vadd.f32 %v288, %v314
      %v360 = vadd.f32 %v289, %v314
      %v361 = vadd.f32 %v290, %v314
      %v362 = vadd.f32 %v291, %v314
      %v363 = vadd.f32 %v292, %v314
      %v364 = vadd.f32 %v293, %v314
      %v365 = vadd.f32 %v294, %v314
      %v366 = vadd.f32 %v295, %v314
      %v367 = vadd.f32 %v296, %v314
      %v368 = vadd.f32 %v297, %v314
      %v369 = vadd.f32 %v298, %v314
      %v370 = vadd.f32 %v299, %v314
      %v371 = vadd.f32 %v300, %v314
      %v372 = vadd.f32 %v301, %v314
      %v373 = vadd.f32 %v302, %v314
      %v374 = vadd.f32 %v303, %v314
      %v375 = vadd.f32 %v304, %v314
      %v376 = vadd.f32 %v305, %v314
      %v377 = vadd.f32 %v306, %v314
      %v378 = vadd.f32 %v307, %v314
      %v379 = vadd.f32 %v308, %v314
      %vm380 = vcmp.gt.f32.partialorder %v316, 0.0
      %vm381 = vcmp.gt.f32.partialorder %v317, 0.0
      %vm382 = vcmp.gt.f32.partialorder %v318, 0.0
      %vm383 = vcmp.gt.f32.partialorder %v319, 0.0
      %vm384 = vcmp.gt.f32.partialorder %v320, 0.0
      %vm385 = vcmp.gt.f32.partialorder %v321, 0.0
      %vm386 = vcmp.gt.f32.partialorder %v322, 0.0
      %vm387 = vcmp.gt.f32.partialorder %v323, 0.0
      %vm388 = vcmp.gt.f32.partialorder %v324, 0.0
      %vm389 = vcmp.gt.f32.partialorder %v325, 0.0
      %vm390 = vcmp.gt.f32.partialorder %v326, 0.0
      %vm391 = vcmp.gt.f32.partialorder %v327, 0.0
      %vm392 = vcmp.gt.f32.partialorder %v328, 0.0
      %vm393 = vcmp.gt.f32.partialorder %v329, 0.0
      %vm394 = vcmp.gt.f32.partialorder %v330, 0.0
      %vm395 = vcmp.gt.f32.partialorder %v331, 0.0
      %vm396 = vcmp.gt.f32.partialorder %v332, 0.0
      %vm397 = vcmp.gt.f32.partialorder %v333, 0.0
      %vm398 = vcmp.gt.f32.partialorder %v334, 0.0
      %vm399 = vcmp.gt.f32.partialorder %v335, 0.0
      %vm400 = vcmp.gt.f32.partialorder %v336, 0.0
      %vm401 = vcmp.gt.f32.partialorder %v337, 0.0
      %vm402 = vcmp.gt.f32.partialorder %v338, 0.0
      %vm403 = vcmp.gt.f32.partialorder %v339, 0.0
      %vm404 = vcmp.gt.f32.partialorder %v340, 0.0
      %vm405 = vcmp.gt.f32.partialorder %v341, 0.0
      %vm406 = vcmp.gt.f32.partialorder %v342, 0.0
      %vm407 = vcmp.gt.f32.partialorder %v343, 0.0
      %vm408 = vcmp.gt.f32.partialorder %v344, 0.0
      %vm409 = vcmp.gt.f32.partialorder %v345, 0.0
      %vm410 = vcmp.gt.f32.partialorder %v346, 0.0
      %vm411 = vcmp.gt.f32.partialorder %v347, 0.0
      %vm412 = vcmp.gt.f32.partialorder %v348, 0.0
      %vm413 = vcmp.gt.f32.partialorder %v349, 0.0
      %vm414 = vcmp.gt.f32.partialorder %v350, 0.0
      %vm415 = vcmp.gt.f32.partialorder %v351, 0.0
      %vm416 = vcmp.gt.f32.partialorder %v352, 0.0
      %vm417 = vcmp.gt.f32.partialorder %v353, 0.0
      %vm418 = vcmp.gt.f32.partialorder %v354, 0.0
      %vm419 = vcmp.gt.f32.partialorder %v355, 0.0
      %vm420 = vcmp.gt.f32.partialorder %v356, 0.0
      %vm421 = vcmp.gt.f32.partialorder %v357, 0.0
      %vm422 = vcmp.gt.f32.partialorder %v358, 0.0
      %vm423 = vcmp.gt.f32.partialorder %v359, 0.0
      %vm424 = vcmp.gt.f32.partialorder %v360, 0.0
      %vm425 = vcmp.gt.f32.partialorder %v361, 0.0
      %vm426 = vcmp.gt.f32.partialorder %v362, 0.0
      %vm427 = vcmp.gt.f32.partialorder %v363, 0.0
      %vm428 = vcmp.gt.f32.partialorder %v364, 0.0
      %vm429 = vcmp.gt.f32.partialorder %v365, 0.0
      %vm430 = vcmp.gt.f32.partialorder %v366, 0.0
      %vm431 = vcmp.gt.f32.partialorder %v367, 0.0
      %vm432 = vcmp.gt.f32.partialorder %v368, 0.0
      %vm433 = vcmp.gt.f32.partialorder %v369, 0.0
      %vm434 = vcmp.gt.f32.partialorder %v370, 0.0
      %vm435 = vcmp.gt.f32.partialorder %v371, 0.0
      %vm436 = vcmp.gt.f32.partialorder %v372, 0.0
      %vm437 = vcmp.gt.f32.partialorder %v373, 0.0
      %vm438 = vcmp.gt.f32.partialorder %v374, 0.0
      %vm439 = vcmp.gt.f32.partialorder %v375, 0.0
      %vm440 = vcmp.gt.f32.partialorder %v376, 0.0
      %vm441 = vcmp.gt.f32.partialorder %v377, 0.0
      %vm442 = vcmp.gt.f32.partialorder %v378, 0.0
      %vm443 = vcmp.gt.f32.partialorder %v379, 0.0
      %v444 = vmul.f32 %v316, 0.01
      %v445 = vmul.f32 %v317, 0.01
      %v446 = vmul.f32 %v318, 0.01
      %v447 = vmul.f32 %v319, 0.01
      %v448 = vmul.f32 %v320, 0.01
      %v449 = vmul.f32 %v321, 0.01
      %v450 = vmul.f32 %v322, 0.01
      %v451 = vmul.f32 %v323, 0.01
      %v452 = vmul.f32 %v324, 0.01
      %v453 = vmul.f32 %v325, 0.01
      %v454 = vmul.f32 %v326, 0.01
      %v455 = vmul.f32 %v327, 0.01
      %v456 = vmul.f32 %v328, 0.01
      %v457 = vmul.f32 %v329, 0.01
      %v458 = vmul.f32 %v330, 0.01
      %v459 = vmul.f32 %v331, 0.01
      %v460 = vmul.f32 %v332, 0.01
      %v461 = vmul.f32 %v333, 0.01
      %v462 = vmul.f32 %v334, 0.01
      %v463 = vmul.f32 %v335, 0.01
      %v464 = vmul.f32 %v336, 0.01
      %v465 = vmul.f32 %v337, 0.01
      %v466 = vmul.f32 %v338, 0.01
      %v467 = vmul.f32 %v339, 0.01
      %v468 = vmul.f32 %v340, 0.01
      %v469 = vmul.f32 %v341, 0.01
      %v470 = vmul.f32 %v342, 0.01
      %v471 = vmul.f32 %v343, 0.01
      %v472 = vmul.f32 %v344, 0.01
      %v473 = vmul.f32 %v345, 0.01
      %v474 = vmul.f32 %v346, 0.01
      %v475 = vmul.f32 %v347, 0.01
      %v476 = vmul.f32 %v348, 0.01
      %v477 = vmul.f32 %v349, 0.01
      %v478 = vmul.f32 %v350, 0.01
      %v479 = vmul.f32 %v351, 0.01
      %v480 = vmul.f32 %v352, 0.01
      %v481 = vmul.f32 %v353, 0.01
      %v482 = vmul.f32 %v354, 0.01
      %v483 = vmul.f32 %v355, 0.01
      %v484 = vmul.f32 %v356, 0.01
      %v485 = vmul.f32 %v357, 0.01
      %v486 = vmul.f32 %v358, 0.01
      %v487 = vmul.f32 %v359, 0.01
      %v488 = vmul.f32 %v360, 0.01
      %v489 = vmul.f32 %v361, 0.01
      %v490 = vmul.f32 %v362, 0.01
      %v491 = vmul.f32 %v363, 0.01
      %v492 = vmul.f32 %v364, 0.01
      %v493 = vmul.f32 %v365, 0.01
      %v494 = vmul.f32 %v366, 0.01
      %v495 = vmul.f32 %v367, 0.01
      %v496 = vmul.f32 %v368, 0.01
      %v497 = vmul.f32 %v369, 0.01
      %v498 = vmul.f32 %v370, 0.01
      %v499 = vmul.f32 %v371, 0.01
      %v500 = vmul.f32 %v372, 0.01
      %v501 = vmul.f32 %v373, 0.01
      %v502 = vmul.f32 %v374, 0.01
      %v503 = vmul.f32 %v375, 0.01
      %v504 = vmul.f32 %v376, 0.01
      %v505 = vmul.f32 %v377, 0.01
      %v506 = vmul.f32 %v378, 0.01
      %v507 = vmul.f32 %v379, 0.01
      %v508 = vsel %vm380, %v316, %v444
      %v509 = vsel %vm381, %v317, %v445
      %v510 = vsel %vm382, %v318, %v446
      %v511 = vsel %vm383, %v319, %v447
      %v512 = vsel %vm384, %v320, %v448
      %v513 = vsel %vm385, %v321, %v449
      %v514 = vsel %vm386, %v322, %v450
      %v515 = vsel %vm387, %v323, %v451
      %v516 = vsel %vm388, %v324, %v452
      %v517 = vsel %vm389, %v325, %v453
      %v518 = vsel %vm390, %v326, %v454
      %v519 = vsel %vm391, %v327, %v455
      %v520 = vsel %vm392, %v328, %v456
      %v521 = vsel %vm393, %v329, %v457
      %v522 = vsel %vm394, %v330, %v458
      %v523 = vsel %vm395, %v331, %v459
      %v524 = vsel %vm396, %v332, %v460
      %v525 = vsel %vm397, %v333, %v461
      %v526 = vsel %vm398, %v334, %v462
      %v527 = vsel %vm399, %v335, %v463
      %v528 = vsel %vm400, %v336, %v464
      %v529 = vsel %vm401, %v337, %v465
      %v530 = vsel %vm402, %v338, %v466
      %v531 = vsel %vm403, %v339, %v467
      %v532 = vsel %vm404, %v340, %v468
      %v533 = vsel %vm405, %v341, %v469
      %v534 = vsel %vm406, %v342, %v470
      %v535 = vsel %vm407, %v343, %v471
      %v536 = vsel %vm408, %v344, %v472
      %v537 = vsel %vm409, %v345, %v473
      %v538 = vsel %vm410, %v346, %v474
      %v539 = vsel %vm411, %v347, %v475
      %v540 = vsel %vm412, %v348, %v476
      %v541 = vsel %vm413, %v349, %v477
      %v542 = vsel %vm414, %v350, %v478
      %v543 = vsel %vm415, %v351, %v479
      %v544 = vsel %vm416, %v352, %v480
      %v545 = vsel %vm417, %v353, %v481
      %v546 = vsel %vm418, %v354, %v482
      %v547 = vsel %vm419, %v355, %v483
      %v548 = vsel %vm420, %v356, %v484
      %v549 = vsel %vm421, %v357, %v485
      %v550 = vsel %vm422, %v358, %v486
      %v551 = vsel %vm423, %v359, %v487
      %v552 = vsel %vm424, %v360, %v488
      %v553 = vsel %vm425, %v361, %v489
      %v554 = vsel %vm426, %v362, %v490
      %v555 = vsel %vm427, %v363, %v491
      %v556 = vsel %vm428, %v364, %v492
      %v557 = vsel %vm429, %v365, %v493
      %v558 = vsel %vm430, %v366, %v494
      %v559 = vsel %vm431, %v367, %v495
      %v560 = vsel %vm432, %v368, %v496
      %v561 = vsel %vm433, %v369, %v497
      %v562 = vsel %vm434, %v370, %v498
      %v563 = vsel %vm435, %v371, %v499
      %v564 = vsel %vm436, %v372, %v500
      %v565 = vsel %vm437, %v373, %v501
      %v566 = vsel %vm438, %v374, %v502
      %v567 = vsel %vm439, %v375, %v503
      %v568 = vsel %vm440, %v376, %v504
      %v569 = vsel %vm441, %v377, %v505
      %v570 = vsel %vm442, %v378, %v506
      %v571 = vsel %vm443, %v379, %v507
      %572 = vst [vmem:[%s172] sm:$0xff] %v508
      %573 = vst [vmem:[%s172 + $0x8] sm:$0xff] %v509
      %574 = vst [vmem:[%s172 + $0x10] sm:$0xff] %v510
      %575 = vst [vmem:[%s172 + $0x18] sm:$0xff] %v511
      %576 = vst [vmem:[%s172 + $0x20] sm:$0xff] %v512
      %577 = vst [vmem:[%s172 + $0x28] sm:$0xff] %v513
      %578 = vst [vmem:[%s172 + $0x30] sm:$0xff] %v514
      %579 = vst [vmem:[%s172 + $0x38] sm:$0xff] %v515
      %580 = vst [vmem:[%s172 + $0x40] sm:$0xff] %v516
      %581 = vst [vmem:[%s172 + $0x48] sm:$0xff] %v517
      %582 = vst [vmem:[%s172 + $0x50] sm:$0xff] %v518
      %583 = vst [vmem:[%s172 + $0x58] sm:$0xff] %v519
      %584 = vst [vmem:[%s172 + $0x60] sm:$0xff] %v520
      %585 = vst [vmem:[%s172 + $0x68] sm:$0xff] %v521
      %586 = vst [vmem:[%s172 + $0x70] sm:$0xff] %v522
      %587 = vst [vmem:[%s172 + $0x78] sm:$0xff] %v523
      %588 = vst [vmem:[%s172 + $0x80] sm:$0xff] %v524
      %589 = vst [vmem:[%s172 + $0x88] sm:$0xff] %v525
      %590 = vst [vmem:[%s172 + $0x90] sm:$0xff] %v526
      %591 = vst [vmem:[%s172 + $0x98] sm:$0xff] %v527
      %592 = vst [vmem:[%s172 + $0xa0] sm:$0xff] %v528
      %593 = vst [vmem:[%s172 + $0xa8] sm:$0xff] %v529
      %594 = vst [vmem:[%s172 + $0xb0] sm:$0xff] %v530
      %595 = vst [vmem:[%s172 + $0xb8] sm:$0xff] %v531
      %596 = vst [vmem:[%s172 + $0xc0] sm:$0xff] %v532
      %597 = vst [vmem:[%s172 + $0xc8] sm:$0xff] %v533
      %598 = vst [vmem:[%s172 + $0xd0] sm:$0xff] %v534
      %599 = vst [vmem:[%s172 + $0xd8] sm:$0xff] %v535
      %600 = vst [vmem:[%s172 + $0xe0] sm:$0xff] %v536
      %601 = vst [vmem:[%s172 + $0xe8] sm:$0xff] %v537
      %602 = vst [vmem:[%s172 + $0xf0] sm:$0xff] %v538
      %603 = vst [vmem:[%s172 + $0xf8] sm:$0xff] %v539
      %604 = vst [vmem:[%s172 + $0x100] sm:$0xff] %v540
      %605 = vst [vmem:[%s172 + $0x108] sm:$0xff] %v541
      %606 = vst [vmem:[%s172 + $0x110] sm:$0xff] %v542
      %607 = vst [vmem:[%s172 + $0x118] sm:$0xff] %v543
      %608 = vst [vmem:[%s172 + $0x120] sm:$0xff] %v544
      %609 = vst [vmem:[%s172 + $0x128] sm:$0xff] %v545
      %610 = vst [vmem:[%s172 + $0x130] sm:$0xff] %v546
      %611 = vst [vmem:[%s172 + $0x138] sm:$0xff] %v547
      %612 = vst [vmem:[%s172 + $0x140] sm:$0xff] %v548
      %613 = vst [vmem:[%s172 + $0x148] sm:$0xff] %v549
      %614 = vst [vmem:[%s172 + $0x150] sm:$0xff] %v550
      %615 = vst [vmem:[%s172 + $0x158] sm:$0xff] %v551
      %616 = vst [vmem:[%s172 + $0x160] sm:$0xff] %v552
      %617 = vst [vmem:[%s172 + $0x168] sm:$0xff] %v553
      %618 = vst [vmem:[%s172 + $0x170] sm:$0xff] %v554
      %619 = vst [vmem:[%s172 + $0x178] sm:$0xff] %v555
      %620 = vst [vmem:[%s172 + $0x180] sm:$0xff] %v556
      %621 = vst [vmem:[%s172 + $0x188] sm:$0xff] %v557
      %622 = vst [vmem:[%s172 + $0x190] sm:$0xff] %v558
      %623 = vst [vmem:[%s172 + $0x198] sm:$0xff] %v559
      %624 = vst [vmem:[%s172 + $0x1a0] sm:$0xff] %v560
      %625 = vst [vmem:[%s172 + $0x1a8] sm:$0xff] %v561
      %626 = vst [vmem:[%s172 + $0x1b0] sm:$0xff] %v562
      %627 = vst [vmem:[%s172 + $0x1b8] sm:$0xff] %v563
      %628 = vst [vmem:[%s172 + $0x1c0] sm:$0xff] %v564
      %629 = vst [vmem:[%s172 + $0x1c8] sm:$0xff] %v565
      %630 = vst [vmem:[%s172 + $0x1d0] sm:$0xff] %v566
      %631 = vst [vmem:[%s172 + $0x1d8] sm:$0xff] %v567
      %632 = vst [vmem:[%s172 + $0x1e0] sm:$0xff] %v568
      %633 = vst [vmem:[%s172 + $0x1e8] sm:$0xff] %v569
      %634 = vst [vmem:[%s172 + $0x1f0] sm:$0xff] %v570
      %635 = vst [vmem:[%s172 + $0x1f8] sm:$0xff] %v571
      %s636 = smul.u32 64, %s14
      %p637 = scmp.lt.s32.totalorder %s636, 4095
      %s638 = scalar_select %p637, %s636, 4095
      %s639 = smul.addr %s638, 8
      %s640 = scalar_lea.vmem %s3, %s639
      // Predicated region
      $region33: #{discriminator_forward.12} parent=31 // pred_check
        %p641 = pneg %p100
      $region34: #{discriminator_forward.12} parent=31 // pred_check_branch
        %643 = sbr.rel (%p641) target = $region36
      $region35: #{discriminator_forward.12} parent=31 // pred_region
        %s644 = smul.u32 64, %s14
      $region36: #{discriminator_forward.12} parent=31 // pred_fallthru
        _
    $region32: #{discriminator_forward.12} parent=5 // pred_fallthru
      _
    %p645 = scmp.le.s32.totalorder 2, %s9
    // Predicated region
    $region37: #{discriminator_forward.12} parent=5 // pred_check
      %p646 = pneg %p645
    $region38: #{discriminator_forward.12} parent=5 // pred_check_branch
      %648 = sbr.rel (%p646) target = $region40
    $region39: #{discriminator_forward.12} parent=5 // pred_region
      %s649 = ssub.s32 %s9, 2
      // Predicated region
      $region41: #{discriminator_forward.12} parent=39 // pred_check
        %p650 = pneg %p106
      $region42: #{discriminator_forward.12} parent=39 // pred_check_branch
        %652 = sbr.rel (%p650) target = $region44
      $region43: #{discriminator_forward.12} parent=39 // pred_region
        %s653 = smul.u32 64, %s15
        %p654 = scmp.lt.s32.totalorder %s653, 4095
        %s655 = scalar_select %p654, %s653, 4095
        %s656 = smul.addr %s655, 8
        %s657 = scalar_lea.vmem %s3, %s656
      $region44: #{discriminator_forward.12} parent=39 // pred_fallthru
        _
    $region40: #{discriminator_forward.12} parent=5 // pred_fallthru
      _
  $region6: #{discriminator_forward.12} parent=0 // loop_footer
    %s13 = sadd.s32 1, %s9
  $region7: #{discriminator_forward.12} parent=0 // loop_footer_branch
    %8 = sbr.rel target = $region3
  $region8: #{discriminator_forward.12} parent=0 // loop_exit
    _

// kernel: discriminator_forward.13
$region0: #{discriminator_forward.13}
  #allocation0 [shape = 'u32[]', space=smem, size = 0x4, offset = 0x4, fixed_abs, tag = 'smem constant byte address 0x4 - core index']
  #allocation1 [shape = 'u32[144,128]{1,0:T(1,128)}', space=vmem, size = 0x12000, scoped, tag = 'internal scratch']
  %s0 = inlined_call_operand.vmem [shape: bf16[8192,256], index: 0, kind: input, shape index: {}]
  %s1 = inlined_call_operand.vmem [shape: bf16[256,128], index: 1, kind: input, shape index: {}]
  %s2 = inlined_call_operand.vmem [shape: f32[8192,128], index: 2, kind: output, shape index: {0}]
  %s3 = inlined_call_operand.vmem [shape: f32[16,8,128], index: 3, kind: output, shape index: {1}]
  %4 = xla_tuple %s2, %s3
  %s5 = sld [smem:[#allocation0]]
  $region49: #{discriminator_forward.13} parent=0
    _
  %s7 = ssub.s32 1, %s5
  %s8 = scalar_select 0, %s7, %s5
  loop: start=0, step=1, limit=18
  $region2: #{discriminator_forward.13} parent=0 // loop_pre_header
    _
  $region3: #{discriminator_forward.13} parent=0 // loop_header
    %s10 = sphi 0, %s14
    %p11 = scmp.ge.s32.totalorder %s10, 18
    %s20 = sphi 0, %s22
    %s23 = sphi 0, %s20
    %s24 = sphi 0, %s23
    %s40 = sphi 0, %s24
    %s44 = sphi 0, %s44
    %s46 = sphi 0, %s44
    %s47 = sphi 0, %s46
    %s61 = sphi 0, %s47
    %s67 = sphi 0, %s69
    %s70 = sphi 0, %s67
    %s71 = sphi 0, %s70
    %s87 = sphi 0, %s71
    %s93 = sphi 0, %s95
    %s96 = sphi 0, %s93
    %s97 = sphi 0, %s96
    %s113 = sphi 0, %s97
  $region4: #{discriminator_forward.13} parent=0 // loop_header_branch
    %13 = sbr.rel (%p11) target = $region8
  $region5: #{discriminator_forward.13} parent=0 // loop_body
    %s15 = ssub.s32 %s10, 1
    %s16 = ssub.s32 %s10, 2
    %s17 = sadd.s32 %s10, 1
    %s18 = ssub.s32 %s10, %s17
    %p19 = scmp.eq.s32.totalorder %s18, 0
    %s21 = sadd.s32 %s20, 1
    %s22 = scalar_select %p19, %s20, %s21
    %p25 = pneg %p19
    %p26 = scmp.eq.s32.totalorder %s10, 15
    %p27 = por %p25, %p26
    %p28 = scmp.ne.s32.totalorder %s20, %s23
    %p29 = scmp.eq.s32.totalorder %s10, 0
    %p30 = por %p28, %p29
    %p31 = scmp.ne.s32.totalorder %s20, %s23
    %p32 = scmp.eq.s32.totalorder %s15, 15
    %p33 = por %p31, %p32
    %p34 = scmp.ne.s32.totalorder %s23, %s24
    %p35 = scmp.eq.s32.totalorder %s15, 0
    %p36 = por %p34, %p35
    %p37 = scmp.ne.s32.totalorder %s23, %s24
    %p38 = scmp.eq.s32.totalorder %s16, 15
    %p39 = por %p37, %p38
    %p41 = scmp.ne.s32.totalorder %s24, %s40
    %p42 = scmp.eq.s32.totalorder %s16, 0
    %p43 = por %p41, %p42
    %s45 = sadd.s32 %s44, 1
    %p48 = scmp.eq.s32.totalorder %s10, 15
    %p49 = scmp.ne.s32.totalorder %s44, %s46
    %p50 = scmp.eq.s32.totalorder %s10, 0
    %p51 = por %p49, %p50
    %p52 = scmp.ne.s32.totalorder %s44, %s46
    %p53 = scmp.eq.s32.totalorder %s15, 15
    %p54 = por %p52, %p53
    %p55 = scmp.ne.s32.totalorder %s46, %s47
    %p56 = scmp.eq.s32.totalorder %s15, 0
    %p57 = por %p55, %p56
    %p58 = scmp.ne.s32.totalorder %s46, %s47
    %p59 = scmp.eq.s32.totalorder %s16, 15
    %p60 = por %p58, %p59
    %p62 = scmp.ne.s32.totalorder %s47, %s61
    %p63 = scmp.eq.s32.totalorder %s16, 0
    %p64 = por %p62, %p63
    %s65 = ssub.s32 %s10, %s17
    %p66 = scmp.eq.s32.totalorder %s65, 0
    %s68 = sadd.s32 %s67, 1
    %s69 = scalar_select %p66, %s67, %s68
    %p72 = pneg %p66
    %p73 = scmp.eq.s32.totalorder %s10, 15
    %p74 = por %p72, %p73
    %p75 = scmp.ne.s32.totalorder %s67, %s70
    %p76 = scmp.eq.s32.totalorder %s10, 0
    %p77 = por %p75, %p76
    %p78 = scmp.ne.s32.totalorder %s67, %s70
    %p79 = scmp.eq.s32.totalorder %s15, 15
    %p80 = por %p78, %p79
    %p81 = scmp.ne.s32.totalorder %s70, %s71
    %p82 = scmp.eq.s32.totalorder %s15, 0
    %p83 = por %p81, %p82
    %p84 = scmp.ne.s32.totalorder %s70, %s71
    %p85 = scmp.eq.s32.totalorder %s16, 15
    %p86 = por %p84, %p85
    %p88 = scmp.ne.s32.totalorder %s71, %s87
    %p89 = scmp.eq.s32.totalorder %s16, 0
    %p90 = por %p88, %p89
    %s91 = ssub.s32 %s10, %s17
    %p92 = scmp.eq.s32.totalorder %s91, 0
    %s94 = sadd.s32 %s93, 1
    %s95 = scalar_select %p92, %s93, %s94
    %p98 = pneg %p92
    %p99 = scmp.eq.s32.totalorder %s10, 15
    %p100 = por %p98, %p99
    %p101 = scmp.ne.s32.totalorder %s93, %s96
    %p102 = scmp.eq.s32.totalorder %s10, 0
    %p103 = por %p101, %p102
    %p104 = scmp.ne.s32.totalorder %s93, %s96
    %p105 = scmp.eq.s32.totalorder %s15, 15
    %p106 = por %p104, %p105
    %p107 = scmp.ne.s32.totalorder %s96, %s97
    %p108 = scmp.eq.s32.totalorder %s15, 0
    %p109 = por %p107, %p108
    %p110 = scmp.ne.s32.totalorder %s96, %s97
    %p111 = scmp.eq.s32.totalorder %s16, 15
    %p112 = por %p110, %p111
    %p114 = scmp.ne.s32.totalorder %s97, %s113
    %p115 = scmp.eq.s32.totalorder %s16, 0
    %p116 = por %p114, %p115
    %p117 = scmp.le.s32.totalorder 1, %s10
    %p118 = scmp.lt.s32.totalorder %s10, 17
    %p119 = pnand %p117, %p118
    %p120 = pneg %p119
    // Predicated region
    $region9: #{discriminator_forward.13} parent=5 // pred_check
      _
    $region10: #{discriminator_forward.13} parent=5 // pred_check_branch
      %122 = sbr.rel (%p119) target = $region12
    $region11: #{discriminator_forward.13} parent=5 // pred_region
      %s123 = ssub.s32 %s10, 1
      // Predicated region
      $region13: #{discriminator_forward.13} parent=11 // pred_check
        %p124 = pneg %p57
      $region14: #{discriminator_forward.13} parent=11 // pred_check_branch
        %126 = sbr.rel (%p124) target = $region16
      $region15: #{discriminator_forward.13} parent=11 // pred_region
        _
      $region16: #{discriminator_forward.13} parent=11 // pred_fallthru
        _
    $region12: #{discriminator_forward.13} parent=5 // pred_fallthru
      _
    %p127 = scmp.lt.s32.totalorder %s10, 16
    // Predicated region
    $region17: #{discriminator_forward.13} parent=5 // pred_check
      %p128 = pneg %p127
    $region18: #{discriminator_forward.13} parent=5 // pred_check_branch
      %130 = sbr.rel (%p128) target = $region20
    $region19: #{discriminator_forward.13} parent=5 // pred_region
      // Predicated region
      $region21: #{discriminator_forward.13} parent=19 // pred_check
        %p131 = pneg %p30
      $region22: #{discriminator_forward.13} parent=19 // pred_check_branch
        %133 = sbr.rel (%p131) target = $region24
      $region23: #{discriminator_forward.13} parent=19 // pred_region
        %s134 = smul.u32 64, %s10
        %p135 = scmp.lt.s32.totalorder %s134, 1023
        %s136 = scalar_select %p135, %s134, 1023
        %s137 = smul.addr %s136, 2
        %s138 = smul.addr %s137, 4
        %s139 = scalar_lea.vmem %s0, %s138
        %s140 = smul.u32 64, %s10
      $region24: #{discriminator_forward.13} parent=19 // pred_fallthru
        _
    $region20: #{discriminator_forward.13} parent=5 // pred_fallthru
      _
    %p141 = scmp.le.s32.totalorder 1, %s10
    %p142 = scmp.lt.s32.totalorder %s10, 17
    %p143 = pnand %p141, %p142
    %p144 = pneg %p143
    // Predicated region
    $region25: #{discriminator_forward.13} parent=5 // pred_check
      _
    $region26: #{discriminator_forward.13} parent=5 // pred_check_branch
      %146 = sbr.rel (%p143) target = $region28
    $region27: #{discriminator_forward.13} parent=5 // pred_region
      %s147 = ssub.s32 %s10, 1
      %s148 = smul.u32 64, %s15
      %p149 = scmp.lt.s32.totalorder %s148, 1023
      %s150 = scalar_select %p149, %s148, 1023
      %s151 = smul.addr %s150, 2
      %s152 = smul.addr %s151, 4
      %s153 = scalar_lea.vmem %s0, %s152
      %p154 = pneg %p36
      %p155 = pneg %p33
      %p156 = pneg %p57
      %p157 = pneg %p54
      %p158 = pneg %p83
      %p159 = pneg %p80
      %s160 = smul.u32 64, %s15
      %p161 = scmp.lt.s32.totalorder %s160, 1023
      %s162 = scalar_select %p161, %s160, 1023
      %s163 = smul.addr %s162, 8
      %s164 = scalar_lea.vmem %s2, %s163
      %p165 = pneg %p109
      %p166 = pneg %p106
      %p167 = scmp.lt.s32.totalorder %s15, 15
      %s168 = scalar_select %p167, %s15, 15
      %s169 = smul.addr %s168, 8
      %s170 = scalar_lea.vmem %s3, %s169
      %s171 = smul.u32 64, %s15
      %p172 = scmp.lt.s32.totalorder %s171, 1023
      %s173 = scalar_select %p172, %s171, 1023
      %s174 = smul.addr %s173, 2
      %s175 = smul.addr %s174, 4
      %s176 = scalar_lea.vmem %s0, %s175
      %s177 = smul.u32 64, %s15
      %s178 = smul.u32 64, %s15
      %p179 = scmp.lt.s32.totalorder %s178, 1023
      %s180 = scalar_select %p179, %s178, 1023
      %s181 = smul.addr %s180, 8
      %s182 = scalar_lea.vmem %s2, %s181
      %s183 = smul.u32 64, %s15
      %p184 = scmp.lt.s32.totalorder %s15, 15
      %s185 = scalar_select %p184, %s15, 15
      %s186 = smul.addr %s185, 8
      %s187 = scalar_lea.vmem %s3, %s186
      %v189 = vld [vmem:[%s176] sm:$0xff]
      %v190 = vld [vmem:[%s176 + $0x8] sm:$0xff]
      %v191 = vld [vmem:[%s176 + $0x10] sm:$0xff]
      %v192 = vld [vmem:[%s176 + $0x18] sm:$0xff]
      %v193 = vld [vmem:[%s176 + $0x20] sm:$0xff]
      %v194 = vld [vmem:[%s176 + $0x28] sm:$0xff]
      %v195 = vld [vmem:[%s176 + $0x30] sm:$0xff]
      %v196 = vld [vmem:[%s176 + $0x38] sm:$0xff]
      %v197 = vld [vmem:[%s176 + $0x40] sm:$0xff]
      %v198 = vld [vmem:[%s176 + $0x48] sm:$0xff]
      %v199 = vld [vmem:[%s176 + $0x50] sm:$0xff]
      %v200 = vld [vmem:[%s176 + $0x58] sm:$0xff]
      %v201 = vld [vmem:[%s176 + $0x60] sm:$0xff]
      %v202 = vld [vmem:[%s176 + $0x68] sm:$0xff]
      %v203 = vld [vmem:[%s176 + $0x70] sm:$0xff]
      %v204 = vld [vmem:[%s176 + $0x78] sm:$0xff]
      %v205 = vld [vmem:[%s176 + $0x80] sm:$0xff]
      %v206 = vld [vmem:[%s176 + $0x88] sm:$0xff]
      %v207 = vld [vmem:[%s176 + $0x90] sm:$0xff]
      %v208 = vld [vmem:[%s176 + $0x98] sm:$0xff]
      %v209 = vld [vmem:[%s176 + $0xa0] sm:$0xff]
      %v210 = vld [vmem:[%s176 + $0xa8] sm:$0xff]
      %v211 = vld [vmem:[%s176 + $0xb0] sm:$0xff]
      %v212 = vld [vmem:[%s176 + $0xb8] sm:$0xff]
      %v213 = vld [vmem:[%s176 + $0xc0] sm:$0xff]
      %v214 = vld [vmem:[%s176 + $0xc8] sm:$0xff]
      %v215 = vld [vmem:[%s176 + $0xd0] sm:$0xff]
      %v216 = vld [vmem:[%s176 + $0xd8] sm:$0xff]
      %v217 = vld [vmem:[%s176 + $0xe0] sm:$0xff]
      %v218 = vld [vmem:[%s176 + $0xe8] sm:$0xff]
      %v219 = vld [vmem:[%s176 + $0xf0] sm:$0xff]
      %v220 = vld [vmem:[%s176 + $0xf8] sm:$0xff]
      %v221 = vld [vmem:[%s176 + $0x100] sm:$0xff]
      %v222 = vld [vmem:[%s176 + $0x108] sm:$0xff]
      %v223 = vld [vmem:[%s176 + $0x110] sm:$0xff]
      %v224 = vld [vmem:[%s176 + $0x118] sm:$0xff]
      %v225 = vld [vmem:[%s176 + $0x120] sm:$0xff]
      %v226 = vld [vmem:[%s176 + $0x128] sm:$0xff]
      %v227 = vld [vmem:[%s176 + $0x130] sm:$0xff]
      %v228 = vld [vmem:[%s176 + $0x138] sm:$0xff]
      %v229 = vld [vmem:[%s176 + $0x140] sm:$0xff]
      %v230 = vld [vmem:[%s176 + $0x148] sm:$0xff]
      %v231 = vld [vmem:[%s176 + $0x150] sm:$0xff]
      %v232 = vld [vmem:[%s176 + $0x158] sm:$0xff]
      %v233 = vld [vmem:[%s176 + $0x160] sm:$0xff]
      %v234 = vld [vmem:[%s176 + $0x168] sm:$0xff]
      %v235 = vld [vmem:[%s176 + $0x170] sm:$0xff]
      %v236 = vld [vmem:[%s176 + $0x178] sm:$0xff]
      %v237 = vld [vmem:[%s176 + $0x180] sm:$0xff]
      %v238 = vld [vmem:[%s176 + $0x188] sm:$0xff]
      %v239 = vld [vmem:[%s176 + $0x190] sm:$0xff]
      %v240 = vld [vmem:[%s176 + $0x198] sm:$0xff]
      %v241 = vld [vmem:[%s176 + $0x1a0] sm:$0xff]
      %v242 = vld [vmem:[%s176 + $0x1a8] sm:$0xff]
      %v243 = vld [vmem:[%s176 + $0x1b0] sm:$0xff]
      %v244 = vld [vmem:[%s176 + $0x1b8] sm:$0xff]
      %v245 = vld [vmem:[%s176 + $0x1c0] sm:$0xff]
      %v246 = vld [vmem:[%s176 + $0x1c8] sm:$0xff]
      %v247 = vld [vmem:[%s176 + $0x1d0] sm:$0xff]
      %v248 = vld [vmem:[%s176 + $0x1d8] sm:$0xff]
      %v249 = vld [vmem:[%s176 + $0x1e0] sm:$0xff]
      %v250 = vld [vmem:[%s176 + $0x1e8] sm:$0xff]
      %v251 = vld [vmem:[%s176 + $0x1f0] sm:$0xff]
      %v252 = vld [vmem:[%s176 + $0x1f8] sm:$0xff]
      %v253 = vld [vmem:[%s1] sm:$0xf]
      %v254 = vld [vmem:[%s1 + $0x4] sm:$0xf]
      %v255 = vld [vmem:[%s1 + $0x8] sm:$0xf]
      %v256 = vld [vmem:[%s1 + $0xc] sm:$0xf]
      %v257 = vld [vmem:[%s1 + $0x10] sm:$0xf]
      %v258 = vld [vmem:[%s1 + $0x14] sm:$0xf]
      %v259 = vld [vmem:[%s1 + $0x18] sm:$0xf]
      %v260 = vld [vmem:[%s1 + $0x1c] sm:$0xf]
      %v261 = vld [vmem:[%s1 + $0x20] sm:$0xf]
      %v262 = vld [vmem:[%s1 + $0x24] sm:$0xf]
      %v263 = vld [vmem:[%s1 + $0x28] sm:$0xf]
      %v264 = vld [vmem:[%s1 + $0x2c] sm:$0xf]
      %v265 = vld [vmem:[%s1 + $0x30] sm:$0xf]
      %v266 = vld [vmem:[%s1 + $0x34] sm:$0xf]
      %v267 = vld [vmem:[%s1 + $0x38] sm:$0xf]
      %v268 = vld [vmem:[%s1 + $0x3c] sm:$0xf]
      %v269 = vld [vmem:[%s1 + $0x40] sm:$0xf]
      %v270 = vld [vmem:[%s1 + $0x44] sm:$0xf]
      %v271 = vld [vmem:[%s1 + $0x48] sm:$0xf]
      %v272 = vld [vmem:[%s1 + $0x4c] sm:$0xf]
      %v273 = vld [vmem:[%s1 + $0x50] sm:$0xf]
      %v274 = vld [vmem:[%s1 + $0x54] sm:$0xf]
      %v275 = vld [vmem:[%s1 + $0x58] sm:$0xf]
      %v276 = vld [vmem:[%s1 + $0x5c] sm:$0xf]
      %v277 = vld [vmem:[%s1 + $0x60] sm:$0xf]
      %v278 = vld [vmem:[%s1 + $0x64] sm:$0xf]
      %v279 = vld [vmem:[%s1 + $0x68] sm:$0xf]
      %v280 = vld [vmem:[%s1 + $0x6c] sm:$0xf]
      %v281 = vld [vmem:[%s1 + $0x70] sm:$0xf]
      %v282 = vld [vmem:[%s1 + $0x74] sm:$0xf]
      %v283 = vld [vmem:[%s1 + $0x78] sm:$0xf]
      %v284 = vld [vmem:[%s1 + $0x7c] sm:$0xf]
      %v349 = vunpack.c.l.b16 %v189
      %v350 = vunpack.c.h.b16 %v189
      %v351 = vunpack.c.l.b16 %v190
      %v352 = vunpack.c.h.b16 %v190
      %v353 = vunpack.c.l.b16 %v191
      %v354 = vunpack.c.h.b16 %v191
      %v355 = vunpack.c.l.b16 %v192
      %v356 = vunpack.c.h.b16 %v192
      %v357 = vunpack.c.l.b16 %v193
      %v358 = vunpack.c.h.b16 %v193
      %v359 = vunpack.c.l.b16 %v194
      %v360 = vunpack.c.h.b16 %v194
      %v361 = vunpack.c.l.b16 %v195
      %v362 = vunpack.c.h.b16 %v195
      %v363 = vunpack.c.l.b16 %v196
      %v364 = vunpack.c.h.b16 %v196
      %v365 = vunpack.c.l.b16 %v197
      %v366 = vunpack.c.h.b16 %v197
      %v367 = vunpack.c.l.b16 %v198
      %v368 = vunpack.c.h.b16 %v198
      %v369 = vunpack.c.l.b16 %v199
      %v370 = vunpack.c.h.b16 %v199
      %v371 = vunpack.c.l.b16 %v200
      %v372 = vunpack.c.h.b16 %v200
      %v373 = vunpack.c.l.b16 %v201
      %v374 = vunpack.c.h.b16 %v201
      %v375 = vunpack.c.l.b16 %v202
      %v376 = vunpack.c.h.b16 %v202
      %v377 = vunpack.c.l.b16 %v203
      %v378 = vunpack.c.h.b16 %v203
      %v379 = vunpack.c.l.b16 %v204
      %v380 = vunpack.c.h.b16 %v204
      %v381 = vunpack.c.l.b16 %v205
      %v382 = vunpack.c.h.b16 %v205
      %v383 = vunpack.c.l.b16 %v206
      %v384 = vunpack.c.h.b16 %v206
      %v385 = vunpack.c.l.b16 %v207
      %v386 = vunpack.c.h.b16 %v207
      %v387 = vunpack.c.l.b16 %v208
      %v388 = vunpack.c.h.b16 %v208
      %v389 = vunpack.c.l.b16 %v209
      %v390 = vunpack.c.h.b16 %v209
      %v391 = vunpack.c.l.b16 %v210
      %v392 = vunpack.c.h.b16 %v210
      %v393 = vunpack.c.l.b16 %v211
      %v394 = vunpack.c.h.b16 %v211
      %v395 = vunpack.c.l.b16 %v212
      %v396 = vunpack.c.h.b16 %v212
      %v397 = vunpack.c.l.b16 %v213
      %v398 = vunpack.c.h.b16 %v213
      %v399 = vunpack.c.l.b16 %v214
      %v400 = vunpack.c.h.b16 %v214
      %v401 = vunpack.c.l.b16 %v215
      %v402 = vunpack.c.h.b16 %v215
      %v403 = vunpack.c.l.b16 %v216
      %v404 = vunpack.c.h.b16 %v216
      %v405 = vunpack.c.l.b16 %v217
      %v406 = vunpack.c.h.b16 %v217
      %v407 = vunpack.c.l.b16 %v218
      %v408 = vunpack.c.h.b16 %v218
      %v409 = vunpack.c.l.b16 %v219
      %v410 = vunpack.c.h.b16 %v219
      %v411 = vunpack.c.l.b16 %v220
      %v412 = vunpack.c.h.b16 %v220
      %v413 = vunpack.c.l.b16 %v221
      %v414 = vunpack.c.h.b16 %v221
      %v415 = vunpack.c.l.b16 %v222
      %v416 = vunpack.c.h.b16 %v222
      %v417 = vunpack.c.l.b16 %v223
      %v418 = vunpack.c.h.b16 %v223
      %v419 = vunpack.c.l.b16 %v224
      %v420 = vunpack.c.h.b16 %v224
      %v421 = vunpack.c.l.b16 %v225
      %v422 = vunpack.c.h.b16 %v225
      %v423 = vunpack.c.l.b16 %v226
      %v424 = vunpack.c.h.b16 %v226
      %v425 = vunpack.c.l.b16 %v227
      %v426 = vunpack.c.h.b16 %v227
      %v427 = vunpack.c.l.b16 %v228
      %v428 = vunpack.c.h.b16 %v228
      %v429 = vunpack.c.l.b16 %v229
      %v430 = vunpack.c.h.b16 %v229
      %v431 = vunpack.c.l.b16 %v230
      %v432 = vunpack.c.h.b16 %v230
      %v433 = vunpack.c.l.b16 %v231
      %v434 = vunpack.c.h.b16 %v231
      %v435 = vunpack.c.l.b16 %v232
      %v436 = vunpack.c.h.b16 %v232
      %v437 = vunpack.c.l.b16 %v233
      %v438 = vunpack.c.h.b16 %v233
      %v439 = vunpack.c.l.b16 %v234
      %v440 = vunpack.c.h.b16 %v234
      %v441 = vunpack.c.l.b16 %v235
      %v442 = vunpack.c.h.b16 %v235
      %v443 = vunpack.c.l.b16 %v236
      %v444 = vunpack.c.h.b16 %v236
      %v445 = vunpack.c.l.b16 %v237
      %v446 = vunpack.c.h.b16 %v237
      %v447 = vunpack.c.l.b16 %v238
      %v448 = vunpack.c.h.b16 %v238
      %v449 = vunpack.c.l.b16 %v239
      %v450 = vunpack.c.h.b16 %v239
      %v451 = vunpack.c.l.b16 %v240
      %v452 = vunpack.c.h.b16 %v240
      %v453 = vunpack.c.l.b16 %v241
      %v454 = vunpack.c.h.b16 %v241
      %v455 = vunpack.c.l.b16 %v242
      %v456 = vunpack.c.h.b16 %v242
      %v457 = vunpack.c.l.b16 %v243
      %v458 = vunpack.c.h.b16 %v243
      %v459 = vunpack.c.l.b16 %v244
      %v460 = vunpack.c.h.b16 %v244
      %v461 = vunpack.c.l.b16 %v245
      %v462 = vunpack.c.h.b16 %v245
      %v463 = vunpack.c.l.b16 %v246
      %v464 = vunpack.c.h.b16 %v246
      %v465 = vunpack.c.l.b16 %v247
      %v466 = vunpack.c.h.b16 %v247
      %v467 = vunpack.c.l.b16 %v248
      %v468 = vunpack.c.h.b16 %v248
      %v469 = vunpack.c.l.b16 %v249
      %v470 = vunpack.c.h.b16 %v249
      %v471 = vunpack.c.l.b16 %v250
      %v472 = vunpack.c.h.b16 %v250
      %v473 = vunpack.c.l.b16 %v251
      %v474 = vunpack.c.h.b16 %v251
      %v475 = vunpack.c.l.b16 %v252
      %v476 = vunpack.c.h.b16 %v252
      %v477 = vpack.c.b16 %v351, %v349
      %v478 = vpack.c.b16 %v352, %v350
      %v479 = vpack.c.b16 %v355, %v353
      %v480 = vpack.c.b16 %v356, %v354
      %v481 = vpack.c.b16 %v359, %v357
      %v482 = vpack.c.b16 %v360, %v358
      %v483 = vpack.c.b16 %v363, %v361
      %v484 = vpack.c.b16 %v364, %v362
      %v485 = vpack.c.b16 %v367, %v365
      %v486 = vpack.c.b16 %v368, %v366
      %v487 = vpack.c.b16 %v371, %v369
      %v488 = vpack.c.b16 %v372, %v370
      %v489 = vpack.c.b16 %v375, %v373
      %v490 = vpack.c.b16 %v376, %v374
      %v491 = vpack.c.b16 %v379, %v377
      %v492 = vpack.c.b16 %v380, %v378
      %v493 = vpack.c.b16 %v383, %v381
      %v494 = vpack.c.b16 %v384, %v382
      %v495 = vpack.c.b16 %v387, %v385
      %v496 = vpack.c.b16 %v388, %v386
      %v497 = vpack.c.b16 %v391, %v389
      %v498 = vpack.c.b16 %v392, %v390
      %v499 = vpack.c.b16 %v395, %v393
      %v500 = vpack.c.b16 %v396, %v394
      %v501 = vpack.c.b16 %v399, %v397
      %v502 = vpack.c.b16 %v400, %v398
      %v503 = vpack.c.b16 %v403, %v401
      %v504 = vpack.c.b16 %v404, %v402
      %v505 = vpack.c.b16 %v407, %v405
      %v506 = vpack.c.b16 %v408, %v406
      %v507 = vpack.c.b16 %v411, %v409
      %v508 = vpack.c.b16 %v412, %v410
      %v509 = vpack.c.b16 %v415, %v413
      %v510 = vpack.c.b16 %v416, %v414
      %v511 = vpack.c.b16 %v419, %v417
      %v512 = vpack.c.b16 %v420, %v418
      %v513 = vpack.c.b16 %v423, %v421
      %v514 = vpack.c.b16 %v424, %v422
      %v515 = vpack.c.b16 %v427, %v425
      %v516 = vpack.c.b16 %v428, %v426
      %v517 = vpack.c.b16 %v431, %v429
      %v518 = vpack.c.b16 %v432, %v430
      %v519 = vpack.c.b16 %v435, %v433
      %v520 = vpack.c.b16 %v436, %v434
      %v521 = vpack.c.b16 %v439, %v437
      %v522 = vpack.c.b16 %v440, %v438
      %v523 = vpack.c.b16 %v443, %v441
      %v524 = vpack.c.b16 %v444, %v442
      %v525 = vpack.c.b16 %v447, %v445
      %v526 = vpack.c.b16 %v448, %v446
      %v527 = vpack.c.b16 %v451, %v449
      %v528 = vpack.c.b16 %v452, %v450
      %v529 = vpack.c.b16 %v455, %v453
      %v530 = vpack.c.b16 %v456, %v454
      %v531 = vpack.c.b16 %v459, %v457
      %v532 = vpack.c.b16 %v460, %v458
      %v533 = vpack.c.b16 %v463, %v461
      %v534 = vpack.c.b16 %v464, %v462
      %v535 = vpack.c.b16 %v467, %v465
      %v536 = vpack.c.b16 %v468, %v466
      %v537 = vpack.c.b16 %v471, %v469
      %v538 = vpack.c.b16 %v472, %v470
      %v539 = vpack.c.b16 %v475, %v473
      %v540 = vpack.c.b16 %v476, %v474
      %v637 = vunpack.c.l.b16 %v253
      %v638 = vunpack.c.l.b16 %v254
      %v639 = vunpack.c.l.b16 %v255
      %v640 = vunpack.c.l.b16 %v256
      %v641 = vunpack.c.l.b16 %v257
      %v642 = vunpack.c.l.b16 %v258
      %v643 = vunpack.c.l.b16 %v259
      %v644 = vunpack.c.l.b16 %v260
      %v645 = vunpack.c.l.b16 %v261
      %v646 = vunpack.c.l.b16 %v262
      %v647 = vunpack.c.l.b16 %v263
      %v648 = vunpack.c.l.b16 %v264
      %v649 = vunpack.c.l.b16 %v265
      %v650 = vunpack.c.l.b16 %v266
      %v651 = vunpack.c.l.b16 %v267
      %v652 = vunpack.c.l.b16 %v268
      %v653 = vunpack.c.l.b16 %v269
      %v654 = vunpack.c.l.b16 %v270
      %v655 = vunpack.c.l.b16 %v271
      %v656 = vunpack.c.l.b16 %v272
      %v657 = vunpack.c.l.b16 %v273
      %v658 = vunpack.c.l.b16 %v274
      %v659 = vunpack.c.l.b16 %v275
      %v660 = vunpack.c.l.b16 %v276
      %v661 = vunpack.c.l.b16 %v277
      %v662 = vunpack.c.l.b16 %v278
      %v663 = vunpack.c.l.b16 %v279
      %v664 = vunpack.c.l.b16 %v280
      %v665 = vunpack.c.l.b16 %v281
      %v666 = vunpack.c.l.b16 %v282
      %v667 = vunpack.c.l.b16 %v283
      %v668 = vunpack.c.l.b16 %v284
      %v669 = vpack.c.b16 %v638, %v637
      %v670 = vpack.c.b16 %v640, %v639
      %v671 = vpack.c.b16 %v642, %v641
      %v672 = vpack.c.b16 %v644, %v643
      %v673 = vpack.c.b16 %v646, %v645
      %v674 = vpack.c.b16 %v648, %v647
      %v675 = vpack.c.b16 %v650, %v649
      %v676 = vpack.c.b16 %v652, %v651
      %v677 = vpack.c.b16 %v654, %v653
      %v678 = vpack.c.b16 %v656, %v655
      %v679 = vpack.c.b16 %v658, %v657
      %v680 = vpack.c.b16 %v660, %v659
      %v681 = vpack.c.b16 %v662, %v661
      %v682 = vpack.c.b16 %v664, %v663
      %v683 = vpack.c.b16 %v666, %v665
      %v684 = vpack.c.b16 %v668, %v667
      %701 = vmatprep.subr.bf16.mxu0 0
      %702 = vmatpush1.bf16.msra.mxu0 %v676
      %703 = vmatprep.subr.bf16.mxu0 0
      %704 = vmatpush1.bf16.msra.mxu0 %v675
      %705 = vmatprep.subr.bf16.mxu0 0
      %706 = vmatpush1.bf16.msra.mxu0 %v674
      %707 = vmatprep.subr.bf16.mxu0 0
      %708 = vmatpush1.bf16.msra.mxu0 %v673
      %709 = vmatprep.subr.bf16.mxu0 0
      %710 = vmatpush1.bf16.msra.mxu0 %v672
      %711 = vmatprep.subr.bf16.mxu0 0
      %712 = vmatpush1.bf16.msra.mxu0 %v671
      %713 = vmatprep.subr.bf16.mxu0 0
      %714 = vmatpush1.bf16.msra.mxu0 %v670
      %715 = vmatprep.subr.bf16.mxu0 0
      %716 = vmatpush1.bf16.msra.mxu0 %v669
      %717 = vmatprep.subr.bf16.mxu0 0
      %718 = vmatpush2.bf16.msra.mxu0 %v684
      %719 = vmatprep.subr.bf16.mxu0 0
      %720 = vmatpush2.bf16.msra.mxu0 %v683
      %721 = vmatprep.subr.bf16.mxu0 0
      %722 = vmatpush2.bf16.msra.mxu0 %v682
      %723 = vmatprep.subr.bf16.mxu0 0
      %724 = vmatpush2.bf16.msra.mxu0 %v681
      %725 = vmatprep.subr.bf16.mxu0 0
      %726 = vmatpush2.bf16.msra.mxu0 %v680
      %727 = vmatprep.subr.bf16.mxu0 0
      %728 = vmatpush2.bf16.msra.mxu0 %v679
      %729 = vmatprep.subr.bf16.mxu0 0
      %730 = vmatpush2.bf16.msra.mxu0 %v678
      %731 = vmatprep.subr.bf16.mxu0 0
      %732 = vmatpush2.bf16.msra.mxu0 %v677
      %733 = vmatprep.mubr.bf16.mxu0 %v478
      %734 = vmatmul.mubr.bf16.gmra.mxu0 %v477
      %v735 = vpop.f32.mrf.mxu0
      %v736 = vadd.f32 0.0, %v735
      %v737 = vpop.f32.mrf.mxu0
      %v738 = vpop.f32.mrf.mxu0
      %v739 = vadd.f32 0.0, %v738
      %v740 = vpop.f32.mrf.mxu0
      %741 = vmatprep.mubr.bf16.mxu0 %v480
      %742 = vmatmul.mubr.bf16.gmra.mxu0 %v479
      %v743 = vpop.f32.mrf.mxu0
      %v744 = vadd.f32 0.0, %v743
      %v745 = vpop.f32.mrf.mxu0
      %v746 = vpop.f32.mrf.mxu0
      %v747 = vadd.f32 0.0, %v746
      %v748 = vpop.f32.mrf.mxu0
      %749 = vmatprep.mubr.bf16.mxu0 %v482
      %750 = vmatmul.mubr.bf16.gmra.mxu0 %v481
      %v751 = vpop.f32.mrf.mxu0
      %v752 = vadd.f32 0.0, %v751
      %v753 = vpop.f32.mrf.mxu0
      %v754 = vpop.f32.mrf.mxu0
      %v755 = vadd.f32 0.0, %v754
      %v756 = vpop.f32.mrf.mxu0
      %757 = vmatprep.mubr.bf16.mxu0 %v484
      %758 = vmatmul.mubr.bf16.gmra.mxu0 %v483
      %v759 = vpop.f32.mrf.mxu0
      %v760 = vadd.f32 0.0, %v759
      %v761 = vpop.f32.mrf.mxu0
      %v762 = vpop.f32.mrf.mxu0
      %v763 = vadd.f32 0.0, %v762
      %v764 = vpop.f32.mrf.mxu0
      %765 = vmatprep.mubr.bf16.mxu0 %v486
      %766 = vmatmul.mubr.bf16.gmra.mxu0 %v485
      %v767 = vpop.f32.mrf.mxu0
      %v768 = vadd.f32 0.0, %v767
      %v769 = vpop.f32.mrf.mxu0
      %v770 = vpop.f32.mrf.mxu0
      %v771 = vadd.f32 0.0, %v770
      %v772 = vpop.f32.mrf.mxu0
      %773 = vmatprep.mubr.bf16.mxu0 %v488
      %774 = vmatmul.mubr.bf16.gmra.mxu0 %v487
      %v775 = vpop.f32.mrf.mxu0
      %v776 = vadd.f32 0.0, %v775
      %v777 = vpop.f32.mrf.mxu0
      %v778 = vpop.f32.mrf.mxu0
      %v779 = vadd.f32 0.0, %v778
      %v780 = vpop.f32.mrf.mxu0
      %781 = vmatprep.mubr.bf16.mxu0 %v490
      %782 = vmatmul.mubr.bf16.gmra.mxu0 %v489
      %v783 = vpop.f32.mrf.mxu0
      %v784 = vadd.f32 0.0, %v783
      %v785 = vpop.f32.mrf.mxu0
      %v786 = vpop.f32.mrf.mxu0
      %v787 = vadd.f32 0.0, %v786
      %v788 = vpop.f32.mrf.mxu0
      %789 = vmatprep.mubr.bf16.mxu0 %v492
      %790 = vmatmul.mubr.bf16.gmra.mxu0 %v491
      %v791 = vpop.f32.mrf.mxu0
      %v792 = vadd.f32 0.0, %v791
      %v793 = vpop.f32.mrf.mxu0
      %v794 = vpop.f32.mrf.mxu0
      %v795 = vadd.f32 0.0, %v794
      %v796 = vpop.f32.mrf.mxu0
      %797 = vmatprep.mubr.bf16.mxu0 %v494
      %798 = vmatmul.mubr.bf16.gmra.mxu0 %v493
      %v799 = vpop.f32.mrf.mxu0
      %v800 = vadd.f32 0.0, %v799
      %v801 = vpop.f32.mrf.mxu0
      %v802 = vpop.f32.mrf.mxu0
      %v803 = vadd.f32 0.0, %v802
      %v804 = vpop.f32.mrf.mxu0
      %805 = vmatprep.mubr.bf16.mxu0 %v496
      %806 = vmatmul.mubr.bf16.gmra.mxu0 %v495
      %v807 = vpop.f32.mrf.mxu0
      %v808 = vadd.f32 0.0, %v807
      %v809 = vpop.f32.mrf.mxu0
      %v810 = vpop.f32.mrf.mxu0
      %v811 = vadd.f32 0.0, %v810
      %v812 = vpop.f32.mrf.mxu0
      %813 = vmatprep.mubr.bf16.mxu0 %v498
      %814 = vmatmul.mubr.bf16.gmra.mxu0 %v497
      %v815 = vpop.f32.mrf.mxu0
      %v816 = vadd.f32 0.0, %v815
      %v817 = vpop.f32.mrf.mxu0
      %v818 = vpop.f32.mrf.mxu0
      %v819 = vadd.f32 0.0, %v818
      %v820 = vpop.f32.mrf.mxu0
      %821 = vmatprep.mubr.bf16.mxu0 %v500
      %822 = vmatmul.mubr.bf16.gmra.mxu0 %v499
      %v823 = vpop.f32.mrf.mxu0
      %v824 = vadd.f32 0.0, %v823
      %v825 = vpop.f32.mrf.mxu0
      %v826 = vpop.f32.mrf.mxu0
      %v827 = vadd.f32 0.0, %v826
      %v828 = vpop.f32.mrf.mxu0
      %829 = vmatprep.mubr.bf16.mxu0 %v502
      %830 = vmatmul.mubr.bf16.gmra.mxu0 %v501
      %v831 = vpop.f32.mrf.mxu0
      %v832 = vadd.f32 0.0, %v831
      %v833 = vpop.f32.mrf.mxu0
      %v834 = vpop.f32.mrf.mxu0
      %v835 = vadd.f32 0.0, %v834
      %v836 = vpop.f32.mrf.mxu0
      %837 = vmatprep.mubr.bf16.mxu0 %v504
      %838 = vmatmul.mubr.bf16.gmra.mxu0 %v503
      %v839 = vpop.f32.mrf.mxu0
      %v840 = vadd.f32 0.0, %v839
      %v841 = vpop.f32.mrf.mxu0
      %v842 = vpop.f32.mrf.mxu0
      %v843 = vadd.f32 0.0, %v842
      %v844 = vpop.f32.mrf.mxu0
      %845 = vmatprep.mubr.bf16.mxu0 %v506
      %846 = vmatmul.mubr.bf16.gmra.mxu0 %v505
      %v847 = vpop.f32.mrf.mxu0
      %v848 = vadd.f32 0.0, %v847
      %v849 = vpop.f32.mrf.mxu0
      %v850 = vpop.f32.mrf.mxu0
      %v851 = vadd.f32 0.0, %v850
      %v852 = vpop.f32.mrf.mxu0
      %853 = vmatprep.mubr.bf16.mxu0 %v508
      %854 = vmatmul.mubr.bf16.gmra.mxu0 %v507
      %v855 = vpop.f32.mrf.mxu0
      %v856 = vadd.f32 0.0, %v855
      %v857 = vpop.f32.mrf.mxu0
      %v858 = vpop.f32.mrf.mxu0
      %v859 = vadd.f32 0.0, %v858
      %v860 = vpop.f32.mrf.mxu0
      %861 = vmatprep.mubr.bf16.mxu0 %v510
      %862 = vmatmul.mubr.bf16.gmra.mxu0 %v509
      %v863 = vpop.f32.mrf.mxu0
      %v864 = vadd.f32 0.0, %v863
      %v865 = vpop.f32.mrf.mxu0
      %v866 = vpop.f32.mrf.mxu0
      %v867 = vadd.f32 0.0, %v866
      %v868 = vpop.f32.mrf.mxu0
      %869 = vmatprep.mubr.bf16.mxu0 %v512
      %870 = vmatmul.mubr.bf16.gmra.mxu0 %v511
      %v871 = vpop.f32.mrf.mxu0
      %v872 = vadd.f32 0.0, %v871
      %v873 = vpop.f32.mrf.mxu0
      %v874 = vpop.f32.mrf.mxu0
      %v875 = vadd.f32 0.0, %v874
      %v876 = vpop.f32.mrf.mxu0
      %877 = vmatprep.mubr.bf16.mxu0 %v514
      %878 = vmatmul.mubr.bf16.gmra.mxu0 %v513
      %v879 = vpop.f32.mrf.mxu0
      %v880 = vadd.f32 0.0, %v879
      %v881 = vpop.f32.mrf.mxu0
      %v882 = vpop.f32.mrf.mxu0
      %v883 = vadd.f32 0.0, %v882
      %v884 = vpop.f32.mrf.mxu0
      %885 = vmatprep.mubr.bf16.mxu0 %v516
      %886 = vmatmul.mubr.bf16.gmra.mxu0 %v515
      %v887 = vpop.f32.mrf.mxu0
      %v888 = vadd.f32 0.0, %v887
      %v889 = vpop.f32.mrf.mxu0
      %v890 = vpop.f32.mrf.mxu0
      %v891 = vadd.f32 0.0, %v890
      %v892 = vpop.f32.mrf.mxu0
      %893 = vmatprep.mubr.bf16.mxu0 %v518
      %894 = vmatmul.mubr.bf16.gmra.mxu0 %v517
      %v895 = vpop.f32.mrf.mxu0
      %v896 = vadd.f32 0.0, %v895
      %v897 = vpop.f32.mrf.mxu0
      %v898 = vpop.f32.mrf.mxu0
      %v899 = vadd.f32 0.0, %v898
      %v900 = vpop.f32.mrf.mxu0
      %901 = vmatprep.mubr.bf16.mxu0 %v520
      %902 = vmatmul.mubr.bf16.gmra.mxu0 %v519
      %v903 = vpop.f32.mrf.mxu0
      %v904 = vadd.f32 0.0, %v903
      %v905 = vpop.f32.mrf.mxu0
      %v906 = vpop.f32.mrf.mxu0
      %v907 = vadd.f32 0.0, %v906
      %v908 = vpop.f32.mrf.mxu0
      %909 = vmatprep.mubr.bf16.mxu0 %v522
      %910 = vmatmul.mubr.bf16.gmra.mxu0 %v521
      %v911 = vpop.f32.mrf.mxu0
      %v912 = vadd.f32 0.0, %v911
      %v913 = vpop.f32.mrf.mxu0
      %v914 = vpop.f32.mrf.mxu0
      %v915 = vadd.f32 0.0, %v914
      %v916 = vpop.f32.mrf.mxu0
      %917 = vmatprep.mubr.bf16.mxu0 %v524
      %918 = vmatmul.mubr.bf16.gmra.mxu0 %v523
      %v919 = vpop.f32.mrf.mxu0
      %v920 = vadd.f32 0.0, %v919
      %v921 = vpop.f32.mrf.mxu0
      %v922 = vpop.f32.mrf.mxu0
      %v923 = vadd.f32 0.0, %v922
      %v924 = vpop.f32.mrf.mxu0
      %925 = vmatprep.mubr.bf16.mxu0 %v526
      %926 = vmatmul.mubr.bf16.gmra.mxu0 %v525
      %v927 = vpop.f32.mrf.mxu0
      %v928 = vadd.f32 0.0, %v927
      %v929 = vpop.f32.mrf.mxu0
      %v930 = vpop.f32.mrf.mxu0
      %v931 = vadd.f32 0.0, %v930
      %v932 = vpop.f32.mrf.mxu0
      %933 = vmatprep.mubr.bf16.mxu0 %v528
      %934 = vmatmul.mubr.bf16.gmra.mxu0 %v527
      %v935 = vpop.f32.mrf.mxu0
      %v936 = vadd.f32 0.0, %v935
      %v937 = vpop.f32.mrf.mxu0
      %v938 = vpop.f32.mrf.mxu0
      %v939 = vadd.f32 0.0, %v938
      %v940 = vpop.f32.mrf.mxu0
      %941 = vmatprep.mubr.bf16.mxu0 %v530
      %942 = vmatmul.mubr.bf16.gmra.mxu0 %v529
      %v943 = vpop.f32.mrf.mxu0
      %v944 = vadd.f32 0.0, %v943
      %v945 = vpop.f32.mrf.mxu0
      %v946 = vpop.f32.mrf.mxu0
      %v947 = vadd.f32 0.0, %v946
      %v948 = vpop.f32.mrf.mxu0
      %949 = vmatprep.mubr.bf16.mxu0 %v532
      %950 = vmatmul.mubr.bf16.gmra.mxu0 %v531
      %v951 = vpop.f32.mrf.mxu0
      %v952 = vadd.f32 0.0, %v951
      %v953 = vpop.f32.mrf.mxu0
      %v954 = vpop.f32.mrf.mxu0
      %v955 = vadd.f32 0.0, %v954
      %v956 = vpop.f32.mrf.mxu0
      %957 = vmatprep.mubr.bf16.mxu0 %v534
      %958 = vmatmul.mubr.bf16.gmra.mxu0 %v533
      %v959 = vpop.f32.mrf.mxu0
      %v960 = vadd.f32 0.0, %v959
      %v961 = vpop.f32.mrf.mxu0
      %v962 = vpop.f32.mrf.mxu0
      %v963 = vadd.f32 0.0, %v962
      %v964 = vpop.f32.mrf.mxu0
      %965 = vmatprep.mubr.bf16.mxu0 %v536
      %966 = vmatmul.mubr.bf16.gmra.mxu0 %v535
      %v967 = vpop.f32.mrf.mxu0
      %v968 = vadd.f32 0.0, %v967
      %v969 = vpop.f32.mrf.mxu0
      %v970 = vpop.f32.mrf.mxu0
      %v971 = vadd.f32 0.0, %v970
      %v972 = vpop.f32.mrf.mxu0
      %973 = vmatprep.mubr.bf16.mxu0 %v538
      %974 = vmatmul.mubr.bf16.gmra.mxu0 %v537
      %v975 = vpop.f32.mrf.mxu0
      %v976 = vadd.f32 0.0, %v975
      %v977 = vpop.f32.mrf.mxu0
      %v978 = vpop.f32.mrf.mxu0
      %v979 = vadd.f32 0.0, %v978
      %v980 = vpop.f32.mrf.mxu0
      %981 = vmatprep.mubr.bf16.mxu0 %v540
      %982 = vmatmul.mubr.bf16.gmra.mxu0 %v539
      %v983 = vpop.f32.mrf.mxu0
      %v984 = vadd.f32 0.0, %v983
      %v985 = vpop.f32.mrf.mxu0
      %v986 = vpop.f32.mrf.mxu0
      %v987 = vadd.f32 0.0, %v986
      %v988 = vpop.f32.mrf.mxu0
      %989 = vdwg.mxu0
      %990 = vst [vmem:[%s182] sm:$0xff] %v736
      %991 = vst [vmem:[%s182 + $0x8] sm:$0xff] %v739
      %992 = vst [vmem:[%s182 + $0x10] sm:$0xff] %v744
      %993 = vst [vmem:[%s182 + $0x18] sm:$0xff] %v747
      %994 = vst [vmem:[%s182 + $0x20] sm:$0xff] %v752
      %995 = vst [vmem:[%s182 + $0x28] sm:$0xff] %v755
      %996 = vst [vmem:[%s182 + $0x30] sm:$0xff] %v760
      %997 = vst [vmem:[%s182 + $0x38] sm:$0xff] %v763
      %998 = vst [vmem:[%s182 + $0x40] sm:$0xff] %v768
      %999 = vst [vmem:[%s182 + $0x48] sm:$0xff] %v771
      %1000 = vst [vmem:[%s182 + $0x50] sm:$0xff] %v776
      %1001 = vst [vmem:[%s182 + $0x58] sm:$0xff] %v779
      %1002 = vst [vmem:[%s182 + $0x60] sm:$0xff] %v784
      %1003 = vst [vmem:[%s182 + $0x68] sm:$0xff] %v787
      %1004 = vst [vmem:[%s182 + $0x70] sm:$0xff] %v792
      %1005 = vst [vmem:[%s182 + $0x78] sm:$0xff] %v795
      %1006 = vst [vmem:[%s182 + $0x80] sm:$0xff] %v800
      %1007 = vst [vmem:[%s182 + $0x88] sm:$0xff] %v803
      %1008 = vst [vmem:[%s182 + $0x90] sm:$0xff] %v808
      %1009 = vst [vmem:[%s182 + $0x98] sm:$0xff] %v811
      %1010 = vst [vmem:[%s182 + $0xa0] sm:$0xff] %v816
      %1011 = vst [vmem:[%s182 + $0xa8] sm:$0xff] %v819
      %1012 = vst [vmem:[%s182 + $0xb0] sm:$0xff] %v824
      %1013 = vst [vmem:[%s182 + $0xb8] sm:$0xff] %v827
      %1014 = vst [vmem:[%s182 + $0xc0] sm:$0xff] %v832
      %1015 = vst [vmem:[%s182 + $0xc8] sm:$0xff] %v835
      %1016 = vst [vmem:[%s182 + $0xd0] sm:$0xff] %v840
      %1017 = vst [vmem:[%s182 + $0xd8] sm:$0xff] %v843
      %1018 = vst [vmem:[%s182 + $0xe0] sm:$0xff] %v848
      %1019 = vst [vmem:[%s182 + $0xe8] sm:$0xff] %v851
      %1020 = vst [vmem:[%s182 + $0xf0] sm:$0xff] %v856
      %1021 = vst [vmem:[%s182 + $0xf8] sm:$0xff] %v859
      %1022 = vst [vmem:[%s182 + $0x100] sm:$0xff] %v864
      %1023 = vst [vmem:[%s182 + $0x108] sm:$0xff] %v867
      %1024 = vst [vmem:[%s182 + $0x110] sm:$0xff] %v872
      %1025 = vst [vmem:[%s182 + $0x118] sm:$0xff] %v875
      %1026 = vst [vmem:[%s182 + $0x120] sm:$0xff] %v880
      %1027 = vst [vmem:[%s182 + $0x128] sm:$0xff] %v883
      %1028 = vst [vmem:[%s182 + $0x130] sm:$0xff] %v888
      %1029 = vst [vmem:[%s182 + $0x138] sm:$0xff] %v891
      %1030 = vst [vmem:[%s182 + $0x140] sm:$0xff] %v896
      %1031 = vst [vmem:[%s182 + $0x148] sm:$0xff] %v899
      %1032 = vst [vmem:[%s182 + $0x150] sm:$0xff] %v904
      %1033 = vst [vmem:[%s182 + $0x158] sm:$0xff] %v907
      %1034 = vst [vmem:[%s182 + $0x160] sm:$0xff] %v912
      %1035 = vst [vmem:[%s182 + $0x168] sm:$0xff] %v915
      %1036 = vst [vmem:[%s182 + $0x170] sm:$0xff] %v920
      %1037 = vst [vmem:[%s182 + $0x178] sm:$0xff] %v923
      %1038 = vst [vmem:[%s182 + $0x180] sm:$0xff] %v928
      %1039 = vst [vmem:[%s182 + $0x188] sm:$0xff] %v931
      %1040 = vst [vmem:[%s182 + $0x190] sm:$0xff] %v936
      %1041 = vst [vmem:[%s182 + $0x198] sm:$0xff] %v939
      %1042 = vst [vmem:[%s182 + $0x1a0] sm:$0xff] %v944
      %1043 = vst [vmem:[%s182 + $0x1a8] sm:$0xff] %v947
      %1044 = vst [vmem:[%s182 + $0x1b0] sm:$0xff] %v952
      %1045 = vst [vmem:[%s182 + $0x1b8] sm:$0xff] %v955
      %1046 = vst [vmem:[%s182 + $0x1c0] sm:$0xff] %v960
      %1047 = vst [vmem:[%s182 + $0x1c8] sm:$0xff] %v963
      %1048 = vst [vmem:[%s182 + $0x1d0] sm:$0xff] %v968
      %1049 = vst [vmem:[%s182 + $0x1d8] sm:$0xff] %v971
      %1050 = vst [vmem:[%s182 + $0x1e0] sm:$0xff] %v976
      %1051 = vst [vmem:[%s182 + $0x1e8] sm:$0xff] %v979
      %1052 = vst [vmem:[%s182 + $0x1f0] sm:$0xff] %v984
      %1053 = vst [vmem:[%s182 + $0x1f8] sm:$0xff] %v987
      %v1054 = vadd.f32 %v736, %v739
      %v1055 = vadd.f32 %v1054, %v744
      %v1056 = vadd.f32 %v1055, %v747
      %v1057 = vadd.f32 %v1056, %v752
      %v1058 = vadd.f32 %v1057, %v755
      %v1059 = vadd.f32 %v1058, %v760
      %v1060 = vadd.f32 %v1059, %v763
      %v1061 = vadd.f32 %v1060, %v768
      %v1062 = vadd.f32 %v1061, %v771
      %v1063 = vadd.f32 %v1062, %v776
      %v1064 = vadd.f32 %v1063, %v779
      %v1065 = vadd.f32 %v1064, %v784
      %v1066 = vadd.f32 %v1065, %v787
      %v1067 = vadd.f32 %v1066, %v792
      %v1068 = vadd.f32 %v1067, %v795
      %v1069 = vadd.f32 %v1068, %v800
      %v1070 = vadd.f32 %v1069, %v803
      %v1071 = vadd.f32 %v1070, %v808
      %v1072 = vadd.f32 %v1071, %v811
      %v1073 = vadd.f32 %v1072, %v816
      %v1074 = vadd.f32 %v1073, %v819
      %v1075 = vadd.f32 %v1074, %v824
      %v1076 = vadd.f32 %v1075, %v827
      %v1077 = vadd.f32 %v1076, %v832
      %v1078 = vadd.f32 %v1077, %v835
      %v1079 = vadd.f32 %v1078, %v840
      %v1080 = vadd.f32 %v1079, %v843
      %v1081 = vadd.f32 %v1080, %v848
      %v1082 = vadd.f32 %v1081, %v851
      %v1083 = vadd.f32 %v1082, %v856
      %v1084 = vadd.f32 %v1083, %v859
      %v1085 = vadd.f32 %v1084, %v864
      %v1086 = vadd.f32 %v1085, %v867
      %v1087 = vadd.f32 %v1086, %v872
      %v1088 = vadd.f32 %v1087, %v875
      %v1089 = vadd.f32 %v1088, %v880
      %v1090 = vadd.f32 %v1089, %v883
      %v1091 = vadd.f32 %v1090, %v888
      %v1092 = vadd.f32 %v1091, %v891
      %v1093 = vadd.f32 %v1092, %v896
      %v1094 = vadd.f32 %v1093, %v899
      %v1095 = vadd.f32 %v1094, %v904
      %v1096 = vadd.f32 %v1095, %v907
      %v1097 = vadd.f32 %v1096, %v912
      %v1098 = vadd.f32 %v1097, %v915
      %v1099 = vadd.f32 %v1098, %v920
      %v1100 = vadd.f32 %v1099, %v923
      %v1101 = vadd.f32 %v1100, %v928
      %v1102 = vadd.f32 %v1101, %v931
      %v1103 = vadd.f32 %v1102, %v936
      %v1104 = vadd.f32 %v1103, %v939
      %v1105 = vadd.f32 %v1104, %v944
      %v1106 = vadd.f32 %v1105, %v947
      %v1107 = vadd.f32 %v1106, %v952
      %v1108 = vadd.f32 %v1107, %v955
      %v1109 = vadd.f32 %v1108, %v960
      %v1110 = vadd.f32 %v1109, %v963
      %v1111 = vadd.f32 %v1110, %v968
      %v1112 = vadd.f32 %v1111, %v971
      %v1113 = vadd.f32 %v1112, %v976
      %v1114 = vadd.f32 %v1113, %v979
      %v1115 = vadd.f32 %v1114, %v984
      %v1116 = vadd.f32 %v1115, %v987
      %v1117 = vrot.slane %v1116, 4
      %v1118 = vadd.f32 %v1116, %v1117
      %v1119 = vrot.slane %v1118, 2
      %v1120 = vadd.f32 %v1118, %v1119
      %v1121 = vrot.slane %v1120, 1
      %v1122 = vadd.f32 %v1120, %v1121
      %v1123 = vmul.f32 %v736, %v736
      %v1124 = vmul.f32 %v739, %v739
      %v1125 = vmul.f32 %v744, %v744
      %v1126 = vmul.f32 %v747, %v747
      %v1127 = vmul.f32 %v752, %v752
      %v1128 = vmul.f32 %v755, %v755
      %v1129 = vmul.f32 %v760, %v760
      %v1130 = vmul.f32 %v763, %v763
      %v1131 = vmul.f32 %v768, %v768
      %v1132 = vmul.f32 %v771, %v771
      %v1133 = vmul.f32 %v776, %v776
      %v1134 = vmul.f32 %v779, %v779
      %v1135 = vmul.f32 %v784, %v784
      %v1136 = vmul.f32 %v787, %v787
      %v1137 = vmul.f32 %v792, %v792
      %v1138 = vmul.f32 %v795, %v795
      %v1139 = vmul.f32 %v800, %v800
      %v1140 = vmul.f32 %v803, %v803
      %v1141 = vmul.f32 %v808, %v808
      %v1142 = vmul.f32 %v811, %v811
      %v1143 = vmul.f32 %v816, %v816
      %v1144 = vmul.f32 %v819, %v819
      %v1145 = vmul.f32 %v824, %v824
      %v1146 = vmul.f32 %v827, %v827
      %v1147 = vmul.f32 %v832, %v832
      %v1148 = vmul.f32 %v835, %v835
      %v1149 = vmul.f32 %v840, %v840
      %v1150 = vmul.f32 %v843, %v843
      %v1151 = vmul.f32 %v848, %v848
      %v1152 = vmul.f32 %v851, %v851
      %v1153 = vmul.f32 %v856, %v856
      %v1154 = vmul.f32 %v859, %v859
      %v1155 = vmul.f32 %v864, %v864
      %v1156 = vmul.f32 %v867, %v867
      %v1157 = vmul.f32 %v872, %v872
      %v1158 = vmul.f32 %v875, %v875
      %v1159 = vmul.f32 %v880, %v880
      %v1160 = vmul.f32 %v883, %v883
      %v1161 = vmul.f32 %v888, %v888
      %v1162 = vmul.f32 %v891, %v891
      %v1163 = vmul.f32 %v896, %v896
      %v1164 = vmul.f32 %v899, %v899
      %v1165 = vmul.f32 %v904, %v904
      %v1166 = vmul.f32 %v907, %v907
      %v1167 = vmul.f32 %v912, %v912
      %v1168 = vmul.f32 %v915, %v915
      %v1169 = vmul.f32 %v920, %v920
      %v1170 = vmul.f32 %v923, %v923
      %v1171 = vmul.f32 %v928, %v928
      %v1172 = vmul.f32 %v931, %v931
      %v1173 = vmul.f32 %v936, %v936
      %v1174 = vmul.f32 %v939, %v939
      %v1175 = vmul.f32 %v944, %v944
      %v1176 = vmul.f32 %v947, %v947
      %v1177 = vmul.f32 %v952, %v952
      %v1178 = vmul.f32 %v955, %v955
      %v1179 = vmul.f32 %v960, %v960
      %v1180 = vmul.f32 %v963, %v963
      %v1181 = vmul.f32 %v968, %v968
      %v1182 = vmul.f32 %v971, %v971
      %v1183 = vmul.f32 %v976, %v976
      %v1184 = vmul.f32 %v979, %v979
      %v1185 = vmul.f32 %v984, %v984
      %v1186 = vmul.f32 %v987, %v987
      %v1187 = vadd.f32 %v1123, %v1124
      %v1188 = vadd.f32 %v1187, %v1125
      %v1189 = vadd.f32 %v1188, %v1126
      %v1190 = vadd.f32 %v1189, %v1127
      %v1191 = vadd.f32 %v1190, %v1128
      %v1192 = vadd.f32 %v1191, %v1129
      %v1193 = vadd.f32 %v1192, %v1130
      %v1194 = vadd.f32 %v1193, %v1131
      %v1195 = vadd.f32 %v1194, %v1132
      %v1196 = vadd.f32 %v1195, %v1133
      %v1197 = vadd.f32 %v1196, %v1134
      %v1198 = vadd.f32 %v1197, %v1135
      %v1199 = vadd.f32 %v1198, %v1136
      %v1200 = vadd.f32 %v1199, %v1137
      %v1201 = vadd.f32 %v1200, %v1138
      %v1202 = vadd.f32 %v1201, %v1139
      %v1203 = vadd.f32 %v1202, %v1140
      %v1204 = vadd.f32 %v1203, %v1141
      %v1205 = vadd.f32 %v1204, %v1142
      %v1206 = vadd.f32 %v1205, %v1143
      %v1207 = vadd.f32 %v1206, %v1144
      %v1208 = vadd.f32 %v1207, %v1145
      %v1209 = vadd.f32 %v1208, %v1146
      %v1210 = vadd.f32 %v1209, %v1147
      %v1211 = vadd.f32 %v1210, %v1148
      %v1212 = vadd.f32 %v1211, %v1149
      %v1213 = vadd.f32 %v1212, %v1150
      %v1214 = vadd.f32 %v1213, %v1151
      %v1215 = vadd.f32 %v1214, %v1152
      %v1216 = vadd.f32 %v1215, %v1153
      %v1217 = vadd.f32 %v1216, %v1154
      %v1218 = vadd.f32 %v1217, %v1155
      %v1219 = vadd.f32 %v1218, %v1156
      %v1220 = vadd.f32 %v1219, %v1157
      %v1221 = vadd.f32 %v1220, %v1158
      %v1222 = vadd.f32 %v1221, %v1159
      %v1223 = vadd.f32 %v1222, %v1160
      %v1224 = vadd.f32 %v1223, %v1161
      %v1225 = vadd.f32 %v1224, %v1162
      %v1226 = vadd.f32 %v1225, %v1163
      %v1227 = vadd.f32 %v1226, %v1164
      %v1228 = vadd.f32 %v1227, %v1165
      %v1229 = vadd.f32 %v1228, %v1166
      %v1230 = vadd.f32 %v1229, %v1167
      %v1231 = vadd.f32 %v1230, %v1168
      %v1232 = vadd.f32 %v1231, %v1169
      %v1233 = vadd.f32 %v1232, %v1170
      %v1234 = vadd.f32 %v1233, %v1171
      %v1235 = vadd.f32 %v1234, %v1172
      %v1236 = vadd.f32 %v1235, %v1173
      %v1237 = vadd.f32 %v1236, %v1174
      %v1238 = vadd.f32 %v1237, %v1175
      %v1239 = vadd.f32 %v1238, %v1176
      %v1240 = vadd.f32 %v1239, %v1177
      %v1241 = vadd.f32 %v1240, %v1178
      %v1242 = vadd.f32 %v1241, %v1179
      %v1243 = vadd.f32 %v1242, %v1180
      %v1244 = vadd.f32 %v1243, %v1181
      %v1245 = vadd.f32 %v1244, %v1182
      %v1246 = vadd.f32 %v1245, %v1183
      %v1247 = vadd.f32 %v1246, %v1184
      %v1248 = vadd.f32 %v1247, %v1185
      %v1249 = vadd.f32 %v1248, %v1186
      %v1250 = vrot.slane %v1249, 4
      %v1251 = vadd.f32 %v1249, %v1250
      %v1252 = vrot.slane %v1251, 2
      %v1253 = vadd.f32 %v1251, %v1252
      %v1254 = vrot.slane %v1253, 1
      %v1255 = vadd.f32 %v1253, %v1254
      %vm1256 = vcmask 1040384
      %v1257 = vsel %vm1256, %v1122, %v1255
      %vm1258 = vcmask 1041408
      %v1259 = vsel %vm1258, %v1257, 0.0
      %1260 = vst [vmem:[%s187] sm:$0xff] %v1259
      %s1261 = smul.u32 64, %s15
      %p1262 = scmp.lt.s32.totalorder %s1261, 1023
      %s1263 = scalar_select %p1262, %s1261, 1023
      %s1264 = smul.addr %s1263, 8
      %s1265 = scalar_lea.vmem %s2, %s1264
      %p1266 = scmp.lt.s32.totalorder %s15, 15
      %s1267 = scalar_select %p1266, %s15, 15
      %s1268 = smul.addr %s1267, 8
      %s1269 = scalar_lea.vmem %s3, %s1268
      // Predicated region
      $region29: #{discriminator_forward.13} parent=27 // pred_check
        %p1270 = pneg %p80
      $region30: #{discriminator_forward.13} parent=27 // pred_check_branch
        %1272 = sbr.rel (%p1270) target = $region32
      $region31: #{discriminator_forward.13} parent=27 // pred_region
        %s1273 = smul.u32 64, %s15
      $region32: #{discriminator_forward.13} parent=27 // pred_fallthru
        _
      // Predicated region
      $region33: #{discriminator_forward.13} parent=27 // pred_check
        %p1274 = pneg %p106
      $region34: #{discriminator_forward.13} parent=27 // pred_check_branch
        %1276 = sbr.rel (%p1274) target = $region36
      $region35: #{discriminator_forward.13} parent=27 // pred_region
        _
      $region36: #{discriminator_forward.13} parent=27 // pred_fallthru
        _
    $region28: #{discriminator_forward.13} parent=5 // pred_fallthru
      _
    %p1277 = scmp.le.s32.totalorder 2, %s10
    // Predicated region
    $region37: #{discriminator_forward.13} parent=5 // pred_check
      %p1278 = pneg %p1277
    $region38: #{discriminator_forward.13} parent=5 // pred_check_branch
      %1280 = sbr.rel (%p1278) target = $region40
    $region39: #{discriminator_forward.13} parent=5 // pred_region
      %s1281 = ssub.s32 %s10, 2
      // Predicated region
      $region41: #{discriminator_forward.13} parent=39 // pred_check
        %p1282 = pneg %p86
      $region42: #{discriminator_forward.13} parent=39 // pred_check_branch
        %1284 = sbr.rel (%p1282) target = $region44
      $region43: #{discriminator_forward.13} parent=39 // pred_region
        %s1285 = smul.u32 64, %s16
        %p1286 = scmp.lt.s32.totalorder %s1285, 1023
        %s1287 = scalar_select %p1286, %s1285, 1023
        %s1288 = smul.addr %s1287, 8
        %s1289 = scalar_lea.vmem %s2, %s1288
      $region44: #{discriminator_forward.13} parent=39 // pred_fallthru
        _
      // Predicated region
      $region45: #{discriminator_forward.13} parent=39 // pred_check
        %p1290 = pneg %p112
      $region46: #{discriminator_forward.13} parent=39 // pred_check_branch
        %1292 = sbr.rel (%p1290) target = $region48
      $region47: #{discriminator_forward.13} parent=39 // pred_region
        %p1293 = scmp.lt.s32.totalorder %s16, 15
        %s1294 = scalar_select %p1293, %s16, 15
        %s1295 = smul.addr %s1294, 8
        %s1296 = scalar_lea.vmem %s3, %s1295
      $region48: #{discriminator_forward.13} parent=39 // pred_fallthru
        _
    $region40: #{discriminator_forward.13} parent=5 // pred_fallthru
      _
  $region6: #{discriminator_forward.13} parent=0 // loop_footer
    %s14 = sadd.s32 1, %s10
  $region7: #{discriminator_forward.13} parent=0 // loop_footer_branch
    %9 = sbr.rel target = $region3
  $region8: #{discriminator_forward.13} parent=0 // loop_exit
    _

// kernel: discriminator_forward.14
$region0: #{discriminator_forward.14}
  #allocation0 [shape = 'u32[]', space=smem, size = 0x4, offset = 0x4, fixed_abs, tag = 'smem constant byte address 0x4 - core index']
  #allocation1 [shape = 'u32[144,128]{1,0:T(1,128)}', space=vmem, size = 0x12000, scoped, tag = 'internal scratch']
  %s0 = inlined_call_operand.vmem [shape: f32[8192,128], index: 0, kind: input, shape index: {}]
  %s1 = inlined_call_operand.vmem [shape: f32[1,128], index: 1, kind: input, shape index: {}]
  %s2 = inlined_call_operand.vmem [shape: f32[1,128], index: 2, kind: input, shape index: {}]
  %s3 = inlined_call_operand.vmem [shape: f32[8192,128], index: 3, kind: output, shape index: {}]
  %s4 = sld [smem:[#allocation0]]
  $region45: #{discriminator_forward.14} parent=0
    _
  %s6 = ssub.s32 1, %s4
  %s7 = scalar_select 0, %s6, %s4
  loop: start=0, step=1, limit=18
  $region2: #{discriminator_forward.14} parent=0 // loop_pre_header
    _
  $region3: #{discriminator_forward.14} parent=0 // loop_header
    %s9 = sphi 0, %s13
    %p10 = scmp.ge.s32.totalorder %s9, 18
    %s19 = sphi 0, %s21
    %s22 = sphi 0, %s19
    %s23 = sphi 0, %s22
    %s39 = sphi 0, %s23
    %s43 = sphi 0, %s43
    %s45 = sphi 0, %s43
    %s46 = sphi 0, %s45
    %s60 = sphi 0, %s46
    %s64 = sphi 0, %s64
    %s66 = sphi 0, %s64
    %s67 = sphi 0, %s66
    %s81 = sphi 0, %s67
    %s87 = sphi 0, %s89
    %s90 = sphi 0, %s87
    %s91 = sphi 0, %s90
    %s107 = sphi 0, %s91
  $region4: #{discriminator_forward.14} parent=0 // loop_header_branch
    %12 = sbr.rel (%p10) target = $region8
  $region5: #{discriminator_forward.14} parent=0 // loop_body
    %s14 = ssub.s32 %s9, 1
    %s15 = ssub.s32 %s9, 2
    %s16 = sadd.s32 %s9, 1
    %s17 = ssub.s32 %s9, %s16
    %p18 = scmp.eq.s32.totalorder %s17, 0
    %s20 = sadd.s32 %s19, 1
    %s21 = scalar_select %p18, %s19, %s20
    %p24 = pneg %p18
    %p25 = scmp.eq.s32.totalorder %s9, 15
    %p26 = por %p24, %p25
    %p27 = scmp.ne.s32.totalorder %s19, %s22
    %p28 = scmp.eq.s32.totalorder %s9, 0
    %p29 = por %p27, %p28
    %p30 = scmp.ne.s32.totalorder %s19, %s22
    %p31 = scmp.eq.s32.totalorder %s14, 15
    %p32 = por %p30, %p31
    %p33 = scmp.ne.s32.totalorder %s22, %s23
    %p34 = scmp.eq.s32.totalorder %s14, 0
    %p35 = por %p33, %p34
    %p36 = scmp.ne.s32.totalorder %s22, %s23
    %p37 = scmp.eq.s32.totalorder %s15, 15
    %p38 = por %p36, %p37
    %p40 = scmp.ne.s32.totalorder %s23, %s39
    %p41 = scmp.eq.s32.totalorder %s15, 0
    %p42 = por %p40, %p41
    %s44 = sadd.s32 %s43, 1
    %p47 = scmp.eq.s32.totalorder %s9, 15
    %p48 = scmp.ne.s32.totalorder %s43, %s45
    %p49 = scmp.eq.s32.totalorder %s9, 0
    %p50 = por %p48, %p49
    %p51 = scmp.ne.s32.totalorder %s43, %s45
    %p52 = scmp.eq.s32.totalorder %s14, 15
    %p53 = por %p51, %p52
    %p54 = scmp.ne.s32.totalorder %s45, %s46
    %p55 = scmp.eq.s32.totalorder %s14, 0
    %p56 = por %p54, %p55
    %p57 = scmp.ne.s32.totalorder %s45, %s46
    %p58 = scmp.eq.s32.totalorder %s15, 15
    %p59 = por %p57, %p58
    %p61 = scmp.ne.s32.totalorder %s46, %s60
    %p62 = scmp.eq.s32.totalorder %s15, 0
    %p63 = por %p61, %p62
    %s65 = sadd.s32 %s64, 1
    %p68 = scmp.eq.s32.totalorder %s9, 15
    %p69 = scmp.ne.s32.totalorder %s64, %s66
    %p70 = scmp.eq.s32.totalorder %s9, 0
    %p71 = por %p69, %p70
    %p72 = scmp.ne.s32.totalorder %s64, %s66
    %p73 = scmp.eq.s32.totalorder %s14, 15
    %p74 = por %p72, %p73
    %p75 = scmp.ne.s32.totalorder %s66, %s67
    %p76 = scmp.eq.s32.totalorder %s14, 0
    %p77 = por %p75, %p76
    %p78 = scmp.ne.s32.totalorder %s66, %s67
    %p79 = scmp.eq.s32.totalorder %s15, 15
    %p80 = por %p78, %p79
    %p82 = scmp.ne.s32.totalorder %s67, %s81
    %p83 = scmp.eq.s32.totalorder %s15, 0
    %p84 = por %p82, %p83
    %s85 = ssub.s32 %s9, %s16
    %p86 = scmp.eq.s32.totalorder %s85, 0
    %s88 = sadd.s32 %s87, 1
    %s89 = scalar_select %p86, %s87, %s88
    %p92 = pneg %p86
    %p93 = scmp.eq.s32.totalorder %s9, 15
    %p94 = por %p92, %p93
    %p95 = scmp.ne.s32.totalorder %s87, %s90
    %p96 = scmp.eq.s32.totalorder %s9, 0
    %p97 = por %p95, %p96
    %p98 = scmp.ne.s32.totalorder %s87, %s90
    %p99 = scmp.eq.s32.totalorder %s14, 15
    %p100 = por %p98, %p99
    %p101 = scmp.ne.s32.totalorder %s90, %s91
    %p102 = scmp.eq.s32.totalorder %s14, 0
    %p103 = por %p101, %p102
    %p104 = scmp.ne.s32.totalorder %s90, %s91
    %p105 = scmp.eq.s32.totalorder %s15, 15
    %p106 = por %p104, %p105
    %p108 = scmp.ne.s32.totalorder %s91, %s107
    %p109 = scmp.eq.s32.totalorder %s15, 0
    %p110 = por %p108, %p109
    %p111 = scmp.le.s32.totalorder 1, %s9
    %p112 = scmp.lt.s32.totalorder %s9, 17
    %p113 = pnand %p111, %p112
    %p114 = pneg %p113
    // Predicated region
    $region9: #{discriminator_forward.14} parent=5 // pred_check
      _
    $region10: #{discriminator_forward.14} parent=5 // pred_check_branch
      %116 = sbr.rel (%p113) target = $region12
    $region11: #{discriminator_forward.14} parent=5 // pred_region
      %s117 = ssub.s32 %s9, 1
      // Predicated region
      $region13: #{discriminator_forward.14} parent=11 // pred_check
        %p118 = pneg %p56
      $region14: #{discriminator_forward.14} parent=11 // pred_check_branch
        %120 = sbr.rel (%p118) target = $region16
      $region15: #{discriminator_forward.14} parent=11 // pred_region
        _
      $region16: #{discriminator_forward.14} parent=11 // pred_fallthru
        _
      // Predicated region
      $region17: #{discriminator_forward.14} parent=11 // pred_check
        %p121 = pneg %p77
      $region18: #{discriminator_forward.14} parent=11 // pred_check_branch
        %123 = sbr.rel (%p121) target = $region20
      $region19: #{discriminator_forward.14} parent=11 // pred_region
        _
      $region20: #{discriminator_forward.14} parent=11 // pred_fallthru
        _
    $region12: #{discriminator_forward.14} parent=5 // pred_fallthru
      _
    %p124 = scmp.lt.s32.totalorder %s9, 16
    // Predicated region
    $region21: #{discriminator_forward.14} parent=5 // pred_check
      %p125 = pneg %p124
    $region22: #{discriminator_forward.14} parent=5 // pred_check_branch
      %127 = sbr.rel (%p125) target = $region24
    $region23: #{discriminator_forward.14} parent=5 // pred_region
      // Predicated region
      $region25: #{discriminator_forward.14} parent=23 // pred_check
        %p128 = pneg %p29
      $region26: #{discriminator_forward.14} parent=23 // pred_check_branch
        %130 = sbr.rel (%p128) target = $region28
      $region27: #{discriminator_forward.14} parent=23 // pred_region
        %s131 = smul.u32 64, %s9
        %p132 = scmp.lt.s32.totalorder %s131, 1023
        %s133 = scalar_select %p132, %s131, 1023
        %s134 = smul.addr %s133, 8
        %s135 = scalar_lea.vmem %s0, %s134
        %s136 = smul.u32 64, %s9
      $region28: #{discriminator_forward.14} parent=23 // pred_fallthru
        _
    $region24: #{discriminator_forward.14} parent=5 // pred_fallthru
      _
    %p137 = scmp.le.s32.totalorder 1, %s9
    %p138 = scmp.lt.s32.totalorder %s9, 17
    %p139 = pnand %p137, %p138
    %p140 = pneg %p139
    // Predicated region
    $region29: #{discriminator_forward.14} parent=5 // pred_check
      _
    $region30: #{discriminator_forward.14} parent=5 // pred_check_branch
      %142 = sbr.rel (%p139) target = $region32
    $region31: #{discriminator_forward.14} parent=5 // pred_region
      %s143 = ssub.s32 %s9, 1
      %s144 = smul.u32 64, %s14
      %p145 = scmp.lt.s32.totalorder %s144, 1023
      %s146 = scalar_select %p145, %s144, 1023
      %s147 = smul.addr %s146, 8
      %s148 = scalar_lea.vmem %s0, %s147
      %p149 = pneg %p35
      %p150 = pneg %p32
      %p151 = pneg %p56
      %p152 = pneg %p53
      %p153 = pneg %p77
      %p154 = pneg %p74
      %p155 = pneg %p103
      %p156 = pneg %p100
      %s157 = smul.u32 64, %s14
      %p158 = scmp.lt.s32.totalorder %s157, 1023
      %s159 = scalar_select %p158, %s157, 1023
      %s160 = smul.addr %s159, 8
      %s161 = scalar_lea.vmem %s3, %s160
      %s162 = smul.u32 64, %s14
      %p163 = scmp.lt.s32.totalorder %s162, 1023
      %s164 = scalar_select %p163, %s162, 1023
      %s165 = smul.addr %s164, 8
      %s166 = scalar_lea.vmem %s0, %s165
      %s167 = smul.u32 64, %s14
      %s168 = smul.u32 64, %s14
      %p169 = scmp.lt.s32.totalorder %s168, 1023
      %s170 = scalar_select %p169, %s168, 1023
      %s171 = smul.addr %s170, 8
      %s172 = scalar_lea.vmem %s3, %s171
      %s173 = smul.u32 64, %s14
      %v174 = vld [vmem:[%s166] sm:$0xff]
      %v175 = vld [vmem:[%s166 + $0x8] sm:$0xff]
      %v176 = vld [vmem:[%s166 + $0x10] sm:$0xff]
      %v177 = vld [vmem:[%s166 + $0x18] sm:$0xff]
      %v178 = vld [vmem:[%s166 + $0x20] sm:$0xff]
      %v179 = vld [vmem:[%s166 + $0x28] sm:$0xff]
      %v180 = vld [vmem:[%s166 + $0x30] sm:$0xff]
      %v181 = vld [vmem:[%s166 + $0x38] sm:$0xff]
      %v182 = vld [vmem:[%s166 + $0x40] sm:$0xff]
      %v183 = vld [vmem:[%s166 + $0x48] sm:$0xff]
      %v184 = vld [vmem:[%s166 + $0x50] sm:$0xff]
      %v185 = vld [vmem:[%s166 + $0x58] sm:$0xff]
      %v186 = vld [vmem:[%s166 + $0x60] sm:$0xff]
      %v187 = vld [vmem:[%s166 + $0x68] sm:$0xff]
      %v188 = vld [vmem:[%s166 + $0x70] sm:$0xff]
      %v189 = vld [vmem:[%s166 + $0x78] sm:$0xff]
      %v190 = vld [vmem:[%s166 + $0x80] sm:$0xff]
      %v191 = vld [vmem:[%s166 + $0x88] sm:$0xff]
      %v192 = vld [vmem:[%s166 + $0x90] sm:$0xff]
      %v193 = vld [vmem:[%s166 + $0x98] sm:$0xff]
      %v194 = vld [vmem:[%s166 + $0xa0] sm:$0xff]
      %v195 = vld [vmem:[%s166 + $0xa8] sm:$0xff]
      %v196 = vld [vmem:[%s166 + $0xb0] sm:$0xff]
      %v197 = vld [vmem:[%s166 + $0xb8] sm:$0xff]
      %v198 = vld [vmem:[%s166 + $0xc0] sm:$0xff]
      %v199 = vld [vmem:[%s166 + $0xc8] sm:$0xff]
      %v200 = vld [vmem:[%s166 + $0xd0] sm:$0xff]
      %v201 = vld [vmem:[%s166 + $0xd8] sm:$0xff]
      %v202 = vld [vmem:[%s166 + $0xe0] sm:$0xff]
      %v203 = vld [vmem:[%s166 + $0xe8] sm:$0xff]
      %v204 = vld [vmem:[%s166 + $0xf0] sm:$0xff]
      %v205 = vld [vmem:[%s166 + $0xf8] sm:$0xff]
      %v206 = vld [vmem:[%s166 + $0x100] sm:$0xff]
      %v207 = vld [vmem:[%s166 + $0x108] sm:$0xff]
      %v208 = vld [vmem:[%s166 + $0x110] sm:$0xff]
      %v209 = vld [vmem:[%s166 + $0x118] sm:$0xff]
      %v210 = vld [vmem:[%s166 + $0x120] sm:$0xff]
      %v211 = vld [vmem:[%s166 + $0x128] sm:$0xff]
      %v212 = vld [vmem:[%s166 + $0x130] sm:$0xff]
      %v213 = vld [vmem:[%s166 + $0x138] sm:$0xff]
      %v214 = vld [vmem:[%s166 + $0x140] sm:$0xff]
      %v215 = vld [vmem:[%s166 + $0x148] sm:$0xff]
      %v216 = vld [vmem:[%s166 + $0x150] sm:$0xff]
      %v217 = vld [vmem:[%s166 + $0x158] sm:$0xff]
      %v218 = vld [vmem:[%s166 + $0x160] sm:$0xff]
      %v219 = vld [vmem:[%s166 + $0x168] sm:$0xff]
      %v220 = vld [vmem:[%s166 + $0x170] sm:$0xff]
      %v221 = vld [vmem:[%s166 + $0x178] sm:$0xff]
      %v222 = vld [vmem:[%s166 + $0x180] sm:$0xff]
      %v223 = vld [vmem:[%s166 + $0x188] sm:$0xff]
      %v224 = vld [vmem:[%s166 + $0x190] sm:$0xff]
      %v225 = vld [vmem:[%s166 + $0x198] sm:$0xff]
      %v226 = vld [vmem:[%s166 + $0x1a0] sm:$0xff]
      %v227 = vld [vmem:[%s166 + $0x1a8] sm:$0xff]
      %v228 = vld [vmem:[%s166 + $0x1b0] sm:$0xff]
      %v229 = vld [vmem:[%s166 + $0x1b8] sm:$0xff]
      %v230 = vld [vmem:[%s166 + $0x1c0] sm:$0xff]
      %v231 = vld [vmem:[%s166 + $0x1c8] sm:$0xff]
      %v232 = vld [vmem:[%s166 + $0x1d0] sm:$0xff]
      %v233 = vld [vmem:[%s166 + $0x1d8] sm:$0xff]
      %v234 = vld [vmem:[%s166 + $0x1e0] sm:$0xff]
      %v235 = vld [vmem:[%s166 + $0x1e8] sm:$0xff]
      %v236 = vld [vmem:[%s166 + $0x1f0] sm:$0xff]
      %v237 = vld [vmem:[%s166 + $0x1f8] sm:$0xff]
      %v238 = vld [vmem:[%s1] sm:$0x1]
      %v240 = vlaneseq
      %v241 = vshrl.u32 %v240, 7
      %v242 = vsub.s32 0, %v241
      %v243 = vrot.slane %v238, %v242
      %v245 = vmul.f32 %v174, %v243
      %v246 = vmul.f32 %v175, %v243
      %v247 = vmul.f32 %v176, %v243
      %v248 = vmul.f32 %v177, %v243
      %v249 = vmul.f32 %v178, %v243
      %v250 = vmul.f32 %v179, %v243
      %v251 = vmul.f32 %v180, %v243
      %v252 = vmul.f32 %v181, %v243
      %v253 = vmul.f32 %v182, %v243
      %v254 = vmul.f32 %v183, %v243
      %v255 = vmul.f32 %v184, %v243
      %v256 = vmul.f32 %v185, %v243
      %v257 = vmul.f32 %v186, %v243
      %v258 = vmul.f32 %v187, %v243
      %v259 = vmul.f32 %v188, %v243
      %v260 = vmul.f32 %v189, %v243
      %v261 = vmul.f32 %v190, %v243
      %v262 = vmul.f32 %v191, %v243
      %v263 = vmul.f32 %v192, %v243
      %v264 = vmul.f32 %v193, %v243
      %v265 = vmul.f32 %v194, %v243
      %v266 = vmul.f32 %v195, %v243
      %v267 = vmul.f32 %v196, %v243
      %v268 = vmul.f32 %v197, %v243
      %v269 = vmul.f32 %v198, %v243
      %v270 = vmul.f32 %v199, %v243
      %v271 = vmul.f32 %v200, %v243
      %v272 = vmul.f32 %v201, %v243
      %v273 = vmul.f32 %v202, %v243
      %v274 = vmul.f32 %v203, %v243
      %v275 = vmul.f32 %v204, %v243
      %v276 = vmul.f32 %v205, %v243
      %v277 = vmul.f32 %v206, %v243
      %v278 = vmul.f32 %v207, %v243
      %v279 = vmul.f32 %v208, %v243
      %v280 = vmul.f32 %v209, %v243
      %v281 = vmul.f32 %v210, %v243
      %v282 = vmul.f32 %v211, %v243
      %v283 = vmul.f32 %v212, %v243
      %v284 = vmul.f32 %v213, %v243
      %v285 = vmul.f32 %v214, %v243
      %v286 = vmul.f32 %v215, %v243
      %v287 = vmul.f32 %v216, %v243
      %v288 = vmul.f32 %v217, %v243
      %v289 = vmul.f32 %v218, %v243
      %v290 = vmul.f32 %v219, %v243
      %v291 = vmul.f32 %v220, %v243
      %v292 = vmul.f32 %v221, %v243
      %v293 = vmul.f32 %v222, %v243
      %v294 = vmul.f32 %v223, %v243
      %v295 = vmul.f32 %v224, %v243
      %v296 = vmul.f32 %v225, %v243
      %v297 = vmul.f32 %v226, %v243
      %v298 = vmul.f32 %v227, %v243
      %v299 = vmul.f32 %v228, %v243
      %v300 = vmul.f32 %v229, %v243
      %v301 = vmul.f32 %v230, %v243
      %v302 = vmul.f32 %v231, %v243
      %v303 = vmul.f32 %v232, %v243
      %v304 = vmul.f32 %v233, %v243
      %v305 = vmul.f32 %v234, %v243
      %v306 = vmul.f32 %v235, %v243
      %v307 = vmul.f32 %v236, %v243
      %v308 = vmul.f32 %v237, %v243
      %v309 = vld [vmem:[%s2] sm:$0x1]
      %v311 = vlaneseq
      %v312 = vshrl.u32 %v311, 7
      %v313 = vsub.s32 0, %v312
      %v314 = vrot.slane %v309, %v313
      %v316 = vadd.f32 %v245, %v314
      %v317 = vadd.f32 %v246, %v314
      %v318 = vadd.f32 %v247, %v314
      %v319 = vadd.f32 %v248, %v314
      %v320 = vadd.f32 %v249, %v314
      %v321 = vadd.f32 %v250, %v314
      %v322 = vadd.f32 %v251, %v314
      %v323 = vadd.f32 %v252, %v314
      %v324 = vadd.f32 %v253, %v314
      %v325 = vadd.f32 %v254, %v314
      %v326 = vadd.f32 %v255, %v314
      %v327 = vadd.f32 %v256, %v314
      %v328 = vadd.f32 %v257, %v314
      %v329 = vadd.f32 %v258, %v314
      %v330 = vadd.f32 %v259, %v314
      %v331 = vadd.f32 %v260, %v314
      %v332 = vadd.f32 %v261, %v314
      %v333 = vadd.f32 %v262, %v314
      %v334 = vadd.f32 %v263, %v314
      %v335 = vadd.f32 %v264, %v314
      %v336 = vadd.f32 %v265, %v314
      %v337 = vadd.f32 %v266, %v314
      %v338 = vadd.f32 %v267, %v314
      %v339 = vadd.f32 %v268, %v314
      %v340 = vadd.f32 %v269, %v314
      %v341 = vadd.f32 %v270, %v314
      %v342 = vadd.f32 %v271, %v314
      %v343 = vadd.f32 %v272, %v314
      %v344 = vadd.f32 %v273, %v314
      %v345 = vadd.f32 %v274, %v314
      %v346 = vadd.f32 %v275, %v314
      %v347 = vadd.f32 %v276, %v314
      %v348 = vadd.f32 %v277, %v314
      %v349 = vadd.f32 %v278, %v314
      %v350 = vadd.f32 %v279, %v314
      %v351 = vadd.f32 %v280, %v314
      %v352 = vadd.f32 %v281, %v314
      %v353 = vadd.f32 %v282, %v314
      %v354 = vadd.f32 %v283, %v314
      %v355 = vadd.f32 %v284, %v314
      %v356 = vadd.f32 %v285, %v314
      %v357 = vadd.f32 %v286, %v314
      %v358 = vadd.f32 %v287, %v314
      %v359 = vadd.f32 %v288, %v314
      %v360 = vadd.f32 %v289, %v314
      %v361 = vadd.f32 %v290, %v314
      %v362 = vadd.f32 %v291, %v314
      %v363 = vadd.f32 %v292, %v314
      %v364 = vadd.f32 %v293, %v314
      %v365 = vadd.f32 %v294, %v314
      %v366 = vadd.f32 %v295, %v314
      %v367 = vadd.f32 %v296, %v314
      %v368 = vadd.f32 %v297, %v314
      %v369 = vadd.f32 %v298, %v314
      %v370 = vadd.f32 %v299, %v314
      %v371 = vadd.f32 %v300, %v314
      %v372 = vadd.f32 %v301, %v314
      %v373 = vadd.f32 %v302, %v314
      %v374 = vadd.f32 %v303, %v314
      %v375 = vadd.f32 %v304, %v314
      %v376 = vadd.f32 %v305, %v314
      %v377 = vadd.f32 %v306, %v314
      %v378 = vadd.f32 %v307, %v314
      %v379 = vadd.f32 %v308, %v314
      %vm380 = vcmp.gt.f32.partialorder %v316, 0.0
      %vm381 = vcmp.gt.f32.partialorder %v317, 0.0
      %vm382 = vcmp.gt.f32.partialorder %v318, 0.0
      %vm383 = vcmp.gt.f32.partialorder %v319, 0.0
      %vm384 = vcmp.gt.f32.partialorder %v320, 0.0
      %vm385 = vcmp.gt.f32.partialorder %v321, 0.0
      %vm386 = vcmp.gt.f32.partialorder %v322, 0.0
      %vm387 = vcmp.gt.f32.partialorder %v323, 0.0
      %vm388 = vcmp.gt.f32.partialorder %v324, 0.0
      %vm389 = vcmp.gt.f32.partialorder %v325, 0.0
      %vm390 = vcmp.gt.f32.partialorder %v326, 0.0
      %vm391 = vcmp.gt.f32.partialorder %v327, 0.0
      %vm392 = vcmp.gt.f32.partialorder %v328, 0.0
      %vm393 = vcmp.gt.f32.partialorder %v329, 0.0
      %vm394 = vcmp.gt.f32.partialorder %v330, 0.0
      %vm395 = vcmp.gt.f32.partialorder %v331, 0.0
      %vm396 = vcmp.gt.f32.partialorder %v332, 0.0
      %vm397 = vcmp.gt.f32.partialorder %v333, 0.0
      %vm398 = vcmp.gt.f32.partialorder %v334, 0.0
      %vm399 = vcmp.gt.f32.partialorder %v335, 0.0
      %vm400 = vcmp.gt.f32.partialorder %v336, 0.0
      %vm401 = vcmp.gt.f32.partialorder %v337, 0.0
      %vm402 = vcmp.gt.f32.partialorder %v338, 0.0
      %vm403 = vcmp.gt.f32.partialorder %v339, 0.0
      %vm404 = vcmp.gt.f32.partialorder %v340, 0.0
      %vm405 = vcmp.gt.f32.partialorder %v341, 0.0
      %vm406 = vcmp.gt.f32.partialorder %v342, 0.0
      %vm407 = vcmp.gt.f32.partialorder %v343, 0.0
      %vm408 = vcmp.gt.f32.partialorder %v344, 0.0
      %vm409 = vcmp.gt.f32.partialorder %v345, 0.0
      %vm410 = vcmp.gt.f32.partialorder %v346, 0.0
      %vm411 = vcmp.gt.f32.partialorder %v347, 0.0
      %vm412 = vcmp.gt.f32.partialorder %v348, 0.0
      %vm413 = vcmp.gt.f32.partialorder %v349, 0.0
      %vm414 = vcmp.gt.f32.partialorder %v350, 0.0
      %vm415 = vcmp.gt.f32.partialorder %v351, 0.0
      %vm416 = vcmp.gt.f32.partialorder %v352, 0.0
      %vm417 = vcmp.gt.f32.partialorder %v353, 0.0
      %vm418 = vcmp.gt.f32.partialorder %v354, 0.0
      %vm419 = vcmp.gt.f32.partialorder %v355, 0.0
      %vm420 = vcmp.gt.f32.partialorder %v356, 0.0
      %vm421 = vcmp.gt.f32.partialorder %v357, 0.0
      %vm422 = vcmp.gt.f32.partialorder %v358, 0.0
      %vm423 = vcmp.gt.f32.partialorder %v359, 0.0
      %vm424 = vcmp.gt.f32.partialorder %v360, 0.0
      %vm425 = vcmp.gt.f32.partialorder %v361, 0.0
      %vm426 = vcmp.gt.f32.partialorder %v362, 0.0
      %vm427 = vcmp.gt.f32.partialorder %v363, 0.0
      %vm428 = vcmp.gt.f32.partialorder %v364, 0.0
      %vm429 = vcmp.gt.f32.partialorder %v365, 0.0
      %vm430 = vcmp.gt.f32.partialorder %v366, 0.0
      %vm431 = vcmp.gt.f32.partialorder %v367, 0.0
      %vm432 = vcmp.gt.f32.partialorder %v368, 0.0
      %vm433 = vcmp.gt.f32.partialorder %v369, 0.0
      %vm434 = vcmp.gt.f32.partialorder %v370, 0.0
      %vm435 = vcmp.gt.f32.partialorder %v371, 0.0
      %vm436 = vcmp.gt.f32.partialorder %v372, 0.0
      %vm437 = vcmp.gt.f32.partialorder %v373, 0.0
      %vm438 = vcmp.gt.f32.partialorder %v374, 0.0
      %vm439 = vcmp.gt.f32.partialorder %v375, 0.0
      %vm440 = vcmp.gt.f32.partialorder %v376, 0.0
      %vm441 = vcmp.gt.f32.partialorder %v377, 0.0
      %vm442 = vcmp.gt.f32.partialorder %v378, 0.0
      %vm443 = vcmp.gt.f32.partialorder %v379, 0.0
      %v444 = vmul.f32 %v316, 0.01
      %v445 = vmul.f32 %v317, 0.01
      %v446 = vmul.f32 %v318, 0.01
      %v447 = vmul.f32 %v319, 0.01
      %v448 = vmul.f32 %v320, 0.01
      %v449 = vmul.f32 %v321, 0.01
      %v450 = vmul.f32 %v322, 0.01
      %v451 = vmul.f32 %v323, 0.01
      %v452 = vmul.f32 %v324, 0.01
      %v453 = vmul.f32 %v325, 0.01
      %v454 = vmul.f32 %v326, 0.01
      %v455 = vmul.f32 %v327, 0.01
      %v456 = vmul.f32 %v328, 0.01
      %v457 = vmul.f32 %v329, 0.01
      %v458 = vmul.f32 %v330, 0.01
      %v459 = vmul.f32 %v331, 0.01
      %v460 = vmul.f32 %v332, 0.01
      %v461 = vmul.f32 %v333, 0.01
      %v462 = vmul.f32 %v334, 0.01
      %v463 = vmul.f32 %v335, 0.01
      %v464 = vmul.f32 %v336, 0.01
      %v465 = vmul.f32 %v337, 0.01
      %v466 = vmul.f32 %v338, 0.01
      %v467 = vmul.f32 %v339, 0.01
      %v468 = vmul.f32 %v340, 0.01
      %v469 = vmul.f32 %v341, 0.01
      %v470 = vmul.f32 %v342, 0.01
      %v471 = vmul.f32 %v343, 0.01
      %v472 = vmul.f32 %v344, 0.01
      %v473 = vmul.f32 %v345, 0.01
      %v474 = vmul.f32 %v346, 0.01
      %v475 = vmul.f32 %v347, 0.01
      %v476 = vmul.f32 %v348, 0.01
      %v477 = vmul.f32 %v349, 0.01
      %v478 = vmul.f32 %v350, 0.01
      %v479 = vmul.f32 %v351, 0.01
      %v480 = vmul.f32 %v352, 0.01
      %v481 = vmul.f32 %v353, 0.01
      %v482 = vmul.f32 %v354, 0.01
      %v483 = vmul.f32 %v355, 0.01
      %v484 = vmul.f32 %v356, 0.01
      %v485 = vmul.f32 %v357, 0.01
      %v486 = vmul.f32 %v358, 0.01
      %v487 = vmul.f32 %v359, 0.01
      %v488 = vmul.f32 %v360, 0.01
      %v489 = vmul.f32 %v361, 0.01
      %v490 = vmul.f32 %v362, 0.01
      %v491 = vmul.f32 %v363, 0.01
      %v492 = vmul.f32 %v364, 0.01
      %v493 = vmul.f32 %v365, 0.01
      %v494 = vmul.f32 %v366, 0.01
      %v495 = vmul.f32 %v367, 0.01
      %v496 = vmul.f32 %v368, 0.01
      %v497 = vmul.f32 %v369, 0.01
      %v498 = vmul.f32 %v370, 0.01
      %v499 = vmul.f32 %v371, 0.01
      %v500 = vmul.f32 %v372, 0.01
      %v501 = vmul.f32 %v373, 0.01
      %v502 = vmul.f32 %v374, 0.01
      %v503 = vmul.f32 %v375, 0.01
      %v504 = vmul.f32 %v376, 0.01
      %v505 = vmul.f32 %v377, 0.01
      %v506 = vmul.f32 %v378, 0.01
      %v507 = vmul.f32 %v379, 0.01
      %v508 = vsel %vm380, %v316, %v444
      %v509 = vsel %vm381, %v317, %v445
      %v510 = vsel %vm382, %v318, %v446
      %v511 = vsel %vm383, %v319, %v447
      %v512 = vsel %vm384, %v320, %v448
      %v513 = vsel %vm385, %v321, %v449
      %v514 = vsel %vm386, %v322, %v450
      %v515 = vsel %vm387, %v323, %v451
      %v516 = vsel %vm388, %v324, %v452
      %v517 = vsel %vm389, %v325, %v453
      %v518 = vsel %vm390, %v326, %v454
      %v519 = vsel %vm391, %v327, %v455
      %v520 = vsel %vm392, %v328, %v456
      %v521 = vsel %vm393, %v329, %v457
      %v522 = vsel %vm394, %v330, %v458
      %v523 = vsel %vm395, %v331, %v459
      %v524 = vsel %vm396, %v332, %v460
      %v525 = vsel %vm397, %v333, %v461
      %v526 = vsel %vm398, %v334, %v462
      %v527 = vsel %vm399, %v335, %v463
      %v528 = vsel %vm400, %v336, %v464
      %v529 = vsel %vm401, %v337, %v465
      %v530 = vsel %vm402, %v338, %v466
      %v531 = vsel %vm403, %v339, %v467
      %v532 = vsel %vm404, %v340, %v468
      %v533 = vsel %vm405, %v341, %v469
      %v534 = vsel %vm406, %v342, %v470
      %v535 = vsel %vm407, %v343, %v471
      %v536 = vsel %vm408, %v344, %v472
      %v537 = vsel %vm409, %v345, %v473
      %v538 = vsel %vm410, %v346, %v474
      %v539 = vsel %vm411, %v347, %v475
      %v540 = vsel %vm412, %v348, %v476
      %v541 = vsel %vm413, %v349, %v477
      %v542 = vsel %vm414, %v350, %v478
      %v543 = vsel %vm415, %v351, %v479
      %v544 = vsel %vm416, %v352, %v480
      %v545 = vsel %vm417, %v353, %v481
      %v546 = vsel %vm418, %v354, %v482
      %v547 = vsel %vm419, %v355, %v483
      %v548 = vsel %vm420, %v356, %v484
      %v549 = vsel %vm421, %v357, %v485
      %v550 = vsel %vm422, %v358, %v486
      %v551 = vsel %vm423, %v359, %v487
      %v552 = vsel %vm424, %v360, %v488
      %v553 = vsel %vm425, %v361, %v489
      %v554 = vsel %vm426, %v362, %v490
      %v555 = vsel %vm427, %v363, %v491
      %v556 = vsel %vm428, %v364, %v492
      %v557 = vsel %vm429, %v365, %v493
      %v558 = vsel %vm430, %v366, %v494
      %v559 = vsel %vm431, %v367, %v495
      %v560 = vsel %vm432, %v368, %v496
      %v561 = vsel %vm433, %v369, %v497
      %v562 = vsel %vm434, %v370, %v498
      %v563 = vsel %vm435, %v371, %v499
      %v564 = vsel %vm436, %v372, %v500
      %v565 = vsel %vm437, %v373, %v501
      %v566 = vsel %vm438, %v374, %v502
      %v567 = vsel %vm439, %v375, %v503
      %v568 = vsel %vm440, %v376, %v504
      %v569 = vsel %vm441, %v377, %v505
      %v570 = vsel %vm442, %v378, %v506
      %v571 = vsel %vm443, %v379, %v507
      %572 = vst [vmem:[%s172] sm:$0xff] %v508
      %573 = vst [vmem:[%s172 + $0x8] sm:$0xff] %v509
      %574 = vst [vmem:[%s172 + $0x10] sm:$0xff] %v510
      %575 = vst [vmem:[%s172 + $0x18] sm:$0xff] %v511
      %576 = vst [vmem:[%s172 + $0x20] sm:$0xff] %v512
      %577 = vst [vmem:[%s172 + $0x28] sm:$0xff] %v513
      %578 = vst [vmem:[%s172 + $0x30] sm:$0xff] %v514
      %579 = vst [vmem:[%s172 + $0x38] sm:$0xff] %v515
      %580 = vst [vmem:[%s172 + $0x40] sm:$0xff] %v516
      %581 = vst [vmem:[%s172 + $0x48] sm:$0xff] %v517
      %582 = vst [vmem:[%s172 + $0x50] sm:$0xff] %v518
      %583 = vst [vmem:[%s172 + $0x58] sm:$0xff] %v519
      %584 = vst [vmem:[%s172 + $0x60] sm:$0xff] %v520
      %585 = vst [vmem:[%s172 + $0x68] sm:$0xff] %v521
      %586 = vst [vmem:[%s172 + $0x70] sm:$0xff] %v522
      %587 = vst [vmem:[%s172 + $0x78] sm:$0xff] %v523
      %588 = vst [vmem:[%s172 + $0x80] sm:$0xff] %v524
      %589 = vst [vmem:[%s172 + $0x88] sm:$0xff] %v525
      %590 = vst [vmem:[%s172 + $0x90] sm:$0xff] %v526
      %591 = vst [vmem:[%s172 + $0x98] sm:$0xff] %v527
      %592 = vst [vmem:[%s172 + $0xa0] sm:$0xff] %v528
      %593 = vst [vmem:[%s172 + $0xa8] sm:$0xff] %v529
      %594 = vst [vmem:[%s172 + $0xb0] sm:$0xff] %v530
      %595 = vst [vmem:[%s172 + $0xb8] sm:$0xff] %v531
      %596 = vst [vmem:[%s172 + $0xc0] sm:$0xff] %v532
      %597 = vst [vmem:[%s172 + $0xc8] sm:$0xff] %v533
      %598 = vst [vmem:[%s172 + $0xd0] sm:$0xff] %v534
      %599 = vst [vmem:[%s172 + $0xd8] sm:$0xff] %v535
      %600 = vst [vmem:[%s172 + $0xe0] sm:$0xff] %v536
      %601 = vst [vmem:[%s172 + $0xe8] sm:$0xff] %v537
      %602 = vst [vmem:[%s172 + $0xf0] sm:$0xff] %v538
      %603 = vst [vmem:[%s172 + $0xf8] sm:$0xff] %v539
      %604 = vst [vmem:[%s172 + $0x100] sm:$0xff] %v540
      %605 = vst [vmem:[%s172 + $0x108] sm:$0xff] %v541
      %606 = vst [vmem:[%s172 + $0x110] sm:$0xff] %v542
      %607 = vst [vmem:[%s172 + $0x118] sm:$0xff] %v543
      %608 = vst [vmem:[%s172 + $0x120] sm:$0xff] %v544
      %609 = vst [vmem:[%s172 + $0x128] sm:$0xff] %v545
      %610 = vst [vmem:[%s172 + $0x130] sm:$0xff] %v546
      %611 = vst [vmem:[%s172 + $0x138] sm:$0xff] %v547
      %612 = vst [vmem:[%s172 + $0x140] sm:$0xff] %v548
      %613 = vst [vmem:[%s172 + $0x148] sm:$0xff] %v549
      %614 = vst [vmem:[%s172 + $0x150] sm:$0xff] %v550
      %615 = vst [vmem:[%s172 + $0x158] sm:$0xff] %v551
      %616 = vst [vmem:[%s172 + $0x160] sm:$0xff] %v552
      %617 = vst [vmem:[%s172 + $0x168] sm:$0xff] %v553
      %618 = vst [vmem:[%s172 + $0x170] sm:$0xff] %v554
      %619 = vst [vmem:[%s172 + $0x178] sm:$0xff] %v555
      %620 = vst [vmem:[%s172 + $0x180] sm:$0xff] %v556
      %621 = vst [vmem:[%s172 + $0x188] sm:$0xff] %v557
      %622 = vst [vmem:[%s172 + $0x190] sm:$0xff] %v558
      %623 = vst [vmem:[%s172 + $0x198] sm:$0xff] %v559
      %624 = vst [vmem:[%s172 + $0x1a0] sm:$0xff] %v560
      %625 = vst [vmem:[%s172 + $0x1a8] sm:$0xff] %v561
      %626 = vst [vmem:[%s172 + $0x1b0] sm:$0xff] %v562
      %627 = vst [vmem:[%s172 + $0x1b8] sm:$0xff] %v563
      %628 = vst [vmem:[%s172 + $0x1c0] sm:$0xff] %v564
      %629 = vst [vmem:[%s172 + $0x1c8] sm:$0xff] %v565
      %630 = vst [vmem:[%s172 + $0x1d0] sm:$0xff] %v566
      %631 = vst [vmem:[%s172 + $0x1d8] sm:$0xff] %v567
      %632 = vst [vmem:[%s172 + $0x1e0] sm:$0xff] %v568
      %633 = vst [vmem:[%s172 + $0x1e8] sm:$0xff] %v569
      %634 = vst [vmem:[%s172 + $0x1f0] sm:$0xff] %v570
      %635 = vst [vmem:[%s172 + $0x1f8] sm:$0xff] %v571
      %s636 = smul.u32 64, %s14
      %p637 = scmp.lt.s32.totalorder %s636, 1023
      %s638 = scalar_select %p637, %s636, 1023
      %s639 = smul.addr %s638, 8
      %s640 = scalar_lea.vmem %s3, %s639
      // Predicated region
      $region33: #{discriminator_forward.14} parent=31 // pred_check
        %p641 = pneg %p100
      $region34: #{discriminator_forward.14} parent=31 // pred_check_branch
        %643 = sbr.rel (%p641) target = $region36
      $region35: #{discriminator_forward.14} parent=31 // pred_region
        %s644 = smul.u32 64, %s14
      $region36: #{discriminator_forward.14} parent=31 // pred_fallthru
        _
    $region32: #{discriminator_forward.14} parent=5 // pred_fallthru
      _
    %p645 = scmp.le.s32.totalorder 2, %s9
    // Predicated region
    $region37: #{discriminator_forward.14} parent=5 // pred_check
      %p646 = pneg %p645
    $region38: #{discriminator_forward.14} parent=5 // pred_check_branch
      %648 = sbr.rel (%p646) target = $region40
    $region39: #{discriminator_forward.14} parent=5 // pred_region
      %s649 = ssub.s32 %s9, 2
      // Predicated region
      $region41: #{discriminator_forward.14} parent=39 // pred_check
        %p650 = pneg %p106
      $region42: #{discriminator_forward.14} parent=39 // pred_check_branch
        %652 = sbr.rel (%p650) target = $region44
      $region43: #{discriminator_forward.14} parent=39 // pred_region
        %s653 = smul.u32 64, %s15
        %p654 = scmp.lt.s32.totalorder %s653, 1023
        %s655 = scalar_select %p654, %s653, 1023
        %s656 = smul.addr %s655, 8
        %s657 = scalar_lea.vmem %s3, %s656
      $region44: #{discriminator_forward.14} parent=39 // pred_fallthru
        _
    $region40: #{discriminator_forward.14} parent=5 // pred_fallthru
      _
  $region6: #{discriminator_forward.14} parent=0 // loop_footer
    %s13 = sadd.s32 1, %s9
  $region7: #{discriminator_forward.14} parent=0 // loop_footer_branch
    %8 = sbr.rel target = $region3
  $region8: #{discriminator_forward.14} parent=0 // loop_exit
    _

// kernel: discriminator_forward.15
$region0: #{discriminator_forward.15}
  #allocation0 [shape = 'u32[]', space=smem, size = 0x4, offset = 0x4, fixed_abs, tag = 'smem constant byte address 0x4 - core index']
  #allocation1 [shape = 'u32[144,128]{1,0:T(1,128)}', space=vmem, size = 0x12000, scoped, tag = 'internal scratch']
  %s0 = inlined_call_operand.vmem [shape: bf16[2048,384], index: 0, kind: input, shape index: {}]
  %s1 = inlined_call_operand.vmem [shape: bf16[384,128], index: 1, kind: input, shape index: {}]
  %s2 = inlined_call_operand.vmem [shape: f32[2048,128], index: 2, kind: output, shape index: {0}]
  %s3 = inlined_call_operand.vmem [shape: f32[4,8,128], index: 3, kind: output, shape index: {1}]
  %4 = xla_tuple %s2, %s3
  %s5 = sld [smem:[#allocation0]]
  $region49: #{discriminator_forward.15} parent=0
    _
  %s7 = ssub.s32 1, %s5
  %s8 = scalar_select 0, %s7, %s5
  loop: start=0, step=1, limit=6
  $region2: #{discriminator_forward.15} parent=0 // loop_pre_header
    _
  $region3: #{discriminator_forward.15} parent=0 // loop_header
    %s10 = sphi 0, %s14
    %p11 = scmp.ge.s32.totalorder %s10, 6
    %s20 = sphi 0, %s22
    %s23 = sphi 0, %s20
    %s24 = sphi 0, %s23
    %s40 = sphi 0, %s24
    %s44 = sphi 0, %s44
    %s46 = sphi 0, %s44
    %s47 = sphi 0, %s46
    %s61 = sphi 0, %s47
    %s67 = sphi 0, %s69
    %s70 = sphi 0, %s67
    %s71 = sphi 0, %s70
    %s87 = sphi 0, %s71
    %s93 = sphi 0, %s95
    %s96 = sphi 0, %s93
    %s97 = sphi 0, %s96
    %s113 = sphi 0, %s97
  $region4: #{discriminator_forward.15} parent=0 // loop_header_branch
    %13 = sbr.rel (%p11) target = $region8
  $region5: #{discriminator_forward.15} parent=0 // loop_body
    %s15 = ssub.s32 %s10, 1
    %s16 = ssub.s32 %s10, 2
    %s17 = sadd.s32 %s10, 1
    %s18 = ssub.s32 %s10, %s17
    %p19 = scmp.eq.s32.totalorder %s18, 0
    %s21 = sadd.s32 %s20, 1
    %s22 = scalar_select %p19, %s20, %s21
    %p25 = pneg %p19
    %p26 = scmp.eq.s32.totalorder %s10, 3
    %p27 = por %p25, %p26
    %p28 = scmp.ne.s32.totalorder %s20, %s23
    %p29 = scmp.eq.s32.totalorder %s10, 0
    %p30 = por %p28, %p29
    %p31 = scmp.ne.s32.totalorder %s20, %s23
    %p32 = scmp.eq.s32.totalorder %s15, 3
    %p33 = por %p31, %p32
    %p34 = scmp.ne.s32.totalorder %s23, %s24
    %p35 = scmp.eq.s32.totalorder %s15, 0
    %p36 = por %p34, %p35
    %p37 = scmp.ne.s32.totalorder %s23, %s24
    %p38 = scmp.eq.s32.totalorder %s16, 3
    %p39 = por %p37, %p38
    %p41 = scmp.ne.s32.totalorder %s24, %s40
    %p42 = scmp.eq.s32.totalorder %s16, 0
    %p43 = por %p41, %p42
    %s45 = sadd.s32 %s44, 1
    %p48 = scmp.eq.s32.totalorder %s10, 3
    %p49 = scmp.ne.s32.totalorder %s44, %s46
    %p50 = scmp.eq.s32.totalorder %s10, 0
    %p51 = por %p49, %p50
    %p52 = scmp.ne.s32.totalorder %s44, %s46
    %p53 = scmp.eq.s32.totalorder %s15, 3
    %p54 = por %p52, %p53
    %p55 = scmp.ne.s32.totalorder %s46, %s47
    %p56 = scmp.eq.s32.totalorder %s15, 0
    %p57 = por %p55, %p56
    %p58 = scmp.ne.s32.totalorder %s46, %s47
    %p59 = scmp.eq.s32.totalorder %s16, 3
    %p60 = por %p58, %p59
    %p62 = scmp.ne.s32.totalorder %s47, %s61
    %p63 = scmp.eq.s32.totalorder %s16, 0
    %p64 = por %p62, %p63
    %s65 = ssub.s32 %s10, %s17
    %p66 = scmp.eq.s32.totalorder %s65, 0
    %s68 = sadd.s32 %s67, 1
    %s69 = scalar_select %p66, %s67, %s68
    %p72 = pneg %p66
    %p73 = scmp.eq.s32.totalorder %s10, 3
    %p74 = por %p72, %p73
    %p75 = scmp.ne.s32.totalorder %s67, %s70
    %p76 = scmp.eq.s32.totalorder %s10, 0
    %p77 = por %p75, %p76
    %p78 = scmp.ne.s32.totalorder %s67, %s70
    %p79 = scmp.eq.s32.totalorder %s15, 3
    %p80 = por %p78, %p79
    %p81 = scmp.ne.s32.totalorder %s70, %s71
    %p82 = scmp.eq.s32.totalorder %s15, 0
    %p83 = por %p81, %p82
    %p84 = scmp.ne.s32.totalorder %s70, %s71
    %p85 = scmp.eq.s32.totalorder %s16, 3
    %p86 = por %p84, %p85
    %p88 = scmp.ne.s32.totalorder %s71, %s87
    %p89 = scmp.eq.s32.totalorder %s16, 0
    %p90 = por %p88, %p89
    %s91 = ssub.s32 %s10, %s17
    %p92 = scmp.eq.s32.totalorder %s91, 0
    %s94 = sadd.s32 %s93, 1
    %s95 = scalar_select %p92, %s93, %s94
    %p98 = pneg %p92
    %p99 = scmp.eq.s32.totalorder %s10, 3
    %p100 = por %p98, %p99
    %p101 = scmp.ne.s32.totalorder %s93, %s96
    %p102 = scmp.eq.s32.totalorder %s10, 0
    %p103 = por %p101, %p102
    %p104 = scmp.ne.s32.totalorder %s93, %s96
    %p105 = scmp.eq.s32.totalorder %s15, 3
    %p106 = por %p104, %p105
    %p107 = scmp.ne.s32.totalorder %s96, %s97
    %p108 = scmp.eq.s32.totalorder %s15, 0
    %p109 = por %p107, %p108
    %p110 = scmp.ne.s32.totalorder %s96, %s97
    %p111 = scmp.eq.s32.totalorder %s16, 3
    %p112 = por %p110, %p111
    %p114 = scmp.ne.s32.totalorder %s97, %s113
    %p115 = scmp.eq.s32.totalorder %s16, 0
    %p116 = por %p114, %p115
    %p117 = scmp.le.s32.totalorder 1, %s10
    %p118 = scmp.lt.s32.totalorder %s10, 5
    %p119 = pnand %p117, %p118
    %p120 = pneg %p119
    // Predicated region
    $region9: #{discriminator_forward.15} parent=5 // pred_check
      _
    $region10: #{discriminator_forward.15} parent=5 // pred_check_branch
      %122 = sbr.rel (%p119) target = $region12
    $region11: #{discriminator_forward.15} parent=5 // pred_region
      %s123 = ssub.s32 %s10, 1
      // Predicated region
      $region13: #{discriminator_forward.15} parent=11 // pred_check
        %p124 = pneg %p57
      $region14: #{discriminator_forward.15} parent=11 // pred_check_branch
        %126 = sbr.rel (%p124) target = $region16
      $region15: #{discriminator_forward.15} parent=11 // pred_region
        _
      $region16: #{discriminator_forward.15} parent=11 // pred_fallthru
        _
    $region12: #{discriminator_forward.15} parent=5 // pred_fallthru
      _
    %p127 = scmp.lt.s32.totalorder %s10, 4
    // Predicated region
    $region17: #{discriminator_forward.15} parent=5 // pred_check
      %p128 = pneg %p127
    $region18: #{discriminator_forward.15} parent=5 // pred_check_branch
      %130 = sbr.rel (%p128) target = $region20
    $region19: #{discriminator_forward.15} parent=5 // pred_region
      // Predicated region
      $region21: #{discriminator_forward.15} parent=19 // pred_check
        %p131 = pneg %p30
      $region22: #{discriminator_forward.15} parent=19 // pred_check_branch
        %133 = sbr.rel (%p131) target = $region24
      $region23: #{discriminator_forward.15} parent=19 // pred_region
        %s134 = smul.u32 64, %s10
        %p135 = scmp.lt.s32.totalorder %s134, 255
        %s136 = scalar_select %p135, %s134, 255
        %s137 = smul.addr %s136, 3
        %s138 = smul.addr %s137, 4
        %s139 = scalar_lea.vmem %s0, %s138
        %s140 = smul.u32 64, %s10
      $region24: #{discriminator_forward.15} parent=19 // pred_fallthru
        _
    $region20: #{discriminator_forward.15} parent=5 // pred_fallthru
      _
    %p141 = scmp.le.s32.totalorder 1, %s10
    %p142 = scmp.lt.s32.totalorder %s10, 5
    %p143 = pnand %p141, %p142
    %p144 = pneg %p143
    // Predicated region
    $region25: #{discriminator_forward.15} parent=5 // pred_check
      _
    $region26: #{discriminator_forward.15} parent=5 // pred_check_branch
      %146 = sbr.rel (%p143) target = $region28
    $region27: #{discriminator_forward.15} parent=5 // pred_region
      %s147 = ssub.s32 %s10, 1
      %s148 = smul.u32 64, %s15
      %p149 = scmp.lt.s32.totalorder %s148, 255
      %s150 = scalar_select %p149, %s148, 255
      %s151 = smul.addr %s150, 3
      %s152 = smul.addr %s151, 4
      %s153 = scalar_lea.vmem %s0, %s152
      %p154 = pneg %p36
      %p155 = pneg %p33
      %p156 = pneg %p57
      %p157 = pneg %p54
      %p158 = pneg %p83
      %p159 = pneg %p80
      %s160 = smul.u32 64, %s15
      %p161 = scmp.lt.s32.totalorder %s160, 255
      %s162 = scalar_select %p161, %s160, 255
      %s163 = smul.addr %s162, 8
      %s164 = scalar_lea.vmem %s2, %s163
      %p165 = pneg %p109
      %p166 = pneg %p106
      %p167 = scmp.lt.s32.totalorder %s15, 3
      %s168 = scalar_select %p167, %s15, 3
      %s169 = smul.addr %s168, 8
      %s170 = scalar_lea.vmem %s3, %s169
      %s171 = smul.u32 64, %s15
      %p172 = scmp.lt.s32.totalorder %s171, 255
      %s173 = scalar_select %p172, %s171, 255
      %s174 = smul.addr %s173, 3
      %s175 = smul.addr %s174, 4
      %s176 = scalar_lea.vmem %s0, %s175
      %s177 = smul.u32 64, %s15
      %s178 = smul.u32 64, %s15
      %p179 = scmp.lt.s32.totalorder %s178, 255
      %s180 = scalar_select %p179, %s178, 255
      %s181 = smul.addr %s180, 8
      %s182 = scalar_lea.vmem %s2, %s181
      %s183 = smul.u32 64, %s15
      %p184 = scmp.lt.s32.totalorder %s15, 3
      %s185 = scalar_select %p184, %s15, 3
      %s186 = smul.addr %s185, 8
      %s187 = scalar_lea.vmem %s3, %s186
      %v189 = vld [vmem:[%s176] sm:$0xff]
      %v190 = vld [vmem:[%s176 + $0x8] sm:$0xf]
      %v191 = vld [vmem:[%s176 + $0xc] sm:$0xff]
      %v192 = vld [vmem:[%s176 + $0x14] sm:$0xf]
      %v193 = vld [vmem:[%s176 + $0x18] sm:$0xff]
      %v194 = vld [vmem:[%s176 + $0x20] sm:$0xf]
      %v195 = vld [vmem:[%s176 + $0x24] sm:$0xff]
      %v196 = vld [vmem:[%s176 + $0x2c] sm:$0xf]
      %v197 = vld [vmem:[%s176 + $0x30] sm:$0xff]
      %v198 = vld [vmem:[%s176 + $0x38] sm:$0xf]
      %v199 = vld [vmem:[%s176 + $0x3c] sm:$0xff]
      %v200 = vld [vmem:[%s176 + $0x44] sm:$0xf]
      %v201 = vld [vmem:[%s176 + $0x48] sm:$0xff]
      %v202 = vld [vmem:[%s176 + $0x50] sm:$0xf]
      %v203 = vld [vmem:[%s176 + $0x54] sm:$0xff]
      %v204 = vld [vmem:[%s176 + $0x5c] sm:$0xf]
      %v205 = vld [vmem:[%s176 + $0x60] sm:$0xff]
      %v206 = vld [vmem:[%s176 + $0x68] sm:$0xf]
      %v207 = vld [vmem:[%s176 + $0x6c] sm:$0xff]
      %v208 = vld [vmem:[%s176 + $0x74] sm:$0xf]
      %v209 = vld [vmem:[%s176 + $0x78] sm:$0xff]
      %v210 = vld [vmem:[%s176 + $0x80] sm:$0xf]
      %v211 = vld [vmem:[%s176 + $0x84] sm:$0xff]
      %v212 = vld [vmem:[%s176 + $0x8c] sm:$0xf]
      %v213 = vld [vmem:[%s176 + $0x90] sm:$0xff]
      %v214 = vld [vmem:[%s176 + $0x98] sm:$0xf]
      %v215 = vld [vmem:[%s176 + $0x9c] sm:$0xff]
      %v216 = vld [vmem:[%s176 + $0xa4] sm:$0xf]
      %v217 = vld [vmem:[%s176 + $0xa8] sm:$0xff]
      %v218 = vld [vmem:[%s176 + $0xb0] sm:$0xf]
      %v219 = vld [vmem:[%s176 + $0xb4] sm:$0xff]
      %v220 = vld [vmem:[%s176 + $0xbc] sm:$0xf]
      %v221 = vld [vmem:[%s176 + $0xc0] sm:$0xff]
      %v222 = vld [vmem:[%s176 + $0xc8] sm:$0xf]
      %v223 = vld [vmem:[%s176 + $0xcc] sm:$0xff]
      %v224 = vld [vmem:[%s176 + $0xd4] sm:$0xf]
      %v225 = vld [vmem:[%s176 + $0xd8] sm:$0xff]
      %v226 = vld [vmem:[%s176 + $0xe0] sm:$0xf]
      %v227 = vld [vmem:[%s176 + $0xe4] sm:$0xff]
      %v228 = vld [vmem:[%s176 + $0xec] sm:$0xf]
      %v229 = vld [vmem:[%s176 + $0xf0] sm:$0xff]
      %v230 = vld [vmem:[%s176 + $0xf8] sm:$0xf]
      %v231 = vld [vmem:[%s176 + $0xfc] sm:$0xff]
      %v232 = vld [vmem:[%s176 + $0x104] sm:$0xf]
      %v233 = vld [vmem:[%s176 + $0x108] sm:$0xff]
      %v234 = vld [vmem:[%s176 + $0x110] sm:$0xf]
      %v235 = vld [vmem:[%s176 + $0x114] sm:$0xff]
      %v236 = vld [vmem:[%s176 + $0x11c] sm:$0xf]
      %v237 = vld [vmem:[%s176 + $0x120] sm:$0xff]
      %v238 = vld [vmem:[%s176 + $0x128] sm:$0xf]
      %v239 = vld [vmem:[%s176 + $0x12c] sm:$0xff]
      %v240 = vld [vmem:[%s176 + $0x134] sm:$0xf]
      %v241 = vld [vmem:[%s176 + $0x138] sm:$0xff]
      %v242 = vld [vmem:[%s176 + $0x140] sm:$0xf]
      %v243 = vld [vmem:[%s176 + $0x144] sm:$0xff]
      %v244 = vld [vmem:[%s176 + $0x14c] sm:$0xf]
      %v245 = vld [vmem:[%s176 + $0x150] sm:$0xff]
      %v246 = vld [vmem:[%s176 + $0x158] sm:$0xf]
      %v247 = vld [vmem:[%s176 + $0x15c] sm:$0xff]
      %v248 = vld [vmem:[%s176 + $0x164] sm:$0xf]
      %v249 = vld [vmem:[%s176 + $0x168] sm:$0xff]
      %v250 = vld [vmem:[%s176 + $0x170] sm:$0xf]
      %v251 = vld [vmem:[%s176 + $0x174] sm:$0xff]
      %v252 = vld [vmem:[%s176 + $0x17c] sm:$0xf]
      %v253 = vld [vmem:[%s176 + $0x180] sm:$0xff]
      %v254 = vld [vmem:[%s176 + $0x188] sm:$0xf]
      %v255 = vld [vmem:[%s176 + $0x18c] sm:$0xff]
      %v256 = vld [vmem:[%s176 + $0x194] sm:$0xf]
      %v257 = vld [vmem:[%s176 + $0x198] sm:$0xff]
      %v258 = vld [vmem:[%s176 + $0x1a0] sm:$0xf]
      %v259 = vld [vmem:[%s176 + $0x1a4] sm:$0xff]
      %v260 = vld [vmem:[%s176 + $0x1ac] sm:$0xf]
      %v261 = vld [vmem:[%s176 + $0x1b0] sm:$0xff]
      %v262 = vld [vmem:[%s176 + $0x1b8] sm:$0xf]
      %v263 = vld [vmem:[%s176 + $0x1bc] sm:$0xff]
      %v264 = vld [vmem:[%s176 + $0x1c4] sm:$0xf]
      %v265 = vld [vmem:[%s176 + $0x1c8] sm:$0xff]
      %v266 = vld [vmem:[%s176 + $0x1d0] sm:$0xf]
      %v267 = vld [vmem:[%s176 + $0x1d4] sm:$0xff]
      %v268 = vld [vmem:[%s176 + $0x1dc] sm:$0xf]
      %v269 = vld [vmem:[%s176 + $0x1e0] sm:$0xff]
      %v270 = vld [vmem:[%s176 + $0x1e8] sm:$0xf]
      %v271 = vld [vmem:[%s176 + $0x1ec] sm:$0xff]
      %v272 = vld [vmem:[%s176 + $0x1f4] sm:$0xf]
      %v273 = vld [vmem:[%s176 + $0x1f8] sm:$0xff]
      %v274 = vld [vmem:[%s176 + $0x200] sm:$0xf]
      %v275 = vld [vmem:[%s176 + $0x204] sm:$0xff]
      %v276 = vld [vmem:[%s176 + $0x20c] sm:$0xf]
      %v277 = vld [vmem:[%s176 + $0x210] sm:$0xff]
      %v278 = vld [vmem:[%s176 + $0x218] sm:$0xf]
      %v279 = vld [vmem:[%s176 + $0x21c] sm:$0xff]
      %v280 = vld [vmem:[%s176 + $0x224] sm:$0xf]
      %v281 = vld [vmem:[%s176 + $0x228] sm:$0xff]
      %v282 = vld [vmem:[%s176 + $0x230] sm:$0xf]
      %v283 = vld [vmem:[%s176 + $0x234] sm:$0xff]
      %v284 = vld [vmem:[%s176 + $0x23c] sm:$0xf]
      %v285 = vld [vmem:[%s176 + $0x240] sm:$0xff]
      %v286 = vld [vmem:[%s176 + $0x248] sm:$0xf]
      %v287 = vld [vmem:[%s176 + $0x24c] sm:$0xff]
      %v288 = vld [vmem:[%s176 + $0x254] sm:$0xf]
      %v289 = vld [vmem:[%s176 + $0x258] sm:$0xff]
      %v290 = vld [vmem:[%s176 + $0x260] sm:$0xf]
      %v291 = vld [vmem:[%s176 + $0x264] sm:$0xff]
      %v292 = vld [vmem:[%s176 + $0x26c] sm:$0xf]
      %v293 = vld [vmem:[%s176 + $0x270] sm:$0xff]
      %v294 = vld [vmem:[%s176 + $0x278] sm:$0xf]
      %v295 = vld [vmem:[%s176 + $0x27c] sm:$0xff]
      %v296 = vld [vmem:[%s176 + $0x284] sm:$0xf]
      %v297 = vld [vmem:[%s176 + $0x288] sm:$0xff]
      %v298 = vld [vmem:[%s176 + $0x290] sm:$0xf]
      %v299 = vld [vmem:[%s176 + $0x294] sm:$0xff]
      %v300 = vld [vmem:[%s176 + $0x29c] sm:$0xf]
      %v301 = vld [vmem:[%s176 + $0x2a0] sm:$0xff]
      %v302 = vld [vmem:[%s176 + $0x2a8] sm:$0xf]
      %v303 = vld [vmem:[%s176 + $0x2ac] sm:$0xff]
      %v304 = vld [vmem:[%s176 + $0x2b4] sm:$0xf]
      %v305 = vld [vmem:[%s176 + $0x2b8] sm:$0xff]
      %v306 = vld [vmem:[%s176 + $0x2c0] sm:$0xf]
      %v307 = vld [vmem:[%s176 + $0x2c4] sm:$0xff]
      %v308 = vld [vmem:[%s176 + $0x2cc] sm:$0xf]
      %v309 = vld [vmem:[%s176 + $0x2d0] sm:$0xff]
      %v310 = vld [vmem:[%s176 + $0x2d8] sm:$0xf]
      %v311 = vld [vmem:[%s176 + $0x2dc] sm:$0xff]
      %v312 = vld [vmem:[%s176 + $0x2e4] sm:$0xf]
      %v313 = vld [vmem:[%s176 + $0x2e8] sm:$0xff]
      %v314 = vld [vmem:[%s176 + $0x2f0] sm:$0xf]
      %v315 = vld [vmem:[%s176 + $0x2f4] sm:$0xff]
      %v316 = vld [vmem:[%s176 + $0x2fc] sm:$0xf]
      %v317 = vld [vmem:[%s1] sm:$0xf]
      %v318 = vld [vmem:[%s1 + $0x4] sm:$0xf]
      %v319 = vld [vmem:[%s1 + $0x8] sm:$0xf]
      %v320 = vld [vmem:[%s1 + $0xc] sm:$0xf]
      %v321 = vld [vmem:[%s1 + $0x10] sm:$0xf]
      %v322 = vld [vmem:[%s1 + $0x14] sm:$0xf]
      %v323 = vld [vmem:[%s1 + $0x18] sm:$0xf]
      %v324 = vld [vmem:[%s1 + $0x1c] sm:$0xf]
      %v325 = vld [vmem:[%s1 + $0x20] sm:$0xf]
      %v326 = vld [vmem:[%s1 + $0x24] sm:$0xf]
      %v327 = vld [vmem:[%s1 + $0x28] sm:$0xf]
      %v328 = vld [vmem:[%s1 + $0x2c] sm:$0xf]
      %v329 = vld [vmem:[%s1 + $0x30] sm:$0xf]
      %v330 = vld [vmem:[%s1 + $0x34] sm:$0xf]
      %v331 = vld [vmem:[%s1 + $0x38] sm:$0xf]
      %v332 = vld [vmem:[%s1 + $0x3c] sm:$0xf]
      %v333 = vld [vmem:[%s1 + $0x40] sm:$0xf]
      %v334 = vld [vmem:[%s1 + $0x44] sm:$0xf]
      %v335 = vld [vmem:[%s1 + $0x48] sm:$0xf]
      %v336 = vld [vmem:[%s1 + $0x4c] sm:$0xf]
      %v337 = vld [vmem:[%s1 + $0x50] sm:$0xf]
      %v338 = vld [vmem:[%s1 + $0x54] sm:$0xf]
      %v339 = vld [vmem:[%s1 + $0x58] sm:$0xf]
      %v340 = vld [vmem:[%s1 + $0x5c] sm:$0xf]
      %v341 = vld [vmem:[%s1 + $0x60] sm:$0xf]
      %v342 = vld [vmem:[%s1 + $0x64] sm:$0xf]
      %v343 = vld [vmem:[%s1 + $0x68] sm:$0xf]
      %v344 = vld [vmem:[%s1 + $0x6c] sm:$0xf]
      %v345 = vld [vmem:[%s1 + $0x70] sm:$0xf]
      %v346 = vld [vmem:[%s1 + $0x74] sm:$0xf]
      %v347 = vld [vmem:[%s1 + $0x78] sm:$0xf]
      %v348 = vld [vmem:[%s1 + $0x7c] sm:$0xf]
      %v349 = vld [vmem:[%s1 + $0x80] sm:$0xf]
      %v350 = vld [vmem:[%s1 + $0x84] sm:$0xf]
      %v351 = vld [vmem:[%s1 + $0x88] sm:$0xf]
      %v352 = vld [vmem:[%s1 + $0x8c] sm:$0xf]
      %v353 = vld [vmem:[%s1 + $0x90] sm:$0xf]
      %v354 = vld [vmem:[%s1 + $0x94] sm:$0xf]
      %v355 = vld [vmem:[%s1 + $0x98] sm:$0xf]
      %v356 = vld [vmem:[%s1 + $0x9c] sm:$0xf]
      %v357 = vld [vmem:[%s1 + $0xa0] sm:$0xf]
      %v358 = vld [vmem:[%s1 + $0xa4] sm:$0xf]
      %v359 = vld [vmem:[%s1 + $0xa8] sm:$0xf]
      %v360 = vld [vmem:[%s1 + $0xac] sm:$0xf]
      %v361 = vld [vmem:[%s1 + $0xb0] sm:$0xf]
      %v362 = vld [vmem:[%s1 + $0xb4] sm:$0xf]
      %v363 = vld [vmem:[%s1 + $0xb8] sm:$0xf]
      %v364 = vld [vmem:[%s1 + $0xbc] sm:$0xf]
      %v493 = vunpack.c.l.b16 %v189
      %v494 = vunpack.c.h.b16 %v189
      %v495 = vunpack.c.l.b16 %v190
      %v496 = vunpack.c.l.b16 %v191
      %v497 = vunpack.c.h.b16 %v191
      %v498 = vunpack.c.l.b16 %v192
      %v499 = vunpack.c.l.b16 %v193
      %v500 = vunpack.c.h.b16 %v193
      %v501 = vunpack.c.l.b16 %v194
      %v502 = vunpack.c.l.b16 %v195
      %v503 = vunpack.c.h.b16 %v195
      %v504 = vunpack.c.l.b16 %v196
      %v505 = vunpack.c.l.b16 %v197
      %v506 = vunpack.c.h.b16 %v197
      %v507 = vunpack.c.l.b16 %v198
      %v508 = vunpack.c.l.b16 %v199
      %v509 = vunpack.c.h.b16 %v199
      %v510 = vunpack.c.l.b16 %v200
      %v511 = vunpack.c.l.b16 %v201
      %v512 = vunpack.c.h.b16 %v201
      %v513 = vunpack.c.l.b16 %v202
      %v514 = vunpack.c.l.b16 %v203
      %v515 = vunpack.c.h.b16 %v203
      %v516 = vunpack.c.l.b16 %v204
      %v517 = vunpack.c.l.b16 %v205
      %v518 = vunpack.c.h.b16 %v205
      %v519 = vunpack.c.l.b16 %v206
      %v520 = vunpack.c.l.b16 %v207
      %v521 = vunpack.c.h.b16 %v207
      %v522 = vunpack.c.l.b16 %v208
      %v523 = vunpack.c.l.b16 %v209
      %v524 = vunpack.c.h.b16 %v209
      %v525 = vunpack.c.l.b16 %v210
      %v526 = vunpack.c.l.b16 %v211
      %v527 = vunpack.c.h.b16 %v211
      %v528 = vunpack.c.l.b16 %v212
      %v529 = vunpack.c.l.b16 %v213
      %v530 = vunpack.c.h.b16 %v213
      %v531 = vunpack.c.l.b16 %v214
      %v532 = vunpack.c.l.b16 %v215
      %v533 = vunpack.c.h.b16 %v215
      %v534 = vunpack.c.l.b16 %v216
      %v535 = vunpack.c.l.b16 %v217
      %v536 = vunpack.c.h.b16 %v217
      %v537 = vunpack.c.l.b16 %v218
      %v538 = vunpack.c.l.b16 %v219
      %v539 = vunpack.c.h.b16 %v219
      %v540 = vunpack.c.l.b16 %v220
      %v541 = vunpack.c.l.b16 %v221
      %v542 = vunpack.c.h.b16 %v221
      %v543 = vunpack.c.l.b16 %v222
      %v544 = vunpack.c.l.b16 %v223
      %v545 = vunpack.c.h.b16 %v223
      %v546 = vunpack.c.l.b16 %v224
      %v547 = vunpack.c.l.b16 %v225
      %v548 = vunpack.c.h.b16 %v225
      %v549 = vunpack.c.l.b16 %v226
      %v550 = vunpack.c.l.b16 %v227
      %v551 = vunpack.c.h.b16 %v227
      %v552 = vunpack.c.l.b16 %v228
      %v553 = vunpack.c.l.b16 %v229
      %v554 = vunpack.c.h.b16 %v229
      %v555 = vunpack.c.l.b16 %v230
      %v556 = vunpack.c.l.b16 %v231
      %v557 = vunpack.c.h.b16 %v231
      %v558 = vunpack.c.l.b16 %v232
      %v559 = vunpack.c.l.b16 %v233
      %v560 = vunpack.c.h.b16 %v233
      %v561 = vunpack.c.l.b16 %v234
      %v562 = vunpack.c.l.b16 %v235
      %v563 = vunpack.c.h.b16 %v235
      %v564 = vunpack.c.l.b16 %v236
      %v565 = vunpack.c.l.b16 %v237
      %v566 = vunpack.c.h.b16 %v237
      %v567 = vunpack.c.l.b16 %v238
      %v568 = vunpack.c.l.b16 %v239
      %v569 = vunpack.c.h.b16 %v239
      %v570 = vunpack.c.l.b16 %v240
      %v571 = vunpack.c.l.b16 %v241
      %v572 = vunpack.c.h.b16 %v241
      %v573 = vunpack.c.l.b16 %v242
      %v574 = vunpack.c.l.b16 %v243
      %v575 = vunpack.c.h.b16 %v243
      %v576 = vunpack.c.l.b16 %v244
      %v577 = vunpack.c.l.b16 %v245
      %v578 = vunpack.c.h.b16 %v245
      %v579 = vunpack.c.l.b16 %v246
      %v580 = vunpack.c.l.b16 %v247
      %v581 = vunpack.c.h.b16 %v247
      %v582 = vunpack.c.l.b16 %v248
      %v583 = vunpack.c.l.b16 %v249
      %v584 = vunpack.c.h.b16 %v249
      %v585 = vunpack.c.l.b16 %v250
      %v586 = vunpack.c.l.b16 %v251
      %v587 = vunpack.c.h.b16 %v251
      %v588 = vunpack.c.l.b16 %v252
      %v589 = vunpack.c.l.b16 %v253
      %v590 = vunpack.c.h.b16 %v253
      %v591 = vunpack.c.l.b16 %v254
      %v592 = vunpack.c.l.b16 %v255
      %v593 = vunpack.c.h.b16 %v255
      %v594 = vunpack.c.l.b16 %v256
      %v595 = vunpack.c.l.b16 %v257
      %v596 = vunpack.c.h.b16 %v257
      %v597 = vunpack.c.l.b16 %v258
      %v598 = vunpack.c.l.b16 %v259
      %v599 = vunpack.c.h.b16 %v259
      %v600 = vunpack.c.l.b16 %v260
      %v601 = vunpack.c.l.b16 %v261
      %v602 = vunpack.c.h.b16 %v261
      %v603 = vunpack.c.l.b16 %v262
      %v604 = vunpack.c.l.b16 %v263
      %v605 = vunpack.c.h.b16 %v263
      %v606 = vunpack.c.l.b16 %v264
      %v607 = vunpack.c.l.b16 %v265
      %v608 = vunpack.c.h.b16 %v265
      %v609 = vunpack.c.l.b16 %v266
      %v610 = vunpack.c.l.b16 %v267
      %v611 = vunpack.c.h.b16 %v267
      %v612 = vunpack.c.l.b16 %v268
      %v613 = vunpack.c.l.b16 %v269
      %v614 = vunpack.c.h.b16 %v269
      %v615 = vunpack.c.l.b16 %v270
      %v616 = vunpack.c.l.b16 %v271
      %v617 = vunpack.c.h.b16 %v271
      %v618 = vunpack.c.l.b16 %v272
      %v619 = vunpack.c.l.b16 %v273
      %v620 = vunpack.c.h.b16 %v273
      %v621 = vunpack.c.l.b16 %v274
      %v622 = vunpack.c.l.b16 %v275
      %v623 = vunpack.c.h.b16 %v275
      %v624 = vunpack.c.l.b16 %v276
      %v625 = vunpack.c.l.b16 %v277
      %v626 = vunpack.c.h.b16 %v277
      %v627 = vunpack.c.l.b16 %v278
      %v628 = vunpack.c.l.b16 %v279
      %v629 = vunpack.c.h.b16 %v279
      %v630 = vunpack.c.l.b16 %v280
      %v631 = vunpack.c.l.b16 %v281
      %v632 = vunpack.c.h.b16 %v281
      %v633 = vunpack.c.l.b16 %v282
      %v634 = vunpack.c.l.b16 %v283
      %v635 = vunpack.c.h.b16 %v283
      %v636 = vunpack.c.l.b16 %v284
      %v637 = vunpack.c.l.b16 %v285
      %v638 = vunpack.c.h.b16 %v285
      %v639 = vunpack.c.l.b16 %v286
      %v640 = vunpack.c.l.b16 %v287
      %v641 = vunpack.c.h.b16 %v287
      %v642 = vunpack.c.l.b16 %v288
      %v643 = vunpack.c.l.b16 %v289
      %v644 = vunpack.c.h.b16 %v289
      %v645 = vunpack.c.l.b16 %v290
      %v646 = vunpack.c.l.b16 %v291
      %v647 = vunpack.c.h.b16 %v291
      %v648 = vunpack.c.l.b16 %v292
      %v649 = vunpack.c.l.b16 %v293
      %v650 = vunpack.c.h.b16 %v293
      %v651 = vunpack.c.l.b16 %v294
      %v652 = vunpack.c.l.b16 %v295
      %v653 = vunpack.c.h.b16 %v295
      %v654 = vunpack.c.l.b16 %v296
      %v655 = vunpack.c.l.b16 %v297
      %v656 = vunpack.c.h.b16 %v297
      %v657 = vunpack.c.l.b16 %v298
      %v658 = vunpack.c.l.b16 %v299
      %v659 = vunpack.c.h.b16 %v299
      %v660 = vunpack.c.l.b16 %v300
      %v661 = vunpack.c.l.b16 %v301
      %v662 = vunpack.c.h.b16 %v301
      %v663 = vunpack.c.l.b16 %v302
      %v664 = vunpack.c.l.b16 %v303
      %v665 = vunpack.c.h.b16 %v303
      %v666 = vunpack.c.l.b16 %v304
      %v667 = vunpack.c.l.b16 %v305
      %v668 = vunpack.c.h.b16 %v305
      %v669 = vunpack.c.l.b16 %v306
      %v670 = vunpack.c.l.b16 %v307
      %v671 = vunpack.c.h.b16 %v307
      %v672 = vunpack.c.l.b16 %v308
      %v673 = vunpack.c.l.b16 %v309
      %v674 = vunpack.c.h.b16 %v309
      %v675 = vunpack.c.l.b16 %v310
      %v676 = vunpack.c.l.b16 %v311
      %v677 = vunpack.c.h.b16 %v311
      %v678 = vunpack.c.l.b16 %v312
      %v679 = vunpack.c.l.b16 %v313
      %v680 = vunpack.c.h.b16 %v313
      %v681 = vunpack.c.l.b16 %v314
      %v682 = vunpack.c.l.b16 %v315
      %v683 = vunpack.c.h.b16 %v315
      %v684 = vunpack.c.l.b16 %v316
      %v685 = vpack.c.b16 %v496, %v493
      %v686 = vpack.c.b16 %v497, %v494
      %v687 = vpack.c.b16 %v498, %v495
      %v688 = vpack.c.b16 %v502, %v499
      %v689 = vpack.c.b16 %v503, %v500
      %v690 = vpack.c.b16 %v504, %v501
      %v691 = vpack.c.b16 %v508, %v505
      %v692 = vpack.c.b16 %v509, %v506
      %v693 = vpack.c.b16 %v510, %v507
      %v694 = vpack.c.b16 %v514, %v511
      %v695 = vpack.c.b16 %v515, %v512
      %v696 = vpack.c.b16 %v516, %v513
      %v697 = vpack.c.b16 %v520, %v517
      %v698 = vpack.c.b16 %v521, %v518
      %v699 = vpack.c.b16 %v522, %v519
      %v700 = vpack.c.b16 %v526, %v523
      %v701 = vpack.c.b16 %v527, %v524
      %v702 = vpack.c.b16 %v528, %v525
      %v703 = vpack.c.b16 %v532, %v529
      %v704 = vpack.c.b16 %v533, %v530
      %v705 = vpack.c.b16 %v534, %v531
      %v706 = vpack.c.b16 %v538, %v535
      %v707 = vpack.c.b16 %v539, %v536
      %v708 = vpack.c.b16 %v540, %v537
      %v709 = vpack.c.b16 %v544, %v541
      %v710 = vpack.c.b16 %v545, %v542
      %v711 = vpack.c.b16 %v546, %v543
      %v712 = vpack.c.b16 %v550, %v547
      %v713 = vpack.c.b16 %v551, %v548
      %v714 = vpack.c.b16 %v552, %v549
      %v715 = vpack.c.b16 %v556, %v553
      %v716 = vpack.c.b16 %v557, %v554
      %v717 = vpack.c.b16 %v558, %v555
      %v718 = vpack.c.b16 %v562, %v559
      %v719 = vpack.c.b16 %v563, %v560
      %v720 = vpack.c.b16 %v564, %v561
      %v721 = vpack.c.b16 %v568, %v565
      %v722 = vpack.c.b16 %v569, %v566
      %v723 = vpack.c.b16 %v570, %v567
      %v724 = vpack.c.b16 %v574, %v571
      %v725 = vpack.c.b16 %v575, %v572
      %v726 = vpack.c.b16 %v576, %v573
      %v727 = vpack.c.b16 %v580, %v577
      %v728 = vpack.c.b16 %v581, %v578
      %v729 = vpack.c.b16 %v582, %v579
      %v730 = vpack.c.b16 %v586, %v583
      %v731 = vpack.c.b16 %v587, %v584
      %v732 = vpack.c.b16 %v588, %v585
      %v733 = vpack.c.b16 %v592, %v589
      %v734 = vpack.c.b16 %v593, %v590
      %v735 = vpack.c.b16 %v594, %v591
      %v736 = vpack.c.b16 %v598, %v595
      %v737 = vpack.c.b16 %v599, %v596
      %v738 = vpack.c.b16 %v600, %v597
      %v739 = vpack.c.b16 %v604, %v601
      %v740 = vpack.c.b16 %v605, %v602
      %v741 = vpack.c.b16 %v606, %v603
      %v742 = vpack.c.b16 %v610, %v607
      %v743 = vpack.c.b16 %v611, %v608
      %v744 = vpack.c.b16 %v612, %v609
      %v745 = vpack.c.b16 %v616, %v613
      %v746 = vpack.c.b16 %v617, %v614
      %v747 = vpack.c.b16 %v618, %v615
      %v748 = vpack.c.b16 %v622, %v619
      %v749 = vpack.c.b16 %v623, %v620
      %v750 = vpack.c.b16 %v624, %v621
      %v751 = vpack.c.b16 %v628, %v625
      %v752 = vpack.c.b16 %v629, %v626
      %v753 = vpack.c.b16 %v630, %v627
      %v754 = vpack.c.b16 %v634, %v631
      %v755 = vpack.c.b16 %v635, %v632
      %v756 = vpack.c.b16 %v636, %v633
      %v757 = vpack.c.b16 %v640, %v637
      %v758 = vpack.c.b16 %v641, %v638
      %v759 = vpack.c.b16 %v642, %v639
      %v760 = vpack.c.b16 %v646, %v643
      %v761 = vpack.c.b16 %v647, %v644
      %v762 = vpack.c.b16 %v648, %v645
      %v763 = vpack.c.b16 %v652, %v649
      %v764 = vpack.c.b16 %v653, %v650
      %v765 = vpack.c.b16 %v654, %v651
      %v766 = vpack.c.b16 %v658, %v655
      %v767 = vpack.c.b16 %v659, %v656
      %v768 = vpack.c.b16 %v660, %v657
      %v769 = vpack.c.b16 %v664, %v661
      %v770 = vpack.c.b16 %v665, %v662
      %v771 = vpack.c.b16 %v666, %v663
      %v772 = vpack.c.b16 %v670, %v667
      %v773 = vpack.c.b16 %v671, %v668
      %v774 = vpack.c.b16 %v672, %v669
      %v775 = vpack.c.b16 %v676, %v673
      %v776 = vpack.c.b16 %v677, %v674
      %v777 = vpack.c.b16 %v678, %v675
      %v778 = vpack.c.b16 %v682, %v679
      %v779 = vpack.c.b16 %v683, %v680
      %v780 = vpack.c.b16 %v684, %v681
      %v925 = vunpack.c.l.b16 %v317
      %v926 = vunpack.c.l.b16 %v318
      %v927 = vunpack.c.l.b16 %v319
      %v928 = vunpack.c.l.b16 %v320
      %v929 = vunpack.c.l.b16 %v321
      %v930 = vunpack.c.l.b16 %v322
      %v931 = vunpack.c.l.b16 %v323
      %v932 = vunpack.c.l.b16 %v324
      %v933 = vunpack.c.l.b16 %v325
      %v934 = vunpack.c.l.b16 %v326
      %v935 = vunpack.c.l.b16 %v327
      %v936 = vunpack.c.l.b16 %v328
      %v937 = vunpack.c.l.b16 %v329
      %v938 = vunpack.c.l.b16 %v330
      %v939 = vunpack.c.l.b16 %v331
      %v940 = vunpack.c.l.b16 %v332
      %v941 = vunpack.c.l.b16 %v333
      %v942 = vunpack.c.l.b16 %v334
      %v943 = vunpack.c.l.b16 %v335
      %v944 = vunpack.c.l.b16 %v336
      %v945 = vunpack.c.l.b16 %v337
      %v946 = vunpack.c.l.b16 %v338
      %v947 = vunpack.c.l.b16 %v339
      %v948 = vunpack.c.l.b16 %v340
      %v949 = vunpack.c.l.b16 %v341
      %v950 = vunpack.c.l.b16 %v342
      %v951 = vunpack.c.l.b16 %v343
      %v952 = vunpack.c.l.b16 %v344
      %v953 = vunpack.c.l.b16 %v345
      %v954 = vunpack.c.l.b16 %v346
      %v955 = vunpack.c.l.b16 %v347
      %v956 = vunpack.c.l.b16 %v348
      %v957 = vunpack.c.l.b16 %v349
      %v958 = vunpack.c.l.b16 %v350
      %v959 = vunpack.c.l.b16 %v351
      %v960 = vunpack.c.l.b16 %v352
      %v961 = vunpack.c.l.b16 %v353
      %v962 = vunpack.c.l.b16 %v354
      %v963 = vunpack.c.l.b16 %v355
      %v964 = vunpack.c.l.b16 %v356
      %v965 = vunpack.c.l.b16 %v357
      %v966 = vunpack.c.l.b16 %v358
      %v967 = vunpack.c.l.b16 %v359
      %v968 = vunpack.c.l.b16 %v360
      %v969 = vunpack.c.l.b16 %v361
      %v970 = vunpack.c.l.b16 %v362
      %v971 = vunpack.c.l.b16 %v363
      %v972 = vunpack.c.l.b16 %v364
      %v973 = vpack.c.b16 %v926, %v925
      %v974 = vpack.c.b16 %v928, %v927
      %v975 = vpack.c.b16 %v930, %v929
      %v976 = vpack.c.b16 %v932, %v931
      %v977 = vpack.c.b16 %v934, %v933
      %v978 = vpack.c.b16 %v936, %v935
      %v979 = vpack.c.b16 %v938, %v937
      %v980 = vpack.c.b16 %v940, %v939
      %v981 = vpack.c.b16 %v942, %v941
      %v982 = vpack.c.b16 %v944, %v943
      %v983 = vpack.c.b16 %v946, %v945
      %v984 = vpack.c.b16 %v948, %v947
      %v985 = vpack.c.b16 %v950, %v949
      %v986 = vpack.c.b16 %v952, %v951
      %v987 = vpack.c.b16 %v954, %v953
      %v988 = vpack.c.b16 %v956, %v955
      %v989 = vpack.c.b16 %v958, %v957
      %v990 = vpack.c.b16 %v960, %v959
      %v991 = vpack.c.b16 %v962, %v961
      %v992 = vpack.c.b16 %v964, %v963
      %v993 = vpack.c.b16 %v966, %v965
      %v994 = vpack.c.b16 %v968, %v967
      %v995 = vpack.c.b16 %v970, %v969
      %v996 = vpack.c.b16 %v972, %v971
      %1021 = vmatprep.subr.bf16.mxu0 0
      %1022 = vmatpush1.bf16.msra.mxu0 %v980
      %1023 = vmatprep.subr.bf16.mxu0 0
      %1024 = vmatpush1.bf16.msra.mxu0 %v979
      %1025 = vmatprep.subr.bf16.mxu0 0
      %1026 = vmatpush1.bf16.msra.mxu0 %v978
      %1027 = vmatprep.subr.bf16.mxu0 0
      %1028 = vmatpush1.bf16.msra.mxu0 %v977
      %1029 = vmatprep.subr.bf16.mxu0 0
      %1030 = vmatpush1.bf16.msra.mxu0 %v976
      %1031 = vmatprep.subr.bf16.mxu0 0
      %1032 = vmatpush1.bf16.msra.mxu0 %v975
      %1033 = vmatprep.subr.bf16.mxu0 0
      %1034 = vmatpush1.bf16.msra.mxu0 %v974
      %1035 = vmatprep.subr.bf16.mxu0 0
      %1036 = vmatpush1.bf16.msra.mxu0 %v973
      %1037 = vmatprep.subr.bf16.mxu0 0
      %1038 = vmatpush2.bf16.msra.mxu0 %v988
      %1039 = vmatprep.subr.bf16.mxu0 0
      %1040 = vmatpush2.bf16.msra.mxu0 %v987
      %1041 = vmatprep.subr.bf16.mxu0 0
      %1042 = vmatpush2.bf16.msra.mxu0 %v986
      %1043 = vmatprep.subr.bf16.mxu0 0
      %1044 = vmatpush2.bf16.msra.mxu0 %v985
      %1045 = vmatprep.subr.bf16.mxu0 0
      %1046 = vmatpush2.bf16.msra.mxu0 %v984
      %1047 = vmatprep.subr.bf16.mxu0 0
      %1048 = vmatpush2.bf16.msra.mxu0 %v983
      %1049 = vmatprep.subr.bf16.mxu0 0
      %1050 = vmatpush2.bf16.msra.mxu0 %v982
      %1051 = vmatprep.subr.bf16.mxu0 0
      %1052 = vmatpush2.bf16.msra.mxu0 %v981
      %1053 = vmatprep.mubr.bf16.mxu0 %v686
      %1054 = vmatmul.mubr.bf16.gmra.mxu0 %v685
      %v1055 = vpop.f32.mrf.mxu0
      %v1056 = vadd.f32 0.0, %v1055
      %v1057 = vpop.f32.mrf.mxu0
      %v1058 = vpop.f32.mrf.mxu0
      %v1059 = vadd.f32 0.0, %v1058
      %v1060 = vpop.f32.mrf.mxu0
      %1061 = vmatprep.mubr.bf16.mxu0 %v689
      %1062 = vmatmul.mubr.bf16.gmra.mxu0 %v688
      %v1063 = vpop.f32.mrf.mxu0
      %v1064 = vadd.f32 0.0, %v1063
      %v1065 = vpop.f32.mrf.mxu0
      %v1066 = vpop.f32.mrf.mxu0
      %v1067 = vadd.f32 0.0, %v1066
      %v1068 = vpop.f32.mrf.mxu0
      %1069 = vmatprep.mubr.bf16.mxu0 %v692
      %1070 = vmatmul.mubr.bf16.gmra.mxu0 %v691
      %v1071 = vpop.f32.mrf.mxu0
      %v1072 = vadd.f32 0.0, %v1071
      %v1073 = vpop.f32.mrf.mxu0
      %v1074 = vpop.f32.mrf.mxu0
      %v1075 = vadd.f32 0.0, %v1074
      %v1076 = vpop.f32.mrf.mxu0
      %1077 = vmatprep.mubr.bf16.mxu0 %v695
      %1078 = vmatmul.mubr.bf16.gmra.mxu0 %v694
      %v1079 = vpop.f32.mrf.mxu0
      %v1080 = vadd.f32 0.0, %v1079
      %v1081 = vpop.f32.mrf.mxu0
      %v1082 = vpop.f32.mrf.mxu0
      %v1083 = vadd.f32 0.0, %v1082
      %v1084 = vpop.f32.mrf.mxu0
      %1085 = vmatprep.mubr.bf16.mxu0 %v698
      %1086 = vmatmul.mubr.bf16.gmra.mxu0 %v697
      %v1087 = vpop.f32.mrf.mxu0
      %v1088 = vadd.f32 0.0, %v1087
      %v1089 = vpop.f32.mrf.mxu0
      %v1090 = vpop.f32.mrf.mxu0
      %v1091 = vadd.f32 0.0, %v1090
      %v1092 = vpop.f32.mrf.mxu0
      %1093 = vmatprep.mubr.bf16.mxu0 %v701
      %1094 = vmatmul.mubr.bf16.gmra.mxu0 %v700
      %v1095 = vpop.f32.mrf.mxu0
      %v1096 = vadd.f32 0.0, %v1095
      %v1097 = vpop.f32.mrf.mxu0
      %v1098 = vpop.f32.mrf.mxu0
      %v1099 = vadd.f32 0.0, %v1098
      %v1100 = vpop.f32.mrf.mxu0
      %1101 = vmatprep.mubr.bf16.mxu0 %v704
      %1102 = vmatmul.mubr.bf16.gmra.mxu0 %v703
      %v1103 = vpop.f32.mrf.mxu0
      %v1104 = vadd.f32 0.0, %v1103
      %v1105 = vpop.f32.mrf.mxu0
      %v1106 = vpop.f32.mrf.mxu0
      %v1107 = vadd.f32 0.0, %v1106
      %v1108 = vpop.f32.mrf.mxu0
      %1109 = vmatprep.mubr.bf16.mxu0 %v707
      %1110 = vmatmul.mubr.bf16.gmra.mxu0 %v706
      %v1111 = vpop.f32.mrf.mxu0
      %v1112 = vadd.f32 0.0, %v1111
      %v1113 = vpop.f32.mrf.mxu0
      %v1114 = vpop.f32.mrf.mxu0
      %v1115 = vadd.f32 0.0, %v1114
      %v1116 = vpop.f32.mrf.mxu0
      %1117 = vmatprep.mubr.bf16.mxu0 %v710
      %1118 = vmatmul.mubr.bf16.gmra.mxu0 %v709
      %v1119 = vpop.f32.mrf.mxu0
      %v1120 = vadd.f32 0.0, %v1119
      %v1121 = vpop.f32.mrf.mxu0
      %v1122 = vpop.f32.mrf.mxu0
      %v1123 = vadd.f32 0.0, %v1122
      %v1124 = vpop.f32.mrf.mxu0
      %1125 = vmatprep.mubr.bf16.mxu0 %v713
      %1126 = vmatmul.mubr.bf16.gmra.mxu0 %v712
      %v1127 = vpop.f32.mrf.mxu0
      %v1128 = vadd.f32 0.0, %v1127
      %v1129 = vpop.f32.mrf.mxu0
      %v1130 = vpop.f32.mrf.mxu0
      %v1131 = vadd.f32 0.0, %v1130
      %v1132 = vpop.f32.mrf.mxu0
      %1133 = vmatprep.mubr.bf16.mxu0 %v716
      %1134 = vmatmul.mubr.bf16.gmra.mxu0 %v715
      %v1135 = vpop.f32.mrf.mxu0
      %v1136 = vadd.f32 0.0, %v1135
      %v1137 = vpop.f32.mrf.mxu0
      %v1138 = vpop.f32.mrf.mxu0
      %v1139 = vadd.f32 0.0, %v1138
      %v1140 = vpop.f32.mrf.mxu0
      %1141 = vmatprep.mubr.bf16.mxu0 %v719
      %1142 = vmatmul.mubr.bf16.gmra.mxu0 %v718
      %v1143 = vpop.f32.mrf.mxu0
      %v1144 = vadd.f32 0.0, %v1143
      %v1145 = vpop.f32.mrf.mxu0
      %v1146 = vpop.f32.mrf.mxu0
      %v1147 = vadd.f32 0.0, %v1146
      %v1148 = vpop.f32.mrf.mxu0
      %1149 = vmatprep.mubr.bf16.mxu0 %v722
      %1150 = vmatmul.mubr.bf16.gmra.mxu0 %v721
      %v1151 = vpop.f32.mrf.mxu0
      %v1152 = vadd.f32 0.0, %v1151
      %v1153 = vpop.f32.mrf.mxu0
      %v1154 = vpop.f32.mrf.mxu0
      %v1155 = vadd.f32 0.0, %v1154
      %v1156 = vpop.f32.mrf.mxu0
      %1157 = vmatprep.mubr.bf16.mxu0 %v725
      %1158 = vmatmul.mubr.bf16.gmra.mxu0 %v724
      %v1159 = vpop.f32.mrf.mxu0
      %v1160 = vadd.f32 0.0, %v1159
      %v1161 = vpop.f32.mrf.mxu0
      %v1162 = vpop.f32.mrf.mxu0
      %v1163 = vadd.f32 0.0, %v1162
      %v1164 = vpop.f32.mrf.mxu0
      %1165 = vmatprep.mubr.bf16.mxu0 %v728
      %1166 = vmatmul.mubr.bf16.gmra.mxu0 %v727
      %v1167 = vpop.f32.mrf.mxu0
      %v1168 = vadd.f32 0.0, %v1167
      %v1169 = vpop.f32.mrf.mxu0
      %v1170 = vpop.f32.mrf.mxu0
      %v1171 = vadd.f32 0.0, %v1170
      %v1172 = vpop.f32.mrf.mxu0
      %1173 = vmatprep.mubr.bf16.mxu0 %v731
      %1174 = vmatmul.mubr.bf16.gmra.mxu0 %v730
      %v1175 = vpop.f32.mrf.mxu0
      %v1176 = vadd.f32 0.0, %v1175
      %v1177 = vpop.f32.mrf.mxu0
      %v1178 = vpop.f32.mrf.mxu0
      %v1179 = vadd.f32 0.0, %v1178
      %v1180 = vpop.f32.mrf.mxu0
      %1181 = vmatprep.mubr.bf16.mxu0 %v734
      %1182 = vmatmul.mubr.bf16.gmra.mxu0 %v733
      %v1183 = vpop.f32.mrf.mxu0
      %v1184 = vadd.f32 0.0, %v1183
      %v1185 = vpop.f32.mrf.mxu0
      %v1186 = vpop.f32.mrf.mxu0
      %v1187 = vadd.f32 0.0, %v1186
      %v1188 = vpop.f32.mrf.mxu0
      %1189 = vmatprep.mubr.bf16.mxu0 %v737
      %1190 = vmatmul.mubr.bf16.gmra.mxu0 %v736
      %v1191 = vpop.f32.mrf.mxu0
      %v1192 = vadd.f32 0.0, %v1191
      %v1193 = vpop.f32.mrf.mxu0
      %v1194 = vpop.f32.mrf.mxu0
      %v1195 = vadd.f32 0.0, %v1194
      %v1196 = vpop.f32.mrf.mxu0
      %1197 = vmatprep.mubr.bf16.mxu0 %v740
      %1198 = vmatmul.mubr.bf16.gmra.mxu0 %v739
      %v1199 = vpop.f32.mrf.mxu0
      %v1200 = vadd.f32 0.0, %v1199
      %v1201 = vpop.f32.mrf.mxu0
      %v1202 = vpop.f32.mrf.mxu0
      %v1203 = vadd.f32 0.0, %v1202
      %v1204 = vpop.f32.mrf.mxu0
      %1205 = vmatprep.mubr.bf16.mxu0 %v743
      %1206 = vmatmul.mubr.bf16.gmra.mxu0 %v742
      %v1207 = vpop.f32.mrf.mxu0
      %v1208 = vadd.f32 0.0, %v1207
      %v1209 = vpop.f32.mrf.mxu0
      %v1210 = vpop.f32.mrf.mxu0
      %v1211 = vadd.f32 0.0, %v1210
      %v1212 = vpop.f32.mrf.mxu0
      %1213 = vmatprep.mubr.bf16.mxu0 %v746
      %1214 = vmatmul.mubr.bf16.gmra.mxu0 %v745
      %v1215 = vpop.f32.mrf.mxu0
      %v1216 = vadd.f32 0.0, %v1215
      %v1217 = vpop.f32.mrf.mxu0
      %v1218 = vpop.f32.mrf.mxu0
      %v1219 = vadd.f32 0.0, %v1218
      %v1220 = vpop.f32.mrf.mxu0
      %1221 = vmatprep.mubr.bf16.mxu0 %v749
      %1222 = vmatmul.mubr.bf16.gmra.mxu0 %v748
      %v1223 = vpop.f32.mrf.mxu0
      %v1224 = vadd.f32 0.0, %v1223
      %v1225 = vpop.f32.mrf.mxu0
      %v1226 = vpop.f32.mrf.mxu0
      %v1227 = vadd.f32 0.0, %v1226
      %v1228 = vpop.f32.mrf.mxu0
      %1229 = vmatprep.mubr.bf16.mxu0 %v752
      %1230 = vmatmul.mubr.bf16.gmra.mxu0 %v751
      %v1231 = vpop.f32.mrf.mxu0
      %v1232 = vadd.f32 0.0, %v1231
      %v1233 = vpop.f32.mrf.mxu0
      %v1234 = vpop.f32.mrf.mxu0
      %v1235 = vadd.f32 0.0, %v1234
      %v1236 = vpop.f32.mrf.mxu0
      %1237 = vmatprep.mubr.bf16.mxu0 %v755
      %1238 = vmatmul.mubr.bf16.gmra.mxu0 %v754
      %v1239 = vpop.f32.mrf.mxu0
      %v1240 = vadd.f32 0.0, %v1239
      %v1241 = vpop.f32.mrf.mxu0
      %v1242 = vpop.f32.mrf.mxu0
      %v1243 = vadd.f32 0.0, %v1242
      %v1244 = vpop.f32.mrf.mxu0
      %1245 = vmatprep.mubr.bf16.mxu0 %v758
      %1246 = vmatmul.mubr.bf16.gmra.mxu0 %v757
      %v1247 = vpop.f32.mrf.mxu0
      %v1248 = vadd.f32 0.0, %v1247
      %v1249 = vpop.f32.mrf.mxu0
      %v1250 = vpop.f32.mrf.mxu0
      %v1251 = vadd.f32 0.0, %v1250
      %v1252 = vpop.f32.mrf.mxu0
      %1253 = vmatprep.mubr.bf16.mxu0 %v761
      %1254 = vmatmul.mubr.bf16.gmra.mxu0 %v760
      %v1255 = vpop.f32.mrf.mxu0
      %v1256 = vadd.f32 0.0, %v1255
      %v1257 = vpop.f32.mrf.mxu0
      %v1258 = vpop.f32.mrf.mxu0
      %v1259 = vadd.f32 0.0, %v1258
      %v1260 = vpop.f32.mrf.mxu0
      %1261 = vmatprep.mubr.bf16.mxu0 %v764
      %1262 = vmatmul.mubr.bf16.gmra.mxu0 %v763
      %v1263 = vpop.f32.mrf.mxu0
      %v1264 = vadd.f32 0.0, %v1263
      %v1265 = vpop.f32.mrf.mxu0
      %v1266 = vpop.f32.mrf.mxu0
      %v1267 = vadd.f32 0.0, %v1266
      %v1268 = vpop.f32.mrf.mxu0
      %1269 = vmatprep.mubr.bf16.mxu0 %v767
      %1270 = vmatmul.mubr.bf16.gmra.mxu0 %v766
      %v1271 = vpop.f32.mrf.mxu0
      %v1272 = vadd.f32 0.0, %v1271
      %v1273 = vpop.f32.mrf.mxu0
      %v1274 = vpop.f32.mrf.mxu0
      %v1275 = vadd.f32 0.0, %v1274
      %v1276 = vpop.f32.mrf.mxu0
      %1277 = vmatprep.mubr.bf16.mxu0 %v770
      %1278 = vmatmul.mubr.bf16.gmra.mxu0 %v769
      %v1279 = vpop.f32.mrf.mxu0
      %v1280 = vadd.f32 0.0, %v1279
      %v1281 = vpop.f32.mrf.mxu0
      %v1282 = vpop.f32.mrf.mxu0
      %v1283 = vadd.f32 0.0, %v1282
      %v1284 = vpop.f32.mrf.mxu0
      %1285 = vmatprep.mubr.bf16.mxu0 %v773
      %1286 = vmatmul.mubr.bf16.gmra.mxu0 %v772
      %v1287 = vpop.f32.mrf.mxu0
      %v1288 = vadd.f32 0.0, %v1287
      %v1289 = vpop.f32.mrf.mxu0
      %v1290 = vpop.f32.mrf.mxu0
      %v1291 = vadd.f32 0.0, %v1290
      %v1292 = vpop.f32.mrf.mxu0
      %1293 = vmatprep.mubr.bf16.mxu0 %v776
      %1294 = vmatmul.mubr.bf16.gmra.mxu0 %v775
      %v1295 = vpop.f32.mrf.mxu0
      %v1296 = vadd.f32 0.0, %v1295
      %v1297 = vpop.f32.mrf.mxu0
      %v1298 = vpop.f32.mrf.mxu0
      %v1299 = vadd.f32 0.0, %v1298
      %v1300 = vpop.f32.mrf.mxu0
      %1301 = vmatprep.mubr.bf16.mxu0 %v779
      %1302 = vmatmul.mubr.bf16.gmra.mxu0 %v778
      %v1303 = vpop.f32.mrf.mxu0
      %v1304 = vadd.f32 0.0, %v1303
      %v1305 = vpop.f32.mrf.mxu0
      %v1306 = vpop.f32.mrf.mxu0
      %v1307 = vadd.f32 0.0, %v1306
      %v1308 = vpop.f32.mrf.mxu0
      %1309 = vdwg.mxu0
      %1310 = vmatprep.subr.bf16.mxu0 0
      %1311 = vmatpush1.bf16.msra.mxu0 %v996
      %1312 = vmatprep.subr.bf16.mxu0 0
      %1313 = vmatpush1.bf16.msra.mxu0 %v995
      %1314 = vmatprep.subr.bf16.mxu0 0
      %1315 = vmatpush1.bf16.msra.mxu0 %v994
      %1316 = vmatprep.subr.bf16.mxu0 0
      %1317 = vmatpush1.bf16.msra.mxu0 %v993
      %1318 = vmatprep.subr.bf16.mxu0 0
      %1319 = vmatpush1.bf16.msra.mxu0 %v992
      %1320 = vmatprep.subr.bf16.mxu0 0
      %1321 = vmatpush1.bf16.msra.mxu0 %v991
      %1322 = vmatprep.subr.bf16.mxu0 0
      %1323 = vmatpush1.bf16.msra.mxu0 %v990
      %1324 = vmatprep.subr.bf16.mxu0 0
      %1325 = vmatpush1.bf16.msra.mxu0 %v989
      %1326 = vmatprep.subr.bf16.mxu0 0
      %1327 = vmatpush2.bf16.msra.mxu0 0
      %1328 = vmatprep.subr.bf16.mxu0 0
      %1329 = vmatpush2.bf16.msra.mxu0 0
      %1330 = vmatprep.subr.bf16.mxu0 0
      %1331 = vmatpush2.bf16.msra.mxu0 0
      %1332 = vmatprep.subr.bf16.mxu0 0
      %1333 = vmatpush2.bf16.msra.mxu0 0
      %1334 = vmatprep.subr.bf16.mxu0 0
      %1335 = vmatpush2.bf16.msra.mxu0 0
      %1336 = vmatprep.subr.bf16.mxu0 0
      %1337 = vmatpush2.bf16.msra.mxu0 0
      %1338 = vmatprep.subr.bf16.mxu0 0
      %1339 = vmatpush2.bf16.msra.mxu0 0
      %1340 = vmatprep.subr.bf16.mxu0 0
      %1341 = vmatpush2.bf16.msra.mxu0 0
      %1342 = vmatprep.mubr.bf16.mxu0 0
      %1343 = vmatmul.mubr.bf16.gmra.mxu0 %v687
      %v1344 = vpop.f32.mrf.mxu0
      %v1345 = vadd.f32 %v1056, %v1344
      %v1346 = vpop.f32.mrf.mxu0
      %v1347 = vpop.f32.mrf.mxu0
      %v1348 = vadd.f32 %v1059, %v1347
      %v1349 = vpop.f32.mrf.mxu0
      %1350 = vmatprep.mubr.bf16.mxu0 0
      %1351 = vmatmul.mubr.bf16.gmra.mxu0 %v690
      %v1352 = vpop.f32.mrf.mxu0
      %v1353 = vadd.f32 %v1064, %v1352
      %v1354 = vpop.f32.mrf.mxu0
      %v1355 = vpop.f32.mrf.mxu0
      %v1356 = vadd.f32 %v1067, %v1355
      %v1357 = vpop.f32.mrf.mxu0
      %1358 = vmatprep.mubr.bf16.mxu0 0
      %1359 = vmatmul.mubr.bf16.gmra.mxu0 %v693
      %v1360 = vpop.f32.mrf.mxu0
      %v1361 = vadd.f32 %v1072, %v1360
      %v1362 = vpop.f32.mrf.mxu0
      %v1363 = vpop.f32.mrf.mxu0
      %v1364 = vadd.f32 %v1075, %v1363
      %v1365 = vpop.f32.mrf.mxu0
      %1366 = vmatprep.mubr.bf16.mxu0 0
      %1367 = vmatmul.mubr.bf16.gmra.mxu0 %v696
      %v1368 = vpop.f32.mrf.mxu0
      %v1369 = vadd.f32 %v1080, %v1368
      %v1370 = vpop.f32.mrf.mxu0
      %v1371 = vpop.f32.mrf.mxu0
      %v1372 = vadd.f32 %v1083, %v1371
      %v1373 = vpop.f32.mrf.mxu0
      %1374 = vmatprep.mubr.bf16.mxu0 0
      %1375 = vmatmul.mubr.bf16.gmra.mxu0 %v699
      %v1376 = vpop.f32.mrf.mxu0
      %v1377 = vadd.f32 %v1088, %v1376
      %v1378 = vpop.f32.mrf.mxu0
      %v1379 = vpop.f32.mrf.mxu0
      %v1380 = vadd.f32 %v1091, %v1379
      %v1381 = vpop.f32.mrf.mxu0
      %1382 = vmatprep.mubr.bf16.mxu0 0
      %1383 = vmatmul.mubr.bf16.gmra.mxu0 %v702
      %v1384 = vpop.f32.mrf.mxu0
      %v1385 = vadd.f32 %v1096, %v1384
      %v1386 = vpop.f32.mrf.mxu0
      %v1387 = vpop.f32.mrf.mxu0
      %v1388 = vadd.f32 %v1099, %v1387
      %v1389 = vpop.f32.mrf.mxu0
      %1390 = vmatprep.mubr.bf16.mxu0 0
      %1391 = vmatmul.mubr.bf16.gmra.mxu0 %v705
      %v1392 = vpop.f32.mrf.mxu0
      %v1393 = vadd.f32 %v1104, %v1392
      %v1394 = vpop.f32.mrf.mxu0
      %v1395 = vpop.f32.mrf.mxu0
      %v1396 = vadd.f32 %v1107, %v1395
      %v1397 = vpop.f32.mrf.mxu0
      %1398 = vmatprep.mubr.bf16.mxu0 0
      %1399 = vmatmul.mubr.bf16.gmra.mxu0 %v708
      %v1400 = vpop.f32.mrf.mxu0
      %v1401 = vadd.f32 %v1112, %v1400
      %v1402 = vpop.f32.mrf.mxu0
      %v1403 = vpop.f32.mrf.mxu0
      %v1404 = vadd.f32 %v1115, %v1403
      %v1405 = vpop.f32.mrf.mxu0
      %1406 = vmatprep.mubr.bf16.mxu0 0
      %1407 = vmatmul.mubr.bf16.gmra.mxu0 %v711
      %v1408 = vpop.f32.mrf.mxu0
      %v1409 = vadd.f32 %v1120, %v1408
      %v1410 = vpop.f32.mrf.mxu0
      %v1411 = vpop.f32.mrf.mxu0
      %v1412 = vadd.f32 %v1123, %v1411
      %v1413 = vpop.f32.mrf.mxu0
      %1414 = vmatprep.mubr.bf16.mxu0 0
      %1415 = vmatmul.mubr.bf16.gmra.mxu0 %v714
      %v1416 = vpop.f32.mrf.mxu0
      %v1417 = vadd.f32 %v1128, %v1416
      %v1418 = vpop.f32.mrf.mxu0
      %v1419 = vpop.f32.mrf.mxu0
      %v1420 = vadd.f32 %v1131, %v1419
      %v1421 = vpop.f32.mrf.mxu0
      %1422 = vmatprep.mubr.bf16.mxu0 0
      %1423 = vmatmul.mubr.bf16.gmra.mxu0 %v717
      %v1424 = vpop.f32.mrf.mxu0
      %v1425 = vadd.f32 %v1136, %v1424
      %v1426 = vpop.f32.mrf.mxu0
      %v1427 = vpop.f32.mrf.mxu0
      %v1428 = vadd.f32 %v1139, %v1427
      %v1429 = vpop.f32.mrf.mxu0
      %1430 = vmatprep.mubr.bf16.mxu0 0
      %1431 = vmatmul.mubr.bf16.gmra.mxu0 %v720
      %v1432 = vpop.f32.mrf.mxu0
      %v1433 = vadd.f32 %v1144, %v1432
      %v1434 = vpop.f32.mrf.mxu0
      %v1435 = vpop.f32.mrf.mxu0
      %v1436 = vadd.f32 %v1147, %v1435
      %v1437 = vpop.f32.mrf.mxu0
      %1438 = vmatprep.mubr.bf16.mxu0 0
      %1439 = vmatmul.mubr.bf16.gmra.mxu0 %v723
      %v1440 = vpop.f32.mrf.mxu0
      %v1441 = vadd.f32 %v1152, %v1440
      %v1442 = vpop.f32.mrf.mxu0
      %v1443 = vpop.f32.mrf.mxu0
      %v1444 = vadd.f32 %v1155, %v1443
      %v1445 = vpop.f32.mrf.mxu0
      %1446 = vmatprep.mubr.bf16.mxu0 0
      %1447 = vmatmul.mubr.bf16.gmra.mxu0 %v726
      %v1448 = vpop.f32.mrf.mxu0
      %v1449 = vadd.f32 %v1160, %v1448
      %v1450 = vpop.f32.mrf.mxu0
      %v1451 = vpop.f32.mrf.mxu0
      %v1452 = vadd.f32 %v1163, %v1451
      %v1453 = vpop.f32.mrf.mxu0
      %1454 = vmatprep.mubr.bf16.mxu0 0
      %1455 = vmatmul.mubr.bf16.gmra.mxu0 %v729
      %v1456 = vpop.f32.mrf.mxu0
      %v1457 = vadd.f32 %v1168, %v1456
      %v1458 = vpop.f32.mrf.mxu0
      %v1459 = vpop.f32.mrf.mxu0
      %v1460 = vadd.f32 %v1171, %v1459
      %v1461 = vpop.f32.mrf.mxu0
      %1462 = vmatprep.mubr.bf16.mxu0 0
      %1463 = vmatmul.mubr.bf16.gmra.mxu0 %v732
      %v1464 = vpop.f32.mrf.mxu0
      %v1465 = vadd.f32 %v1176, %v1464
      %v1466 = vpop.f32.mrf.mxu0
      %v1467 = vpop.f32.mrf.mxu0
      %v1468 = vadd.f32 %v1179, %v1467
      %v1469 = vpop.f32.mrf.mxu0
      %1470 = vmatprep.mubr.bf16.mxu0 0
      %1471 = vmatmul.mubr.bf16.gmra.mxu0 %v735
      %v1472 = vpop.f32.mrf.mxu0
      %v1473 = vadd.f32 %v1184, %v1472
      %v1474 = vpop.f32.mrf.mxu0
      %v1475 = vpop.f32.mrf.mxu0
      %v1476 = vadd.f32 %v1187, %v1475
      %v1477 = vpop.f32.mrf.mxu0
      %1478 = vmatprep.mubr.bf16.mxu0 0
      %1479 = vmatmul.mubr.bf16.gmra.mxu0 %v738
      %v1480 = vpop.f32.mrf.mxu0
      %v1481 = vadd.f32 %v1192, %v1480
      %v1482 = vpop.f32.mrf.mxu0
      %v1483 = vpop.f32.mrf.mxu0
      %v1484 = vadd.f32 %v1195, %v1483
      %v1485 = vpop.f32.mrf.mxu0
      %1486 = vmatprep.mubr.bf16.mxu0 0
      %1487 = vmatmul.mubr.bf16.gmra.mxu0 %v741
      %v1488 = vpop.f32.mrf.mxu0
      %v1489 = vadd.f32 %v1200, %v1488
      %v1490 = vpop.f32.mrf.mxu0
      %v1491 = vpop.f32.mrf.mxu0
      %v1492 = vadd.f32 %v1203, %v1491
      %v1493 = vpop.f32.mrf.mxu0
      %1494 = vmatprep.mubr.bf16.mxu0 0
      %1495 = vmatmul.mubr.bf16.gmra.mxu0 %v744
      %v1496 = vpop.f32.mrf.mxu0
      %v1497 = vadd.f32 %v1208, %v1496
      %v1498 = vpop.f32.mrf.mxu0
      %v1499 = vpop.f32.mrf.mxu0
      %v1500 = vadd.f32 %v1211, %v1499
      %v1501 = vpop.f32.mrf.mxu0
      %1502 = vmatprep.mubr.bf16.mxu0 0
      %1503 = vmatmul.mubr.bf16.gmra.mxu0 %v747
      %v1504 = vpop.f32.mrf.mxu0
      %v1505 = vadd.f32 %v1216, %v1504
      %v1506 = vpop.f32.mrf.mxu0
      %v1507 = vpop.f32.mrf.mxu0
      %v1508 = vadd.f32 %v1219, %v1507
      %v1509 = vpop.f32.mrf.mxu0
      %1510 = vmatprep.mubr.bf16.mxu0 0
      %1511 = vmatmul.mubr.bf16.gmra.mxu0 %v750
      %v1512 = vpop.f32.mrf.mxu0
      %v1513 = vadd.f32 %v1224, %v1512
      %v1514 = vpop.f32.mrf.mxu0
      %v1515 = vpop.f32.mrf.mxu0
      %v1516 = vadd.f32 %v1227, %v1515
      %v1517 = vpop.f32.mrf.mxu0
      %1518 = vmatprep.mubr.bf16.mxu0 0
      %1519 = vmatmul.mubr.bf16.gmra.mxu0 %v753
      %v1520 = vpop.f32.mrf.mxu0
      %v1521 = vadd.f32 %v1232, %v1520
      %v1522 = vpop.f32.mrf.mxu0
      %v1523 = vpop.f32.mrf.mxu0
      %v1524 = vadd.f32 %v1235, %v1523
      %v1525 = vpop.f32.mrf.mxu0
      %1526 = vmatprep.mubr.bf16.mxu0 0
      %1527 = vmatmul.mubr.bf16.gmra.mxu0 %v756
      %v1528 = vpop.f32.mrf.mxu0
      %v1529 = vadd.f32 %v1240, %v1528
      %v1530 = vpop.f32.mrf.mxu0
      %v1531 = vpop.f32.mrf.mxu0
      %v1532 = vadd.f32 %v1243, %v1531
      %v1533 = vpop.f32.mrf.mxu0
      %1534 = vmatprep.mubr.bf16.mxu0 0
      %1535 = vmatmul.mubr.bf16.gmra.mxu0 %v759
      %v1536 = vpop.f32.mrf.mxu0
      %v1537 = vadd.f32 %v1248, %v1536
      %v1538 = vpop.f32.mrf.mxu0
      %v1539 = vpop.f32.mrf.mxu0
      %v1540 = vadd.f32 %v1251, %v1539
      %v1541 = vpop.f32.mrf.mxu0
      %1542 = vmatprep.mubr.bf16.mxu0 0
      %1543 = vmatmul.mubr.bf16.gmra.mxu0 %v762
      %v1544 = vpop.f32.mrf.mxu0
      %v1545 = vadd.f32 %v1256, %v1544
      %v1546 = vpop.f32.mrf.mxu0
      %v1547 = vpop.f32.mrf.mxu0
      %v1548 = vadd.f32 %v1259, %v1547
      %v1549 = vpop.f32.mrf.mxu0
      %1550 = vmatprep.mubr.bf16.mxu0 0
      %1551 = vmatmul.mubr.bf16.gmra.mxu0 %v765
      %v1552 = vpop.f32.mrf.mxu0
      %v1553 = vadd.f32 %v1264, %v1552
      %v1554 = vpop.f32.mrf.mxu0
      %v1555 = vpop.f32.mrf.mxu0
      %v1556 = vadd.f32 %v1267, %v1555
      %v1557 = vpop.f32.mrf.mxu0
      %1558 = vmatprep.mubr.bf16.mxu0 0
      %1559 = vmatmul.mubr.bf16.gmra.mxu0 %v768
      %v1560 = vpop.f32.mrf.mxu0
      %v1561 = vadd.f32 %v1272, %v1560
      %v1562 = vpop.f32.mrf.mxu0
      %v1563 = vpop.f32.mrf.mxu0
      %v1564 = vadd.f32 %v1275, %v1563
      %v1565 = vpop.f32.mrf.mxu0
      %1566 = vmatprep.mubr.bf16.mxu0 0
      %1567 = vmatmul.mubr.bf16.gmra.mxu0 %v771
      %v1568 = vpop.f32.mrf.mxu0
      %v1569 = vadd.f32 %v1280, %v1568
      %v1570 = vpop.f32.mrf.mxu0
      %v1571 = vpop.f32.mrf.mxu0
      %v1572 = vadd.f32 %v1283, %v1571
      %v1573 = vpop.f32.mrf.mxu0
      %1574 = vmatprep.mubr.bf16.mxu0 0
      %1575 = vmatmul.mubr.bf16.gmra.mxu0 %v774
      %v1576 = vpop.f32.mrf.mxu0
      %v1577 = vadd.f32 %v1288, %v1576
      %v1578 = vpop.f32.mrf.mxu0
      %v1579 = vpop.f32.mrf.mxu0
      %v1580 = vadd.f32 %v1291, %v1579
      %v1581 = vpop.f32.mrf.mxu0
      %1582 = vmatprep.mubr.bf16.mxu0 0
      %1583 = vmatmul.mubr.bf16.gmra.mxu0 %v777
      %v1584 = vpop.f32.mrf.mxu0
      %v1585 = vadd.f32 %v1296, %v1584
      %v1586 = vpop.f32.mrf.mxu0
      %v1587 = vpop.f32.mrf.mxu0
      %v1588 = vadd.f32 %v1299, %v1587
      %v1589 = vpop.f32.mrf.mxu0
      %1590 = vmatprep.mubr.bf16.mxu0 0
      %1591 = vmatmul.mubr.bf16.gmra.mxu0 %v780
      %v1592 = vpop.f32.mrf.mxu0
      %v1593 = vadd.f32 %v1304, %v1592
      %v1594 = vpop.f32.mrf.mxu0
      %v1595 = vpop.f32.mrf.mxu0
      %v1596 = vadd.f32 %v1307, %v1595
      %v1597 = vpop.f32.mrf.mxu0
      %1598 = vdwg.mxu0
      %1599 = vst [vmem:[%s182] sm:$0xff] %v1345
      %1600 = vst [vmem:[%s182 + $0x8] sm:$0xff] %v1348
      %1601 = vst [vmem:[%s182 + $0x10] sm:$0xff] %v1353
      %1602 = vst [vmem:[%s182 + $0x18] sm:$0xff] %v1356
      %1603 = vst [vmem:[%s182 + $0x20] sm:$0xff] %v1361
      %1604 = vst [vmem:[%s182 + $0x28] sm:$0xff] %v1364
      %1605 = vst [vmem:[%s182 + $0x30] sm:$0xff] %v1369
      %1606 = vst [vmem:[%s182 + $0x38] sm:$0xff] %v1372
      %1607 = vst [vmem:[%s182 + $0x40] sm:$0xff] %v1377
      %1608 = vst [vmem:[%s182 + $0x48] sm:$0xff] %v1380
      %1609 = vst [vmem:[%s182 + $0x50] sm:$0xff] %v1385
      %1610 = vst [vmem:[%s182 + $0x58] sm:$0xff] %v1388
      %1611 = vst [vmem:[%s182 + $0x60] sm:$0xff] %v1393
      %1612 = vst [vmem:[%s182 + $0x68] sm:$0xff] %v1396
      %1613 = vst [vmem:[%s182 + $0x70] sm:$0xff] %v1401
      %1614 = vst [vmem:[%s182 + $0x78] sm:$0xff] %v1404
      %1615 = vst [vmem:[%s182 + $0x80] sm:$0xff] %v1409
      %1616 = vst [vmem:[%s182 + $0x88] sm:$0xff] %v1412
      %1617 = vst [vmem:[%s182 + $0x90] sm:$0xff] %v1417
      %1618 = vst [vmem:[%s182 + $0x98] sm:$0xff] %v1420
      %1619 = vst [vmem:[%s182 + $0xa0] sm:$0xff] %v1425
      %1620 = vst [vmem:[%s182 + $0xa8] sm:$0xff] %v1428
      %1621 = vst [vmem:[%s182 + $0xb0] sm:$0xff] %v1433
      %1622 = vst [vmem:[%s182 + $0xb8] sm:$0xff] %v1436
      %1623 = vst [vmem:[%s182 + $0xc0] sm:$0xff] %v1441
      %1624 = vst [vmem:[%s182 + $0xc8] sm:$0xff] %v1444
      %1625 = vst [vmem:[%s182 + $0xd0] sm:$0xff] %v1449
      %1626 = vst [vmem:[%s182 + $0xd8] sm:$0xff] %v1452
      %1627 = vst [vmem:[%s182 + $0xe0] sm:$0xff] %v1457
      %1628 = vst [vmem:[%s182 + $0xe8] sm:$0xff] %v1460
      %1629 = vst [vmem:[%s182 + $0xf0] sm:$0xff] %v1465
      %1630 = vst [vmem:[%s182 + $0xf8] sm:$0xff] %v1468
      %1631 = vst [vmem:[%s182 + $0x100] sm:$0xff] %v1473
      %1632 = vst [vmem:[%s182 + $0x108] sm:$0xff] %v1476
      %1633 = vst [vmem:[%s182 + $0x110] sm:$0xff] %v1481
      %1634 = vst [vmem:[%s182 + $0x118] sm:$0xff] %v1484
      %1635 = vst [vmem:[%s182 + $0x120] sm:$0xff] %v1489
      %1636 = vst [vmem:[%s182 + $0x128] sm:$0xff] %v1492
      %1637 = vst [vmem:[%s182 + $0x130] sm:$0xff] %v1497
      %1638 = vst [vmem:[%s182 + $0x138] sm:$0xff] %v1500
      %1639 = vst [vmem:[%s182 + $0x140] sm:$0xff] %v1505
      %1640 = vst [vmem:[%s182 + $0x148] sm:$0xff] %v1508
      %1641 = vst [vmem:[%s182 + $0x150] sm:$0xff] %v1513
      %1642 = vst [vmem:[%s182 + $0x158] sm:$0xff] %v1516
      %1643 = vst [vmem:[%s182 + $0x160] sm:$0xff] %v1521
      %1644 = vst [vmem:[%s182 + $0x168] sm:$0xff] %v1524
      %1645 = vst [vmem:[%s182 + $0x170] sm:$0xff] %v1529
      %1646 = vst [vmem:[%s182 + $0x178] sm:$0xff] %v1532
      %1647 = vst [vmem:[%s182 + $0x180] sm:$0xff] %v1537
      %1648 = vst [vmem:[%s182 + $0x188] sm:$0xff] %v1540
      %1649 = vst [vmem:[%s182 + $0x190] sm:$0xff] %v1545
      %1650 = vst [vmem:[%s182 + $0x198] sm:$0xff] %v1548
      %1651 = vst [vmem:[%s182 + $0x1a0] sm:$0xff] %v1553
      %1652 = vst [vmem:[%s182 + $0x1a8] sm:$0xff] %v1556
      %1653 = vst [vmem:[%s182 + $0x1b0] sm:$0xff] %v1561
      %1654 = vst [vmem:[%s182 + $0x1b8] sm:$0xff] %v1564
      %1655 = vst [vmem:[%s182 + $0x1c0] sm:$0xff] %v1569
      %1656 = vst [vmem:[%s182 + $0x1c8] sm:$0xff] %v1572
      %1657 = vst [vmem:[%s182 + $0x1d0] sm:$0xff] %v1577
      %1658 = vst [vmem:[%s182 + $0x1d8] sm:$0xff] %v1580
      %1659 = vst [vmem:[%s182 + $0x1e0] sm:$0xff] %v1585
      %1660 = vst [vmem:[%s182 + $0x1e8] sm:$0xff] %v1588
      %1661 = vst [vmem:[%s182 + $0x1f0] sm:$0xff] %v1593
      %1662 = vst [vmem:[%s182 + $0x1f8] sm:$0xff] %v1596
      %v1663 = vadd.f32 %v1345, %v1348
      %v1664 = vadd.f32 %v1663, %v1353
      %v1665 = vadd.f32 %v1664, %v1356
      %v1666 = vadd.f32 %v1665, %v1361
      %v1667 = vadd.f32 %v1666, %v1364
      %v1668 = vadd.f32 %v1667, %v1369
      %v1669 = vadd.f32 %v1668, %v1372
      %v1670 = vadd.f32 %v1669, %v1377
      %v1671 = vadd.f32 %v1670, %v1380
      %v1672 = vadd.f32 %v1671, %v1385
      %v1673 = vadd.f32 %v1672, %v1388
      %v1674 = vadd.f32 %v1673, %v1393
      %v1675 = vadd.f32 %v1674, %v1396
      %v1676 = vadd.f32 %v1675, %v1401
      %v1677 = vadd.f32 %v1676, %v1404
      %v1678 = vadd.f32 %v1677, %v1409
      %v1679 = vadd.f32 %v1678, %v1412
      %v1680 = vadd.f32 %v1679, %v1417
      %v1681 = vadd.f32 %v1680, %v1420
      %v1682 = vadd.f32 %v1681, %v1425
      %v1683 = vadd.f32 %v1682, %v1428
      %v1684 = vadd.f32 %v1683, %v1433
      %v1685 = vadd.f32 %v1684, %v1436
      %v1686 = vadd.f32 %v1685, %v1441
      %v1687 = vadd.f32 %v1686, %v1444
      %v1688 = vadd.f32 %v1687, %v1449
      %v1689 = vadd.f32 %v1688, %v1452
      %v1690 = vadd.f32 %v1689, %v1457
      %v1691 = vadd.f32 %v1690, %v1460
      %v1692 = vadd.f32 %v1691, %v1465
      %v1693 = vadd.f32 %v1692, %v1468
      %v1694 = vadd.f32 %v1693, %v1473
      %v1695 = vadd.f32 %v1694, %v1476
      %v1696 = vadd.f32 %v1695, %v1481
      %v1697 = vadd.f32 %v1696, %v1484
      %v1698 = vadd.f32 %v1697, %v1489
      %v1699 = vadd.f32 %v1698, %v1492
      %v1700 = vadd.f32 %v1699, %v1497
      %v1701 = vadd.f32 %v1700, %v1500
      %v1702 = vadd.f32 %v1701, %v1505
      %v1703 = vadd.f32 %v1702, %v1508
      %v1704 = vadd.f32 %v1703, %v1513
      %v1705 = vadd.f32 %v1704, %v1516
      %v1706 = vadd.f32 %v1705, %v1521
      %v1707 = vadd.f32 %v1706, %v1524
      %v1708 = vadd.f32 %v1707, %v1529
      %v1709 = vadd.f32 %v1708, %v1532
      %v1710 = vadd.f32 %v1709, %v1537
      %v1711 = vadd.f32 %v1710, %v1540
      %v1712 = vadd.f32 %v1711, %v1545
      %v1713 = vadd.f32 %v1712, %v1548
      %v1714 = vadd.f32 %v1713, %v1553
      %v1715 = vadd.f32 %v1714, %v1556
      %v1716 = vadd.f32 %v1715, %v1561
      %v1717 = vadd.f32 %v1716, %v1564
      %v1718 = vadd.f32 %v1717, %v1569
      %v1719 = vadd.f32 %v1718, %v1572
      %v1720 = vadd.f32 %v1719, %v1577
      %v1721 = vadd.f32 %v1720, %v1580
      %v1722 = vadd.f32 %v1721, %v1585
      %v1723 = vadd.f32 %v1722, %v1588
      %v1724 = vadd.f32 %v1723, %v1593
      %v1725 = vadd.f32 %v1724, %v1596
      %v1726 = vrot.slane %v1725, 4
      %v1727 = vadd.f32 %v1725, %v1726
      %v1728 = vrot.slane %v1727, 2
      %v1729 = vadd.f32 %v1727, %v1728
      %v1730 = vrot.slane %v1729, 1
      %v1731 = vadd.f32 %v1729, %v1730
      %v1732 = vmul.f32 %v1345, %v1345
      %v1733 = vmul.f32 %v1348, %v1348
      %v1734 = vmul.f32 %v1353, %v1353
      %v1735 = vmul.f32 %v1356, %v1356
      %v1736 = vmul.f32 %v1361, %v1361
      %v1737 = vmul.f32 %v1364, %v1364
      %v1738 = vmul.f32 %v1369, %v1369
      %v1739 = vmul.f32 %v1372, %v1372
      %v1740 = vmul.f32 %v1377, %v1377
      %v1741 = vmul.f32 %v1380, %v1380
      %v1742 = vmul.f32 %v1385, %v1385
      %v1743 = vmul.f32 %v1388, %v1388
      %v1744 = vmul.f32 %v1393, %v1393
      %v1745 = vmul.f32 %v1396, %v1396
      %v1746 = vmul.f32 %v1401, %v1401
      %v1747 = vmul.f32 %v1404, %v1404
      %v1748 = vmul.f32 %v1409, %v1409
      %v1749 = vmul.f32 %v1412, %v1412
      %v1750 = vmul.f32 %v1417, %v1417
      %v1751 = vmul.f32 %v1420, %v1420
      %v1752 = vmul.f32 %v1425, %v1425
      %v1753 = vmul.f32 %v1428, %v1428
      %v1754 = vmul.f32 %v1433, %v1433
      %v1755 = vmul.f32 %v1436, %v1436
      %v1756 = vmul.f32 %v1441, %v1441
      %v1757 = vmul.f32 %v1444, %v1444
      %v1758 = vmul.f32 %v1449, %v1449
      %v1759 = vmul.f32 %v1452, %v1452
      %v1760 = vmul.f32 %v1457, %v1457
      %v1761 = vmul.f32 %v1460, %v1460
      %v1762 = vmul.f32 %v1465, %v1465
      %v1763 = vmul.f32 %v1468, %v1468
      %v1764 = vmul.f32 %v1473, %v1473
      %v1765 = vmul.f32 %v1476, %v1476
      %v1766 = vmul.f32 %v1481, %v1481
      %v1767 = vmul.f32 %v1484, %v1484
      %v1768 = vmul.f32 %v1489, %v1489
      %v1769 = vmul.f32 %v1492, %v1492
      %v1770 = vmul.f32 %v1497, %v1497
      %v1771 = vmul.f32 %v1500, %v1500
      %v1772 = vmul.f32 %v1505, %v1505
      %v1773 = vmul.f32 %v1508, %v1508
      %v1774 = vmul.f32 %v1513, %v1513
      %v1775 = vmul.f32 %v1516, %v1516
      %v1776 = vmul.f32 %v1521, %v1521
      %v1777 = vmul.f32 %v1524, %v1524
      %v1778 = vmul.f32 %v1529, %v1529
      %v1779 = vmul.f32 %v1532, %v1532
      %v1780 = vmul.f32 %v1537, %v1537
      %v1781 = vmul.f32 %v1540, %v1540
      %v1782 = vmul.f32 %v1545, %v1545
      %v1783 = vmul.f32 %v1548, %v1548
      %v1784 = vmul.f32 %v1553, %v1553
      %v1785 = vmul.f32 %v1556, %v1556
      %v1786 = vmul.f32 %v1561, %v1561
      %v1787 = vmul.f32 %v1564, %v1564
      %v1788 = vmul.f32 %v1569, %v1569
      %v1789 = vmul.f32 %v1572, %v1572
      %v1790 = vmul.f32 %v1577, %v1577
      %v1791 = vmul.f32 %v1580, %v1580
      %v1792 = vmul.f32 %v1585, %v1585
      %v1793 = vmul.f32 %v1588, %v1588
      %v1794 = vmul.f32 %v1593, %v1593
      %v1795 = vmul.f32 %v1596, %v1596
      %v1796 = vadd.f32 %v1732, %v1733
      %v1797 = vadd.f32 %v1796, %v1734
      %v1798 = vadd.f32 %v1797, %v1735
      %v1799 = vadd.f32 %v1798, %v1736
      %v1800 = vadd.f32 %v1799, %v1737
      %v1801 = vadd.f32 %v1800, %v1738
      %v1802 = vadd.f32 %v1801, %v1739
      %v1803 = vadd.f32 %v1802, %v1740
      %v1804 = vadd.f32 %v1803, %v1741
      %v1805 = vadd.f32 %v1804, %v1742
      %v1806 = vadd.f32 %v1805, %v1743
      %v1807 = vadd.f32 %v1806, %v1744
      %v1808 = vadd.f32 %v1807, %v1745
      %v1809 = vadd.f32 %v1808, %v1746
      %v1810 = vadd.f32 %v1809, %v1747
      %v1811 = vadd.f32 %v1810, %v1748
      %v1812 = vadd.f32 %v1811, %v1749
      %v1813 = vadd.f32 %v1812, %v1750
      %v1814 = vadd.f32 %v1813, %v1751
      %v1815 = vadd.f32 %v1814, %v1752
      %v1816 = vadd.f32 %v1815, %v1753
      %v1817 = vadd.f32 %v1816, %v1754
      %v1818 = vadd.f32 %v1817, %v1755
      %v1819 = vadd.f32 %v1818, %v1756
      %v1820 = vadd.f32 %v1819, %v1757
      %v1821 = vadd.f32 %v1820, %v1758
      %v1822 = vadd.f32 %v1821, %v1759
      %v1823 = vadd.f32 %v1822, %v1760
      %v1824 = vadd.f32 %v1823, %v1761
      %v1825 = vadd.f32 %v1824, %v1762
      %v1826 = vadd.f32 %v1825, %v1763
      %v1827 = vadd.f32 %v1826, %v1764
      %v1828 = vadd.f32 %v1827, %v1765
      %v1829 = vadd.f32 %v1828, %v1766
      %v1830 = vadd.f32 %v1829, %v1767
      %v1831 = vadd.f32 %v1830, %v1768
      %v1832 = vadd.f32 %v1831, %v1769
      %v1833 = vadd.f32 %v1832, %v1770
      %v1834 = vadd.f32 %v1833, %v1771
      %v1835 = vadd.f32 %v1834, %v1772
      %v1836 = vadd.f32 %v1835, %v1773
      %v1837 = vadd.f32 %v1836, %v1774
      %v1838 = vadd.f32 %v1837, %v1775
      %v1839 = vadd.f32 %v1838, %v1776
      %v1840 = vadd.f32 %v1839, %v1777
      %v1841 = vadd.f32 %v1840, %v1778
      %v1842 = vadd.f32 %v1841, %v1779
      %v1843 = vadd.f32 %v1842, %v1780
      %v1844 = vadd.f32 %v1843, %v1781
      %v1845 = vadd.f32 %v1844, %v1782
      %v1846 = vadd.f32 %v1845, %v1783
      %v1847 = vadd.f32 %v1846, %v1784
      %v1848 = vadd.f32 %v1847, %v1785
      %v1849 = vadd.f32 %v1848, %v1786
      %v1850 = vadd.f32 %v1849, %v1787
      %v1851 = vadd.f32 %v1850, %v1788
      %v1852 = vadd.f32 %v1851, %v1789
      %v1853 = vadd.f32 %v1852, %v1790
      %v1854 = vadd.f32 %v1853, %v1791
      %v1855 = vadd.f32 %v1854, %v1792
      %v1856 = vadd.f32 %v1855, %v1793
      %v1857 = vadd.f32 %v1856, %v1794
      %v1858 = vadd.f32 %v1857, %v1795
      %v1859 = vrot.slane %v1858, 4
      %v1860 = vadd.f32 %v1858, %v1859
      %v1861 = vrot.slane %v1860, 2
      %v1862 = vadd.f32 %v1860, %v1861
      %v1863 = vrot.slane %v1862, 1
      %v1864 = vadd.f32 %v1862, %v1863
      %vm1865 = vcmask 1040384
      %v1866 = vsel %vm1865, %v1731, %v1864
      %vm1867 = vcmask 1041408
      %v1868 = vsel %vm1867, %v1866, 0.0
      %1869 = vst [vmem:[%s187] sm:$0xff] %v1868
      %s1870 = smul.u32 64, %s15
      %p1871 = scmp.lt.s32.totalorder %s1870, 255
      %s1872 = scalar_select %p1871, %s1870, 255
      %s1873 = smul.addr %s1872, 8
      %s1874 = scalar_lea.vmem %s2, %s1873
      %p1875 = scmp.lt.s32.totalorder %s15, 3
      %s1876 = scalar_select %p1875, %s15, 3
      %s1877 = smul.addr %s1876, 8
      %s1878 = scalar_lea.vmem %s3, %s1877
      // Predicated region
      $region29: #{discriminator_forward.15} parent=27 // pred_check
        %p1879 = pneg %p80
      $region30: #{discriminator_forward.15} parent=27 // pred_check_branch
        %1881 = sbr.rel (%p1879) target = $region32
      $region31: #{discriminator_forward.15} parent=27 // pred_region
        %s1882 = smul.u32 64, %s15
      $region32: #{discriminator_forward.15} parent=27 // pred_fallthru
        _
      // Predicated region
      $region33: #{discriminator_forward.15} parent=27 // pred_check
        %p1883 = pneg %p106
      $region34: #{discriminator_forward.15} parent=27 // pred_check_branch
        %1885 = sbr.rel (%p1883) target = $region36
      $region35: #{discriminator_forward.15} parent=27 // pred_region
        _
      $region36: #{discriminator_forward.15} parent=27 // pred_fallthru
        _
    $region28: #{discriminator_forward.15} parent=5 // pred_fallthru
      _
    %p1886 = scmp.le.s32.totalorder 2, %s10
    // Predicated region
    $region37: #{discriminator_forward.15} parent=5 // pred_check
      %p1887 = pneg %p1886
    $region38: #{discriminator_forward.15} parent=5 // pred_check_branch
      %1889 = sbr.rel (%p1887) target = $region40
    $region39: #{discriminator_forward.15} parent=5 // pred_region
      %s1890 = ssub.s32 %s10, 2
      // Predicated region
      $region41: #{discriminator_forward.15} parent=39 // pred_check
        %p1891 = pneg %p86
      $region42: #{discriminator_forward.15} parent=39 // pred_check_branch
        %1893 = sbr.rel (%p1891) target = $region44
      $region43: #{discriminator_forward.15} parent=39 // pred_region
        %s1894 = smul.u32 64, %s16
        %p1895 = scmp.lt.s32.totalorder %s1894, 255
        %s1896 = scalar_select %p1895, %s1894, 255
        %s1897 = smul.addr %s1896, 8
        %s1898 = scalar_lea.vmem %s2, %s1897
      $region44: #{discriminator_forward.15} parent=39 // pred_fallthru
        _
      // Predicated region
      $region45: #{discriminator_forward.15} parent=39 // pred_check
        %p1899 = pneg %p112
      $region46: #{discriminator_forward.15} parent=39 // pred_check_branch
        %1901 = sbr.rel (%p1899) target = $region48
      $region47: #{discriminator_forward.15} parent=39 // pred_region
        %p1902 = scmp.lt.s32.totalorder %s16, 3
        %s1903 = scalar_select %p1902, %s16, 3
        %s1904 = smul.addr %s1903, 8
        %s1905 = scalar_lea.vmem %s3, %s1904
      $region48: #{discriminator_forward.15} parent=39 // pred_fallthru
        _
    $region40: #{discriminator_forward.15} parent=5 // pred_fallthru
      _
  $region6: #{discriminator_forward.15} parent=0 // loop_footer
    %s14 = sadd.s32 1, %s10
  $region7: #{discriminator_forward.15} parent=0 // loop_footer_branch
    %9 = sbr.rel target = $region3
  $region8: #{discriminator_forward.15} parent=0 // loop_exit
    _

// kernel: discriminator_forward.16
$region0: #{discriminator_forward.16}
  #allocation0 [shape = 'u32[]', space=smem, size = 0x4, offset = 0x4, fixed_abs, tag = 'smem constant byte address 0x4 - core index']
  #allocation1 [shape = 'u32[144,128]{1,0:T(1,128)}', space=vmem, size = 0x12000, scoped, tag = 'internal scratch']
  %s0 = inlined_call_operand.vmem [shape: f32[2048,128], index: 0, kind: input, shape index: {}]
  %s1 = inlined_call_operand.vmem [shape: f32[1,128], index: 1, kind: input, shape index: {}]
  %s2 = inlined_call_operand.vmem [shape: f32[1,128], index: 2, kind: input, shape index: {}]
  %s3 = inlined_call_operand.vmem [shape: f32[2048,128], index: 3, kind: output, shape index: {}]
  %s4 = sld [smem:[#allocation0]]
  $region45: #{discriminator_forward.16} parent=0
    _
  %s6 = ssub.s32 1, %s4
  %s7 = scalar_select 0, %s6, %s4
  loop: start=0, step=1, limit=6
  $region2: #{discriminator_forward.16} parent=0 // loop_pre_header
    _
  $region3: #{discriminator_forward.16} parent=0 // loop_header
    %s9 = sphi 0, %s13
    %p10 = scmp.ge.s32.totalorder %s9, 6
    %s19 = sphi 0, %s21
    %s22 = sphi 0, %s19
    %s23 = sphi 0, %s22
    %s39 = sphi 0, %s23
    %s43 = sphi 0, %s43
    %s45 = sphi 0, %s43
    %s46 = sphi 0, %s45
    %s60 = sphi 0, %s46
    %s64 = sphi 0, %s64
    %s66 = sphi 0, %s64
    %s67 = sphi 0, %s66
    %s81 = sphi 0, %s67
    %s87 = sphi 0, %s89
    %s90 = sphi 0, %s87
    %s91 = sphi 0, %s90
    %s107 = sphi 0, %s91
  $region4: #{discriminator_forward.16} parent=0 // loop_header_branch
    %12 = sbr.rel (%p10) target = $region8
  $region5: #{discriminator_forward.16} parent=0 // loop_body
    %s14 = ssub.s32 %s9, 1
    %s15 = ssub.s32 %s9, 2
    %s16 = sadd.s32 %s9, 1
    %s17 = ssub.s32 %s9, %s16
    %p18 = scmp.eq.s32.totalorder %s17, 0
    %s20 = sadd.s32 %s19, 1
    %s21 = scalar_select %p18, %s19, %s20
    %p24 = pneg %p18
    %p25 = scmp.eq.s32.totalorder %s9, 3
    %p26 = por %p24, %p25
    %p27 = scmp.ne.s32.totalorder %s19, %s22
    %p28 = scmp.eq.s32.totalorder %s9, 0
    %p29 = por %p27, %p28
    %p30 = scmp.ne.s32.totalorder %s19, %s22
    %p31 = scmp.eq.s32.totalorder %s14, 3
    %p32 = por %p30, %p31
    %p33 = scmp.ne.s32.totalorder %s22, %s23
    %p34 = scmp.eq.s32.totalorder %s14, 0
    %p35 = por %p33, %p34
    %p36 = scmp.ne.s32.totalorder %s22, %s23
    %p37 = scmp.eq.s32.totalorder %s15, 3
    %p38 = por %p36, %p37
    %p40 = scmp.ne.s32.totalorder %s23, %s39
    %p41 = scmp.eq.s32.totalorder %s15, 0
    %p42 = por %p40, %p41
    %s44 = sadd.s32 %s43, 1
    %p47 = scmp.eq.s32.totalorder %s9, 3
    %p48 = scmp.ne.s32.totalorder %s43, %s45
    %p49 = scmp.eq.s32.totalorder %s9, 0
    %p50 = por %p48, %p49
    %p51 = scmp.ne.s32.totalorder %s43, %s45
    %p52 = scmp.eq.s32.totalorder %s14, 3
    %p53 = por %p51, %p52
    %p54 = scmp.ne.s32.totalorder %s45, %s46
    %p55 = scmp.eq.s32.totalorder %s14, 0
    %p56 = por %p54, %p55
    %p57 = scmp.ne.s32.totalorder %s45, %s46
    %p58 = scmp.eq.s32.totalorder %s15, 3
    %p59 = por %p57, %p58
    %p61 = scmp.ne.s32.totalorder %s46, %s60
    %p62 = scmp.eq.s32.totalorder %s15, 0
    %p63 = por %p61, %p62
    %s65 = sadd.s32 %s64, 1
    %p68 = scmp.eq.s32.totalorder %s9, 3
    %p69 = scmp.ne.s32.totalorder %s64, %s66
    %p70 = scmp.eq.s32.totalorder %s9, 0
    %p71 = por %p69, %p70
    %p72 = scmp.ne.s32.totalorder %s64, %s66
    %p73 = scmp.eq.s32.totalorder %s14, 3
    %p74 = por %p72, %p73
    %p75 = scmp.ne.s32.totalorder %s66, %s67
    %p76 = scmp.eq.s32.totalorder %s14, 0
    %p77 = por %p75, %p76
    %p78 = scmp.ne.s32.totalorder %s66, %s67
    %p79 = scmp.eq.s32.totalorder %s15, 3
    %p80 = por %p78, %p79
    %p82 = scmp.ne.s32.totalorder %s67, %s81
    %p83 = scmp.eq.s32.totalorder %s15, 0
    %p84 = por %p82, %p83
    %s85 = ssub.s32 %s9, %s16
    %p86 = scmp.eq.s32.totalorder %s85, 0
    %s88 = sadd.s32 %s87, 1
    %s89 = scalar_select %p86, %s87, %s88
    %p92 = pneg %p86
    %p93 = scmp.eq.s32.totalorder %s9, 3
    %p94 = por %p92, %p93
    %p95 = scmp.ne.s32.totalorder %s87, %s90
    %p96 = scmp.eq.s32.totalorder %s9, 0
    %p97 = por %p95, %p96
    %p98 = scmp.ne.s32.totalorder %s87, %s90
    %p99 = scmp.eq.s32.totalorder %s14, 3
    %p100 = por %p98, %p99
    %p101 = scmp.ne.s32.totalorder %s90, %s91
    %p102 = scmp.eq.s32.totalorder %s14, 0
    %p103 = por %p101, %p102
    %p104 = scmp.ne.s32.totalorder %s90, %s91
    %p105 = scmp.eq.s32.totalorder %s15, 3
    %p106 = por %p104, %p105
    %p108 = scmp.ne.s32.totalorder %s91, %s107
    %p109 = scmp.eq.s32.totalorder %s15, 0
    %p110 = por %p108, %p109
    %p111 = scmp.le.s32.totalorder 1, %s9
    %p112 = scmp.lt.s32.totalorder %s9, 5
    %p113 = pnand %p111, %p112
    %p114 = pneg %p113
    // Predicated region
    $region9: #{discriminator_forward.16} parent=5 // pred_check
      _
    $region10: #{discriminator_forward.16} parent=5 // pred_check_branch
      %116 = sbr.rel (%p113) target = $region12
    $region11: #{discriminator_forward.16} parent=5 // pred_region
      %s117 = ssub.s32 %s9, 1
      // Predicated region
      $region13: #{discriminator_forward.16} parent=11 // pred_check
        %p118 = pneg %p56
      $region14: #{discriminator_forward.16} parent=11 // pred_check_branch
        %120 = sbr.rel (%p118) target = $region16
      $region15: #{discriminator_forward.16} parent=11 // pred_region
        _
      $region16: #{discriminator_forward.16} parent=11 // pred_fallthru
        _
      // Predicated region
      $region17: #{discriminator_forward.16} parent=11 // pred_check
        %p121 = pneg %p77
      $region18: #{discriminator_forward.16} parent=11 // pred_check_branch
        %123 = sbr.rel (%p121) target = $region20
      $region19: #{discriminator_forward.16} parent=11 // pred_region
        _
      $region20: #{discriminator_forward.16} parent=11 // pred_fallthru
        _
    $region12: #{discriminator_forward.16} parent=5 // pred_fallthru
      _
    %p124 = scmp.lt.s32.totalorder %s9, 4
    // Predicated region
    $region21: #{discriminator_forward.16} parent=5 // pred_check
      %p125 = pneg %p124
    $region22: #{discriminator_forward.16} parent=5 // pred_check_branch
      %127 = sbr.rel (%p125) target = $region24
    $region23: #{discriminator_forward.16} parent=5 // pred_region
      // Predicated region
      $region25: #{discriminator_forward.16} parent=23 // pred_check
        %p128 = pneg %p29
      $region26: #{discriminator_forward.16} parent=23 // pred_check_branch
        %130 = sbr.rel (%p128) target = $region28
      $region27: #{discriminator_forward.16} parent=23 // pred_region
        %s131 = smul.u32 64, %s9
        %p132 = scmp.lt.s32.totalorder %s131, 255
        %s133 = scalar_select %p132, %s131, 255
        %s134 = smul.addr %s133, 8
        %s135 = scalar_lea.vmem %s0, %s134
        %s136 = smul.u32 64, %s9
      $region28: #{discriminator_forward.16} parent=23 // pred_fallthru
        _
    $region24: #{discriminator_forward.16} parent=5 // pred_fallthru
      _
    %p137 = scmp.le.s32.totalorder 1, %s9
    %p138 = scmp.lt.s32.totalorder %s9, 5
    %p139 = pnand %p137, %p138
    %p140 = pneg %p139
    // Predicated region
    $region29: #{discriminator_forward.16} parent=5 // pred_check
      _
    $region30: #{discriminator_forward.16} parent=5 // pred_check_branch
      %142 = sbr.rel (%p139) target = $region32
    $region31: #{discriminator_forward.16} parent=5 // pred_region
      %s143 = ssub.s32 %s9, 1
      %s144 = smul.u32 64, %s14
      %p145 = scmp.lt.s32.totalorder %s144, 255
      %s146 = scalar_select %p145, %s144, 255
      %s147 = smul.addr %s146, 8
      %s148 = scalar_lea.vmem %s0, %s147
      %p149 = pneg %p35
      %p150 = pneg %p32
      %p151 = pneg %p56
      %p152 = pneg %p53
      %p153 = pneg %p77
      %p154 = pneg %p74
      %p155 = pneg %p103
      %p156 = pneg %p100
      %s157 = smul.u32 64, %s14
      %p158 = scmp.lt.s32.totalorder %s157, 255
      %s159 = scalar_select %p158, %s157, 255
      %s160 = smul.addr %s159, 8
      %s161 = scalar_lea.vmem %s3, %s160
      %s162 = smul.u32 64, %s14
      %p163 = scmp.lt.s32.totalorder %s162, 255
      %s164 = scalar_select %p163, %s162, 255
      %s165 = smul.addr %s164, 8
      %s166 = scalar_lea.vmem %s0, %s165
      %s167 = smul.u32 64, %s14
      %s168 = smul.u32 64, %s14
      %p169 = scmp.lt.s32.totalorder %s168, 255
      %s170 = scalar_select %p169, %s168, 255
      %s171 = smul.addr %s170, 8
      %s172 = scalar_lea.vmem %s3, %s171
      %s173 = smul.u32 64, %s14
      %v174 = vld [vmem:[%s166] sm:$0xff]
      %v175 = vld [vmem:[%s166 + $0x8] sm:$0xff]
      %v176 = vld [vmem:[%s166 + $0x10] sm:$0xff]
      %v177 = vld [vmem:[%s166 + $0x18] sm:$0xff]
      %v178 = vld [vmem:[%s166 + $0x20] sm:$0xff]
      %v179 = vld [vmem:[%s166 + $0x28] sm:$0xff]
      %v180 = vld [vmem:[%s166 + $0x30] sm:$0xff]
      %v181 = vld [vmem:[%s166 + $0x38] sm:$0xff]
      %v182 = vld [vmem:[%s166 + $0x40] sm:$0xff]
      %v183 = vld [vmem:[%s166 + $0x48] sm:$0xff]
      %v184 = vld [vmem:[%s166 + $0x50] sm:$0xff]
      %v185 = vld [vmem:[%s166 + $0x58] sm:$0xff]
      %v186 = vld [vmem:[%s166 + $0x60] sm:$0xff]
      %v187 = vld [vmem:[%s166 + $0x68] sm:$0xff]
      %v188 = vld [vmem:[%s166 + $0x70] sm:$0xff]
      %v189 = vld [vmem:[%s166 + $0x78] sm:$0xff]
      %v190 = vld [vmem:[%s166 + $0x80] sm:$0xff]
      %v191 = vld [vmem:[%s166 + $0x88] sm:$0xff]
      %v192 = vld [vmem:[%s166 + $0x90] sm:$0xff]
      %v193 = vld [vmem:[%s166 + $0x98] sm:$0xff]
      %v194 = vld [vmem:[%s166 + $0xa0] sm:$0xff]
      %v195 = vld [vmem:[%s166 + $0xa8] sm:$0xff]
      %v196 = vld [vmem:[%s166 + $0xb0] sm:$0xff]
      %v197 = vld [vmem:[%s166 + $0xb8] sm:$0xff]
      %v198 = vld [vmem:[%s166 + $0xc0] sm:$0xff]
      %v199 = vld [vmem:[%s166 + $0xc8] sm:$0xff]
      %v200 = vld [vmem:[%s166 + $0xd0] sm:$0xff]
      %v201 = vld [vmem:[%s166 + $0xd8] sm:$0xff]
      %v202 = vld [vmem:[%s166 + $0xe0] sm:$0xff]
      %v203 = vld [vmem:[%s166 + $0xe8] sm:$0xff]
      %v204 = vld [vmem:[%s166 + $0xf0] sm:$0xff]
      %v205 = vld [vmem:[%s166 + $0xf8] sm:$0xff]
      %v206 = vld [vmem:[%s166 + $0x100] sm:$0xff]
      %v207 = vld [vmem:[%s166 + $0x108] sm:$0xff]
      %v208 = vld [vmem:[%s166 + $0x110] sm:$0xff]
      %v209 = vld [vmem:[%s166 + $0x118] sm:$0xff]
      %v210 = vld [vmem:[%s166 + $0x120] sm:$0xff]
      %v211 = vld [vmem:[%s166 + $0x128] sm:$0xff]
      %v212 = vld [vmem:[%s166 + $0x130] sm:$0xff]
      %v213 = vld [vmem:[%s166 + $0x138] sm:$0xff]
      %v214 = vld [vmem:[%s166 + $0x140] sm:$0xff]
      %v215 = vld [vmem:[%s166 + $0x148] sm:$0xff]
      %v216 = vld [vmem:[%s166 + $0x150] sm:$0xff]
      %v217 = vld [vmem:[%s166 + $0x158] sm:$0xff]
      %v218 = vld [vmem:[%s166 + $0x160] sm:$0xff]
      %v219 = vld [vmem:[%s166 + $0x168] sm:$0xff]
      %v220 = vld [vmem:[%s166 + $0x170] sm:$0xff]
      %v221 = vld [vmem:[%s166 + $0x178] sm:$0xff]
      %v222 = vld [vmem:[%s166 + $0x180] sm:$0xff]
      %v223 = vld [vmem:[%s166 + $0x188] sm:$0xff]
      %v224 = vld [vmem:[%s166 + $0x190] sm:$0xff]
      %v225 = vld [vmem:[%s166 + $0x198] sm:$0xff]
      %v226 = vld [vmem:[%s166 + $0x1a0] sm:$0xff]
      %v227 = vld [vmem:[%s166 + $0x1a8] sm:$0xff]
      %v228 = vld [vmem:[%s166 + $0x1b0] sm:$0xff]
      %v229 = vld [vmem:[%s166 + $0x1b8] sm:$0xff]
      %v230 = vld [vmem:[%s166 + $0x1c0] sm:$0xff]
      %v231 = vld [vmem:[%s166 + $0x1c8] sm:$0xff]
      %v232 = vld [vmem:[%s166 + $0x1d0] sm:$0xff]
      %v233 = vld [vmem:[%s166 + $0x1d8] sm:$0xff]
      %v234 = vld [vmem:[%s166 + $0x1e0] sm:$0xff]
      %v235 = vld [vmem:[%s166 + $0x1e8] sm:$0xff]
      %v236 = vld [vmem:[%s166 + $0x1f0] sm:$0xff]
      %v237 = vld [vmem:[%s166 + $0x1f8] sm:$0xff]
      %v238 = vld [vmem:[%s1] sm:$0x1]
      %v240 = vlaneseq
      %v241 = vshrl.u32 %v240, 7
      %v242 = vsub.s32 0, %v241
      %v243 = vrot.slane %v238, %v242
      %v245 = vmul.f32 %v174, %v243
      %v246 = vmul.f32 %v175, %v243
      %v247 = vmul.f32 %v176, %v243
      %v248 = vmul.f32 %v177, %v243
      %v249 = vmul.f32 %v178, %v243
      %v250 = vmul.f32 %v179, %v243
      %v251 = vmul.f32 %v180, %v243
      %v252 = vmul.f32 %v181, %v243
      %v253 = vmul.f32 %v182, %v243
      %v254 = vmul.f32 %v183, %v243
      %v255 = vmul.f32 %v184, %v243
      %v256 = vmul.f32 %v185, %v243
      %v257 = vmul.f32 %v186, %v243
      %v258 = vmul.f32 %v187, %v243
      %v259 = vmul.f32 %v188, %v243
      %v260 = vmul.f32 %v189, %v243
      %v261 = vmul.f32 %v190, %v243
      %v262 = vmul.f32 %v191, %v243
      %v263 = vmul.f32 %v192, %v243
      %v264 = vmul.f32 %v193, %v243
      %v265 = vmul.f32 %v194, %v243
      %v266 = vmul.f32 %v195, %v243
      %v267 = vmul.f32 %v196, %v243
      %v268 = vmul.f32 %v197, %v243
      %v269 = vmul.f32 %v198, %v243
      %v270 = vmul.f32 %v199, %v243
      %v271 = vmul.f32 %v200, %v243
      %v272 = vmul.f32 %v201, %v243
      %v273 = vmul.f32 %v202, %v243
      %v274 = vmul.f32 %v203, %v243
      %v275 = vmul.f32 %v204, %v243
      %v276 = vmul.f32 %v205, %v243
      %v277 = vmul.f32 %v206, %v243
      %v278 = vmul.f32 %v207, %v243
      %v279 = vmul.f32 %v208, %v243
      %v280 = vmul.f32 %v209, %v243
      %v281 = vmul.f32 %v210, %v243
      %v282 = vmul.f32 %v211, %v243
      %v283 = vmul.f32 %v212, %v243
      %v284 = vmul.f32 %v213, %v243
      %v285 = vmul.f32 %v214, %v243
      %v286 = vmul.f32 %v215, %v243
      %v287 = vmul.f32 %v216, %v243
      %v288 = vmul.f32 %v217, %v243
      %v289 = vmul.f32 %v218, %v243
      %v290 = vmul.f32 %v219, %v243
      %v291 = vmul.f32 %v220, %v243
      %v292 = vmul.f32 %v221, %v243
      %v293 = vmul.f32 %v222, %v243
      %v294 = vmul.f32 %v223, %v243
      %v295 = vmul.f32 %v224, %v243
      %v296 = vmul.f32 %v225, %v243
      %v297 = vmul.f32 %v226, %v243
      %v298 = vmul.f32 %v227, %v243
      %v299 = vmul.f32 %v228, %v243
      %v300 = vmul.f32 %v229, %v243
      %v301 = vmul.f32 %v230, %v243
      %v302 = vmul.f32 %v231, %v243
      %v303 = vmul.f32 %v232, %v243
      %v304 = vmul.f32 %v233, %v243
      %v305 = vmul.f32 %v234, %v243
      %v306 = vmul.f32 %v235, %v243
      %v307 = vmul.f32 %v236, %v243
      %v308 = vmul.f32 %v237, %v243
      %v309 = vld [vmem:[%s2] sm:$0x1]
      %v311 = vlaneseq
      %v312 = vshrl.u32 %v311, 7
      %v313 = vsub.s32 0, %v312
      %v314 = vrot.slane %v309, %v313
      %v316 = vadd.f32 %v245, %v314
      %v317 = vadd.f32 %v246, %v314
      %v318 = vadd.f32 %v247, %v314
      %v319 = vadd.f32 %v248, %v314
      %v320 = vadd.f32 %v249, %v314
      %v321 = vadd.f32 %v250, %v314
      %v322 = vadd.f32 %v251, %v314
      %v323 = vadd.f32 %v252, %v314
      %v324 = vadd.f32 %v253, %v314
      %v325 = vadd.f32 %v254, %v314
      %v326 = vadd.f32 %v255, %v314
      %v327 = vadd.f32 %v256, %v314
      %v328 = vadd.f32 %v257, %v314
      %v329 = vadd.f32 %v258, %v314
      %v330 = vadd.f32 %v259, %v314
      %v331 = vadd.f32 %v260, %v314
      %v332 = vadd.f32 %v261, %v314
      %v333 = vadd.f32 %v262, %v314
      %v334 = vadd.f32 %v263, %v314
      %v335 = vadd.f32 %v264, %v314
      %v336 = vadd.f32 %v265, %v314
      %v337 = vadd.f32 %v266, %v314
      %v338 = vadd.f32 %v267, %v314
      %v339 = vadd.f32 %v268, %v314
      %v340 = vadd.f32 %v269, %v314
      %v341 = vadd.f32 %v270, %v314
      %v342 = vadd.f32 %v271, %v314
      %v343 = vadd.f32 %v272, %v314
      %v344 = vadd.f32 %v273, %v314
      %v345 = vadd.f32 %v274, %v314
      %v346 = vadd.f32 %v275, %v314
      %v347 = vadd.f32 %v276, %v314
      %v348 = vadd.f32 %v277, %v314
      %v349 = vadd.f32 %v278, %v314
      %v350 = vadd.f32 %v279, %v314
      %v351 = vadd.f32 %v280, %v314
      %v352 = vadd.f32 %v281, %v314
      %v353 = vadd.f32 %v282, %v314
      %v354 = vadd.f32 %v283, %v314
      %v355 = vadd.f32 %v284, %v314
      %v356 = vadd.f32 %v285, %v314
      %v357 = vadd.f32 %v286, %v314
      %v358 = vadd.f32 %v287, %v314
      %v359 = vadd.f32 %v288, %v314
      %v360 = vadd.f32 %v289, %v314
      %v361 = vadd.f32 %v290, %v314
      %v362 = vadd.f32 %v291, %v314
      %v363 = vadd.f32 %v292, %v314
      %v364 = vadd.f32 %v293, %v314
      %v365 = vadd.f32 %v294, %v314
      %v366 = vadd.f32 %v295, %v314
      %v367 = vadd.f32 %v296, %v314
      %v368 = vadd.f32 %v297, %v314
      %v369 = vadd.f32 %v298, %v314
      %v370 = vadd.f32 %v299, %v314
      %v371 = vadd.f32 %v300, %v314
      %v372 = vadd.f32 %v301, %v314
      %v373 = vadd.f32 %v302, %v314
      %v374 = vadd.f32 %v303, %v314
      %v375 = vadd.f32 %v304, %v314
      %v376 = vadd.f32 %v305, %v314
      %v377 = vadd.f32 %v306, %v314
      %v378 = vadd.f32 %v307, %v314
      %v379 = vadd.f32 %v308, %v314
      %vm380 = vcmp.gt.f32.partialorder %v316, 0.0
      %vm381 = vcmp.gt.f32.partialorder %v317, 0.0
      %vm382 = vcmp.gt.f32.partialorder %v318, 0.0
      %vm383 = vcmp.gt.f32.partialorder %v319, 0.0
      %vm384 = vcmp.gt.f32.partialorder %v320, 0.0
      %vm385 = vcmp.gt.f32.partialorder %v321, 0.0
      %vm386 = vcmp.gt.f32.partialorder %v322, 0.0
      %vm387 = vcmp.gt.f32.partialorder %v323, 0.0
      %vm388 = vcmp.gt.f32.partialorder %v324, 0.0
      %vm389 = vcmp.gt.f32.partialorder %v325, 0.0
      %vm390 = vcmp.gt.f32.partialorder %v326, 0.0
      %vm391 = vcmp.gt.f32.partialorder %v327, 0.0
      %vm392 = vcmp.gt.f32.partialorder %v328, 0.0
      %vm393 = vcmp.gt.f32.partialorder %v329, 0.0
      %vm394 = vcmp.gt.f32.partialorder %v330, 0.0
      %vm395 = vcmp.gt.f32.partialorder %v331, 0.0
      %vm396 = vcmp.gt.f32.partialorder %v332, 0.0
      %vm397 = vcmp.gt.f32.partialorder %v333, 0.0
      %vm398 = vcmp.gt.f32.partialorder %v334, 0.0
      %vm399 = vcmp.gt.f32.partialorder %v335, 0.0
      %vm400 = vcmp.gt.f32.partialorder %v336, 0.0
      %vm401 = vcmp.gt.f32.partialorder %v337, 0.0
      %vm402 = vcmp.gt.f32.partialorder %v338, 0.0
      %vm403 = vcmp.gt.f32.partialorder %v339, 0.0
      %vm404 = vcmp.gt.f32.partialorder %v340, 0.0
      %vm405 = vcmp.gt.f32.partialorder %v341, 0.0
      %vm406 = vcmp.gt.f32.partialorder %v342, 0.0
      %vm407 = vcmp.gt.f32.partialorder %v343, 0.0
      %vm408 = vcmp.gt.f32.partialorder %v344, 0.0
      %vm409 = vcmp.gt.f32.partialorder %v345, 0.0
      %vm410 = vcmp.gt.f32.partialorder %v346, 0.0
      %vm411 = vcmp.gt.f32.partialorder %v347, 0.0
      %vm412 = vcmp.gt.f32.partialorder %v348, 0.0
      %vm413 = vcmp.gt.f32.partialorder %v349, 0.0
      %vm414 = vcmp.gt.f32.partialorder %v350, 0.0
      %vm415 = vcmp.gt.f32.partialorder %v351, 0.0
      %vm416 = vcmp.gt.f32.partialorder %v352, 0.0
      %vm417 = vcmp.gt.f32.partialorder %v353, 0.0
      %vm418 = vcmp.gt.f32.partialorder %v354, 0.0
      %vm419 = vcmp.gt.f32.partialorder %v355, 0.0
      %vm420 = vcmp.gt.f32.partialorder %v356, 0.0
      %vm421 = vcmp.gt.f32.partialorder %v357, 0.0
      %vm422 = vcmp.gt.f32.partialorder %v358, 0.0
      %vm423 = vcmp.gt.f32.partialorder %v359, 0.0
      %vm424 = vcmp.gt.f32.partialorder %v360, 0.0
      %vm425 = vcmp.gt.f32.partialorder %v361, 0.0
      %vm426 = vcmp.gt.f32.partialorder %v362, 0.0
      %vm427 = vcmp.gt.f32.partialorder %v363, 0.0
      %vm428 = vcmp.gt.f32.partialorder %v364, 0.0
      %vm429 = vcmp.gt.f32.partialorder %v365, 0.0
      %vm430 = vcmp.gt.f32.partialorder %v366, 0.0
      %vm431 = vcmp.gt.f32.partialorder %v367, 0.0
      %vm432 = vcmp.gt.f32.partialorder %v368, 0.0
      %vm433 = vcmp.gt.f32.partialorder %v369, 0.0
      %vm434 = vcmp.gt.f32.partialorder %v370, 0.0
      %vm435 = vcmp.gt.f32.partialorder %v371, 0.0
      %vm436 = vcmp.gt.f32.partialorder %v372, 0.0
      %vm437 = vcmp.gt.f32.partialorder %v373, 0.0
      %vm438 = vcmp.gt.f32.partialorder %v374, 0.0
      %vm439 = vcmp.gt.f32.partialorder %v375, 0.0
      %vm440 = vcmp.gt.f32.partialorder %v376, 0.0
      %vm441 = vcmp.gt.f32.partialorder %v377, 0.0
      %vm442 = vcmp.gt.f32.partialorder %v378, 0.0
      %vm443 = vcmp.gt.f32.partialorder %v379, 0.0
      %v444 = vmul.f32 %v316, 0.01
      %v445 = vmul.f32 %v317, 0.01
      %v446 = vmul.f32 %v318, 0.01
      %v447 = vmul.f32 %v319, 0.01
      %v448 = vmul.f32 %v320, 0.01
      %v449 = vmul.f32 %v321, 0.01
      %v450 = vmul.f32 %v322, 0.01
      %v451 = vmul.f32 %v323, 0.01
      %v452 = vmul.f32 %v324, 0.01
      %v453 = vmul.f32 %v325, 0.01
      %v454 = vmul.f32 %v326, 0.01
      %v455 = vmul.f32 %v327, 0.01
      %v456 = vmul.f32 %v328, 0.01
      %v457 = vmul.f32 %v329, 0.01
      %v458 = vmul.f32 %v330, 0.01
      %v459 = vmul.f32 %v331, 0.01
      %v460 = vmul.f32 %v332, 0.01
      %v461 = vmul.f32 %v333, 0.01
      %v462 = vmul.f32 %v334, 0.01
      %v463 = vmul.f32 %v335, 0.01
      %v464 = vmul.f32 %v336, 0.01
      %v465 = vmul.f32 %v337, 0.01
      %v466 = vmul.f32 %v338, 0.01
      %v467 = vmul.f32 %v339, 0.01
      %v468 = vmul.f32 %v340, 0.01
      %v469 = vmul.f32 %v341, 0.01
      %v470 = vmul.f32 %v342, 0.01
      %v471 = vmul.f32 %v343, 0.01
      %v472 = vmul.f32 %v344, 0.01
      %v473 = vmul.f32 %v345, 0.01
      %v474 = vmul.f32 %v346, 0.01
      %v475 = vmul.f32 %v347, 0.01
      %v476 = vmul.f32 %v348, 0.01
      %v477 = vmul.f32 %v349, 0.01
      %v478 = vmul.f32 %v350, 0.01
      %v479 = vmul.f32 %v351, 0.01
      %v480 = vmul.f32 %v352, 0.01
      %v481 = vmul.f32 %v353, 0.01
      %v482 = vmul.f32 %v354, 0.01
      %v483 = vmul.f32 %v355, 0.01
      %v484 = vmul.f32 %v356, 0.01
      %v485 = vmul.f32 %v357, 0.01
      %v486 = vmul.f32 %v358, 0.01
      %v487 = vmul.f32 %v359, 0.01
      %v488 = vmul.f32 %v360, 0.01
      %v489 = vmul.f32 %v361, 0.01
      %v490 = vmul.f32 %v362, 0.01
      %v491 = vmul.f32 %v363, 0.01
      %v492 = vmul.f32 %v364, 0.01
      %v493 = vmul.f32 %v365, 0.01
      %v494 = vmul.f32 %v366, 0.01
      %v495 = vmul.f32 %v367, 0.01
      %v496 = vmul.f32 %v368, 0.01
      %v497 = vmul.f32 %v369, 0.01
      %v498 = vmul.f32 %v370, 0.01
      %v499 = vmul.f32 %v371, 0.01
      %v500 = vmul.f32 %v372, 0.01
      %v501 = vmul.f32 %v373, 0.01
      %v502 = vmul.f32 %v374, 0.01
      %v503 = vmul.f32 %v375, 0.01
      %v504 = vmul.f32 %v376, 0.01
      %v505 = vmul.f32 %v377, 0.01
      %v506 = vmul.f32 %v378, 0.01
      %v507 = vmul.f32 %v379, 0.01
      %v508 = vsel %vm380, %v316, %v444
      %v509 = vsel %vm381, %v317, %v445
      %v510 = vsel %vm382, %v318, %v446
      %v511 = vsel %vm383, %v319, %v447
      %v512 = vsel %vm384, %v320, %v448
      %v513 = vsel %vm385, %v321, %v449
      %v514 = vsel %vm386, %v322, %v450
      %v515 = vsel %vm387, %v323, %v451
      %v516 = vsel %vm388, %v324, %v452
      %v517 = vsel %vm389, %v325, %v453
      %v518 = vsel %vm390, %v326, %v454
      %v519 = vsel %vm391, %v327, %v455
      %v520 = vsel %vm392, %v328, %v456
      %v521 = vsel %vm393, %v329, %v457
      %v522 = vsel %vm394, %v330, %v458
      %v523 = vsel %vm395, %v331, %v459
      %v524 = vsel %vm396, %v332, %v460
      %v525 = vsel %vm397, %v333, %v461
      %v526 = vsel %vm398, %v334, %v462
      %v527 = vsel %vm399, %v335, %v463
      %v528 = vsel %vm400, %v336, %v464
      %v529 = vsel %vm401, %v337, %v465
      %v530 = vsel %vm402, %v338, %v466
      %v531 = vsel %vm403, %v339, %v467
      %v532 = vsel %vm404, %v340, %v468
      %v533 = vsel %vm405, %v341, %v469
      %v534 = vsel %vm406, %v342, %v470
      %v535 = vsel %vm407, %v343, %v471
      %v536 = vsel %vm408, %v344, %v472
      %v537 = vsel %vm409, %v345, %v473
      %v538 = vsel %vm410, %v346, %v474
      %v539 = vsel %vm411, %v347, %v475
      %v540 = vsel %vm412, %v348, %v476
      %v541 = vsel %vm413, %v349, %v477
      %v542 = vsel %vm414, %v350, %v478
      %v543 = vsel %vm415, %v351, %v479
      %v544 = vsel %vm416, %v352, %v480
      %v545 = vsel %vm417, %v353, %v481
      %v546 = vsel %vm418, %v354, %v482
      %v547 = vsel %vm419, %v355, %v483
      %v548 = vsel %vm420, %v356, %v484
      %v549 = vsel %vm421, %v357, %v485
      %v550 = vsel %vm422, %v358, %v486
      %v551 = vsel %vm423, %v359, %v487
      %v552 = vsel %vm424, %v360, %v488
      %v553 = vsel %vm425, %v361, %v489
      %v554 = vsel %vm426, %v362, %v490
      %v555 = vsel %vm427, %v363, %v491
      %v556 = vsel %vm428, %v364, %v492
      %v557 = vsel %vm429, %v365, %v493
      %v558 = vsel %vm430, %v366, %v494
      %v559 = vsel %vm431, %v367, %v495
      %v560 = vsel %vm432, %v368, %v496
      %v561 = vsel %vm433, %v369, %v497
      %v562 = vsel %vm434, %v370, %v498
      %v563 = vsel %vm435, %v371, %v499
      %v564 = vsel %vm436, %v372, %v500
      %v565 = vsel %vm437, %v373, %v501
      %v566 = vsel %vm438, %v374, %v502
      %v567 = vsel %vm439, %v375, %v503
      %v568 = vsel %vm440, %v376, %v504
      %v569 = vsel %vm441, %v377, %v505
      %v570 = vsel %vm442, %v378, %v506
      %v571 = vsel %vm443, %v379, %v507
      %572 = vst [vmem:[%s172] sm:$0xff] %v508
      %573 = vst [vmem:[%s172 + $0x8] sm:$0xff] %v509
      %574 = vst [vmem:[%s172 + $0x10] sm:$0xff] %v510
      %575 = vst [vmem:[%s172 + $0x18] sm:$0xff] %v511
      %576 = vst [vmem:[%s172 + $0x20] sm:$0xff] %v512
      %577 = vst [vmem:[%s172 + $0x28] sm:$0xff] %v513
      %578 = vst [vmem:[%s172 + $0x30] sm:$0xff] %v514
      %579 = vst [vmem:[%s172 + $0x38] sm:$0xff] %v515
      %580 = vst [vmem:[%s172 + $0x40] sm:$0xff] %v516
      %581 = vst [vmem:[%s172 + $0x48] sm:$0xff] %v517
      %582 = vst [vmem:[%s172 + $0x50] sm:$0xff] %v518
      %583 = vst [vmem:[%s172 + $0x58] sm:$0xff] %v519
      %584 = vst [vmem:[%s172 + $0x60] sm:$0xff] %v520
      %585 = vst [vmem:[%s172 + $0x68] sm:$0xff] %v521
      %586 = vst [vmem:[%s172 + $0x70] sm:$0xff] %v522
      %587 = vst [vmem:[%s172 + $0x78] sm:$0xff] %v523
      %588 = vst [vmem:[%s172 + $0x80] sm:$0xff] %v524
      %589 = vst [vmem:[%s172 + $0x88] sm:$0xff] %v525
      %590 = vst [vmem:[%s172 + $0x90] sm:$0xff] %v526
      %591 = vst [vmem:[%s172 + $0x98] sm:$0xff] %v527
      %592 = vst [vmem:[%s172 + $0xa0] sm:$0xff] %v528
      %593 = vst [vmem:[%s172 + $0xa8] sm:$0xff] %v529
      %594 = vst [vmem:[%s172 + $0xb0] sm:$0xff] %v530
      %595 = vst [vmem:[%s172 + $0xb8] sm:$0xff] %v531
      %596 = vst [vmem:[%s172 + $0xc0] sm:$0xff] %v532
      %597 = vst [vmem:[%s172 + $0xc8] sm:$0xff] %v533
      %598 = vst [vmem:[%s172 + $0xd0] sm:$0xff] %v534
      %599 = vst [vmem:[%s172 + $0xd8] sm:$0xff] %v535
      %600 = vst [vmem:[%s172 + $0xe0] sm:$0xff] %v536
      %601 = vst [vmem:[%s172 + $0xe8] sm:$0xff] %v537
      %602 = vst [vmem:[%s172 + $0xf0] sm:$0xff] %v538
      %603 = vst [vmem:[%s172 + $0xf8] sm:$0xff] %v539
      %604 = vst [vmem:[%s172 + $0x100] sm:$0xff] %v540
      %605 = vst [vmem:[%s172 + $0x108] sm:$0xff] %v541
      %606 = vst [vmem:[%s172 + $0x110] sm:$0xff] %v542
      %607 = vst [vmem:[%s172 + $0x118] sm:$0xff] %v543
      %608 = vst [vmem:[%s172 + $0x120] sm:$0xff] %v544
      %609 = vst [vmem:[%s172 + $0x128] sm:$0xff] %v545
      %610 = vst [vmem:[%s172 + $0x130] sm:$0xff] %v546
      %611 = vst [vmem:[%s172 + $0x138] sm:$0xff] %v547
      %612 = vst [vmem:[%s172 + $0x140] sm:$0xff] %v548
      %613 = vst [vmem:[%s172 + $0x148] sm:$0xff] %v549
      %614 = vst [vmem:[%s172 + $0x150] sm:$0xff] %v550
      %615 = vst [vmem:[%s172 + $0x158] sm:$0xff] %v551
      %616 = vst [vmem:[%s172 + $0x160] sm:$0xff] %v552
      %617 = vst [vmem:[%s172 + $0x168] sm:$0xff] %v553
      %618 = vst [vmem:[%s172 + $0x170] sm:$0xff] %v554
      %619 = vst [vmem:[%s172 + $0x178] sm:$0xff] %v555
      %620 = vst [vmem:[%s172 + $0x180] sm:$0xff] %v556
      %621 = vst [vmem:[%s172 + $0x188] sm:$0xff] %v557
      %622 = vst [vmem:[%s172 + $0x190] sm:$0xff] %v558
      %623 = vst [vmem:[%s172 + $0x198] sm:$0xff] %v559
      %624 = vst [vmem:[%s172 + $0x1a0] sm:$0xff] %v560
      %625 = vst [vmem:[%s172 + $0x1a8] sm:$0xff] %v561
      %626 = vst [vmem:[%s172 + $0x1b0] sm:$0xff] %v562
      %627 = vst [vmem:[%s172 + $0x1b8] sm:$0xff] %v563
      %628 = vst [vmem:[%s172 + $0x1c0] sm:$0xff] %v564
      %629 = vst [vmem:[%s172 + $0x1c8] sm:$0xff] %v565
      %630 = vst [vmem:[%s172 + $0x1d0] sm:$0xff] %v566
      %631 = vst [vmem:[%s172 + $0x1d8] sm:$0xff] %v567
      %632 = vst [vmem:[%s172 + $0x1e0] sm:$0xff] %v568
      %633 = vst [vmem:[%s172 + $0x1e8] sm:$0xff] %v569
      %634 = vst [vmem:[%s172 + $0x1f0] sm:$0xff] %v570
      %635 = vst [vmem:[%s172 + $0x1f8] sm:$0xff] %v571
      %s636 = smul.u32 64, %s14
      %p637 = scmp.lt.s32.totalorder %s636, 255
      %s638 = scalar_select %p637, %s636, 255
      %s639 = smul.addr %s638, 8
      %s640 = scalar_lea.vmem %s3, %s639
      // Predicated region
      $region33: #{discriminator_forward.16} parent=31 // pred_check
        %p641 = pneg %p100
      $region34: #{discriminator_forward.16} parent=31 // pred_check_branch
        %643 = sbr.rel (%p641) target = $region36
      $region35: #{discriminator_forward.16} parent=31 // pred_region
        %s644 = smul.u32 64, %s14
      $region36: #{discriminator_forward.16} parent=31 // pred_fallthru
        _
    $region32: #{discriminator_forward.16} parent=5 // pred_fallthru
      _
    %p645 = scmp.le.s32.totalorder 2, %s9
    // Predicated region
    $region37: #{discriminator_forward.16} parent=5 // pred_check
      %p646 = pneg %p645
    $region38: #{discriminator_forward.16} parent=5 // pred_check_branch
      %648 = sbr.rel (%p646) target = $region40
    $region39: #{discriminator_forward.16} parent=5 // pred_region
      %s649 = ssub.s32 %s9, 2
      // Predicated region
      $region41: #{discriminator_forward.16} parent=39 // pred_check
        %p650 = pneg %p106
      $region42: #{discriminator_forward.16} parent=39 // pred_check_branch
        %652 = sbr.rel (%p650) target = $region44
      $region43: #{discriminator_forward.16} parent=39 // pred_region
        %s653 = smul.u32 64, %s15
        %p654 = scmp.lt.s32.totalorder %s653, 255
        %s655 = scalar_select %p654, %s653, 255
        %s656 = smul.addr %s655, 8
        %s657 = scalar_lea.vmem %s3, %s656
      $region44: #{discriminator_forward.16} parent=39 // pred_fallthru
        _
    $region40: #{discriminator_forward.16} parent=5 // pred_fallthru
      _
  $region6: #{discriminator_forward.16} parent=0 // loop_footer
    %s13 = sadd.s32 1, %s9
  $region7: #{discriminator_forward.16} parent=0 // loop_footer_branch
    %8 = sbr.rel target = $region3
  $region8: #{discriminator_forward.16} parent=0 // loop_exit
    _

// kernel: discriminator_forward.17
$region0: #{discriminator_forward.17}
  #allocation0 [shape = 'u32[]', space=smem, size = 0x4, offset = 0x4, fixed_abs, tag = 'smem constant byte address 0x4 - core index']
  #allocation1 [shape = 'u32[144,128]{1,0:T(1,128)}', space=vmem, size = 0x12000, scoped, tag = 'internal scratch']
  %s0 = inlined_call_operand.vmem [shape: bf16[512,640], index: 0, kind: input, shape index: {}]
  %s1 = inlined_call_operand.vmem [shape: bf16[640,128], index: 1, kind: input, shape index: {}]
  %s2 = inlined_call_operand.vmem [shape: f32[512,128], index: 2, kind: output, shape index: {0}]
  %s3 = inlined_call_operand.vmem [shape: f32[1,8,128], index: 3, kind: output, shape index: {1}]
  %4 = xla_tuple %s2, %s3
  %s5 = sld [smem:[#allocation0]]
  $region26: #{discriminator_forward.17} parent=0
    _
  %s7 = ssub.s32 1, %s5
  %s8 = scalar_select 0, %s7, %s5
  // Predicated region
  $region2: #{discriminator_forward.17} parent=0 // pred_check
    _
  $region3: #{discriminator_forward.17} parent=0 // pred_check_branch
    %10 = sbr.rel (0) target = $region5
  $region4: #{discriminator_forward.17} parent=0 // pred_region
    _
  $region5: #{discriminator_forward.17} parent=0 // pred_fallthru
    _
  // Predicated region
  $region6: #{discriminator_forward.17} parent=0 // pred_check
    _
  $region7: #{discriminator_forward.17} parent=0 // pred_check_branch
    %12 = sbr.rel (0) target = $region9
  $region8: #{discriminator_forward.17} parent=0 // pred_region
    _
  $region9: #{discriminator_forward.17} parent=0 // pred_fallthru
    _
  %v14 = vld [vmem:[%s0] sm:$0xff]
  %v15 = vld [vmem:[%s0 + $0x8] sm:$0xff]
  %v16 = vld [vmem:[%s0 + $0x10] sm:$0xf]
  %v17 = vld [vmem:[%s0 + $0x14] sm:$0xff]
  %v18 = vld [vmem:[%s0 + $0x1c] sm:$0xff]
  %v19 = vld [vmem:[%s0 + $0x24] sm:$0xf]
  %v20 = vld [vmem:[%s0 + $0x28] sm:$0xff]
  %v21 = vld [vmem:[%s0 + $0x30] sm:$0xff]
  %v22 = vld [vmem:[%s0 + $0x38] sm:$0xf]
  %v23 = vld [vmem:[%s0 + $0x3c] sm:$0xff]
  %v24 = vld [vmem:[%s0 + $0x44] sm:$0xff]
  %v25 = vld [vmem:[%s0 + $0x4c] sm:$0xf]
  %v26 = vld [vmem:[%s0 + $0x50] sm:$0xff]
  %v27 = vld [vmem:[%s0 + $0x58] sm:$0xff]
  %v28 = vld [vmem:[%s0 + $0x60] sm:$0xf]
  %v29 = vld [vmem:[%s0 + $0x64] sm:$0xff]
  %v30 = vld [vmem:[%s0 + $0x6c] sm:$0xff]
  %v31 = vld [vmem:[%s0 + $0x74] sm:$0xf]
  %v32 = vld [vmem:[%s0 + $0x78] sm:$0xff]
  %v33 = vld [vmem:[%s0 + $0x80] sm:$0xff]
  %v34 = vld [vmem:[%s0 + $0x88] sm:$0xf]
  %v35 = vld [vmem:[%s0 + $0x8c] sm:$0xff]
  %v36 = vld [vmem:[%s0 + $0x94] sm:$0xff]
  %v37 = vld [vmem:[%s0 + $0x9c] sm:$0xf]
  %v38 = vld [vmem:[%s0 + $0xa0] sm:$0xff]
  %v39 = vld [vmem:[%s0 + $0xa8] sm:$0xff]
  %v40 = vld [vmem:[%s0 + $0xb0] sm:$0xf]
  %v41 = vld [vmem:[%s0 + $0xb4] sm:$0xff]
  %v42 = vld [vmem:[%s0 + $0xbc] sm:$0xff]
  %v43 = vld [vmem:[%s0 + $0xc4] sm:$0xf]
  %v44 = vld [vmem:[%s0 + $0xc8] sm:$0xff]
  %v45 = vld [vmem:[%s0 + $0xd0] sm:$0xff]
  %v46 = vld [vmem:[%s0 + $0xd8] sm:$0xf]
  %v47 = vld [vmem:[%s0 + $0xdc] sm:$0xff]
  %v48 = vld [vmem:[%s0 + $0xe4] sm:$0xff]
  %v49 = vld [vmem:[%s0 + $0xec] sm:$0xf]
  %v50 = vld [vmem:[%s0 + $0xf0] sm:$0xff]
  %v51 = vld [vmem:[%s0 + $0xf8] sm:$0xff]
  %v52 = vld [vmem:[%s0 + $0x100] sm:$0xf]
  %v53 = vld [vmem:[%s0 + $0x104] sm:$0xff]
  %v54 = vld [vmem:[%s0 + $0x10c] sm:$0xff]
  %v55 = vld [vmem:[%s0 + $0x114] sm:$0xf]
  %v56 = vld [vmem:[%s0 + $0x118] sm:$0xff]
  %v57 = vld [vmem:[%s0 + $0x120] sm:$0xff]
  %v58 = vld [vmem:[%s0 + $0x128] sm:$0xf]
  %v59 = vld [vmem:[%s0 + $0x12c] sm:$0xff]
  %v60 = vld [vmem:[%s0 + $0x134] sm:$0xff]
  %v61 = vld [vmem:[%s0 + $0x13c] sm:$0xf]
  %v62 = vld [vmem:[%s0 + $0x140] sm:$0xff]
  %v63 = vld [vmem:[%s0 + $0x148] sm:$0xff]
  %v64 = vld [vmem:[%s0 + $0x150] sm:$0xf]
  %v65 = vld [vmem:[%s0 + $0x154] sm:$0xff]
  %v66 = vld [vmem:[%s0 + $0x15c] sm:$0xff]
  %v67 = vld [vmem:[%s0 + $0x164] sm:$0xf]
  %v68 = vld [vmem:[%s0 + $0x168] sm:$0xff]
  %v69 = vld [vmem:[%s0 + $0x170] sm:$0xff]
  %v70 = vld [vmem:[%s0 + $0x178] sm:$0xf]
  %v71 = vld [vmem:[%s0 + $0x17c] sm:$0xff]
  %v72 = vld [vmem:[%s0 + $0x184] sm:$0xff]
  %v73 = vld [vmem:[%s0 + $0x18c] sm:$0xf]
  %v74 = vld [vmem:[%s0 + $0x190] sm:$0xff]
  %v75 = vld [vmem:[%s0 + $0x198] sm:$0xff]
  %v76 = vld [vmem:[%s0 + $0x1a0] sm:$0xf]
  %v77 = vld [vmem:[%s0 + $0x1a4] sm:$0xff]
  %v78 = vld [vmem:[%s0 + $0x1ac] sm:$0xff]
  %v79 = vld [vmem:[%s0 + $0x1b4] sm:$0xf]
  %v80 = vld [vmem:[%s0 + $0x1b8] sm:$0xff]
  %v81 = vld [vmem:[%s0 + $0x1c0] sm:$0xff]
  %v82 = vld [vmem:[%s0 + $0x1c8] sm:$0xf]
  %v83 = vld [vmem:[%s0 + $0x1cc] sm:$0xff]
  %v84 = vld [vmem:[%s0 + $0x1d4] sm:$0xff]
  %v85 = vld [vmem:[%s0 + $0x1dc] sm:$0xf]
  %v86 = vld [vmem:[%s0 + $0x1e0] sm:$0xff]
  %v87 = vld [vmem:[%s0 + $0x1e8] sm:$0xff]
  %v88 = vld [vmem:[%s0 + $0x1f0] sm:$0xf]
  %v89 = vld [vmem:[%s0 + $0x1f4] sm:$0xff]
  %v90 = vld [vmem:[%s0 + $0x1fc] sm:$0xff]
  %v91 = vld [vmem:[%s0 + $0x204] sm:$0xf]
  %v92 = vld [vmem:[%s0 + $0x208] sm:$0xff]
  %v93 = vld [vmem:[%s0 + $0x210] sm:$0xff]
  %v94 = vld [vmem:[%s0 + $0x218] sm:$0xf]
  %v95 = vld [vmem:[%s0 + $0x21c] sm:$0xff]
  %v96 = vld [vmem:[%s0 + $0x224] sm:$0xff]
  %v97 = vld [vmem:[%s0 + $0x22c] sm:$0xf]
  %v98 = vld [vmem:[%s0 + $0x230] sm:$0xff]
  %v99 = vld [vmem:[%s0 + $0x238] sm:$0xff]
  %v100 = vld [vmem:[%s0 + $0x240] sm:$0xf]
  %v101 = vld [vmem:[%s0 + $0x244] sm:$0xff]
  %v102 = vld [vmem:[%s0 + $0x24c] sm:$0xff]
  %v103 = vld [vmem:[%s0 + $0x254] sm:$0xf]
  %v104 = vld [vmem:[%s0 + $0x258] sm:$0xff]
  %v105 = vld [vmem:[%s0 + $0x260] sm:$0xff]
  %v106 = vld [vmem:[%s0 + $0x268] sm:$0xf]
  %v107 = vld [vmem:[%s0 + $0x26c] sm:$0xff]
  %v108 = vld [vmem:[%s0 + $0x274] sm:$0xff]
  %v109 = vld [vmem:[%s0 + $0x27c] sm:$0xf]
  %v110 = vld [vmem:[%s0 + $0x280] sm:$0xff]
  %v111 = vld [vmem:[%s0 + $0x288] sm:$0xff]
  %v112 = vld [vmem:[%s0 + $0x290] sm:$0xf]
  %v113 = vld [vmem:[%s0 + $0x294] sm:$0xff]
  %v114 = vld [vmem:[%s0 + $0x29c] sm:$0xff]
  %v115 = vld [vmem:[%s0 + $0x2a4] sm:$0xf]
  %v116 = vld [vmem:[%s0 + $0x2a8] sm:$0xff]
  %v117 = vld [vmem:[%s0 + $0x2b0] sm:$0xff]
  %v118 = vld [vmem:[%s0 + $0x2b8] sm:$0xf]
  %v119 = vld [vmem:[%s0 + $0x2bc] sm:$0xff]
  %v120 = vld [vmem:[%s0 + $0x2c4] sm:$0xff]
  %v121 = vld [vmem:[%s0 + $0x2cc] sm:$0xf]
  %v122 = vld [vmem:[%s0 + $0x2d0] sm:$0xff]
  %v123 = vld [vmem:[%s0 + $0x2d8] sm:$0xff]
  %v124 = vld [vmem:[%s0 + $0x2e0] sm:$0xf]
  %v125 = vld [vmem:[%s0 + $0x2e4] sm:$0xff]
  %v126 = vld [vmem:[%s0 + $0x2ec] sm:$0xff]
  %v127 = vld [vmem:[%s0 + $0x2f4] sm:$0xf]
  %v128 = vld [vmem:[%s0 + $0x2f8] sm:$0xff]
  %v129 = vld [vmem:[%s0 + $0x300] sm:$0xff]
  %v130 = vld [vmem:[%s0 + $0x308] sm:$0xf]
  %v131 = vld [vmem:[%s0 + $0x30c] sm:$0xff]
  %v132 = vld [vmem:[%s0 + $0x314] sm:$0xff]
  %v133 = vld [vmem:[%s0 + $0x31c] sm:$0xf]
  %v134 = vld [vmem:[%s0 + $0x320] sm:$0xff]
  %v135 = vld [vmem:[%s0 + $0x328] sm:$0xff]
  %v136 = vld [vmem:[%s0 + $0x330] sm:$0xf]
  %v137 = vld [vmem:[%s0 + $0x334] sm:$0xff]
  %v138 = vld [vmem:[%s0 + $0x33c] sm:$0xff]
  %v139 = vld [vmem:[%s0 + $0x344] sm:$0xf]
  %v140 = vld [vmem:[%s0 + $0x348] sm:$0xff]
  %v141 = vld [vmem:[%s0 + $0x350] sm:$0xff]
  %v142 = vld [vmem:[%s0 + $0x358] sm:$0xf]
  %v143 = vld [vmem:[%s0 + $0x35c] sm:$0xff]
  %v144 = vld [vmem:[%s0 + $0x364] sm:$0xff]
  %v145 = vld [vmem:[%s0 + $0x36c] sm:$0xf]
  %v146 = vld [vmem:[%s0 + $0x370] sm:$0xff]
  %v147 = vld [vmem:[%s0 + $0x378] sm:$0xff]
  %v148 = vld [vmem:[%s0 + $0x380] sm:$0xf]
  %v149 = vld [vmem:[%s0 + $0x384] sm:$0xff]
  %v150 = vld [vmem:[%s0 + $0x38c] sm:$0xff]
  %v151 = vld [vmem:[%s0 + $0x394] sm:$0xf]
  %v152 = vld [vmem:[%s0 + $0x398] sm:$0xff]
  %v153 = vld [vmem:[%s0 + $0x3a0] sm:$0xff]
  %v154 = vld [vmem:[%s0 + $0x3a8] sm:$0xf]
  %v155 = vld [vmem:[%s0 + $0x3ac] sm:$0xff]
  %v156 = vld [vmem:[%s0 + $0x3b4] sm:$0xff]
  %v157 = vld [vmem:[%s0 + $0x3bc] sm:$0xf]
  %v158 = vld [vmem:[%s0 + $0x3c0] sm:$0xff]
  %v159 = vld [vmem:[%s0 + $0x3c8] sm:$0xff]
  %v160 = vld [vmem:[%s0 + $0x3d0] sm:$0xf]
  %v161 = vld [vmem:[%s0 + $0x3d4] sm:$0xff]
  %v162 = vld [vmem:[%s0 + $0x3dc] sm:$0xff]
  %v163 = vld [vmem:[%s0 + $0x3e4] sm:$0xf]
  %v164 = vld [vmem:[%s0 + $0x3e8] sm:$0xff]
  %v165 = vld [vmem:[%s0 + $0x3f0] sm:$0xff]
  %v166 = vld [vmem:[%s0 + $0x3f8] sm:$0xf]
  %v167 = vld [vmem:[%s0 + $0x3fc] sm:$0xff]
  %v168 = vld [vmem:[%s0 + $0x404] sm:$0xff]
  %v169 = vld [vmem:[%s0 + $0x40c] sm:$0xf]
  %v170 = vld [vmem:[%s0 + $0x410] sm:$0xff]
  %v171 = vld [vmem:[%s0 + $0x418] sm:$0xff]
  %v172 = vld [vmem:[%s0 + $0x420] sm:$0xf]
  %v173 = vld [vmem:[%s0 + $0x424] sm:$0xff]
  %v174 = vld [vmem:[%s0 + $0x42c] sm:$0xff]
  %v175 = vld [vmem:[%s0 + $0x434] sm:$0xf]
  %v176 = vld [vmem:[%s0 + $0x438] sm:$0xff]
  %v177 = vld [vmem:[%s0 + $0x440] sm:$0xff]
  %v178 = vld [vmem:[%s0 + $0x448] sm:$0xf]
  %v179 = vld [vmem:[%s0 + $0x44c] sm:$0xff]
  %v180 = vld [vmem:[%s0 + $0x454] sm:$0xff]
  %v181 = vld [vmem:[%s0 + $0x45c] sm:$0xf]
  %v182 = vld [vmem:[%s0 + $0x460] sm:$0xff]
  %v183 = vld [vmem:[%s0 + $0x468] sm:$0xff]
  %v184 = vld [vmem:[%s0 + $0x470] sm:$0xf]
  %v185 = vld [vmem:[%s0 + $0x474] sm:$0xff]
  %v186 = vld [vmem:[%s0 + $0x47c] sm:$0xff]
  %v187 = vld [vmem:[%s0 + $0x484] sm:$0xf]
  %v188 = vld [vmem:[%s0 + $0x488] sm:$0xff]
  %v189 = vld [vmem:[%s0 + $0x490] sm:$0xff]
  %v190 = vld [vmem:[%s0 + $0x498] sm:$0xf]
  %v191 = vld [vmem:[%s0 + $0x49c] sm:$0xff]
  %v192 = vld [vmem:[%s0 + $0x4a4] sm:$0xff]
  %v193 = vld [vmem:[%s0 + $0x4ac] sm:$0xf]
  %v194 = vld [vmem:[%s0 + $0x4b0] sm:$0xff]
  %v195 = vld [vmem:[%s0 + $0x4b8] sm:$0xff]
  %v196 = vld [vmem:[%s0 + $0x4c0] sm:$0xf]
  %v197 = vld [vmem:[%s0 + $0x4c4] sm:$0xff]
  %v198 = vld [vmem:[%s0 + $0x4cc] sm:$0xff]
  %v199 = vld [vmem:[%s0 + $0x4d4] sm:$0xf]
  %v200 = vld [vmem:[%s0 + $0x4d8] sm:$0xff]
  %v201 = vld [vmem:[%s0 + $0x4e0] sm:$0xff]
  %v202 = vld [vmem:[%s0 + $0x4e8] sm:$0xf]
  %v203 = vld [vmem:[%s0 + $0x4ec] sm:$0xff]
  %v204 = vld [vmem:[%s0 + $0x4f4] sm:$0xff]
  %v205 = vld [vmem:[%s0 + $0x4fc] sm:$0xf]
  %v206 = vld [vmem:[%s1] sm:$0xf]
  %v207 = vld [vmem:[%s1 + $0x4] sm:$0xf]
  %v208 = vld [vmem:[%s1 + $0x8] sm:$0xf]
  %v209 = vld [vmem:[%s1 + $0xc] sm:$0xf]
  %v210 = vld [vmem:[%s1 + $0x10] sm:$0xf]
  %v211 = vld [vmem:[%s1 + $0x14] sm:$0xf]
  %v212 = vld [vmem:[%s1 + $0x18] sm:$0xf]
  %v213 = vld [vmem:[%s1 + $0x1c] sm:$0xf]
  %v214 = vld [vmem:[%s1 + $0x20] sm:$0xf]
  %v215 = vld [vmem:[%s1 + $0x24] sm:$0xf]
  %v216 = vld [vmem:[%s1 + $0x28] sm:$0xf]
  %v217 = vld [vmem:[%s1 + $0x2c] sm:$0xf]
  %v218 = vld [vmem:[%s1 + $0x30] sm:$0xf]
  %v219 = vld [vmem:[%s1 + $0x34] sm:$0xf]
  %v220 = vld [vmem:[%s1 + $0x38] sm:$0xf]
  %v221 = vld [vmem:[%s1 + $0x3c] sm:$0xf]
  %v222 = vld [vmem:[%s1 + $0x40] sm:$0xf]
  %v223 = vld [vmem:[%s1 + $0x44] sm:$0xf]
  %v224 = vld [vmem:[%s1 + $0x48] sm:$0xf]
  %v225 = vld [vmem:[%s1 + $0x4c] sm:$0xf]
  %v226 = vld [vmem:[%s1 + $0x50] sm:$0xf]
  %v227 = vld [vmem:[%s1 + $0x54] sm:$0xf]
  %v228 = vld [vmem:[%s1 + $0x58] sm:$0xf]
  %v229 = vld [vmem:[%s1 + $0x5c] sm:$0xf]
  %v230 = vld [vmem:[%s1 + $0x60] sm:$0xf]
  %v231 = vld [vmem:[%s1 + $0x64] sm:$0xf]
  %v232 = vld [vmem:[%s1 + $0x68] sm:$0xf]
  %v233 = vld [vmem:[%s1 + $0x6c] sm:$0xf]
  %v234 = vld [vmem:[%s1 + $0x70] sm:$0xf]
  %v235 = vld [vmem:[%s1 + $0x74] sm:$0xf]
  %v236 = vld [vmem:[%s1 + $0x78] sm:$0xf]
  %v237 = vld [vmem:[%s1 + $0x7c] sm:$0xf]
  %v238 = vld [vmem:[%s1 + $0x80] sm:$0xf]
  %v239 = vld [vmem:[%s1 + $0x84] sm:$0xf]
  %v240 = vld [vmem:[%s1 + $0x88] sm:$0xf]
  %v241 = vld [vmem:[%s1 + $0x8c] sm:$0xf]
  %v242 = vld [vmem:[%s1 + $0x90] sm:$0xf]
  %v243 = vld [vmem:[%s1 + $0x94] sm:$0xf]
  %v244 = vld [vmem:[%s1 + $0x98] sm:$0xf]
  %v245 = vld [vmem:[%s1 + $0x9c] sm:$0xf]
  %v246 = vld [vmem:[%s1 + $0xa0] sm:$0xf]
  %v247 = vld [vmem:[%s1 + $0xa4] sm:$0xf]
  %v248 = vld [vmem:[%s1 + $0xa8] sm:$0xf]
  %v249 = vld [vmem:[%s1 + $0xac] sm:$0xf]
  %v250 = vld [vmem:[%s1 + $0xb0] sm:$0xf]
  %v251 = vld [vmem:[%s1 + $0xb4] sm:$0xf]
  %v252 = vld [vmem:[%s1 + $0xb8] sm:$0xf]
  %v253 = vld [vmem:[%s1 + $0xbc] sm:$0xf]
  %v254 = vld [vmem:[%s1 + $0xc0] sm:$0xf]
  %v255 = vld [vmem:[%s1 + $0xc4] sm:$0xf]
  %v256 = vld [vmem:[%s1 + $0xc8] sm:$0xf]
  %v257 = vld [vmem:[%s1 + $0xcc] sm:$0xf]
  %v258 = vld [vmem:[%s1 + $0xd0] sm:$0xf]
  %v259 = vld [vmem:[%s1 + $0xd4] sm:$0xf]
  %v260 = vld [vmem:[%s1 + $0xd8] sm:$0xf]
  %v261 = vld [vmem:[%s1 + $0xdc] sm:$0xf]
  %v262 = vld [vmem:[%s1 + $0xe0] sm:$0xf]
  %v263 = vld [vmem:[%s1 + $0xe4] sm:$0xf]
  %v264 = vld [vmem:[%s1 + $0xe8] sm:$0xf]
  %v265 = vld [vmem:[%s1 + $0xec] sm:$0xf]
  %v266 = vld [vmem:[%s1 + $0xf0] sm:$0xf]
  %v267 = vld [vmem:[%s1 + $0xf4] sm:$0xf]
  %v268 = vld [vmem:[%s1 + $0xf8] sm:$0xf]
  %v269 = vld [vmem:[%s1 + $0xfc] sm:$0xf]
  %v270 = vld [vmem:[%s1 + $0x100] sm:$0xf]
  %v271 = vld [vmem:[%s1 + $0x104] sm:$0xf]
  %v272 = vld [vmem:[%s1 + $0x108] sm:$0xf]
  %v273 = vld [vmem:[%s1 + $0x10c] sm:$0xf]
  %v274 = vld [vmem:[%s1 + $0x110] sm:$0xf]
  %v275 = vld [vmem:[%s1 + $0x114] sm:$0xf]
  %v276 = vld [vmem:[%s1 + $0x118] sm:$0xf]
  %v277 = vld [vmem:[%s1 + $0x11c] sm:$0xf]
  %v278 = vld [vmem:[%s1 + $0x120] sm:$0xf]
  %v279 = vld [vmem:[%s1 + $0x124] sm:$0xf]
  %v280 = vld [vmem:[%s1 + $0x128] sm:$0xf]
  %v281 = vld [vmem:[%s1 + $0x12c] sm:$0xf]
  %v282 = vld [vmem:[%s1 + $0x130] sm:$0xf]
  %v283 = vld [vmem:[%s1 + $0x134] sm:$0xf]
  %v284 = vld [vmem:[%s1 + $0x138] sm:$0xf]
  %v285 = vld [vmem:[%s1 + $0x13c] sm:$0xf]
  %v478 = vunpack.c.l.b16 %v14
  %v479 = vunpack.c.h.b16 %v14
  %v480 = vunpack.c.l.b16 %v15
  %v481 = vunpack.c.h.b16 %v15
  %v482 = vunpack.c.l.b16 %v16
  %v483 = vunpack.c.l.b16 %v17
  %v484 = vunpack.c.h.b16 %v17
  %v485 = vunpack.c.l.b16 %v18
  %v486 = vunpack.c.h.b16 %v18
  %v487 = vunpack.c.l.b16 %v19
  %v488 = vunpack.c.l.b16 %v20
  %v489 = vunpack.c.h.b16 %v20
  %v490 = vunpack.c.l.b16 %v21
  %v491 = vunpack.c.h.b16 %v21
  %v492 = vunpack.c.l.b16 %v22
  %v493 = vunpack.c.l.b16 %v23
  %v494 = vunpack.c.h.b16 %v23
  %v495 = vunpack.c.l.b16 %v24
  %v496 = vunpack.c.h.b16 %v24
  %v497 = vunpack.c.l.b16 %v25
  %v498 = vunpack.c.l.b16 %v26
  %v499 = vunpack.c.h.b16 %v26
  %v500 = vunpack.c.l.b16 %v27
  %v501 = vunpack.c.h.b16 %v27
  %v502 = vunpack.c.l.b16 %v28
  %v503 = vunpack.c.l.b16 %v29
  %v504 = vunpack.c.h.b16 %v29
  %v505 = vunpack.c.l.b16 %v30
  %v506 = vunpack.c.h.b16 %v30
  %v507 = vunpack.c.l.b16 %v31
  %v508 = vunpack.c.l.b16 %v32
  %v509 = vunpack.c.h.b16 %v32
  %v510 = vunpack.c.l.b16 %v33
  %v511 = vunpack.c.h.b16 %v33
  %v512 = vunpack.c.l.b16 %v34
  %v513 = vunpack.c.l.b16 %v35
  %v514 = vunpack.c.h.b16 %v35
  %v515 = vunpack.c.l.b16 %v36
  %v516 = vunpack.c.h.b16 %v36
  %v517 = vunpack.c.l.b16 %v37
  %v518 = vunpack.c.l.b16 %v38
  %v519 = vunpack.c.h.b16 %v38
  %v520 = vunpack.c.l.b16 %v39
  %v521 = vunpack.c.h.b16 %v39
  %v522 = vunpack.c.l.b16 %v40
  %v523 = vunpack.c.l.b16 %v41
  %v524 = vunpack.c.h.b16 %v41
  %v525 = vunpack.c.l.b16 %v42
  %v526 = vunpack.c.h.b16 %v42
  %v527 = vunpack.c.l.b16 %v43
  %v528 = vunpack.c.l.b16 %v44
  %v529 = vunpack.c.h.b16 %v44
  %v530 = vunpack.c.l.b16 %v45
  %v531 = vunpack.c.h.b16 %v45
  %v532 = vunpack.c.l.b16 %v46
  %v533 = vunpack.c.l.b16 %v47
  %v534 = vunpack.c.h.b16 %v47
  %v535 = vunpack.c.l.b16 %v48
  %v536 = vunpack.c.h.b16 %v48
  %v537 = vunpack.c.l.b16 %v49
  %v538 = vunpack.c.l.b16 %v50
  %v539 = vunpack.c.h.b16 %v50
  %v540 = vunpack.c.l.b16 %v51
  %v541 = vunpack.c.h.b16 %v51
  %v542 = vunpack.c.l.b16 %v52
  %v543 = vunpack.c.l.b16 %v53
  %v544 = vunpack.c.h.b16 %v53
  %v545 = vunpack.c.l.b16 %v54
  %v546 = vunpack.c.h.b16 %v54
  %v547 = vunpack.c.l.b16 %v55
  %v548 = vunpack.c.l.b16 %v56
  %v549 = vunpack.c.h.b16 %v56
  %v550 = vunpack.c.l.b16 %v57
  %v551 = vunpack.c.h.b16 %v57
  %v552 = vunpack.c.l.b16 %v58
  %v553 = vunpack.c.l.b16 %v59
  %v554 = vunpack.c.h.b16 %v59
  %v555 = vunpack.c.l.b16 %v60
  %v556 = vunpack.c.h.b16 %v60
  %v557 = vunpack.c.l.b16 %v61
  %v558 = vunpack.c.l.b16 %v62
  %v559 = vunpack.c.h.b16 %v62
  %v560 = vunpack.c.l.b16 %v63
  %v561 = vunpack.c.h.b16 %v63
  %v562 = vunpack.c.l.b16 %v64
  %v563 = vunpack.c.l.b16 %v65
  %v564 = vunpack.c.h.b16 %v65
  %v565 = vunpack.c.l.b16 %v66
  %v566 = vunpack.c.h.b16 %v66
  %v567 = vunpack.c.l.b16 %v67
  %v568 = vunpack.c.l.b16 %v68
  %v569 = vunpack.c.h.b16 %v68
  %v570 = vunpack.c.l.b16 %v69
  %v571 = vunpack.c.h.b16 %v69
  %v572 = vunpack.c.l.b16 %v70
  %v573 = vunpack.c.l.b16 %v71
  %v574 = vunpack.c.h.b16 %v71
  %v575 = vunpack.c.l.b16 %v72
  %v576 = vunpack.c.h.b16 %v72
  %v577 = vunpack.c.l.b16 %v73
  %v578 = vunpack.c.l.b16 %v74
  %v579 = vunpack.c.h.b16 %v74
  %v580 = vunpack.c.l.b16 %v75
  %v581 = vunpack.c.h.b16 %v75
  %v582 = vunpack.c.l.b16 %v76
  %v583 = vunpack.c.l.b16 %v77
  %v584 = vunpack.c.h.b16 %v77
  %v585 = vunpack.c.l.b16 %v78
  %v586 = vunpack.c.h.b16 %v78
  %v587 = vunpack.c.l.b16 %v79
  %v588 = vunpack.c.l.b16 %v80
  %v589 = vunpack.c.h.b16 %v80
  %v590 = vunpack.c.l.b16 %v81
  %v591 = vunpack.c.h.b16 %v81
  %v592 = vunpack.c.l.b16 %v82
  %v593 = vunpack.c.l.b16 %v83
  %v594 = vunpack.c.h.b16 %v83
  %v595 = vunpack.c.l.b16 %v84
  %v596 = vunpack.c.h.b16 %v84
  %v597 = vunpack.c.l.b16 %v85
  %v598 = vunpack.c.l.b16 %v86
  %v599 = vunpack.c.h.b16 %v86
  %v600 = vunpack.c.l.b16 %v87
  %v601 = vunpack.c.h.b16 %v87
  %v602 = vunpack.c.l.b16 %v88
  %v603 = vunpack.c.l.b16 %v89
  %v604 = vunpack.c.h.b16 %v89
  %v605 = vunpack.c.l.b16 %v90
  %v606 = vunpack.c.h.b16 %v90
  %v607 = vunpack.c.l.b16 %v91
  %v608 = vunpack.c.l.b16 %v92
  %v609 = vunpack.c.h.b16 %v92
  %v610 = vunpack.c.l.b16 %v93
  %v611 = vunpack.c.h.b16 %v93
  %v612 = vunpack.c.l.b16 %v94
  %v613 = vunpack.c.l.b16 %v95
  %v614 = vunpack.c.h.b16 %v95
  %v615 = vunpack.c.l.b16 %v96
  %v616 = vunpack.c.h.b16 %v96
  %v617 = vunpack.c.l.b16 %v97
  %v618 = vunpack.c.l.b16 %v98
  %v619 = vunpack.c.h.b16 %v98
  %v620 = vunpack.c.l.b16 %v99
  %v621 = vunpack.c.h.b16 %v99
  %v622 = vunpack.c.l.b16 %v100
  %v623 = vunpack.c.l.b16 %v101
  %v624 = vunpack.c.h.b16 %v101
  %v625 = vunpack.c.l.b16 %v102
  %v626 = vunpack.c.h.b16 %v102
  %v627 = vunpack.c.l.b16 %v103
  %v628 = vunpack.c.l.b16 %v104
  %v629 = vunpack.c.h.b16 %v104
  %v630 = vunpack.c.l.b16 %v105
  %v631 = vunpack.c.h.b16 %v105
  %v632 = vunpack.c.l.b16 %v106
  %v633 = vunpack.c.l.b16 %v107
  %v634 = vunpack.c.h.b16 %v107
  %v635 = vunpack.c.l.b16 %v108
  %v636 = vunpack.c.h.b16 %v108
  %v637 = vunpack.c.l.b16 %v109
  %v638 = vunpack.c.l.b16 %v110
  %v639 = vunpack.c.h.b16 %v110
  %v640 = vunpack.c.l.b16 %v111
  %v641 = vunpack.c.h.b16 %v111
  %v642 = vunpack.c.l.b16 %v112
  %v643 = vunpack.c.l.b16 %v113
  %v644 = vunpack.c.h.b16 %v113
  %v645 = vunpack.c.l.b16 %v114
  %v646 = vunpack.c.h.b16 %v114
  %v647 = vunpack.c.l.b16 %v115
  %v648 = vunpack.c.l.b16 %v116
  %v649 = vunpack.c.h.b16 %v116
  %v650 = vunpack.c.l.b16 %v117
  %v651 = vunpack.c.h.b16 %v117
  %v652 = vunpack.c.l.b16 %v118
  %v653 = vunpack.c.l.b16 %v119
  %v654 = vunpack.c.h.b16 %v119
  %v655 = vunpack.c.l.b16 %v120
  %v656 = vunpack.c.h.b16 %v120
  %v657 = vunpack.c.l.b16 %v121
  %v658 = vunpack.c.l.b16 %v122
  %v659 = vunpack.c.h.b16 %v122
  %v660 = vunpack.c.l.b16 %v123
  %v661 = vunpack.c.h.b16 %v123
  %v662 = vunpack.c.l.b16 %v124
  %v663 = vunpack.c.l.b16 %v125
  %v664 = vunpack.c.h.b16 %v125
  %v665 = vunpack.c.l.b16 %v126
  %v666 = vunpack.c.h.b16 %v126
  %v667 = vunpack.c.l.b16 %v127
  %v668 = vunpack.c.l.b16 %v128
  %v669 = vunpack.c.h.b16 %v128
  %v670 = vunpack.c.l.b16 %v129
  %v671 = vunpack.c.h.b16 %v129
  %v672 = vunpack.c.l.b16 %v130
  %v673 = vunpack.c.l.b16 %v131
  %v674 = vunpack.c.h.b16 %v131
  %v675 = vunpack.c.l.b16 %v132
  %v676 = vunpack.c.h.b16 %v132
  %v677 = vunpack.c.l.b16 %v133
  %v678 = vunpack.c.l.b16 %v134
  %v679 = vunpack.c.h.b16 %v134
  %v680 = vunpack.c.l.b16 %v135
  %v681 = vunpack.c.h.b16 %v135
  %v682 = vunpack.c.l.b16 %v136
  %v683 = vunpack.c.l.b16 %v137
  %v684 = vunpack.c.h.b16 %v137
  %v685 = vunpack.c.l.b16 %v138
  %v686 = vunpack.c.h.b16 %v138
  %v687 = vunpack.c.l.b16 %v139
  %v688 = vunpack.c.l.b16 %v140
  %v689 = vunpack.c.h.b16 %v140
  %v690 = vunpack.c.l.b16 %v141
  %v691 = vunpack.c.h.b16 %v141
  %v692 = vunpack.c.l.b16 %v142
  %v693 = vunpack.c.l.b16 %v143
  %v694 = vunpack.c.h.b16 %v143
  %v695 = vunpack.c.l.b16 %v144
  %v696 = vunpack.c.h.b16 %v144
  %v697 = vunpack.c.l.b16 %v145
  %v698 = vunpack.c.l.b16 %v146
  %v699 = vunpack.c.h.b16 %v146
  %v700 = vunpack.c.l.b16 %v147
  %v701 = vunpack.c.h.b16 %v147
  %v702 = vunpack.c.l.b16 %v148
  %v703 = vunpack.c.l.b16 %v149
  %v704 = vunpack.c.h.b16 %v149
  %v705 = vunpack.c.l.b16 %v150
  %v706 = vunpack.c.h.b16 %v150
  %v707 = vunpack.c.l.b16 %v151
  %v708 = vunpack.c.l.b16 %v152
  %v709 = vunpack.c.h.b16 %v152
  %v710 = vunpack.c.l.b16 %v153
  %v711 = vunpack.c.h.b16 %v153
  %v712 = vunpack.c.l.b16 %v154
  %v713 = vunpack.c.l.b16 %v155
  %v714 = vunpack.c.h.b16 %v155
  %v715 = vunpack.c.l.b16 %v156
  %v716 = vunpack.c.h.b16 %v156
  %v717 = vunpack.c.l.b16 %v157
  %v718 = vunpack.c.l.b16 %v158
  %v719 = vunpack.c.h.b16 %v158
  %v720 = vunpack.c.l.b16 %v159
  %v721 = vunpack.c.h.b16 %v159
  %v722 = vunpack.c.l.b16 %v160
  %v723 = vunpack.c.l.b16 %v161
  %v724 = vunpack.c.h.b16 %v161
  %v725 = vunpack.c.l.b16 %v162
  %v726 = vunpack.c.h.b16 %v162
  %v727 = vunpack.c.l.b16 %v163
  %v728 = vunpack.c.l.b16 %v164
  %v729 = vunpack.c.h.b16 %v164
  %v730 = vunpack.c.l.b16 %v165
  %v731 = vunpack.c.h.b16 %v165
  %v732 = vunpack.c.l.b16 %v166
  %v733 = vunpack.c.l.b16 %v167
  %v734 = vunpack.c.h.b16 %v167
  %v735 = vunpack.c.l.b16 %v168
  %v736 = vunpack.c.h.b16 %v168
  %v737 = vunpack.c.l.b16 %v169
  %v738 = vunpack.c.l.b16 %v170
  %v739 = vunpack.c.h.b16 %v170
  %v740 = vunpack.c.l.b16 %v171
  %v741 = vunpack.c.h.b16 %v171
  %v742 = vunpack.c.l.b16 %v172
  %v743 = vunpack.c.l.b16 %v173
  %v744 = vunpack.c.h.b16 %v173
  %v745 = vunpack.c.l.b16 %v174
  %v746 = vunpack.c.h.b16 %v174
  %v747 = vunpack.c.l.b16 %v175
  %v748 = vunpack.c.l.b16 %v176
  %v749 = vunpack.c.h.b16 %v176
  %v750 = vunpack.c.l.b16 %v177
  %v751 = vunpack.c.h.b16 %v177
  %v752 = vunpack.c.l.b16 %v178
  %v753 = vunpack.c.l.b16 %v179
  %v754 = vunpack.c.h.b16 %v179
  %v755 = vunpack.c.l.b16 %v180
  %v756 = vunpack.c.h.b16 %v180
  %v757 = vunpack.c.l.b16 %v181
  %v758 = vunpack.c.l.b16 %v182
  %v759 = vunpack.c.h.b16 %v182
  %v760 = vunpack.c.l.b16 %v183
  %v761 = vunpack.c.h.b16 %v183
  %v762 = vunpack.c.l.b16 %v184
  %v763 = vunpack.c.l.b16 %v185
  %v764 = vunpack.c.h.b16 %v185
  %v765 = vunpack.c.l.b16 %v186
  %v766 = vunpack.c.h.b16 %v186
  %v767 = vunpack.c.l.b16 %v187
  %v768 = vunpack.c.l.b16 %v188
  %v769 = vunpack.c.h.b16 %v188
  %v770 = vunpack.c.l.b16 %v189
  %v771 = vunpack.c.h.b16 %v189
  %v772 = vunpack.c.l.b16 %v190
  %v773 = vunpack.c.l.b16 %v191
  %v774 = vunpack.c.h.b16 %v191
  %v775 = vunpack.c.l.b16 %v192
  %v776 = vunpack.c.h.b16 %v192
  %v777 = vunpack.c.l.b16 %v193
  %v778 = vunpack.c.l.b16 %v194
  %v779 = vunpack.c.h.b16 %v194
  %v780 = vunpack.c.l.b16 %v195
  %v781 = vunpack.c.h.b16 %v195
  %v782 = vunpack.c.l.b16 %v196
  %v783 = vunpack.c.l.b16 %v197
  %v784 = vunpack.c.h.b16 %v197
  %v785 = vunpack.c.l.b16 %v198
  %v786 = vunpack.c.h.b16 %v198
  %v787 = vunpack.c.l.b16 %v199
  %v788 = vunpack.c.l.b16 %v200
  %v789 = vunpack.c.h.b16 %v200
  %v790 = vunpack.c.l.b16 %v201
  %v791 = vunpack.c.h.b16 %v201
  %v792 = vunpack.c.l.b16 %v202
  %v793 = vunpack.c.l.b16 %v203
  %v794 = vunpack.c.h.b16 %v203
  %v795 = vunpack.c.l.b16 %v204
  %v796 = vunpack.c.h.b16 %v204
  %v797 = vunpack.c.l.b16 %v205
  %v798 = vpack.c.b16 %v483, %v478
  %v799 = vpack.c.b16 %v484, %v479
  %v800 = vpack.c.b16 %v485, %v480
  %v801 = vpack.c.b16 %v486, %v481
  %v802 = vpack.c.b16 %v487, %v482
  %v803 = vpack.c.b16 %v493, %v488
  %v804 = vpack.c.b16 %v494, %v489
  %v805 = vpack.c.b16 %v495, %v490
  %v806 = vpack.c.b16 %v496, %v491
  %v807 = vpack.c.b16 %v497, %v492
  %v808 = vpack.c.b16 %v503, %v498
  %v809 = vpack.c.b16 %v504, %v499
  %v810 = vpack.c.b16 %v505, %v500
  %v811 = vpack.c.b16 %v506, %v501
  %v812 = vpack.c.b16 %v507, %v502
  %v813 = vpack.c.b16 %v513, %v508
  %v814 = vpack.c.b16 %v514, %v509
  %v815 = vpack.c.b16 %v515, %v510
  %v816 = vpack.c.b16 %v516, %v511
  %v817 = vpack.c.b16 %v517, %v512
  %v818 = vpack.c.b16 %v523, %v518
  %v819 = vpack.c.b16 %v524, %v519
  %v820 = vpack.c.b16 %v525, %v520
  %v821 = vpack.c.b16 %v526, %v521
  %v822 = vpack.c.b16 %v527, %v522
  %v823 = vpack.c.b16 %v533, %v528
  %v824 = vpack.c.b16 %v534, %v529
  %v825 = vpack.c.b16 %v535, %v530
  %v826 = vpack.c.b16 %v536, %v531
  %v827 = vpack.c.b16 %v537, %v532
  %v828 = vpack.c.b16 %v543, %v538
  %v829 = vpack.c.b16 %v544, %v539
  %v830 = vpack.c.b16 %v545, %v540
  %v831 = vpack.c.b16 %v546, %v541
  %v832 = vpack.c.b16 %v547, %v542
  %v833 = vpack.c.b16 %v553, %v548
  %v834 = vpack.c.b16 %v554, %v549
  %v835 = vpack.c.b16 %v555, %v550
  %v836 = vpack.c.b16 %v556, %v551
  %v837 = vpack.c.b16 %v557, %v552
  %v838 = vpack.c.b16 %v563, %v558
  %v839 = vpack.c.b16 %v564, %v559
  %v840 = vpack.c.b16 %v565, %v560
  %v841 = vpack.c.b16 %v566, %v561
  %v842 = vpack.c.b16 %v567, %v562
  %v843 = vpack.c.b16 %v573, %v568
  %v844 = vpack.c.b16 %v574, %v569
  %v845 = vpack.c.b16 %v575, %v570
  %v846 = vpack.c.b16 %v576, %v571
  %v847 = vpack.c.b16 %v577, %v572
  %v848 = vpack.c.b16 %v583, %v578
  %v849 = vpack.c.b16 %v584, %v579
  %v850 = vpack.c.b16 %v585, %v580
  %v851 = vpack.c.b16 %v586, %v581
  %v852 = vpack.c.b16 %v587, %v582
  %v853 = vpack.c.b16 %v593, %v588
  %v854 = vpack.c.b16 %v594, %v589
  %v855 = vpack.c.b16 %v595, %v590
  %v856 = vpack.c.b16 %v596, %v591
  %v857 = vpack.c.b16 %v597, %v592
  %v858 = vpack.c.b16 %v603, %v598
  %v859 = vpack.c.b16 %v604, %v599
  %v860 = vpack.c.b16 %v605, %v600
  %v861 = vpack.c.b16 %v606, %v601
  %v862 = vpack.c.b16 %v607, %v602
  %v863 = vpack.c.b16 %v613, %v608
  %v864 = vpack.c.b16 %v614, %v609
  %v865 = vpack.c.b16 %v615, %v610
  %v866 = vpack.c.b16 %v616, %v611
  %v867 = vpack.c.b16 %v617, %v612
  %v868 = vpack.c.b16 %v623, %v618
  %v869 = vpack.c.b16 %v624, %v619
  %v870 = vpack.c.b16 %v625, %v620
  %v871 = vpack.c.b16 %v626, %v621
  %v872 = vpack.c.b16 %v627, %v622
  %v873 = vpack.c.b16 %v633, %v628
  %v874 = vpack.c.b16 %v634, %v629
  %v875 = vpack.c.b16 %v635, %v630
  %v876 = vpack.c.b16 %v636, %v631
  %v877 = vpack.c.b16 %v637, %v632
  %v878 = vpack.c.b16 %v643, %v638
  %v879 = vpack.c.b16 %v644, %v639
  %v880 = vpack.c.b16 %v645, %v640
  %v881 = vpack.c.b16 %v646, %v641
  %v882 = vpack.c.b16 %v647, %v642
  %v883 = vpack.c.b16 %v653, %v648
  %v884 = vpack.c.b16 %v654, %v649
  %v885 = vpack.c.b16 %v655, %v650
  %v886 = vpack.c.b16 %v656, %v651
  %v887 = vpack.c.b16 %v657, %v652
  %v888 = vpack.c.b16 %v663, %v658
  %v889 = vpack.c.b16 %v664, %v659
  %v890 = vpack.c.b16 %v665, %v660
  %v891 = vpack.c.b16 %v666, %v661
  %v892 = vpack.c.b16 %v667, %v662
  %v893 = vpack.c.b16 %v673, %v668
  %v894 = vpack.c.b16 %v674, %v669
  %v895 = vpack.c.b16 %v675, %v670
  %v896 = vpack.c.b16 %v676, %v671
  %v897 = vpack.c.b16 %v677, %v672
  %v898 = vpack.c.b16 %v683, %v678
  %v899 = vpack.c.b16 %v684, %v679
  %v900 = vpack.c.b16 %v685, %v680
  %v901 = vpack.c.b16 %v686, %v681
  %v902 = vpack.c.b16 %v687, %v682
  %v903 = vpack.c.b16 %v693, %v688
  %v904 = vpack.c.b16 %v694, %v689
  %v905 = vpack.c.b16 %v695, %v690
  %v906 = vpack.c.b16 %v696, %v691
  %v907 = vpack.c.b16 %v697, %v692
  %v908 = vpack.c.b16 %v703, %v698
  %v909 = vpack.c.b16 %v704, %v699
  %v910 = vpack.c.b16 %v705, %v700
  %v911 = vpack.c.b16 %v706, %v701
  %v912 = vpack.c.b16 %v707, %v702
  %v913 = vpack.c.b16 %v713, %v708
  %v914 = vpack.c.b16 %v714, %v709
  %v915 = vpack.c.b16 %v715, %v710
  %v916 = vpack.c.b16 %v716, %v711
  %v917 = vpack.c.b16 %v717, %v712
  %v918 = vpack.c.b16 %v723, %v718
  %v919 = vpack.c.b16 %v724, %v719
  %v920 = vpack.c.b16 %v725, %v720
  %v921 = vpack.c.b16 %v726, %v721
  %v922 = vpack.c.b16 %v727, %v722
  %v923 = vpack.c.b16 %v733, %v728
  %v924 = vpack.c.b16 %v734, %v729
  %v925 = vpack.c.b16 %v735, %v730
  %v926 = vpack.c.b16 %v736, %v731
  %v927 = vpack.c.b16 %v737, %v732
  %v928 = vpack.c.b16 %v743, %v738
  %v929 = vpack.c.b16 %v744, %v739
  %v930 = vpack.c.b16 %v745, %v740
  %v931 = vpack.c.b16 %v746, %v741
  %v932 = vpack.c.b16 %v747, %v742
  %v933 = vpack.c.b16 %v753, %v748
  %v934 = vpack.c.b16 %v754, %v749
  %v935 = vpack.c.b16 %v755, %v750
  %v936 = vpack.c.b16 %v756, %v751
  %v937 = vpack.c.b16 %v757, %v752
  %v938 = vpack.c.b16 %v763, %v758
  %v939 = vpack.c.b16 %v764, %v759
  %v940 = vpack.c.b16 %v765, %v760
  %v941 = vpack.c.b16 %v766, %v761
  %v942 = vpack.c.b16 %v767, %v762
  %v943 = vpack.c.b16 %v773, %v768
  %v944 = vpack.c.b16 %v774, %v769
  %v945 = vpack.c.b16 %v775, %v770
  %v946 = vpack.c.b16 %v776, %v771
  %v947 = vpack.c.b16 %v777, %v772
  %v948 = vpack.c.b16 %v783, %v778
  %v949 = vpack.c.b16 %v784, %v779
  %v950 = vpack.c.b16 %v785, %v780
  %v951 = vpack.c.b16 %v786, %v781
  %v952 = vpack.c.b16 %v787, %v782
  %v953 = vpack.c.b16 %v793, %v788
  %v954 = vpack.c.b16 %v794, %v789
  %v955 = vpack.c.b16 %v795, %v790
  %v956 = vpack.c.b16 %v796, %v791
  %v957 = vpack.c.b16 %v797, %v792
  %v1198 = vunpack.c.l.b16 %v206
  %v1199 = vunpack.c.l.b16 %v207
  %v1200 = vunpack.c.l.b16 %v208
  %v1201 = vunpack.c.l.b16 %v209
  %v1202 = vunpack.c.l.b16 %v210
  %v1203 = vunpack.c.l.b16 %v211
  %v1204 = vunpack.c.l.b16 %v212
  %v1205 = vunpack.c.l.b16 %v213
  %v1206 = vunpack.c.l.b16 %v214
  %v1207 = vunpack.c.l.b16 %v215
  %v1208 = vunpack.c.l.b16 %v216
  %v1209 = vunpack.c.l.b16 %v217
  %v1210 = vunpack.c.l.b16 %v218
  %v1211 = vunpack.c.l.b16 %v219
  %v1212 = vunpack.c.l.b16 %v220
  %v1213 = vunpack.c.l.b16 %v221
  %v1214 = vunpack.c.l.b16 %v222
  %v1215 = vunpack.c.l.b16 %v223
  %v1216 = vunpack.c.l.b16 %v224
  %v1217 = vunpack.c.l.b16 %v225
  %v1218 = vunpack.c.l.b16 %v226
  %v1219 = vunpack.c.l.b16 %v227
  %v1220 = vunpack.c.l.b16 %v228
  %v1221 = vunpack.c.l.b16 %v229
  %v1222 = vunpack.c.l.b16 %v230
  %v1223 = vunpack.c.l.b16 %v231
  %v1224 = vunpack.c.l.b16 %v232
  %v1225 = vunpack.c.l.b16 %v233
  %v1226 = vunpack.c.l.b16 %v234
  %v1227 = vunpack.c.l.b16 %v235
  %v1228 = vunpack.c.l.b16 %v236
  %v1229 = vunpack.c.l.b16 %v237
  %v1230 = vunpack.c.l.b16 %v238
  %v1231 = vunpack.c.l.b16 %v239
  %v1232 = vunpack.c.l.b16 %v240
  %v1233 = vunpack.c.l.b16 %v241
  %v1234 = vunpack.c.l.b16 %v242
  %v1235 = vunpack.c.l.b16 %v243
  %v1236 = vunpack.c.l.b16 %v244
  %v1237 = vunpack.c.l.b16 %v245
  %v1238 = vunpack.c.l.b16 %v246
  %v1239 = vunpack.c.l.b16 %v247
  %v1240 = vunpack.c.l.b16 %v248
  %v1241 = vunpack.c.l.b16 %v249
  %v1242 = vunpack.c.l.b16 %v250
  %v1243 = vunpack.c.l.b16 %v251
  %v1244 = vunpack.c.l.b16 %v252
  %v1245 = vunpack.c.l.b16 %v253
  %v1246 = vunpack.c.l.b16 %v254
  %v1247 = vunpack.c.l.b16 %v255
  %v1248 = vunpack.c.l.b16 %v256
  %v1249 = vunpack.c.l.b16 %v257
  %v1250 = vunpack.c.l.b16 %v258
  %v1251 = vunpack.c.l.b16 %v259
  %v1252 = vunpack.c.l.b16 %v260
  %v1253 = vunpack.c.l.b16 %v261
  %v1254 = vunpack.c.l.b16 %v262
  %v1255 = vunpack.c.l.b16 %v263
  %v1256 = vunpack.c.l.b16 %v264
  %v1257 = vunpack.c.l.b16 %v265
  %v1258 = vunpack.c.l.b16 %v266
  %v1259 = vunpack.c.l.b16 %v267
  %v1260 = vunpack.c.l.b16 %v268
  %v1261 = vunpack.c.l.b16 %v269
  %v1262 = vunpack.c.l.b16 %v270
  %v1263 = vunpack.c.l.b16 %v271
  %v1264 = vunpack.c.l.b16 %v272
  %v1265 = vunpack.c.l.b16 %v273
  %v1266 = vunpack.c.l.b16 %v274
  %v1267 = vunpack.c.l.b16 %v275
  %v1268 = vunpack.c.l.b16 %v276
  %v1269 = vunpack.c.l.b16 %v277
  %v1270 = vunpack.c.l.b16 %v278
  %v1271 = vunpack.c.l.b16 %v279
  %v1272 = vunpack.c.l.b16 %v280
  %v1273 = vunpack.c.l.b16 %v281
  %v1274 = vunpack.c.l.b16 %v282
  %v1275 = vunpack.c.l.b16 %v283
  %v1276 = vunpack.c.l.b16 %v284
  %v1277 = vunpack.c.l.b16 %v285
  %v1278 = vpack.c.b16 %v1199, %v1198
  %v1279 = vpack.c.b16 %v1201, %v1200
  %v1280 = vpack.c.b16 %v1203, %v1202
  %v1281 = vpack.c.b16 %v1205, %v1204
  %v1282 = vpack.c.b16 %v1207, %v1206
  %v1283 = vpack.c.b16 %v1209, %v1208
  %v1284 = vpack.c.b16 %v1211, %v1210
  %v1285 = vpack.c.b16 %v1213, %v1212
  %v1286 = vpack.c.b16 %v1215, %v1214
  %v1287 = vpack.c.b16 %v1217, %v1216
  %v1288 = vpack.c.b16 %v1219, %v1218
  %v1289 = vpack.c.b16 %v1221, %v1220
  %v1290 = vpack.c.b16 %v1223, %v1222
  %v1291 = vpack.c.b16 %v1225, %v1224
  %v1292 = vpack.c.b16 %v1227, %v1226
  %v1293 = vpack.c.b16 %v1229, %v1228
  %v1294 = vpack.c.b16 %v1231, %v1230
  %v1295 = vpack.c.b16 %v1233, %v1232
  %v1296 = vpack.c.b16 %v1235, %v1234
  %v1297 = vpack.c.b16 %v1237, %v1236
  %v1298 = vpack.c.b16 %v1239, %v1238
  %v1299 = vpack.c.b16 %v1241, %v1240
  %v1300 = vpack.c.b16 %v1243, %v1242
  %v1301 = vpack.c.b16 %v1245, %v1244
  %v1302 = vpack.c.b16 %v1247, %v1246
  %v1303 = vpack.c.b16 %v1249, %v1248
  %v1304 = vpack.c.b16 %v1251, %v1250
  %v1305 = vpack.c.b16 %v1253, %v1252
  %v1306 = vpack.c.b16 %v1255, %v1254
  %v1307 = vpack.c.b16 %v1257, %v1256
  %v1308 = vpack.c.b16 %v1259, %v1258
  %v1309 = vpack.c.b16 %v1261, %v1260
  %v1310 = vpack.c.b16 %v1263, %v1262
  %v1311 = vpack.c.b16 %v1265, %v1264
  %v1312 = vpack.c.b16 %v1267, %v1266
  %v1313 = vpack.c.b16 %v1269, %v1268
  %v1314 = vpack.c.b16 %v1271, %v1270
  %v1315 = vpack.c.b16 %v1273, %v1272
  %v1316 = vpack.c.b16 %v1275, %v1274
  %v1317 = vpack.c.b16 %v1277, %v1276
  %1358 = vmatprep.subr.bf16.mxu0 0
  %1359 = vmatpush1.bf16.msra.mxu0 %v1285
  %1360 = vmatprep.subr.bf16.mxu0 0
  %1361 = vmatpush1.bf16.msra.mxu0 %v1284
  %1362 = vmatprep.subr.bf16.mxu0 0
  %1363 = vmatpush1.bf16.msra.mxu0 %v1283
  %1364 = vmatprep.subr.bf16.mxu0 0
  %1365 = vmatpush1.bf16.msra.mxu0 %v1282
  %1366 = vmatprep.subr.bf16.mxu0 0
  %1367 = vmatpush1.bf16.msra.mxu0 %v1281
  %1368 = vmatprep.subr.bf16.mxu0 0
  %1369 = vmatpush1.bf16.msra.mxu0 %v1280
  %1370 = vmatprep.subr.bf16.mxu0 0
  %1371 = vmatpush1.bf16.msra.mxu0 %v1279
  %1372 = vmatprep.subr.bf16.mxu0 0
  %1373 = vmatpush1.bf16.msra.mxu0 %v1278
  %1374 = vmatprep.subr.bf16.mxu0 0
  %1375 = vmatpush2.bf16.msra.mxu0 %v1293
  %1376 = vmatprep.subr.bf16.mxu0 0
  %1377 = vmatpush2.bf16.msra.mxu0 %v1292
  %1378 = vmatprep.subr.bf16.mxu0 0
  %1379 = vmatpush2.bf16.msra.mxu0 %v1291
  %1380 = vmatprep.subr.bf16.mxu0 0
  %1381 = vmatpush2.bf16.msra.mxu0 %v1290
  %1382 = vmatprep.subr.bf16.mxu0 0
  %1383 = vmatpush2.bf16.msra.mxu0 %v1289
  %1384 = vmatprep.subr.bf16.mxu0 0
  %1385 = vmatpush2.bf16.msra.mxu0 %v1288
  %1386 = vmatprep.subr.bf16.mxu0 0
  %1387 = vmatpush2.bf16.msra.mxu0 %v1287
  %1388 = vmatprep.subr.bf16.mxu0 0
  %1389 = vmatpush2.bf16.msra.mxu0 %v1286
  %1390 = vmatprep.mubr.bf16.mxu0 %v799
  %1391 = vmatmul.mubr.bf16.gmra.mxu0 %v798
  %v1392 = vpop.f32.mrf.mxu0
  %v1393 = vadd.f32 0.0, %v1392
  %v1394 = vpop.f32.mrf.mxu0
  %v1395 = vpop.f32.mrf.mxu0
  %v1396 = vadd.f32 0.0, %v1395
  %v1397 = vpop.f32.mrf.mxu0
  %1398 = vmatprep.mubr.bf16.mxu0 %v804
  %1399 = vmatmul.mubr.bf16.gmra.mxu0 %v803
  %v1400 = vpop.f32.mrf.mxu0
  %v1401 = vadd.f32 0.0, %v1400
  %v1402 = vpop.f32.mrf.mxu0
  %v1403 = vpop.f32.mrf.mxu0
  %v1404 = vadd.f32 0.0, %v1403
  %v1405 = vpop.f32.mrf.mxu0
  %1406 = vmatprep.mubr.bf16.mxu0 %v809
  %1407 = vmatmul.mubr.bf16.gmra.mxu0 %v808
  %v1408 = vpop.f32.mrf.mxu0
  %v1409 = vadd.f32 0.0, %v1408
  %v1410 = vpop.f32.mrf.mxu0
  %v1411 = vpop.f32.mrf.mxu0
  %v1412 = vadd.f32 0.0, %v1411
  %v1413 = vpop.f32.mrf.mxu0
  %1414 = vmatprep.mubr.bf16.mxu0 %v814
  %1415 = vmatmul.mubr.bf16.gmra.mxu0 %v813
  %v1416 = vpop.f32.mrf.mxu0
  %v1417 = vadd.f32 0.0, %v1416
  %v1418 = vpop.f32.mrf.mxu0
  %v1419 = vpop.f32.mrf.mxu0
  %v1420 = vadd.f32 0.0, %v1419
  %v1421 = vpop.f32.mrf.mxu0
  %1422 = vmatprep.mubr.bf16.mxu0 %v819
  %1423 = vmatmul.mubr.bf16.gmra.mxu0 %v818
  %v1424 = vpop.f32.mrf.mxu0
  %v1425 = vadd.f32 0.0, %v1424
  %v1426 = vpop.f32.mrf.mxu0
  %v1427 = vpop.f32.mrf.mxu0
  %v1428 = vadd.f32 0.0, %v1427
  %v1429 = vpop.f32.mrf.mxu0
  %1430 = vmatprep.mubr.bf16.mxu0 %v824
  %1431 = vmatmul.mubr.bf16.gmra.mxu0 %v823
  %v1432 = vpop.f32.mrf.mxu0
  %v1433 = vadd.f32 0.0, %v1432
  %v1434 = vpop.f32.mrf.mxu0
  %v1435 = vpop.f32.mrf.mxu0
  %v1436 = vadd.f32 0.0, %v1435
  %v1437 = vpop.f32.mrf.mxu0
  %1438 = vmatprep.mubr.bf16.mxu0 %v829
  %1439 = vmatmul.mubr.bf16.gmra.mxu0 %v828
  %v1440 = vpop.f32.mrf.mxu0
  %v1441 = vadd.f32 0.0, %v1440
  %v1442 = vpop.f32.mrf.mxu0
  %v1443 = vpop.f32.mrf.mxu0
  %v1444 = vadd.f32 0.0, %v1443
  %v1445 = vpop.f32.mrf.mxu0
  %1446 = vmatprep.mubr.bf16.mxu0 %v834
  %1447 = vmatmul.mubr.bf16.gmra.mxu0 %v833
  %v1448 = vpop.f32.mrf.mxu0
  %v1449 = vadd.f32 0.0, %v1448
  %v1450 = vpop.f32.mrf.mxu0
  %v1451 = vpop.f32.mrf.mxu0
  %v1452 = vadd.f32 0.0, %v1451
  %v1453 = vpop.f32.mrf.mxu0
  %1454 = vmatprep.mubr.bf16.mxu0 %v839
  %1455 = vmatmul.mubr.bf16.gmra.mxu0 %v838
  %v1456 = vpop.f32.mrf.mxu0
  %v1457 = vadd.f32 0.0, %v1456
  %v1458 = vpop.f32.mrf.mxu0
  %v1459 = vpop.f32.mrf.mxu0
  %v1460 = vadd.f32 0.0, %v1459
  %v1461 = vpop.f32.mrf.mxu0
  %1462 = vmatprep.mubr.bf16.mxu0 %v844
  %1463 = vmatmul.mubr.bf16.gmra.mxu0 %v843
  %v1464 = vpop.f32.mrf.mxu0
  %v1465 = vadd.f32 0.0, %v1464
  %v1466 = vpop.f32.mrf.mxu0
  %v1467 = vpop.f32.mrf.mxu0
  %v1468 = vadd.f32 0.0, %v1467
  %v1469 = vpop.f32.mrf.mxu0
  %1470 = vmatprep.mubr.bf16.mxu0 %v849
  %1471 = vmatmul.mubr.bf16.gmra.mxu0 %v848
  %v1472 = vpop.f32.mrf.mxu0
  %v1473 = vadd.f32 0.0, %v1472
  %v1474 = vpop.f32.mrf.mxu0
  %v1475 = vpop.f32.mrf.mxu0
  %v1476 = vadd.f32 0.0, %v1475
  %v1477 = vpop.f32.mrf.mxu0
  %1478 = vmatprep.mubr.bf16.mxu0 %v854
  %1479 = vmatmul.mubr.bf16.gmra.mxu0 %v853
  %v1480 = vpop.f32.mrf.mxu0
  %v1481 = vadd.f32 0.0, %v1480
  %v1482 = vpop.f32.mrf.mxu0
  %v1483 = vpop.f32.mrf.mxu0
  %v1484 = vadd.f32 0.0, %v1483
  %v1485 = vpop.f32.mrf.mxu0
  %1486 = vmatprep.mubr.bf16.mxu0 %v859
  %1487 = vmatmul.mubr.bf16.gmra.mxu0 %v858
  %v1488 = vpop.f32.mrf.mxu0
  %v1489 = vadd.f32 0.0, %v1488
  %v1490 = vpop.f32.mrf.mxu0
  %v1491 = vpop.f32.mrf.mxu0
  %v1492 = vadd.f32 0.0, %v1491
  %v1493 = vpop.f32.mrf.mxu0
  %1494 = vmatprep.mubr.bf16.mxu0 %v864
  %1495 = vmatmul.mubr.bf16.gmra.mxu0 %v863
  %v1496 = vpop.f32.mrf.mxu0
  %v1497 = vadd.f32 0.0, %v1496
  %v1498 = vpop.f32.mrf.mxu0
  %v1499 = vpop.f32.mrf.mxu0
  %v1500 = vadd.f32 0.0, %v1499
  %v1501 = vpop.f32.mrf.mxu0
  %1502 = vmatprep.mubr.bf16.mxu0 %v869
  %1503 = vmatmul.mubr.bf16.gmra.mxu0 %v868
  %v1504 = vpop.f32.mrf.mxu0
  %v1505 = vadd.f32 0.0, %v1504
  %v1506 = vpop.f32.mrf.mxu0
  %v1507 = vpop.f32.mrf.mxu0
  %v1508 = vadd.f32 0.0, %v1507
  %v1509 = vpop.f32.mrf.mxu0
  %1510 = vmatprep.mubr.bf16.mxu0 %v874
  %1511 = vmatmul.mubr.bf16.gmra.mxu0 %v873
  %v1512 = vpop.f32.mrf.mxu0
  %v1513 = vadd.f32 0.0, %v1512
  %v1514 = vpop.f32.mrf.mxu0
  %v1515 = vpop.f32.mrf.mxu0
  %v1516 = vadd.f32 0.0, %v1515
  %v1517 = vpop.f32.mrf.mxu0
  %1518 = vmatprep.mubr.bf16.mxu0 %v879
  %1519 = vmatmul.mubr.bf16.gmra.mxu0 %v878
  %v1520 = vpop.f32.mrf.mxu0
  %v1521 = vadd.f32 0.0, %v1520
  %v1522 = vpop.f32.mrf.mxu0
  %v1523 = vpop.f32.mrf.mxu0
  %v1524 = vadd.f32 0.0, %v1523
  %v1525 = vpop.f32.mrf.mxu0
  %1526 = vmatprep.mubr.bf16.mxu0 %v884
  %1527 = vmatmul.mubr.bf16.gmra.mxu0 %v883
  %v1528 = vpop.f32.mrf.mxu0
  %v1529 = vadd.f32 0.0, %v1528
  %v1530 = vpop.f32.mrf.mxu0
  %v1531 = vpop.f32.mrf.mxu0
  %v1532 = vadd.f32 0.0, %v1531
  %v1533 = vpop.f32.mrf.mxu0
  %1534 = vmatprep.mubr.bf16.mxu0 %v889
  %1535 = vmatmul.mubr.bf16.gmra.mxu0 %v888
  %v1536 = vpop.f32.mrf.mxu0
  %v1537 = vadd.f32 0.0, %v1536
  %v1538 = vpop.f32.mrf.mxu0
  %v1539 = vpop.f32.mrf.mxu0
  %v1540 = vadd.f32 0.0, %v1539
  %v1541 = vpop.f32.mrf.mxu0
  %1542 = vmatprep.mubr.bf16.mxu0 %v894
  %1543 = vmatmul.mubr.bf16.gmra.mxu0 %v893
  %v1544 = vpop.f32.mrf.mxu0
  %v1545 = vadd.f32 0.0, %v1544
  %v1546 = vpop.f32.mrf.mxu0
  %v1547 = vpop.f32.mrf.mxu0
  %v1548 = vadd.f32 0.0, %v1547
  %v1549 = vpop.f32.mrf.mxu0
  %1550 = vmatprep.mubr.bf16.mxu0 %v899
  %1551 = vmatmul.mubr.bf16.gmra.mxu0 %v898
  %v1552 = vpop.f32.mrf.mxu0
  %v1553 = vadd.f32 0.0, %v1552
  %v1554 = vpop.f32.mrf.mxu0
  %v1555 = vpop.f32.mrf.mxu0
  %v1556 = vadd.f32 0.0, %v1555
  %v1557 = vpop.f32.mrf.mxu0
  %1558 = vmatprep.mubr.bf16.mxu0 %v904
  %1559 = vmatmul.mubr.bf16.gmra.mxu0 %v903
  %v1560 = vpop.f32.mrf.mxu0
  %v1561 = vadd.f32 0.0, %v1560
  %v1562 = vpop.f32.mrf.mxu0
  %v1563 = vpop.f32.mrf.mxu0
  %v1564 = vadd.f32 0.0, %v1563
  %v1565 = vpop.f32.mrf.mxu0
  %1566 = vmatprep.mubr.bf16.mxu0 %v909
  %1567 = vmatmul.mubr.bf16.gmra.mxu0 %v908
  %v1568 = vpop.f32.mrf.mxu0
  %v1569 = vadd.f32 0.0, %v1568
  %v1570 = vpop.f32.mrf.mxu0
  %v1571 = vpop.f32.mrf.mxu0
  %v1572 = vadd.f32 0.0, %v1571
  %v1573 = vpop.f32.mrf.mxu0
  %1574 = vmatprep.mubr.bf16.mxu0 %v914
  %1575 = vmatmul.mubr.bf16.gmra.mxu0 %v913
  %v1576 = vpop.f32.mrf.mxu0
  %v1577 = vadd.f32 0.0, %v1576
  %v1578 = vpop.f32.mrf.mxu0
  %v1579 = vpop.f32.mrf.mxu0
  %v1580 = vadd.f32 0.0, %v1579
  %v1581 = vpop.f32.mrf.mxu0
  %1582 = vmatprep.mubr.bf16.mxu0 %v919
  %1583 = vmatmul.mubr.bf16.gmra.mxu0 %v918
  %v1584 = vpop.f32.mrf.mxu0
  %v1585 = vadd.f32 0.0, %v1584
  %v1586 = vpop.f32.mrf.mxu0
  %v1587 = vpop.f32.mrf.mxu0
  %v1588 = vadd.f32 0.0, %v1587
  %v1589 = vpop.f32.mrf.mxu0
  %1590 = vmatprep.mubr.bf16.mxu0 %v924
  %1591 = vmatmul.mubr.bf16.gmra.mxu0 %v923
  %v1592 = vpop.f32.mrf.mxu0
  %v1593 = vadd.f32 0.0, %v1592
  %v1594 = vpop.f32.mrf.mxu0
  %v1595 = vpop.f32.mrf.mxu0
  %v1596 = vadd.f32 0.0, %v1595
  %v1597 = vpop.f32.mrf.mxu0
  %1598 = vmatprep.mubr.bf16.mxu0 %v929
  %1599 = vmatmul.mubr.bf16.gmra.mxu0 %v928
  %v1600 = vpop.f32.mrf.mxu0
  %v1601 = vadd.f32 0.0, %v1600
  %v1602 = vpop.f32.mrf.mxu0
  %v1603 = vpop.f32.mrf.mxu0
  %v1604 = vadd.f32 0.0, %v1603
  %v1605 = vpop.f32.mrf.mxu0
  %1606 = vmatprep.mubr.bf16.mxu0 %v934
  %1607 = vmatmul.mubr.bf16.gmra.mxu0 %v933
  %v1608 = vpop.f32.mrf.mxu0
  %v1609 = vadd.f32 0.0, %v1608
  %v1610 = vpop.f32.mrf.mxu0
  %v1611 = vpop.f32.mrf.mxu0
  %v1612 = vadd.f32 0.0, %v1611
  %v1613 = vpop.f32.mrf.mxu0
  %1614 = vmatprep.mubr.bf16.mxu0 %v939
  %1615 = vmatmul.mubr.bf16.gmra.mxu0 %v938
  %v1616 = vpop.f32.mrf.mxu0
  %v1617 = vadd.f32 0.0, %v1616
  %v1618 = vpop.f32.mrf.mxu0
  %v1619 = vpop.f32.mrf.mxu0
  %v1620 = vadd.f32 0.0, %v1619
  %v1621 = vpop.f32.mrf.mxu0
  %1622 = vmatprep.mubr.bf16.mxu0 %v944
  %1623 = vmatmul.mubr.bf16.gmra.mxu0 %v943
  %v1624 = vpop.f32.mrf.mxu0
  %v1625 = vadd.f32 0.0, %v1624
  %v1626 = vpop.f32.mrf.mxu0
  %v1627 = vpop.f32.mrf.mxu0
  %v1628 = vadd.f32 0.0, %v1627
  %v1629 = vpop.f32.mrf.mxu0
  %1630 = vmatprep.mubr.bf16.mxu0 %v949
  %1631 = vmatmul.mubr.bf16.gmra.mxu0 %v948
  %v1632 = vpop.f32.mrf.mxu0
  %v1633 = vadd.f32 0.0, %v1632
  %v1634 = vpop.f32.mrf.mxu0
  %v1635 = vpop.f32.mrf.mxu0
  %v1636 = vadd.f32 0.0, %v1635
  %v1637 = vpop.f32.mrf.mxu0
  %1638 = vmatprep.mubr.bf16.mxu0 %v954
  %1639 = vmatmul.mubr.bf16.gmra.mxu0 %v953
  %v1640 = vpop.f32.mrf.mxu0
  %v1641 = vadd.f32 0.0, %v1640
  %v1642 = vpop.f32.mrf.mxu0
  %v1643 = vpop.f32.mrf.mxu0
  %v1644 = vadd.f32 0.0, %v1643
  %v1645 = vpop.f32.mrf.mxu0
  %1646 = vdwg.mxu0
  %1647 = vmatprep.subr.bf16.mxu0 0
  %1648 = vmatpush1.bf16.msra.mxu0 %v1301
  %1649 = vmatprep.subr.bf16.mxu0 0
  %1650 = vmatpush1.bf16.msra.mxu0 %v1300
  %1651 = vmatprep.subr.bf16.mxu0 0
  %1652 = vmatpush1.bf16.msra.mxu0 %v1299
  %1653 = vmatprep.subr.bf16.mxu0 0
  %1654 = vmatpush1.bf16.msra.mxu0 %v1298
  %1655 = vmatprep.subr.bf16.mxu0 0
  %1656 = vmatpush1.bf16.msra.mxu0 %v1297
  %1657 = vmatprep.subr.bf16.mxu0 0
  %1658 = vmatpush1.bf16.msra.mxu0 %v1296
  %1659 = vmatprep.subr.bf16.mxu0 0
  %1660 = vmatpush1.bf16.msra.mxu0 %v1295
  %1661 = vmatprep.subr.bf16.mxu0 0
  %1662 = vmatpush1.bf16.msra.mxu0 %v1294
  %1663 = vmatprep.subr.bf16.mxu0 0
  %1664 = vmatpush2.bf16.msra.mxu0 %v1309
  %1665 = vmatprep.subr.bf16.mxu0 0
  %1666 = vmatpush2.bf16.msra.mxu0 %v1308
  %1667 = vmatprep.subr.bf16.mxu0 0
  %1668 = vmatpush2.bf16.msra.mxu0 %v1307
  %1669 = vmatprep.subr.bf16.mxu0 0
  %1670 = vmatpush2.bf16.msra.mxu0 %v1306
  %1671 = vmatprep.subr.bf16.mxu0 0
  %1672 = vmatpush2.bf16.msra.mxu0 %v1305
  %1673 = vmatprep.subr.bf16.mxu0 0
  %1674 = vmatpush2.bf16.msra.mxu0 %v1304
  %1675 = vmatprep.subr.bf16.mxu0 0
  %1676 = vmatpush2.bf16.msra.mxu0 %v1303
  %1677 = vmatprep.subr.bf16.mxu0 0
  %1678 = vmatpush2.bf16.msra.mxu0 %v1302
  %1679 = vmatprep.mubr.bf16.mxu0 %v801
  %1680 = vmatmul.mubr.bf16.gmra.mxu0 %v800
  %v1681 = vpop.f32.mrf.mxu0
  %v1682 = vadd.f32 %v1393, %v1681
  %v1683 = vpop.f32.mrf.mxu0
  %v1684 = vpop.f32.mrf.mxu0
  %v1685 = vadd.f32 %v1396, %v1684
  %v1686 = vpop.f32.mrf.mxu0
  %1687 = vmatprep.mubr.bf16.mxu0 %v806
  %1688 = vmatmul.mubr.bf16.gmra.mxu0 %v805
  %v1689 = vpop.f32.mrf.mxu0
  %v1690 = vadd.f32 %v1401, %v1689
  %v1691 = vpop.f32.mrf.mxu0
  %v1692 = vpop.f32.mrf.mxu0
  %v1693 = vadd.f32 %v1404, %v1692
  %v1694 = vpop.f32.mrf.mxu0
  %1695 = vmatprep.mubr.bf16.mxu0 %v811
  %1696 = vmatmul.mubr.bf16.gmra.mxu0 %v810
  %v1697 = vpop.f32.mrf.mxu0
  %v1698 = vadd.f32 %v1409, %v1697
  %v1699 = vpop.f32.mrf.mxu0
  %v1700 = vpop.f32.mrf.mxu0
  %v1701 = vadd.f32 %v1412, %v1700
  %v1702 = vpop.f32.mrf.mxu0
  %1703 = vmatprep.mubr.bf16.mxu0 %v816
  %1704 = vmatmul.mubr.bf16.gmra.mxu0 %v815
  %v1705 = vpop.f32.mrf.mxu0
  %v1706 = vadd.f32 %v1417, %v1705
  %v1707 = vpop.f32.mrf.mxu0
  %v1708 = vpop.f32.mrf.mxu0
  %v1709 = vadd.f32 %v1420, %v1708
  %v1710 = vpop.f32.mrf.mxu0
  %1711 = vmatprep.mubr.bf16.mxu0 %v821
  %1712 = vmatmul.mubr.bf16.gmra.mxu0 %v820
  %v1713 = vpop.f32.mrf.mxu0
  %v1714 = vadd.f32 %v1425, %v1713
  %v1715 = vpop.f32.mrf.mxu0
  %v1716 = vpop.f32.mrf.mxu0
  %v1717 = vadd.f32 %v1428, %v1716
  %v1718 = vpop.f32.mrf.mxu0
  %1719 = vmatprep.mubr.bf16.mxu0 %v826
  %1720 = vmatmul.mubr.bf16.gmra.mxu0 %v825
  %v1721 = vpop.f32.mrf.mxu0
  %v1722 = vadd.f32 %v1433, %v1721
  %v1723 = vpop.f32.mrf.mxu0
  %v1724 = vpop.f32.mrf.mxu0
  %v1725 = vadd.f32 %v1436, %v1724
  %v1726 = vpop.f32.mrf.mxu0
  %1727 = vmatprep.mubr.bf16.mxu0 %v831
  %1728 = vmatmul.mubr.bf16.gmra.mxu0 %v830
  %v1729 = vpop.f32.mrf.mxu0
  %v1730 = vadd.f32 %v1441, %v1729
  %v1731 = vpop.f32.mrf.mxu0
  %v1732 = vpop.f32.mrf.mxu0
  %v1733 = vadd.f32 %v1444, %v1732
  %v1734 = vpop.f32.mrf.mxu0
  %1735 = vmatprep.mubr.bf16.mxu0 %v836
  %1736 = vmatmul.mubr.bf16.gmra.mxu0 %v835
  %v1737 = vpop.f32.mrf.mxu0
  %v1738 = vadd.f32 %v1449, %v1737
  %v1739 = vpop.f32.mrf.mxu0
  %v1740 = vpop.f32.mrf.mxu0
  %v1741 = vadd.f32 %v1452, %v1740
  %v1742 = vpop.f32.mrf.mxu0
  %1743 = vmatprep.mubr.bf16.mxu0 %v841
  %1744 = vmatmul.mubr.bf16.gmra.mxu0 %v840
  %v1745 = vpop.f32.mrf.mxu0
  %v1746 = vadd.f32 %v1457, %v1745
  %v1747 = vpop.f32.mrf.mxu0
  %v1748 = vpop.f32.mrf.mxu0
  %v1749 = vadd.f32 %v1460, %v1748
  %v1750 = vpop.f32.mrf.mxu0
  %1751 = vmatprep.mubr.bf16.mxu0 %v846
  %1752 = vmatmul.mubr.bf16.gmra.mxu0 %v845
  %v1753 = vpop.f32.mrf.mxu0
  %v1754 = vadd.f32 %v1465, %v1753
  %v1755 = vpop.f32.mrf.mxu0
  %v1756 = vpop.f32.mrf.mxu0
  %v1757 = vadd.f32 %v1468, %v1756
  %v1758 = vpop.f32.mrf.mxu0
  %1759 = vmatprep.mubr.bf16.mxu0 %v851
  %1760 = vmatmul.mubr.bf16.gmra.mxu0 %v850
  %v1761 = vpop.f32.mrf.mxu0
  %v1762 = vadd.f32 %v1473, %v1761
  %v1763 = vpop.f32.mrf.mxu0
  %v1764 = vpop.f32.mrf.mxu0
  %v1765 = vadd.f32 %v1476, %v1764
  %v1766 = vpop.f32.mrf.mxu0
  %1767 = vmatprep.mubr.bf16.mxu0 %v856
  %1768 = vmatmul.mubr.bf16.gmra.mxu0 %v855
  %v1769 = vpop.f32.mrf.mxu0
  %v1770 = vadd.f32 %v1481, %v1769
  %v1771 = vpop.f32.mrf.mxu0
  %v1772 = vpop.f32.mrf.mxu0
  %v1773 = vadd.f32 %v1484, %v1772
  %v1774 = vpop.f32.mrf.mxu0
  %1775 = vmatprep.mubr.bf16.mxu0 %v861
  %1776 = vmatmul.mubr.bf16.gmra.mxu0 %v860
  %v1777 = vpop.f32.mrf.mxu0
  %v1778 = vadd.f32 %v1489, %v1777
  %v1779 = vpop.f32.mrf.mxu0
  %v1780 = vpop.f32.mrf.mxu0
  %v1781 = vadd.f32 %v1492, %v1780
  %v1782 = vpop.f32.mrf.mxu0
  %1783 = vmatprep.mubr.bf16.mxu0 %v866
  %1784 = vmatmul.mubr.bf16.gmra.mxu0 %v865
  %v1785 = vpop.f32.mrf.mxu0
  %v1786 = vadd.f32 %v1497, %v1785
  %v1787 = vpop.f32.mrf.mxu0
  %v1788 = vpop.f32.mrf.mxu0
  %v1789 = vadd.f32 %v1500, %v1788
  %v1790 = vpop.f32.mrf.mxu0
  %1791 = vmatprep.mubr.bf16.mxu0 %v871
  %1792 = vmatmul.mubr.bf16.gmra.mxu0 %v870
  %v1793 = vpop.f32.mrf.mxu0
  %v1794 = vadd.f32 %v1505, %v1793
  %v1795 = vpop.f32.mrf.mxu0
  %v1796 = vpop.f32.mrf.mxu0
  %v1797 = vadd.f32 %v1508, %v1796
  %v1798 = vpop.f32.mrf.mxu0
  %1799 = vmatprep.mubr.bf16.mxu0 %v876
  %1800 = vmatmul.mubr.bf16.gmra.mxu0 %v875
  %v1801 = vpop.f32.mrf.mxu0
  %v1802 = vadd.f32 %v1513, %v1801
  %v1803 = vpop.f32.mrf.mxu0
  %v1804 = vpop.f32.mrf.mxu0
  %v1805 = vadd.f32 %v1516, %v1804
  %v1806 = vpop.f32.mrf.mxu0
  %1807 = vmatprep.mubr.bf16.mxu0 %v881
  %1808 = vmatmul.mubr.bf16.gmra.mxu0 %v880
  %v1809 = vpop.f32.mrf.mxu0
  %v1810 = vadd.f32 %v1521, %v1809
  %v1811 = vpop.f32.mrf.mxu0
  %v1812 = vpop.f32.mrf.mxu0
  %v1813 = vadd.f32 %v1524, %v1812
  %v1814 = vpop.f32.mrf.mxu0
  %1815 = vmatprep.mubr.bf16.mxu0 %v886
  %1816 = vmatmul.mubr.bf16.gmra.mxu0 %v885
  %v1817 = vpop.f32.mrf.mxu0
  %v1818 = vadd.f32 %v1529, %v1817
  %v1819 = vpop.f32.mrf.mxu0
  %v1820 = vpop.f32.mrf.mxu0
  %v1821 = vadd.f32 %v1532, %v1820
  %v1822 = vpop.f32.mrf.mxu0
  %1823 = vmatprep.mubr.bf16.mxu0 %v891
  %1824 = vmatmul.mubr.bf16.gmra.mxu0 %v890
  %v1825 = vpop.f32.mrf.mxu0
  %v1826 = vadd.f32 %v1537, %v1825
  %v1827 = vpop.f32.mrf.mxu0
  %v1828 = vpop.f32.mrf.mxu0
  %v1829 = vadd.f32 %v1540, %v1828
  %v1830 = vpop.f32.mrf.mxu0
  %1831 = vmatprep.mubr.bf16.mxu0 %v896
  %1832 = vmatmul.mubr.bf16.gmra.mxu0 %v895
  %v1833 = vpop.f32.mrf.mxu0
  %v1834 = vadd.f32 %v1545, %v1833
  %v1835 = vpop.f32.mrf.mxu0
  %v1836 = vpop.f32.mrf.mxu0
  %v1837 = vadd.f32 %v1548, %v1836
  %v1838 = vpop.f32.mrf.mxu0
  %1839 = vmatprep.mubr.bf16.mxu0 %v901
  %1840 = vmatmul.mubr.bf16.gmra.mxu0 %v900
  %v1841 = vpop.f32.mrf.mxu0
  %v1842 = vadd.f32 %v1553, %v1841
  %v1843 = vpop.f32.mrf.mxu0
  %v1844 = vpop.f32.mrf.mxu0
  %v1845 = vadd.f32 %v1556, %v1844
  %v1846 = vpop.f32.mrf.mxu0
  %1847 = vmatprep.mubr.bf16.mxu0 %v906
  %1848 = vmatmul.mubr.bf16.gmra.mxu0 %v905
  %v1849 = vpop.f32.mrf.mxu0
  %v1850 = vadd.f32 %v1561, %v1849
  %v1851 = vpop.f32.mrf.mxu0
  %v1852 = vpop.f32.mrf.mxu0
  %v1853 = vadd.f32 %v1564, %v1852
  %v1854 = vpop.f32.mrf.mxu0
  %1855 = vmatprep.mubr.bf16.mxu0 %v911
  %1856 = vmatmul.mubr.bf16.gmra.mxu0 %v910
  %v1857 = vpop.f32.mrf.mxu0
  %v1858 = vadd.f32 %v1569, %v1857
  %v1859 = vpop.f32.mrf.mxu0
  %v1860 = vpop.f32.mrf.mxu0
  %v1861 = vadd.f32 %v1572, %v1860
  %v1862 = vpop.f32.mrf.mxu0
  %1863 = vmatprep.mubr.bf16.mxu0 %v916
  %1864 = vmatmul.mubr.bf16.gmra.mxu0 %v915
  %v1865 = vpop.f32.mrf.mxu0
  %v1866 = vadd.f32 %v1577, %v1865
  %v1867 = vpop.f32.mrf.mxu0
  %v1868 = vpop.f32.mrf.mxu0
  %v1869 = vadd.f32 %v1580, %v1868
  %v1870 = vpop.f32.mrf.mxu0
  %1871 = vmatprep.mubr.bf16.mxu0 %v921
  %1872 = vmatmul.mubr.bf16.gmra.mxu0 %v920
  %v1873 = vpop.f32.mrf.mxu0
  %v1874 = vadd.f32 %v1585, %v1873
  %v1875 = vpop.f32.mrf.mxu0
  %v1876 = vpop.f32.mrf.mxu0
  %v1877 = vadd.f32 %v1588, %v1876
  %v1878 = vpop.f32.mrf.mxu0
  %1879 = vmatprep.mubr.bf16.mxu0 %v926
  %1880 = vmatmul.mubr.bf16.gmra.mxu0 %v925
  %v1881 = vpop.f32.mrf.mxu0
  %v1882 = vadd.f32 %v1593, %v1881
  %v1883 = vpop.f32.mrf.mxu0
  %v1884 = vpop.f32.mrf.mxu0
  %v1885 = vadd.f32 %v1596, %v1884
  %v1886 = vpop.f32.mrf.mxu0
  %1887 = vmatprep.mubr.bf16.mxu0 %v931
  %1888 = vmatmul.mubr.bf16.gmra.mxu0 %v930
  %v1889 = vpop.f32.mrf.mxu0
  %v1890 = vadd.f32 %v1601, %v1889
  %v1891 = vpop.f32.mrf.mxu0
  %v1892 = vpop.f32.mrf.mxu0
  %v1893 = vadd.f32 %v1604, %v1892
  %v1894 = vpop.f32.mrf.mxu0
  %1895 = vmatprep.mubr.bf16.mxu0 %v936
  %1896 = vmatmul.mubr.bf16.gmra.mxu0 %v935
  %v1897 = vpop.f32.mrf.mxu0
  %v1898 = vadd.f32 %v1609, %v1897
  %v1899 = vpop.f32.mrf.mxu0
  %v1900 = vpop.f32.mrf.mxu0
  %v1901 = vadd.f32 %v1612, %v1900
  %v1902 = vpop.f32.mrf.mxu0
  %1903 = vmatprep.mubr.bf16.mxu0 %v941
  %1904 = vmatmul.mubr.bf16.gmra.mxu0 %v940
  %v1905 = vpop.f32.mrf.mxu0
  %v1906 = vadd.f32 %v1617, %v1905
  %v1907 = vpop.f32.mrf.mxu0
  %v1908 = vpop.f32.mrf.mxu0
  %v1909 = vadd.f32 %v1620, %v1908
  %v1910 = vpop.f32.mrf.mxu0
  %1911 = vmatprep.mubr.bf16.mxu0 %v946
  %1912 = vmatmul.mubr.bf16.gmra.mxu0 %v945
  %v1913 = vpop.f32.mrf.mxu0
  %v1914 = vadd.f32 %v1625, %v1913
  %v1915 = vpop.f32.mrf.mxu0
  %v1916 = vpop.f32.mrf.mxu0
  %v1917 = vadd.f32 %v1628, %v1916
  %v1918 = vpop.f32.mrf.mxu0
  %1919 = vmatprep.mubr.bf16.mxu0 %v951
  %1920 = vmatmul.mubr.bf16.gmra.mxu0 %v950
  %v1921 = vpop.f32.mrf.mxu0
  %v1922 = vadd.f32 %v1633, %v1921
  %v1923 = vpop.f32.mrf.mxu0
  %v1924 = vpop.f32.mrf.mxu0
  %v1925 = vadd.f32 %v1636, %v1924
  %v1926 = vpop.f32.mrf.mxu0
  %1927 = vmatprep.mubr.bf16.mxu0 %v956
  %1928 = vmatmul.mubr.bf16.gmra.mxu0 %v955
  %v1929 = vpop.f32.mrf.mxu0
  %v1930 = vadd.f32 %v1641, %v1929
  %v1931 = vpop.f32.mrf.mxu0
  %v1932 = vpop.f32.mrf.mxu0
  %v1933 = vadd.f32 %v1644, %v1932
  %v1934 = vpop.f32.mrf.mxu0
  %1935 = vdwg.mxu0
  %1936 = vmatprep.subr.bf16.mxu0 0
  %1937 = vmatpush1.bf16.msra.mxu0 %v1317
  %1938 = vmatprep.subr.bf16.mxu0 0
  %1939 = vmatpush1.bf16.msra.mxu0 %v1316
  %1940 = vmatprep.subr.bf16.mxu0 0
  %1941 = vmatpush1.bf16.msra.mxu0 %v1315
  %1942 = vmatprep.subr.bf16.mxu0 0
  %1943 = vmatpush1.bf16.msra.mxu0 %v1314
  %1944 = vmatprep.subr.bf16.mxu0 0
  %1945 = vmatpush1.bf16.msra.mxu0 %v1313
  %1946 = vmatprep.subr.bf16.mxu0 0
  %1947 = vmatpush1.bf16.msra.mxu0 %v1312
  %1948 = vmatprep.subr.bf16.mxu0 0
  %1949 = vmatpush1.bf16.msra.mxu0 %v1311
  %1950 = vmatprep.subr.bf16.mxu0 0
  %1951 = vmatpush1.bf16.msra.mxu0 %v1310
  %1952 = vmatprep.subr.bf16.mxu0 0
  %1953 = vmatpush2.bf16.msra.mxu0 0
  %1954 = vmatprep.subr.bf16.mxu0 0
  %1955 = vmatpush2.bf16.msra.mxu0 0
  %1956 = vmatprep.subr.bf16.mxu0 0
  %1957 = vmatpush2.bf16.msra.mxu0 0
  %1958 = vmatprep.subr.bf16.mxu0 0
  %1959 = vmatpush2.bf16.msra.mxu0 0
  %1960 = vmatprep.subr.bf16.mxu0 0
  %1961 = vmatpush2.bf16.msra.mxu0 0
  %1962 = vmatprep.subr.bf16.mxu0 0
  %1963 = vmatpush2.bf16.msra.mxu0 0
  %1964 = vmatprep.subr.bf16.mxu0 0
  %1965 = vmatpush2.bf16.msra.mxu0 0
  %1966 = vmatprep.subr.bf16.mxu0 0
  %1967 = vmatpush2.bf16.msra.mxu0 0
  %1968 = vmatprep.mubr.bf16.mxu0 0
  %1969 = vmatmul.mubr.bf16.gmra.mxu0 %v802
  %v1970 = vpop.f32.mrf.mxu0
  %v1971 = vadd.f32 %v1682, %v1970
  %v1972 = vpop.f32.mrf.mxu0
  %v1973 = vpop.f32.mrf.mxu0
  %v1974 = vadd.f32 %v1685, %v1973
  %v1975 = vpop.f32.mrf.mxu0
  %1976 = vmatprep.mubr.bf16.mxu0 0
  %1977 = vmatmul.mubr.bf16.gmra.mxu0 %v807
  %v1978 = vpop.f32.mrf.mxu0
  %v1979 = vadd.f32 %v1690, %v1978
  %v1980 = vpop.f32.mrf.mxu0
  %v1981 = vpop.f32.mrf.mxu0
  %v1982 = vadd.f32 %v1693, %v1981
  %v1983 = vpop.f32.mrf.mxu0
  %1984 = vmatprep.mubr.bf16.mxu0 0
  %1985 = vmatmul.mubr.bf16.gmra.mxu0 %v812
  %v1986 = vpop.f32.mrf.mxu0
  %v1987 = vadd.f32 %v1698, %v1986
  %v1988 = vpop.f32.mrf.mxu0
  %v1989 = vpop.f32.mrf.mxu0
  %v1990 = vadd.f32 %v1701, %v1989
  %v1991 = vpop.f32.mrf.mxu0
  %1992 = vmatprep.mubr.bf16.mxu0 0
  %1993 = vmatmul.mubr.bf16.gmra.mxu0 %v817
  %v1994 = vpop.f32.mrf.mxu0
  %v1995 = vadd.f32 %v1706, %v1994
  %v1996 = vpop.f32.mrf.mxu0
  %v1997 = vpop.f32.mrf.mxu0
  %v1998 = vadd.f32 %v1709, %v1997
  %v1999 = vpop.f32.mrf.mxu0
  %2000 = vmatprep.mubr.bf16.mxu0 0
  %2001 = vmatmul.mubr.bf16.gmra.mxu0 %v822
  %v2002 = vpop.f32.mrf.mxu0
  %v2003 = vadd.f32 %v1714, %v2002
  %v2004 = vpop.f32.mrf.mxu0
  %v2005 = vpop.f32.mrf.mxu0
  %v2006 = vadd.f32 %v1717, %v2005
  %v2007 = vpop.f32.mrf.mxu0
  %2008 = vmatprep.mubr.bf16.mxu0 0
  %2009 = vmatmul.mubr.bf16.gmra.mxu0 %v827
  %v2010 = vpop.f32.mrf.mxu0
  %v2011 = vadd.f32 %v1722, %v2010
  %v2012 = vpop.f32.mrf.mxu0
  %v2013 = vpop.f32.mrf.mxu0
  %v2014 = vadd.f32 %v1725, %v2013
  %v2015 = vpop.f32.mrf.mxu0
  %2016 = vmatprep.mubr.bf16.mxu0 0
  %2017 = vmatmul.mubr.bf16.gmra.mxu0 %v832
  %v2018 = vpop.f32.mrf.mxu0
  %v2019 = vadd.f32 %v1730, %v2018
  %v2020 = vpop.f32.mrf.mxu0
  %v2021 = vpop.f32.mrf.mxu0
  %v2022 = vadd.f32 %v1733, %v2021
  %v2023 = vpop.f32.mrf.mxu0
  %2024 = vmatprep.mubr.bf16.mxu0 0
  %2025 = vmatmul.mubr.bf16.gmra.mxu0 %v837
  %v2026 = vpop.f32.mrf.mxu0
  %v2027 = vadd.f32 %v1738, %v2026
  %v2028 = vpop.f32.mrf.mxu0
  %v2029 = vpop.f32.mrf.mxu0
  %v2030 = vadd.f32 %v1741, %v2029
  %v2031 = vpop.f32.mrf.mxu0
  %2032 = vmatprep.mubr.bf16.mxu0 0
  %2033 = vmatmul.mubr.bf16.gmra.mxu0 %v842
  %v2034 = vpop.f32.mrf.mxu0
  %v2035 = vadd.f32 %v1746, %v2034
  %v2036 = vpop.f32.mrf.mxu0
  %v2037 = vpop.f32.mrf.mxu0
  %v2038 = vadd.f32 %v1749, %v2037
  %v2039 = vpop.f32.mrf.mxu0
  %2040 = vmatprep.mubr.bf16.mxu0 0
  %2041 = vmatmul.mubr.bf16.gmra.mxu0 %v847
  %v2042 = vpop.f32.mrf.mxu0
  %v2043 = vadd.f32 %v1754, %v2042
  %v2044 = vpop.f32.mrf.mxu0
  %v2045 = vpop.f32.mrf.mxu0
  %v2046 = vadd.f32 %v1757, %v2045
  %v2047 = vpop.f32.mrf.mxu0
  %2048 = vmatprep.mubr.bf16.mxu0 0
  %2049 = vmatmul.mubr.bf16.gmra.mxu0 %v852
  %v2050 = vpop.f32.mrf.mxu0
  %v2051 = vadd.f32 %v1762, %v2050
  %v2052 = vpop.f32.mrf.mxu0
  %v2053 = vpop.f32.mrf.mxu0
  %v2054 = vadd.f32 %v1765, %v2053
  %v2055 = vpop.f32.mrf.mxu0
  %2056 = vmatprep.mubr.bf16.mxu0 0
  %2057 = vmatmul.mubr.bf16.gmra.mxu0 %v857
  %v2058 = vpop.f32.mrf.mxu0
  %v2059 = vadd.f32 %v1770, %v2058
  %v2060 = vpop.f32.mrf.mxu0
  %v2061 = vpop.f32.mrf.mxu0
  %v2062 = vadd.f32 %v1773, %v2061
  %v2063 = vpop.f32.mrf.mxu0
  %2064 = vmatprep.mubr.bf16.mxu0 0
  %2065 = vmatmul.mubr.bf16.gmra.mxu0 %v862
  %v2066 = vpop.f32.mrf.mxu0
  %v2067 = vadd.f32 %v1778, %v2066
  %v2068 = vpop.f32.mrf.mxu0
  %v2069 = vpop.f32.mrf.mxu0
  %v2070 = vadd.f32 %v1781, %v2069
  %v2071 = vpop.f32.mrf.mxu0
  %2072 = vmatprep.mubr.bf16.mxu0 0
  %2073 = vmatmul.mubr.bf16.gmra.mxu0 %v867
  %v2074 = vpop.f32.mrf.mxu0
  %v2075 = vadd.f32 %v1786, %v2074
  %v2076 = vpop.f32.mrf.mxu0
  %v2077 = vpop.f32.mrf.mxu0
  %v2078 = vadd.f32 %v1789, %v2077
  %v2079 = vpop.f32.mrf.mxu0
  %2080 = vmatprep.mubr.bf16.mxu0 0
  %2081 = vmatmul.mubr.bf16.gmra.mxu0 %v872
  %v2082 = vpop.f32.mrf.mxu0
  %v2083 = vadd.f32 %v1794, %v2082
  %v2084 = vpop.f32.mrf.mxu0
  %v2085 = vpop.f32.mrf.mxu0
  %v2086 = vadd.f32 %v1797, %v2085
  %v2087 = vpop.f32.mrf.mxu0
  %2088 = vmatprep.mubr.bf16.mxu0 0
  %2089 = vmatmul.mubr.bf16.gmra.mxu0 %v877
  %v2090 = vpop.f32.mrf.mxu0
  %v2091 = vadd.f32 %v1802, %v2090
  %v2092 = vpop.f32.mrf.mxu0
  %v2093 = vpop.f32.mrf.mxu0
  %v2094 = vadd.f32 %v1805, %v2093
  %v2095 = vpop.f32.mrf.mxu0
  %2096 = vmatprep.mubr.bf16.mxu0 0
  %2097 = vmatmul.mubr.bf16.gmra.mxu0 %v882
  %v2098 = vpop.f32.mrf.mxu0
  %v2099 = vadd.f32 %v1810, %v2098
  %v2100 = vpop.f32.mrf.mxu0
  %v2101 = vpop.f32.mrf.mxu0
  %v2102 = vadd.f32 %v1813, %v2101
  %v2103 = vpop.f32.mrf.mxu0
  %2104 = vmatprep.mubr.bf16.mxu0 0
  %2105 = vmatmul.mubr.bf16.gmra.mxu0 %v887
  %v2106 = vpop.f32.mrf.mxu0
  %v2107 = vadd.f32 %v1818, %v2106
  %v2108 = vpop.f32.mrf.mxu0
  %v2109 = vpop.f32.mrf.mxu0
  %v2110 = vadd.f32 %v1821, %v2109
  %v2111 = vpop.f32.mrf.mxu0
  %2112 = vmatprep.mubr.bf16.mxu0 0
  %2113 = vmatmul.mubr.bf16.gmra.mxu0 %v892
  %v2114 = vpop.f32.mrf.mxu0
  %v2115 = vadd.f32 %v1826, %v2114
  %v2116 = vpop.f32.mrf.mxu0
  %v2117 = vpop.f32.mrf.mxu0
  %v2118 = vadd.f32 %v1829, %v2117
  %v2119 = vpop.f32.mrf.mxu0
  %2120 = vmatprep.mubr.bf16.mxu0 0
  %2121 = vmatmul.mubr.bf16.gmra.mxu0 %v897
  %v2122 = vpop.f32.mrf.mxu0
  %v2123 = vadd.f32 %v1834, %v2122
  %v2124 = vpop.f32.mrf.mxu0
  %v2125 = vpop.f32.mrf.mxu0
  %v2126 = vadd.f32 %v1837, %v2125
  %v2127 = vpop.f32.mrf.mxu0
  %2128 = vmatprep.mubr.bf16.mxu0 0
  %2129 = vmatmul.mubr.bf16.gmra.mxu0 %v902
  %v2130 = vpop.f32.mrf.mxu0
  %v2131 = vadd.f32 %v1842, %v2130
  %v2132 = vpop.f32.mrf.mxu0
  %v2133 = vpop.f32.mrf.mxu0
  %v2134 = vadd.f32 %v1845, %v2133
  %v2135 = vpop.f32.mrf.mxu0
  %2136 = vmatprep.mubr.bf16.mxu0 0
  %2137 = vmatmul.mubr.bf16.gmra.mxu0 %v907
  %v2138 = vpop.f32.mrf.mxu0
  %v2139 = vadd.f32 %v1850, %v2138
  %v2140 = vpop.f32.mrf.mxu0
  %v2141 = vpop.f32.mrf.mxu0
  %v2142 = vadd.f32 %v1853, %v2141
  %v2143 = vpop.f32.mrf.mxu0
  %2144 = vmatprep.mubr.bf16.mxu0 0
  %2145 = vmatmul.mubr.bf16.gmra.mxu0 %v912
  %v2146 = vpop.f32.mrf.mxu0
  %v2147 = vadd.f32 %v1858, %v2146
  %v2148 = vpop.f32.mrf.mxu0
  %v2149 = vpop.f32.mrf.mxu0
  %v2150 = vadd.f32 %v1861, %v2149
  %v2151 = vpop.f32.mrf.mxu0
  %2152 = vmatprep.mubr.bf16.mxu0 0
  %2153 = vmatmul.mubr.bf16.gmra.mxu0 %v917
  %v2154 = vpop.f32.mrf.mxu0
  %v2155 = vadd.f32 %v1866, %v2154
  %v2156 = vpop.f32.mrf.mxu0
  %v2157 = vpop.f32.mrf.mxu0
  %v2158 = vadd.f32 %v1869, %v2157
  %v2159 = vpop.f32.mrf.mxu0
  %2160 = vmatprep.mubr.bf16.mxu0 0
  %2161 = vmatmul.mubr.bf16.gmra.mxu0 %v922
  %v2162 = vpop.f32.mrf.mxu0
  %v2163 = vadd.f32 %v1874, %v2162
  %v2164 = vpop.f32.mrf.mxu0
  %v2165 = vpop.f32.mrf.mxu0
  %v2166 = vadd.f32 %v1877, %v2165
  %v2167 = vpop.f32.mrf.mxu0
  %2168 = vmatprep.mubr.bf16.mxu0 0
  %2169 = vmatmul.mubr.bf16.gmra.mxu0 %v927
  %v2170 = vpop.f32.mrf.mxu0
  %v2171 = vadd.f32 %v1882, %v2170
  %v2172 = vpop.f32.mrf.mxu0
  %v2173 = vpop.f32.mrf.mxu0
  %v2174 = vadd.f32 %v1885, %v2173
  %v2175 = vpop.f32.mrf.mxu0
  %2176 = vmatprep.mubr.bf16.mxu0 0
  %2177 = vmatmul.mubr.bf16.gmra.mxu0 %v932
  %v2178 = vpop.f32.mrf.mxu0
  %v2179 = vadd.f32 %v1890, %v2178
  %v2180 = vpop.f32.mrf.mxu0
  %v2181 = vpop.f32.mrf.mxu0
  %v2182 = vadd.f32 %v1893, %v2181
  %v2183 = vpop.f32.mrf.mxu0
  %2184 = vmatprep.mubr.bf16.mxu0 0
  %2185 = vmatmul.mubr.bf16.gmra.mxu0 %v937
  %v2186 = vpop.f32.mrf.mxu0
  %v2187 = vadd.f32 %v1898, %v2186
  %v2188 = vpop.f32.mrf.mxu0
  %v2189 = vpop.f32.mrf.mxu0
  %v2190 = vadd.f32 %v1901, %v2189
  %v2191 = vpop.f32.mrf.mxu0
  %2192 = vmatprep.mubr.bf16.mxu0 0
  %2193 = vmatmul.mubr.bf16.gmra.mxu0 %v942
  %v2194 = vpop.f32.mrf.mxu0
  %v2195 = vadd.f32 %v1906, %v2194
  %v2196 = vpop.f32.mrf.mxu0
  %v2197 = vpop.f32.mrf.mxu0
  %v2198 = vadd.f32 %v1909, %v2197
  %v2199 = vpop.f32.mrf.mxu0
  %2200 = vmatprep.mubr.bf16.mxu0 0
  %2201 = vmatmul.mubr.bf16.gmra.mxu0 %v947
  %v2202 = vpop.f32.mrf.mxu0
  %v2203 = vadd.f32 %v1914, %v2202
  %v2204 = vpop.f32.mrf.mxu0
  %v2205 = vpop.f32.mrf.mxu0
  %v2206 = vadd.f32 %v1917, %v2205
  %v2207 = vpop.f32.mrf.mxu0
  %2208 = vmatprep.mubr.bf16.mxu0 0
  %2209 = vmatmul.mubr.bf16.gmra.mxu0 %v952
  %v2210 = vpop.f32.mrf.mxu0
  %v2211 = vadd.f32 %v1922, %v2210
  %v2212 = vpop.f32.mrf.mxu0
  %v2213 = vpop.f32.mrf.mxu0
  %v2214 = vadd.f32 %v1925, %v2213
  %v2215 = vpop.f32.mrf.mxu0
  %2216 = vmatprep.mubr.bf16.mxu0 0
  %2217 = vmatmul.mubr.bf16.gmra.mxu0 %v957
  %v2218 = vpop.f32.mrf.mxu0
  %v2219 = vadd.f32 %v1930, %v2218
  %v2220 = vpop.f32.mrf.mxu0
  %v2221 = vpop.f32.mrf.mxu0
  %v2222 = vadd.f32 %v1933, %v2221
  %v2223 = vpop.f32.mrf.mxu0
  %2224 = vdwg.mxu0
  %2225 = vst [vmem:[%s2] sm:$0xff] %v1971
  %2226 = vst [vmem:[%s2 + $0x8] sm:$0xff] %v1974
  %2227 = vst [vmem:[%s2 + $0x10] sm:$0xff] %v1979
  %2228 = vst [vmem:[%s2 + $0x18] sm:$0xff] %v1982
  %2229 = vst [vmem:[%s2 + $0x20] sm:$0xff] %v1987
  %2230 = vst [vmem:[%s2 + $0x28] sm:$0xff] %v1990
  %2231 = vst [vmem:[%s2 + $0x30] sm:$0xff] %v1995
  %2232 = vst [vmem:[%s2 + $0x38] sm:$0xff] %v1998
  %2233 = vst [vmem:[%s2 + $0x40] sm:$0xff] %v2003
  %2234 = vst [vmem:[%s2 + $0x48] sm:$0xff] %v2006
  %2235 = vst [vmem:[%s2 + $0x50] sm:$0xff] %v2011
  %2236 = vst [vmem:[%s2 + $0x58] sm:$0xff] %v2014
  %2237 = vst [vmem:[%s2 + $0x60] sm:$0xff] %v2019
  %2238 = vst [vmem:[%s2 + $0x68] sm:$0xff] %v2022
  %2239 = vst [vmem:[%s2 + $0x70] sm:$0xff] %v2027
  %2240 = vst [vmem:[%s2 + $0x78] sm:$0xff] %v2030
  %2241 = vst [vmem:[%s2 + $0x80] sm:$0xff] %v2035
  %2242 = vst [vmem:[%s2 + $0x88] sm:$0xff] %v2038
  %2243 = vst [vmem:[%s2 + $0x90] sm:$0xff] %v2043
  %2244 = vst [vmem:[%s2 + $0x98] sm:$0xff] %v2046
  %2245 = vst [vmem:[%s2 + $0xa0] sm:$0xff] %v2051
  %2246 = vst [vmem:[%s2 + $0xa8] sm:$0xff] %v2054
  %2247 = vst [vmem:[%s2 + $0xb0] sm:$0xff] %v2059
  %2248 = vst [vmem:[%s2 + $0xb8] sm:$0xff] %v2062
  %2249 = vst [vmem:[%s2 + $0xc0] sm:$0xff] %v2067
  %2250 = vst [vmem:[%s2 + $0xc8] sm:$0xff] %v2070
  %2251 = vst [vmem:[%s2 + $0xd0] sm:$0xff] %v2075
  %2252 = vst [vmem:[%s2 + $0xd8] sm:$0xff] %v2078
  %2253 = vst [vmem:[%s2 + $0xe0] sm:$0xff] %v2083
  %2254 = vst [vmem:[%s2 + $0xe8] sm:$0xff] %v2086
  %2255 = vst [vmem:[%s2 + $0xf0] sm:$0xff] %v2091
  %2256 = vst [vmem:[%s2 + $0xf8] sm:$0xff] %v2094
  %2257 = vst [vmem:[%s2 + $0x100] sm:$0xff] %v2099
  %2258 = vst [vmem:[%s2 + $0x108] sm:$0xff] %v2102
  %2259 = vst [vmem:[%s2 + $0x110] sm:$0xff] %v2107
  %2260 = vst [vmem:[%s2 + $0x118] sm:$0xff] %v2110
  %2261 = vst [vmem:[%s2 + $0x120] sm:$0xff] %v2115
  %2262 = vst [vmem:[%s2 + $0x128] sm:$0xff] %v2118
  %2263 = vst [vmem:[%s2 + $0x130] sm:$0xff] %v2123
  %2264 = vst [vmem:[%s2 + $0x138] sm:$0xff] %v2126
  %2265 = vst [vmem:[%s2 + $0x140] sm:$0xff] %v2131
  %2266 = vst [vmem:[%s2 + $0x148] sm:$0xff] %v2134
  %2267 = vst [vmem:[%s2 + $0x150] sm:$0xff] %v2139
  %2268 = vst [vmem:[%s2 + $0x158] sm:$0xff] %v2142
  %2269 = vst [vmem:[%s2 + $0x160] sm:$0xff] %v2147
  %2270 = vst [vmem:[%s2 + $0x168] sm:$0xff] %v2150
  %2271 = vst [vmem:[%s2 + $0x170] sm:$0xff] %v2155
  %2272 = vst [vmem:[%s2 + $0x178] sm:$0xff] %v2158
  %2273 = vst [vmem:[%s2 + $0x180] sm:$0xff] %v2163
  %2274 = vst [vmem:[%s2 + $0x188] sm:$0xff] %v2166
  %2275 = vst [vmem:[%s2 + $0x190] sm:$0xff] %v2171
  %2276 = vst [vmem:[%s2 + $0x198] sm:$0xff] %v2174
  %2277 = vst [vmem:[%s2 + $0x1a0] sm:$0xff] %v2179
  %2278 = vst [vmem:[%s2 + $0x1a8] sm:$0xff] %v2182
  %2279 = vst [vmem:[%s2 + $0x1b0] sm:$0xff] %v2187
  %2280 = vst [vmem:[%s2 + $0x1b8] sm:$0xff] %v2190
  %2281 = vst [vmem:[%s2 + $0x1c0] sm:$0xff] %v2195
  %2282 = vst [vmem:[%s2 + $0x1c8] sm:$0xff] %v2198
  %2283 = vst [vmem:[%s2 + $0x1d0] sm:$0xff] %v2203
  %2284 = vst [vmem:[%s2 + $0x1d8] sm:$0xff] %v2206
  %2285 = vst [vmem:[%s2 + $0x1e0] sm:$0xff] %v2211
  %2286 = vst [vmem:[%s2 + $0x1e8] sm:$0xff] %v2214
  %2287 = vst [vmem:[%s2 + $0x1f0] sm:$0xff] %v2219
  %2288 = vst [vmem:[%s2 + $0x1f8] sm:$0xff] %v2222
  %v2289 = vadd.f32 %v1971, %v1974
  %v2290 = vadd.f32 %v2289, %v1979
  %v2291 = vadd.f32 %v2290, %v1982
  %v2292 = vadd.f32 %v2291, %v1987
  %v2293 = vadd.f32 %v2292, %v1990
  %v2294 = vadd.f32 %v2293, %v1995
  %v2295 = vadd.f32 %v2294, %v1998
  %v2296 = vadd.f32 %v2295, %v2003
  %v2297 = vadd.f32 %v2296, %v2006
  %v2298 = vadd.f32 %v2297, %v2011
  %v2299 = vadd.f32 %v2298, %v2014
  %v2300 = vadd.f32 %v2299, %v2019
  %v2301 = vadd.f32 %v2300, %v2022
  %v2302 = vadd.f32 %v2301, %v2027
  %v2303 = vadd.f32 %v2302, %v2030
  %v2304 = vadd.f32 %v2303, %v2035
  %v2305 = vadd.f32 %v2304, %v2038
  %v2306 = vadd.f32 %v2305, %v2043
  %v2307 = vadd.f32 %v2306, %v2046
  %v2308 = vadd.f32 %v2307, %v2051
  %v2309 = vadd.f32 %v2308, %v2054
  %v2310 = vadd.f32 %v2309, %v2059
  %v2311 = vadd.f32 %v2310, %v2062
  %v2312 = vadd.f32 %v2311, %v2067
  %v2313 = vadd.f32 %v2312, %v2070
  %v2314 = vadd.f32 %v2313, %v2075
  %v2315 = vadd.f32 %v2314, %v2078
  %v2316 = vadd.f32 %v2315, %v2083
  %v2317 = vadd.f32 %v2316, %v2086
  %v2318 = vadd.f32 %v2317, %v2091
  %v2319 = vadd.f32 %v2318, %v2094
  %v2320 = vadd.f32 %v2319, %v2099
  %v2321 = vadd.f32 %v2320, %v2102
  %v2322 = vadd.f32 %v2321, %v2107
  %v2323 = vadd.f32 %v2322, %v2110
  %v2324 = vadd.f32 %v2323, %v2115
  %v2325 = vadd.f32 %v2324, %v2118
  %v2326 = vadd.f32 %v2325, %v2123
  %v2327 = vadd.f32 %v2326, %v2126
  %v2328 = vadd.f32 %v2327, %v2131
  %v2329 = vadd.f32 %v2328, %v2134
  %v2330 = vadd.f32 %v2329, %v2139
  %v2331 = vadd.f32 %v2330, %v2142
  %v2332 = vadd.f32 %v2331, %v2147
  %v2333 = vadd.f32 %v2332, %v2150
  %v2334 = vadd.f32 %v2333, %v2155
  %v2335 = vadd.f32 %v2334, %v2158
  %v2336 = vadd.f32 %v2335, %v2163
  %v2337 = vadd.f32 %v2336, %v2166
  %v2338 = vadd.f32 %v2337, %v2171
  %v2339 = vadd.f32 %v2338, %v2174
  %v2340 = vadd.f32 %v2339, %v2179
  %v2341 = vadd.f32 %v2340, %v2182
  %v2342 = vadd.f32 %v2341, %v2187
  %v2343 = vadd.f32 %v2342, %v2190
  %v2344 = vadd.f32 %v2343, %v2195
  %v2345 = vadd.f32 %v2344, %v2198
  %v2346 = vadd.f32 %v2345, %v2203
  %v2347 = vadd.f32 %v2346, %v2206
  %v2348 = vadd.f32 %v2347, %v2211
  %v2349 = vadd.f32 %v2348, %v2214
  %v2350 = vadd.f32 %v2349, %v2219
  %v2351 = vadd.f32 %v2350, %v2222
  %v2352 = vrot.slane %v2351, 4
  %v2353 = vadd.f32 %v2351, %v2352
  %v2354 = vrot.slane %v2353, 2
  %v2355 = vadd.f32 %v2353, %v2354
  %v2356 = vrot.slane %v2355, 1
  %v2357 = vadd.f32 %v2355, %v2356
  %v2358 = vmul.f32 %v1971, %v1971
  %v2359 = vmul.f32 %v1974, %v1974
  %v2360 = vmul.f32 %v1979, %v1979
  %v2361 = vmul.f32 %v1982, %v1982
  %v2362 = vmul.f32 %v1987, %v1987
  %v2363 = vmul.f32 %v1990, %v1990
  %v2364 = vmul.f32 %v1995, %v1995
  %v2365 = vmul.f32 %v1998, %v1998
  %v2366 = vmul.f32 %v2003, %v2003
  %v2367 = vmul.f32 %v2006, %v2006
  %v2368 = vmul.f32 %v2011, %v2011
  %v2369 = vmul.f32 %v2014, %v2014
  %v2370 = vmul.f32 %v2019, %v2019
  %v2371 = vmul.f32 %v2022, %v2022
  %v2372 = vmul.f32 %v2027, %v2027
  %v2373 = vmul.f32 %v2030, %v2030
  %v2374 = vmul.f32 %v2035, %v2035
  %v2375 = vmul.f32 %v2038, %v2038
  %v2376 = vmul.f32 %v2043, %v2043
  %v2377 = vmul.f32 %v2046, %v2046
  %v2378 = vmul.f32 %v2051, %v2051
  %v2379 = vmul.f32 %v2054, %v2054
  %v2380 = vmul.f32 %v2059, %v2059
  %v2381 = vmul.f32 %v2062, %v2062
  %v2382 = vmul.f32 %v2067, %v2067
  %v2383 = vmul.f32 %v2070, %v2070
  %v2384 = vmul.f32 %v2075, %v2075
  %v2385 = vmul.f32 %v2078, %v2078
  %v2386 = vmul.f32 %v2083, %v2083
  %v2387 = vmul.f32 %v2086, %v2086
  %v2388 = vmul.f32 %v2091, %v2091
  %v2389 = vmul.f32 %v2094, %v2094
  %v2390 = vmul.f32 %v2099, %v2099
  %v2391 = vmul.f32 %v2102, %v2102
  %v2392 = vmul.f32 %v2107, %v2107
  %v2393 = vmul.f32 %v2110, %v2110
  %v2394 = vmul.f32 %v2115, %v2115
  %v2395 = vmul.f32 %v2118, %v2118
  %v2396 = vmul.f32 %v2123, %v2123
  %v2397 = vmul.f32 %v2126, %v2126
  %v2398 = vmul.f32 %v2131, %v2131
  %v2399 = vmul.f32 %v2134, %v2134
  %v2400 = vmul.f32 %v2139, %v2139
  %v2401 = vmul.f32 %v2142, %v2142
  %v2402 = vmul.f32 %v2147, %v2147
  %v2403 = vmul.f32 %v2150, %v2150
  %v2404 = vmul.f32 %v2155, %v2155
  %v2405 = vmul.f32 %v2158, %v2158
  %v2406 = vmul.f32 %v2163, %v2163
  %v2407 = vmul.f32 %v2166, %v2166
  %v2408 = vmul.f32 %v2171, %v2171
  %v2409 = vmul.f32 %v2174, %v2174
  %v2410 = vmul.f32 %v2179, %v2179
  %v2411 = vmul.f32 %v2182, %v2182
  %v2412 = vmul.f32 %v2187, %v2187
  %v2413 = vmul.f32 %v2190, %v2190
  %v2414 = vmul.f32 %v2195, %v2195
  %v2415 = vmul.f32 %v2198, %v2198
  %v2416 = vmul.f32 %v2203, %v2203
  %v2417 = vmul.f32 %v2206, %v2206
  %v2418 = vmul.f32 %v2211, %v2211
  %v2419 = vmul.f32 %v2214, %v2214
  %v2420 = vmul.f32 %v2219, %v2219
  %v2421 = vmul.f32 %v2222, %v2222
  %v2422 = vadd.f32 %v2358, %v2359
  %v2423 = vadd.f32 %v2422, %v2360
  %v2424 = vadd.f32 %v2423, %v2361
  %v2425 = vadd.f32 %v2424, %v2362
  %v2426 = vadd.f32 %v2425, %v2363
  %v2427 = vadd.f32 %v2426, %v2364
  %v2428 = vadd.f32 %v2427, %v2365
  %v2429 = vadd.f32 %v2428, %v2366
  %v2430 = vadd.f32 %v2429, %v2367
  %v2431 = vadd.f32 %v2430, %v2368
  %v2432 = vadd.f32 %v2431, %v2369
  %v2433 = vadd.f32 %v2432, %v2370
  %v2434 = vadd.f32 %v2433, %v2371
  %v2435 = vadd.f32 %v2434, %v2372
  %v2436 = vadd.f32 %v2435, %v2373
  %v2437 = vadd.f32 %v2436, %v2374
  %v2438 = vadd.f32 %v2437, %v2375
  %v2439 = vadd.f32 %v2438, %v2376
  %v2440 = vadd.f32 %v2439, %v2377
  %v2441 = vadd.f32 %v2440, %v2378
  %v2442 = vadd.f32 %v2441, %v2379
  %v2443 = vadd.f32 %v2442, %v2380
  %v2444 = vadd.f32 %v2443, %v2381
  %v2445 = vadd.f32 %v2444, %v2382
  %v2446 = vadd.f32 %v2445, %v2383
  %v2447 = vadd.f32 %v2446, %v2384
  %v2448 = vadd.f32 %v2447, %v2385
  %v2449 = vadd.f32 %v2448, %v2386
  %v2450 = vadd.f32 %v2449, %v2387
  %v2451 = vadd.f32 %v2450, %v2388
  %v2452 = vadd.f32 %v2451, %v2389
  %v2453 = vadd.f32 %v2452, %v2390
  %v2454 = vadd.f32 %v2453, %v2391
  %v2455 = vadd.f32 %v2454, %v2392
  %v2456 = vadd.f32 %v2455, %v2393
  %v2457 = vadd.f32 %v2456, %v2394
  %v2458 = vadd.f32 %v2457, %v2395
  %v2459 = vadd.f32 %v2458, %v2396
  %v2460 = vadd.f32 %v2459, %v2397
  %v2461 = vadd.f32 %v2460, %v2398
  %v2462 = vadd.f32 %v2461, %v2399
  %v2463 = vadd.f32 %v2462, %v2400
  %v2464 = vadd.f32 %v2463, %v2401
  %v2465 = vadd.f32 %v2464, %v2402
  %v2466 = vadd.f32 %v2465, %v2403
  %v2467 = vadd.f32 %v2466, %v2404
  %v2468 = vadd.f32 %v2467, %v2405
  %v2469 = vadd.f32 %v2468, %v2406
  %v2470 = vadd.f32 %v2469, %v2407
  %v2471 = vadd.f32 %v2470, %v2408
  %v2472 = vadd.f32 %v2471, %v2409
  %v2473 = vadd.f32 %v2472, %v2410
  %v2474 = vadd.f32 %v2473, %v2411
  %v2475 = vadd.f32 %v2474, %v2412
  %v2476 = vadd.f32 %v2475, %v2413
  %v2477 = vadd.f32 %v2476, %v2414
  %v2478 = vadd.f32 %v2477, %v2415
  %v2479 = vadd.f32 %v2478, %v2416
  %v2480 = vadd.f32 %v2479, %v2417
  %v2481 = vadd.f32 %v2480, %v2418
  %v2482 = vadd.f32 %v2481, %v2419
  %v2483 = vadd.f32 %v2482, %v2420
  %v2484 = vadd.f32 %v2483, %v2421
  %v2485 = vrot.slane %v2484, 4
  %v2486 = vadd.f32 %v2484, %v2485
  %v2487 = vrot.slane %v2486, 2
  %v2488 = vadd.f32 %v2486, %v2487
  %v2489 = vrot.slane %v2488, 1
  %v2490 = vadd.f32 %v2488, %v2489
  %vm2491 = vcmask 1040384
  %v2492 = vsel %vm2491, %v2357, %v2490
  %vm2493 = vcmask 1041408
  %v2494 = vsel %vm2493, %v2492, 0.0
  %2495 = vst [vmem:[%s3] sm:$0xff] %v2494
  // Predicated region
  $region10: #{discriminator_forward.17} parent=0 // pred_check
    _
  $region11: #{discriminator_forward.17} parent=0 // pred_check_branch
    %2497 = sbr.rel (0) target = $region13
  $region12: #{discriminator_forward.17} parent=0 // pred_region
    _
  $region13: #{discriminator_forward.17} parent=0 // pred_fallthru
    _
  // Predicated region
  $region14: #{discriminator_forward.17} parent=0 // pred_check
    _
  $region15: #{discriminator_forward.17} parent=0 // pred_check_branch
    %2499 = sbr.rel (0) target = $region17
  $region16: #{discriminator_forward.17} parent=0 // pred_region
    _
  $region17: #{discriminator_forward.17} parent=0 // pred_fallthru
    _
  // Predicated region
  $region18: #{discriminator_forward.17} parent=0 // pred_check
    _
  $region19: #{discriminator_forward.17} parent=0 // pred_check_branch
    %2501 = sbr.rel (0) target = $region21
  $region20: #{discriminator_forward.17} parent=0 // pred_region
    _
  $region21: #{discriminator_forward.17} parent=0 // pred_fallthru
    _
  // Predicated region
  $region22: #{discriminator_forward.17} parent=0 // pred_check
    _
  $region23: #{discriminator_forward.17} parent=0 // pred_check_branch
    %2503 = sbr.rel (0) target = $region25
  $region24: #{discriminator_forward.17} parent=0 // pred_region
    _
  $region25: #{discriminator_forward.17} parent=0 // pred_fallthru
    _

// kernel: discriminator_forward.18
$region0: #{discriminator_forward.18}
  #allocation0 [shape = 'u32[]', space=smem, size = 0x4, offset = 0x4, fixed_abs, tag = 'smem constant byte address 0x4 - core index']
  #allocation1 [shape = 'u32[144,128]{1,0:T(1,128)}', space=vmem, size = 0x12000, scoped, tag = 'internal scratch']
  %s0 = inlined_call_operand.vmem [shape: f32[512,128], index: 0, kind: input, shape index: {}]
  %s1 = inlined_call_operand.vmem [shape: f32[1,128], index: 1, kind: input, shape index: {}]
  %s2 = inlined_call_operand.vmem [shape: f32[1,128], index: 2, kind: input, shape index: {}]
  %s3 = inlined_call_operand.vmem [shape: f32[512,128], index: 3, kind: output, shape index: {}]
  %s4 = sld [smem:[#allocation0]]
  $region22: #{discriminator_forward.18} parent=0
    _
  %s6 = ssub.s32 1, %s4
  %s7 = scalar_select 0, %s6, %s4
  // Predicated region
  $region2: #{discriminator_forward.18} parent=0 // pred_check
    _
  $region3: #{discriminator_forward.18} parent=0 // pred_check_branch
    %9 = sbr.rel (0) target = $region5
  $region4: #{discriminator_forward.18} parent=0 // pred_region
    _
  $region5: #{discriminator_forward.18} parent=0 // pred_fallthru
    _
  // Predicated region
  $region6: #{discriminator_forward.18} parent=0 // pred_check
    _
  $region7: #{discriminator_forward.18} parent=0 // pred_check_branch
    %11 = sbr.rel (0) target = $region9
  $region8: #{discriminator_forward.18} parent=0 // pred_region
    _
  $region9: #{discriminator_forward.18} parent=0 // pred_fallthru
    _
  // Predicated region
  $region10: #{discriminator_forward.18} parent=0 // pred_check
    _
  $region11: #{discriminator_forward.18} parent=0 // pred_check_branch
    %13 = sbr.rel (0) target = $region13
  $region12: #{discriminator_forward.18} parent=0 // pred_region
    _
  $region13: #{discriminator_forward.18} parent=0 // pred_fallthru
    _
  %v14 = vld [vmem:[%s0] sm:$0xff]
  %v15 = vld [vmem:[%s0 + $0x8] sm:$0xff]
  %v16 = vld [vmem:[%s0 + $0x10] sm:$0xff]
  %v17 = vld [vmem:[%s0 + $0x18] sm:$0xff]
  %v18 = vld [vmem:[%s0 + $0x20] sm:$0xff]
  %v19 = vld [vmem:[%s0 + $0x28] sm:$0xff]
  %v20 = vld [vmem:[%s0 + $0x30] sm:$0xff]
  %v21 = vld [vmem:[%s0 + $0x38] sm:$0xff]
  %v22 = vld [vmem:[%s0 + $0x40] sm:$0xff]
  %v23 = vld [vmem:[%s0 + $0x48] sm:$0xff]
  %v24 = vld [vmem:[%s0 + $0x50] sm:$0xff]
  %v25 = vld [vmem:[%s0 + $0x58] sm:$0xff]
  %v26 = vld [vmem:[%s0 + $0x60] sm:$0xff]
  %v27 = vld [vmem:[%s0 + $0x68] sm:$0xff]
  %v28 = vld [vmem:[%s0 + $0x70] sm:$0xff]
  %v29 = vld [vmem:[%s0 + $0x78] sm:$0xff]
  %v30 = vld [vmem:[%s0 + $0x80] sm:$0xff]
  %v31 = vld [vmem:[%s0 + $0x88] sm:$0xff]
  %v32 = vld [vmem:[%s0 + $0x90] sm:$0xff]
  %v33 = vld [vmem:[%s0 + $0x98] sm:$0xff]
  %v34 = vld [vmem:[%s0 + $0xa0] sm:$0xff]
  %v35 = vld [vmem:[%s0 + $0xa8] sm:$0xff]
  %v36 = vld [vmem:[%s0 + $0xb0] sm:$0xff]
  %v37 = vld [vmem:[%s0 + $0xb8] sm:$0xff]
  %v38 = vld [vmem:[%s0 + $0xc0] sm:$0xff]
  %v39 = vld [vmem:[%s0 + $0xc8] sm:$0xff]
  %v40 = vld [vmem:[%s0 + $0xd0] sm:$0xff]
  %v41 = vld [vmem:[%s0 + $0xd8] sm:$0xff]
  %v42 = vld [vmem:[%s0 + $0xe0] sm:$0xff]
  %v43 = vld [vmem:[%s0 + $0xe8] sm:$0xff]
  %v44 = vld [vmem:[%s0 + $0xf0] sm:$0xff]
  %v45 = vld [vmem:[%s0 + $0xf8] sm:$0xff]
  %v46 = vld [vmem:[%s0 + $0x100] sm:$0xff]
  %v47 = vld [vmem:[%s0 + $0x108] sm:$0xff]
  %v48 = vld [vmem:[%s0 + $0x110] sm:$0xff]
  %v49 = vld [vmem:[%s0 + $0x118] sm:$0xff]
  %v50 = vld [vmem:[%s0 + $0x120] sm:$0xff]
  %v51 = vld [vmem:[%s0 + $0x128] sm:$0xff]
  %v52 = vld [vmem:[%s0 + $0x130] sm:$0xff]
  %v53 = vld [vmem:[%s0 + $0x138] sm:$0xff]
  %v54 = vld [vmem:[%s0 + $0x140] sm:$0xff]
  %v55 = vld [vmem:[%s0 + $0x148] sm:$0xff]
  %v56 = vld [vmem:[%s0 + $0x150] sm:$0xff]
  %v57 = vld [vmem:[%s0 + $0x158] sm:$0xff]
  %v58 = vld [vmem:[%s0 + $0x160] sm:$0xff]
  %v59 = vld [vmem:[%s0 + $0x168] sm:$0xff]
  %v60 = vld [vmem:[%s0 + $0x170] sm:$0xff]
  %v61 = vld [vmem:[%s0 + $0x178] sm:$0xff]
  %v62 = vld [vmem:[%s0 + $0x180] sm:$0xff]
  %v63 = vld [vmem:[%s0 + $0x188] sm:$0xff]
  %v64 = vld [vmem:[%s0 + $0x190] sm:$0xff]
  %v65 = vld [vmem:[%s0 + $0x198] sm:$0xff]
  %v66 = vld [vmem:[%s0 + $0x1a0] sm:$0xff]
  %v67 = vld [vmem:[%s0 + $0x1a8] sm:$0xff]
  %v68 = vld [vmem:[%s0 + $0x1b0] sm:$0xff]
  %v69 = vld [vmem:[%s0 + $0x1b8] sm:$0xff]
  %v70 = vld [vmem:[%s0 + $0x1c0] sm:$0xff]
  %v71 = vld [vmem:[%s0 + $0x1c8] sm:$0xff]
  %v72 = vld [vmem:[%s0 + $0x1d0] sm:$0xff]
  %v73 = vld [vmem:[%s0 + $0x1d8] sm:$0xff]
  %v74 = vld [vmem:[%s0 + $0x1e0] sm:$0xff]
  %v75 = vld [vmem:[%s0 + $0x1e8] sm:$0xff]
  %v76 = vld [vmem:[%s0 + $0x1f0] sm:$0xff]
  %v77 = vld [vmem:[%s0 + $0x1f8] sm:$0xff]
  %v78 = vld [vmem:[%s1] sm:$0x1]
  %v80 = vlaneseq
  %v81 = vshrl.u32 %v80, 7
  %v82 = vsub.s32 0, %v81
  %v83 = vrot.slane %v78, %v82
  %v85 = vmul.f32 %v14, %v83
  %v86 = vmul.f32 %v15, %v83
  %v87 = vmul.f32 %v16, %v83
  %v88 = vmul.f32 %v17, %v83
  %v89 = vmul.f32 %v18, %v83
  %v90 = vmul.f32 %v19, %v83
  %v91 = vmul.f32 %v20, %v83
  %v92 = vmul.f32 %v21, %v83
  %v93 = vmul.f32 %v22, %v83
  %v94 = vmul.f32 %v23, %v83
  %v95 = vmul.f32 %v24, %v83
  %v96 = vmul.f32 %v25, %v83
  %v97 = vmul.f32 %v26, %v83
  %v98 = vmul.f32 %v27, %v83
  %v99 = vmul.f32 %v28, %v83
  %v100 = vmul.f32 %v29, %v83
  %v101 = vmul.f32 %v30, %v83
  %v102 = vmul.f32 %v31, %v83
  %v103 = vmul.f32 %v32, %v83
  %v104 = vmul.f32 %v33, %v83
  %v105 = vmul.f32 %v34, %v83
  %v106 = vmul.f32 %v35, %v83
  %v107 = vmul.f32 %v36, %v83
  %v108 = vmul.f32 %v37, %v83
  %v109 = vmul.f32 %v38, %v83
  %v110 = vmul.f32 %v39, %v83
  %v111 = vmul.f32 %v40, %v83
  %v112 = vmul.f32 %v41, %v83
  %v113 = vmul.f32 %v42, %v83
  %v114 = vmul.f32 %v43, %v83
  %v115 = vmul.f32 %v44, %v83
  %v116 = vmul.f32 %v45, %v83
  %v117 = vmul.f32 %v46, %v83
  %v118 = vmul.f32 %v47, %v83
  %v119 = vmul.f32 %v48, %v83
  %v120 = vmul.f32 %v49, %v83
  %v121 = vmul.f32 %v50, %v83
  %v122 = vmul.f32 %v51, %v83
  %v123 = vmul.f32 %v52, %v83
  %v124 = vmul.f32 %v53, %v83
  %v125 = vmul.f32 %v54, %v83
  %v126 = vmul.f32 %v55, %v83
  %v127 = vmul.f32 %v56, %v83
  %v128 = vmul.f32 %v57, %v83
  %v129 = vmul.f32 %v58, %v83
  %v130 = vmul.f32 %v59, %v83
  %v131 = vmul.f32 %v60, %v83
  %v132 = vmul.f32 %v61, %v83
  %v133 = vmul.f32 %v62, %v83
  %v134 = vmul.f32 %v63, %v83
  %v135 = vmul.f32 %v64, %v83
  %v136 = vmul.f32 %v65, %v83
  %v137 = vmul.f32 %v66, %v83
  %v138 = vmul.f32 %v67, %v83
  %v139 = vmul.f32 %v68, %v83
  %v140 = vmul.f32 %v69, %v83
  %v141 = vmul.f32 %v70, %v83
  %v142 = vmul.f32 %v71, %v83
  %v143 = vmul.f32 %v72, %v83
  %v144 = vmul.f32 %v73, %v83
  %v145 = vmul.f32 %v74, %v83
  %v146 = vmul.f32 %v75, %v83
  %v147 = vmul.f32 %v76, %v83
  %v148 = vmul.f32 %v77, %v83
  %v149 = vld [vmem:[%s2] sm:$0x1]
  %v151 = vlaneseq
  %v152 = vshrl.u32 %v151, 7
  %v153 = vsub.s32 0, %v152
  %v154 = vrot.slane %v149, %v153
  %v156 = vadd.f32 %v85, %v154
  %v157 = vadd.f32 %v86, %v154
  %v158 = vadd.f32 %v87, %v154
  %v159 = vadd.f32 %v88, %v154
  %v160 = vadd.f32 %v89, %v154
  %v161 = vadd.f32 %v90, %v154
  %v162 = vadd.f32 %v91, %v154
  %v163 = vadd.f32 %v92, %v154
  %v164 = vadd.f32 %v93, %v154
  %v165 = vadd.f32 %v94, %v154
  %v166 = vadd.f32 %v95, %v154
  %v167 = vadd.f32 %v96, %v154
  %v168 = vadd.f32 %v97, %v154
  %v169 = vadd.f32 %v98, %v154
  %v170 = vadd.f32 %v99, %v154
  %v171 = vadd.f32 %v100, %v154
  %v172 = vadd.f32 %v101, %v154
  %v173 = vadd.f32 %v102, %v154
  %v174 = vadd.f32 %v103, %v154
  %v175 = vadd.f32 %v104, %v154
  %v176 = vadd.f32 %v105, %v154
  %v177 = vadd.f32 %v106, %v154
  %v178 = vadd.f32 %v107, %v154
  %v179 = vadd.f32 %v108, %v154
  %v180 = vadd.f32 %v109, %v154
  %v181 = vadd.f32 %v110, %v154
  %v182 = vadd.f32 %v111, %v154
  %v183 = vadd.f32 %v112, %v154
  %v184 = vadd.f32 %v113, %v154
  %v185 = vadd.f32 %v114, %v154
  %v186 = vadd.f32 %v115, %v154
  %v187 = vadd.f32 %v116, %v154
  %v188 = vadd.f32 %v117, %v154
  %v189 = vadd.f32 %v118, %v154
  %v190 = vadd.f32 %v119, %v154
  %v191 = vadd.f32 %v120, %v154
  %v192 = vadd.f32 %v121, %v154
  %v193 = vadd.f32 %v122, %v154
  %v194 = vadd.f32 %v123, %v154
  %v195 = vadd.f32 %v124, %v154
  %v196 = vadd.f32 %v125, %v154
  %v197 = vadd.f32 %v126, %v154
  %v198 = vadd.f32 %v127, %v154
  %v199 = vadd.f32 %v128, %v154
  %v200 = vadd.f32 %v129, %v154
  %v201 = vadd.f32 %v130, %v154
  %v202 = vadd.f32 %v131, %v154
  %v203 = vadd.f32 %v132, %v154
  %v204 = vadd.f32 %v133, %v154
  %v205 = vadd.f32 %v134, %v154
  %v206 = vadd.f32 %v135, %v154
  %v207 = vadd.f32 %v136, %v154
  %v208 = vadd.f32 %v137, %v154
  %v209 = vadd.f32 %v138, %v154
  %v210 = vadd.f32 %v139, %v154
  %v211 = vadd.f32 %v140, %v154
  %v212 = vadd.f32 %v141, %v154
  %v213 = vadd.f32 %v142, %v154
  %v214 = vadd.f32 %v143, %v154
  %v215 = vadd.f32 %v144, %v154
  %v216 = vadd.f32 %v145, %v154
  %v217 = vadd.f32 %v146, %v154
  %v218 = vadd.f32 %v147, %v154
  %v219 = vadd.f32 %v148, %v154
  %vm220 = vcmp.gt.f32.partialorder %v156, 0.0
  %vm221 = vcmp.gt.f32.partialorder %v157, 0.0
  %vm222 = vcmp.gt.f32.partialorder %v158, 0.0
  %vm223 = vcmp.gt.f32.partialorder %v159, 0.0
  %vm224 = vcmp.gt.f32.partialorder %v160, 0.0
  %vm225 = vcmp.gt.f32.partialorder %v161, 0.0
  %vm226 = vcmp.gt.f32.partialorder %v162, 0.0
  %vm227 = vcmp.gt.f32.partialorder %v163, 0.0
  %vm228 = vcmp.gt.f32.partialorder %v164, 0.0
  %vm229 = vcmp.gt.f32.partialorder %v165, 0.0
  %vm230 = vcmp.gt.f32.partialorder %v166, 0.0
  %vm231 = vcmp.gt.f32.partialorder %v167, 0.0
  %vm232 = vcmp.gt.f32.partialorder %v168, 0.0
  %vm233 = vcmp.gt.f32.partialorder %v169, 0.0
  %vm234 = vcmp.gt.f32.partialorder %v170, 0.0
  %vm235 = vcmp.gt.f32.partialorder %v171, 0.0
  %vm236 = vcmp.gt.f32.partialorder %v172, 0.0
  %vm237 = vcmp.gt.f32.partialorder %v173, 0.0
  %vm238 = vcmp.gt.f32.partialorder %v174, 0.0
  %vm239 = vcmp.gt.f32.partialorder %v175, 0.0
  %vm240 = vcmp.gt.f32.partialorder %v176, 0.0
  %vm241 = vcmp.gt.f32.partialorder %v177, 0.0
  %vm242 = vcmp.gt.f32.partialorder %v178, 0.0
  %vm243 = vcmp.gt.f32.partialorder %v179, 0.0
  %vm244 = vcmp.gt.f32.partialorder %v180, 0.0
  %vm245 = vcmp.gt.f32.partialorder %v181, 0.0
  %vm246 = vcmp.gt.f32.partialorder %v182, 0.0
  %vm247 = vcmp.gt.f32.partialorder %v183, 0.0
  %vm248 = vcmp.gt.f32.partialorder %v184, 0.0
  %vm249 = vcmp.gt.f32.partialorder %v185, 0.0
  %vm250 = vcmp.gt.f32.partialorder %v186, 0.0
  %vm251 = vcmp.gt.f32.partialorder %v187, 0.0
  %vm252 = vcmp.gt.f32.partialorder %v188, 0.0
  %vm253 = vcmp.gt.f32.partialorder %v189, 0.0
  %vm254 = vcmp.gt.f32.partialorder %v190, 0.0
  %vm255 = vcmp.gt.f32.partialorder %v191, 0.0
  %vm256 = vcmp.gt.f32.partialorder %v192, 0.0
  %vm257 = vcmp.gt.f32.partialorder %v193, 0.0
  %vm258 = vcmp.gt.f32.partialorder %v194, 0.0
  %vm259 = vcmp.gt.f32.partialorder %v195, 0.0
  %vm260 = vcmp.gt.f32.partialorder %v196, 0.0
  %vm261 = vcmp.gt.f32.partialorder %v197, 0.0
  %vm262 = vcmp.gt.f32.partialorder %v198, 0.0
  %vm263 = vcmp.gt.f32.partialorder %v199, 0.0
  %vm264 = vcmp.gt.f32.partialorder %v200, 0.0
  %vm265 = vcmp.gt.f32.partialorder %v201, 0.0
  %vm266 = vcmp.gt.f32.partialorder %v202, 0.0
  %vm267 = vcmp.gt.f32.partialorder %v203, 0.0
  %vm268 = vcmp.gt.f32.partialorder %v204, 0.0
  %vm269 = vcmp.gt.f32.partialorder %v205, 0.0
  %vm270 = vcmp.gt.f32.partialorder %v206, 0.0
  %vm271 = vcmp.gt.f32.partialorder %v207, 0.0
  %vm272 = vcmp.gt.f32.partialorder %v208, 0.0
  %vm273 = vcmp.gt.f32.partialorder %v209, 0.0
  %vm274 = vcmp.gt.f32.partialorder %v210, 0.0
  %vm275 = vcmp.gt.f32.partialorder %v211, 0.0
  %vm276 = vcmp.gt.f32.partialorder %v212, 0.0
  %vm277 = vcmp.gt.f32.partialorder %v213, 0.0
  %vm278 = vcmp.gt.f32.partialorder %v214, 0.0
  %vm279 = vcmp.gt.f32.partialorder %v215, 0.0
  %vm280 = vcmp.gt.f32.partialorder %v216, 0.0
  %vm281 = vcmp.gt.f32.partialorder %v217, 0.0
  %vm282 = vcmp.gt.f32.partialorder %v218, 0.0
  %vm283 = vcmp.gt.f32.partialorder %v219, 0.0
  %v284 = vmul.f32 %v156, 0.01
  %v285 = vmul.f32 %v157, 0.01
  %v286 = vmul.f32 %v158, 0.01
  %v287 = vmul.f32 %v159, 0.01
  %v288 = vmul.f32 %v160, 0.01
  %v289 = vmul.f32 %v161, 0.01
  %v290 = vmul.f32 %v162, 0.01
  %v291 = vmul.f32 %v163, 0.01
  %v292 = vmul.f32 %v164, 0.01
  %v293 = vmul.f32 %v165, 0.01
  %v294 = vmul.f32 %v166, 0.01
  %v295 = vmul.f32 %v167, 0.01
  %v296 = vmul.f32 %v168, 0.01
  %v297 = vmul.f32 %v169, 0.01
  %v298 = vmul.f32 %v170, 0.01
  %v299 = vmul.f32 %v171, 0.01
  %v300 = vmul.f32 %v172, 0.01
  %v301 = vmul.f32 %v173, 0.01
  %v302 = vmul.f32 %v174, 0.01
  %v303 = vmul.f32 %v175, 0.01
  %v304 = vmul.f32 %v176, 0.01
  %v305 = vmul.f32 %v177, 0.01
  %v306 = vmul.f32 %v178, 0.01
  %v307 = vmul.f32 %v179, 0.01
  %v308 = vmul.f32 %v180, 0.01
  %v309 = vmul.f32 %v181, 0.01
  %v310 = vmul.f32 %v182, 0.01
  %v311 = vmul.f32 %v183, 0.01
  %v312 = vmul.f32 %v184, 0.01
  %v313 = vmul.f32 %v185, 0.01
  %v314 = vmul.f32 %v186, 0.01
  %v315 = vmul.f32 %v187, 0.01
  %v316 = vmul.f32 %v188, 0.01
  %v317 = vmul.f32 %v189, 0.01
  %v318 = vmul.f32 %v190, 0.01
  %v319 = vmul.f32 %v191, 0.01
  %v320 = vmul.f32 %v192, 0.01
  %v321 = vmul.f32 %v193, 0.01
  %v322 = vmul.f32 %v194, 0.01
  %v323 = vmul.f32 %v195, 0.01
  %v324 = vmul.f32 %v196, 0.01
  %v325 = vmul.f32 %v197, 0.01
  %v326 = vmul.f32 %v198, 0.01
  %v327 = vmul.f32 %v199, 0.01
  %v328 = vmul.f32 %v200, 0.01
  %v329 = vmul.f32 %v201, 0.01
  %v330 = vmul.f32 %v202, 0.01
  %v331 = vmul.f32 %v203, 0.01
  %v332 = vmul.f32 %v204, 0.01
  %v333 = vmul.f32 %v205, 0.01
  %v334 = vmul.f32 %v206, 0.01
  %v335 = vmul.f32 %v207, 0.01
  %v336 = vmul.f32 %v208, 0.01
  %v337 = vmul.f32 %v209, 0.01
  %v338 = vmul.f32 %v210, 0.01
  %v339 = vmul.f32 %v211, 0.01
  %v340 = vmul.f32 %v212, 0.01
  %v341 = vmul.f32 %v213, 0.01
  %v342 = vmul.f32 %v214, 0.01
  %v343 = vmul.f32 %v215, 0.01
  %v344 = vmul.f32 %v216, 0.01
  %v345 = vmul.f32 %v217, 0.01
  %v346 = vmul.f32 %v218, 0.01
  %v347 = vmul.f32 %v219, 0.01
  %v348 = vsel %vm220, %v156, %v284
  %v349 = vsel %vm221, %v157, %v285
  %v350 = vsel %vm222, %v158, %v286
  %v351 = vsel %vm223, %v159, %v287
  %v352 = vsel %vm224, %v160, %v288
  %v353 = vsel %vm225, %v161, %v289
  %v354 = vsel %vm226, %v162, %v290
  %v355 = vsel %vm227, %v163, %v291
  %v356 = vsel %vm228, %v164, %v292
  %v357 = vsel %vm229, %v165, %v293
  %v358 = vsel %vm230, %v166, %v294
  %v359 = vsel %vm231, %v167, %v295
  %v360 = vsel %vm232, %v168, %v296
  %v361 = vsel %vm233, %v169, %v297
  %v362 = vsel %vm234, %v170, %v298
  %v363 = vsel %vm235, %v171, %v299
  %v364 = vsel %vm236, %v172, %v300
  %v365 = vsel %vm237, %v173, %v301
  %v366 = vsel %vm238, %v174, %v302
  %v367 = vsel %vm239, %v175, %v303
  %v368 = vsel %vm240, %v176, %v304
  %v369 = vsel %vm241, %v177, %v305
  %v370 = vsel %vm242, %v178, %v306
  %v371 = vsel %vm243, %v179, %v307
  %v372 = vsel %vm244, %v180, %v308
  %v373 = vsel %vm245, %v181, %v309
  %v374 = vsel %vm246, %v182, %v310
  %v375 = vsel %vm247, %v183, %v311
  %v376 = vsel %vm248, %v184, %v312
  %v377 = vsel %vm249, %v185, %v313
  %v378 = vsel %vm250, %v186, %v314
  %v379 = vsel %vm251, %v187, %v315
  %v380 = vsel %vm252, %v188, %v316
  %v381 = vsel %vm253, %v189, %v317
  %v382 = vsel %vm254, %v190, %v318
  %v383 = vsel %vm255, %v191, %v319
  %v384 = vsel %vm256, %v192, %v320
  %v385 = vsel %vm257, %v193, %v321
  %v386 = vsel %vm258, %v194, %v322
  %v387 = vsel %vm259, %v195, %v323
  %v388 = vsel %vm260, %v196, %v324
  %v389 = vsel %vm261, %v197, %v325
  %v390 = vsel %vm262, %v198, %v326
  %v391 = vsel %vm263, %v199, %v327
  %v392 = vsel %vm264, %v200, %v328
  %v393 = vsel %vm265, %v201, %v329
  %v394 = vsel %vm266, %v202, %v330
  %v395 = vsel %vm267, %v203, %v331
  %v396 = vsel %vm268, %v204, %v332
  %v397 = vsel %vm269, %v205, %v333
  %v398 = vsel %vm270, %v206, %v334
  %v399 = vsel %vm271, %v207, %v335
  %v400 = vsel %vm272, %v208, %v336
  %v401 = vsel %vm273, %v209, %v337
  %v402 = vsel %vm274, %v210, %v338
  %v403 = vsel %vm275, %v211, %v339
  %v404 = vsel %vm276, %v212, %v340
  %v405 = vsel %vm277, %v213, %v341
  %v406 = vsel %vm278, %v214, %v342
  %v407 = vsel %vm279, %v215, %v343
  %v408 = vsel %vm280, %v216, %v344
  %v409 = vsel %vm281, %v217, %v345
  %v410 = vsel %vm282, %v218, %v346
  %v411 = vsel %vm283, %v219, %v347
  %412 = vst [vmem:[%s3] sm:$0xff] %v348
  %413 = vst [vmem:[%s3 + $0x8] sm:$0xff] %v349
  %414 = vst [vmem:[%s3 + $0x10] sm:$0xff] %v350
  %415 = vst [vmem:[%s3 + $0x18] sm:$0xff] %v351
  %416 = vst [vmem:[%s3 + $0x20] sm:$0xff] %v352
  %417 = vst [vmem:[%s3 + $0x28] sm:$0xff] %v353
  %418 = vst [vmem:[%s3 + $0x30] sm:$0xff] %v354
  %419 = vst [vmem:[%s3 + $0x38] sm:$0xff] %v355
  %420 = vst [vmem:[%s3 + $0x40] sm:$0xff] %v356
  %421 = vst [vmem:[%s3 + $0x48] sm:$0xff] %v357
  %422 = vst [vmem:[%s3 + $0x50] sm:$0xff] %v358
  %423 = vst [vmem:[%s3 + $0x58] sm:$0xff] %v359
  %424 = vst [vmem:[%s3 + $0x60] sm:$0xff] %v360
  %425 = vst [vmem:[%s3 + $0x68] sm:$0xff] %v361
  %426 = vst [vmem:[%s3 + $0x70] sm:$0xff] %v362
  %427 = vst [vmem:[%s3 + $0x78] sm:$0xff] %v363
  %428 = vst [vmem:[%s3 + $0x80] sm:$0xff] %v364
  %429 = vst [vmem:[%s3 + $0x88] sm:$0xff] %v365
  %430 = vst [vmem:[%s3 + $0x90] sm:$0xff] %v366
  %431 = vst [vmem:[%s3 + $0x98] sm:$0xff] %v367
  %432 = vst [vmem:[%s3 + $0xa0] sm:$0xff] %v368
  %433 = vst [vmem:[%s3 + $0xa8] sm:$0xff] %v369
  %434 = vst [vmem:[%s3 + $0xb0] sm:$0xff] %v370
  %435 = vst [vmem:[%s3 + $0xb8] sm:$0xff] %v371
  %436 = vst [vmem:[%s3 + $0xc0] sm:$0xff] %v372
  %437 = vst [vmem:[%s3 + $0xc8] sm:$0xff] %v373
  %438 = vst [vmem:[%s3 + $0xd0] sm:$0xff] %v374
  %439 = vst [vmem:[%s3 + $0xd8] sm:$0xff] %v375
  %440 = vst [vmem:[%s3 + $0xe0] sm:$0xff] %v376
  %441 = vst [vmem:[%s3 + $0xe8] sm:$0xff] %v377
  %442 = vst [vmem:[%s3 + $0xf0] sm:$0xff] %v378
  %443 = vst [vmem:[%s3 + $0xf8] sm:$0xff] %v379
  %444 = vst [vmem:[%s3 + $0x100] sm:$0xff] %v380
  %445 = vst [vmem:[%s3 + $0x108] sm:$0xff] %v381
  %446 = vst [vmem:[%s3 + $0x110] sm:$0xff] %v382
  %447 = vst [vmem:[%s3 + $0x118] sm:$0xff] %v383
  %448 = vst [vmem:[%s3 + $0x120] sm:$0xff] %v384
  %449 = vst [vmem:[%s3 + $0x128] sm:$0xff] %v385
  %450 = vst [vmem:[%s3 + $0x130] sm:$0xff] %v386
  %451 = vst [vmem:[%s3 + $0x138] sm:$0xff] %v387
  %452 = vst [vmem:[%s3 + $0x140] sm:$0xff] %v388
  %453 = vst [vmem:[%s3 + $0x148] sm:$0xff] %v389
  %454 = vst [vmem:[%s3 + $0x150] sm:$0xff] %v390
  %455 = vst [vmem:[%s3 + $0x158] sm:$0xff] %v391
  %456 = vst [vmem:[%s3 + $0x160] sm:$0xff] %v392
  %457 = vst [vmem:[%s3 + $0x168] sm:$0xff] %v393
  %458 = vst [vmem:[%s3 + $0x170] sm:$0xff] %v394
  %459 = vst [vmem:[%s3 + $0x178] sm:$0xff] %v395
  %460 = vst [vmem:[%s3 + $0x180] sm:$0xff] %v396
  %461 = vst [vmem:[%s3 + $0x188] sm:$0xff] %v397
  %462 = vst [vmem:[%s3 + $0x190] sm:$0xff] %v398
  %463 = vst [vmem:[%s3 + $0x198] sm:$0xff] %v399
  %464 = vst [vmem:[%s3 + $0x1a0] sm:$0xff] %v400
  %465 = vst [vmem:[%s3 + $0x1a8] sm:$0xff] %v401
  %466 = vst [vmem:[%s3 + $0x1b0] sm:$0xff] %v402
  %467 = vst [vmem:[%s3 + $0x1b8] sm:$0xff] %v403
  %468 = vst [vmem:[%s3 + $0x1c0] sm:$0xff] %v404
  %469 = vst [vmem:[%s3 + $0x1c8] sm:$0xff] %v405
  %470 = vst [vmem:[%s3 + $0x1d0] sm:$0xff] %v406
  %471 = vst [vmem:[%s3 + $0x1d8] sm:$0xff] %v407
  %472 = vst [vmem:[%s3 + $0x1e0] sm:$0xff] %v408
  %473 = vst [vmem:[%s3 + $0x1e8] sm:$0xff] %v409
  %474 = vst [vmem:[%s3 + $0x1f0] sm:$0xff] %v410
  %475 = vst [vmem:[%s3 + $0x1f8] sm:$0xff] %v411
  // Predicated region
  $region14: #{discriminator_forward.18} parent=0 // pred_check
    _
  $region15: #{discriminator_forward.18} parent=0 // pred_check_branch
    %477 = sbr.rel (0) target = $region17
  $region16: #{discriminator_forward.18} parent=0 // pred_region
    _
  $region17: #{discriminator_forward.18} parent=0 // pred_fallthru
    _
  // Predicated region
  $region18: #{discriminator_forward.18} parent=0 // pred_check
    _
  $region19: #{discriminator_forward.18} parent=0 // pred_check_branch
    %479 = sbr.rel (0) target = $region21
  $region20: #{discriminator_forward.18} parent=0 // pred_region
    _
  $region21: #{discriminator_forward.18} parent=0 // pred_fallthru
    _

// kernel: discriminator_forward.19
$region0: #{discriminator_forward.19}
  #allocation0 [shape = 'u32[]', space=smem, size = 0x4, offset = 0x4, fixed_abs, tag = 'smem constant byte address 0x4 - core index']
  #allocation1 [shape = 'u32[144,128]{1,0:T(1,128)}', space=vmem, size = 0x12000, scoped, tag = 'internal scratch']
  %s0 = inlined_call_operand.vmem [shape: f32[2,512], index: 0, kind: input, shape index: {}]
  %s1 = inlined_call_operand.vmem [shape: f32[512,128], index: 1, kind: input, shape index: {}]
  %s2 = inlined_call_operand.vmem [shape: f32[1,128], index: 2, kind: input, shape index: {}]
  %s3 = inlined_call_operand.vmem [shape: f32[2,128], index: 3, kind: output, shape index: {}]
  %s4 = sld [smem:[#allocation0]]
  $region22: #{discriminator_forward.19} parent=0
    _
  %s6 = ssub.s32 1, %s4
  %s7 = scalar_select 0, %s6, %s4
  // Predicated region
  $region2: #{discriminator_forward.19} parent=0 // pred_check
    _
  $region3: #{discriminator_forward.19} parent=0 // pred_check_branch
    %9 = sbr.rel (0) target = $region5
  $region4: #{discriminator_forward.19} parent=0 // pred_region
    _
  $region5: #{discriminator_forward.19} parent=0 // pred_fallthru
    _
  // Predicated region
  $region6: #{discriminator_forward.19} parent=0 // pred_check
    _
  $region7: #{discriminator_forward.19} parent=0 // pred_check_branch
    %11 = sbr.rel (0) target = $region9
  $region8: #{discriminator_forward.19} parent=0 // pred_region
    _
  $region9: #{discriminator_forward.19} parent=0 // pred_fallthru
    _
  // Predicated region
  $region10: #{discriminator_forward.19} parent=0 // pred_check
    _
  $region11: #{discriminator_forward.19} parent=0 // pred_check_branch
    %13 = sbr.rel (0) target = $region13
  $region12: #{discriminator_forward.19} parent=0 // pred_region
    _
  $region13: #{discriminator_forward.19} parent=0 // pred_fallthru
    _
  %v14 = vld [vmem:[%s0] sm:$0xff]
  %v15 = vld [vmem:[%s1] sm:$0xff]
  %v16 = vld [vmem:[%s1 + $0x8] sm:$0xff]
  %v17 = vld [vmem:[%s1 + $0x10] sm:$0xff]
  %v18 = vld [vmem:[%s1 + $0x18] sm:$0xff]
  %v19 = vld [vmem:[%s1 + $0x20] sm:$0xff]
  %v20 = vld [vmem:[%s1 + $0x28] sm:$0xff]
  %v21 = vld [vmem:[%s1 + $0x30] sm:$0xff]
  %v22 = vld [vmem:[%s1 + $0x38] sm:$0xff]
  %v23 = vld [vmem:[%s1 + $0x40] sm:$0xff]
  %v24 = vld [vmem:[%s1 + $0x48] sm:$0xff]
  %v25 = vld [vmem:[%s1 + $0x50] sm:$0xff]
  %v26 = vld [vmem:[%s1 + $0x58] sm:$0xff]
  %v27 = vld [vmem:[%s1 + $0x60] sm:$0xff]
  %v28 = vld [vmem:[%s1 + $0x68] sm:$0xff]
  %v29 = vld [vmem:[%s1 + $0x70] sm:$0xff]
  %v30 = vld [vmem:[%s1 + $0x78] sm:$0xff]
  %v31 = vld [vmem:[%s1 + $0x80] sm:$0xff]
  %v32 = vld [vmem:[%s1 + $0x88] sm:$0xff]
  %v33 = vld [vmem:[%s1 + $0x90] sm:$0xff]
  %v34 = vld [vmem:[%s1 + $0x98] sm:$0xff]
  %v35 = vld [vmem:[%s1 + $0xa0] sm:$0xff]
  %v36 = vld [vmem:[%s1 + $0xa8] sm:$0xff]
  %v37 = vld [vmem:[%s1 + $0xb0] sm:$0xff]
  %v38 = vld [vmem:[%s1 + $0xb8] sm:$0xff]
  %v39 = vld [vmem:[%s1 + $0xc0] sm:$0xff]
  %v40 = vld [vmem:[%s1 + $0xc8] sm:$0xff]
  %v41 = vld [vmem:[%s1 + $0xd0] sm:$0xff]
  %v42 = vld [vmem:[%s1 + $0xd8] sm:$0xff]
  %v43 = vld [vmem:[%s1 + $0xe0] sm:$0xff]
  %v44 = vld [vmem:[%s1 + $0xe8] sm:$0xff]
  %v45 = vld [vmem:[%s1 + $0xf0] sm:$0xff]
  %v46 = vld [vmem:[%s1 + $0xf8] sm:$0xff]
  %v47 = vld [vmem:[%s1 + $0x100] sm:$0xff]
  %v48 = vld [vmem:[%s1 + $0x108] sm:$0xff]
  %v49 = vld [vmem:[%s1 + $0x110] sm:$0xff]
  %v50 = vld [vmem:[%s1 + $0x118] sm:$0xff]
  %v51 = vld [vmem:[%s1 + $0x120] sm:$0xff]
  %v52 = vld [vmem:[%s1 + $0x128] sm:$0xff]
  %v53 = vld [vmem:[%s1 + $0x130] sm:$0xff]
  %v54 = vld [vmem:[%s1 + $0x138] sm:$0xff]
  %v55 = vld [vmem:[%s1 + $0x140] sm:$0xff]
  %v56 = vld [vmem:[%s1 + $0x148] sm:$0xff]
  %v57 = vld [vmem:[%s1 + $0x150] sm:$0xff]
  %v58 = vld [vmem:[%s1 + $0x158] sm:$0xff]
  %v59 = vld [vmem:[%s1 + $0x160] sm:$0xff]
  %v60 = vld [vmem:[%s1 + $0x168] sm:$0xff]
  %v61 = vld [vmem:[%s1 + $0x170] sm:$0xff]
  %v62 = vld [vmem:[%s1 + $0x178] sm:$0xff]
  %v63 = vld [vmem:[%s1 + $0x180] sm:$0xff]
  %v64 = vld [vmem:[%s1 + $0x188] sm:$0xff]
  %v65 = vld [vmem:[%s1 + $0x190] sm:$0xff]
  %v66 = vld [vmem:[%s1 + $0x198] sm:$0xff]
  %v67 = vld [vmem:[%s1 + $0x1a0] sm:$0xff]
  %v68 = vld [vmem:[%s1 + $0x1a8] sm:$0xff]
  %v69 = vld [vmem:[%s1 + $0x1b0] sm:$0xff]
  %v70 = vld [vmem:[%s1 + $0x1b8] sm:$0xff]
  %v71 = vld [vmem:[%s1 + $0x1c0] sm:$0xff]
  %v72 = vld [vmem:[%s1 + $0x1c8] sm:$0xff]
  %v73 = vld [vmem:[%s1 + $0x1d0] sm:$0xff]
  %v74 = vld [vmem:[%s1 + $0x1d8] sm:$0xff]
  %v75 = vld [vmem:[%s1 + $0x1e0] sm:$0xff]
  %v76 = vld [vmem:[%s1 + $0x1e8] sm:$0xff]
  %v77 = vld [vmem:[%s1 + $0x1f0] sm:$0xff]
  %v78 = vld [vmem:[%s1 + $0x1f8] sm:$0xff]
  %v79 = vld [vmem:[%s2] sm:$0x1]
  %v81 = vlaneseq
  %v82 = vshrl.u32 %v81, 7
  %v83 = vsub.s32 0, %v82
  %v84 = vrot.slane %v79, %v83
  %v87 = vcombine.high %v14, %v14
  %v89 = vunpack.c.l.s4 1983009808
  %v90 = vunpack.c.0.s8 %v89
  %v91 = vlaneseq
  %v92 = vshrl.u32 %v91, 7
  %v93 = vsub.s32 %v90, %v92
  %v94 = vrot.slane %v14, %v93
  %v96 = vunpack.c.l.s4 1983009808
  %v97 = vunpack.c.0.s8 %v96
  %v98 = vlaneseq
  %v99 = vshrl.u32 %v98, 7
  %v100 = vsub.s32 %v97, %v99
  %v101 = vrot.slane %v87, %v100
  %v102 = vcombine.high %v94, %v94
  %v103 = vcombine.high %v101, %v101
  %108 = vmatprep.subr.mxu0 0.0
  %109 = vmatpush1.msra.mxu0 %v30
  %110 = vmatprep.subr.mxu0 0.0
  %111 = vmatpush1.msra.mxu0 %v29
  %112 = vmatprep.subr.mxu0 0.0
  %113 = vmatpush1.msra.mxu0 %v28
  %114 = vmatprep.subr.mxu0 0.0
  %115 = vmatpush1.msra.mxu0 %v27
  %116 = vmatprep.subr.mxu0 0.0
  %117 = vmatpush1.msra.mxu0 %v26
  %118 = vmatprep.subr.mxu0 0.0
  %119 = vmatpush1.msra.mxu0 %v25
  %120 = vmatprep.subr.mxu0 0.0
  %121 = vmatpush1.msra.mxu0 %v24
  %122 = vmatprep.subr.mxu0 0.0
  %123 = vmatpush1.msra.mxu0 %v23
  %124 = vmatprep.subr.mxu0 0.0
  %125 = vmatpush1.msra.mxu0 %v22
  %126 = vmatprep.subr.mxu0 0.0
  %127 = vmatpush1.msra.mxu0 %v21
  %128 = vmatprep.subr.mxu0 0.0
  %129 = vmatpush1.msra.mxu0 %v20
  %130 = vmatprep.subr.mxu0 0.0
  %131 = vmatpush1.msra.mxu0 %v19
  %132 = vmatprep.subr.mxu0 0.0
  %133 = vmatpush1.msra.mxu0 %v18
  %134 = vmatprep.subr.mxu0 0.0
  %135 = vmatpush1.msra.mxu0 %v17
  %136 = vmatprep.subr.mxu0 0.0
  %137 = vmatpush1.msra.mxu0 %v16
  %138 = vmatprep.subr.mxu0 0.0
  %139 = vmatpush1.msra.mxu0 %v15
  %140 = vmatprep.subr.mxu0 0.0
  %141 = vmatpush2.msra.mxu0 %v46
  %142 = vmatprep.subr.mxu0 0.0
  %143 = vmatpush2.msra.mxu0 %v45
  %144 = vmatprep.subr.mxu0 0.0
  %145 = vmatpush2.msra.mxu0 %v44
  %146 = vmatprep.subr.mxu0 0.0
  %147 = vmatpush2.msra.mxu0 %v43
  %148 = vmatprep.subr.mxu0 0.0
  %149 = vmatpush2.msra.mxu0 %v42
  %150 = vmatprep.subr.mxu0 0.0
  %151 = vmatpush2.msra.mxu0 %v41
  %152 = vmatprep.subr.mxu0 0.0
  %153 = vmatpush2.msra.mxu0 %v40
  %154 = vmatprep.subr.mxu0 0.0
  %155 = vmatpush2.msra.mxu0 %v39
  %156 = vmatprep.subr.mxu0 0.0
  %157 = vmatpush2.msra.mxu0 %v38
  %158 = vmatprep.subr.mxu0 0.0
  %159 = vmatpush2.msra.mxu0 %v37
  %160 = vmatprep.subr.mxu0 0.0
  %161 = vmatpush2.msra.mxu0 %v36
  %162 = vmatprep.subr.mxu0 0.0
  %163 = vmatpush2.msra.mxu0 %v35
  %164 = vmatprep.subr.mxu0 0.0
  %165 = vmatpush2.msra.mxu0 %v34
  %166 = vmatprep.subr.mxu0 0.0
  %167 = vmatpush2.msra.mxu0 %v33
  %168 = vmatprep.subr.mxu0 0.0
  %169 = vmatpush2.msra.mxu0 %v32
  %170 = vmatprep.subr.mxu0 0.0
  %171 = vmatpush2.msra.mxu0 %v31
  %172 = vmatprep.mubr.f32.mxu0 %v102
  %173 = vmatmul.mubr.f32.gmra.mxu0 %v94
  %v174 = vpop.f32.mrf.mxu0
  %v175 = vadd.f32 %v84, %v174
  %v176 = vpop.f32.mrf.mxu0
  %177 = vdwg.mxu0
  %178 = vmatprep.subr.mxu0 0.0
  %179 = vmatpush1.msra.mxu0 %v62
  %180 = vmatprep.subr.mxu0 0.0
  %181 = vmatpush1.msra.mxu0 %v61
  %182 = vmatprep.subr.mxu0 0.0
  %183 = vmatpush1.msra.mxu0 %v60
  %184 = vmatprep.subr.mxu0 0.0
  %185 = vmatpush1.msra.mxu0 %v59
  %186 = vmatprep.subr.mxu0 0.0
  %187 = vmatpush1.msra.mxu0 %v58
  %188 = vmatprep.subr.mxu0 0.0
  %189 = vmatpush1.msra.mxu0 %v57
  %190 = vmatprep.subr.mxu0 0.0
  %191 = vmatpush1.msra.mxu0 %v56
  %192 = vmatprep.subr.mxu0 0.0
  %193 = vmatpush1.msra.mxu0 %v55
  %194 = vmatprep.subr.mxu0 0.0
  %195 = vmatpush1.msra.mxu0 %v54
  %196 = vmatprep.subr.mxu0 0.0
  %197 = vmatpush1.msra.mxu0 %v53
  %198 = vmatprep.subr.mxu0 0.0
  %199 = vmatpush1.msra.mxu0 %v52
  %200 = vmatprep.subr.mxu0 0.0
  %201 = vmatpush1.msra.mxu0 %v51
  %202 = vmatprep.subr.mxu0 0.0
  %203 = vmatpush1.msra.mxu0 %v50
  %204 = vmatprep.subr.mxu0 0.0
  %205 = vmatpush1.msra.mxu0 %v49
  %206 = vmatprep.subr.mxu0 0.0
  %207 = vmatpush1.msra.mxu0 %v48
  %208 = vmatprep.subr.mxu0 0.0
  %209 = vmatpush1.msra.mxu0 %v47
  %210 = vmatprep.subr.mxu0 0.0
  %211 = vmatpush2.msra.mxu0 %v78
  %212 = vmatprep.subr.mxu0 0.0
  %213 = vmatpush2.msra.mxu0 %v77
  %214 = vmatprep.subr.mxu0 0.0
  %215 = vmatpush2.msra.mxu0 %v76
  %216 = vmatprep.subr.mxu0 0.0
  %217 = vmatpush2.msra.mxu0 %v75
  %218 = vmatprep.subr.mxu0 0.0
  %219 = vmatpush2.msra.mxu0 %v74
  %220 = vmatprep.subr.mxu0 0.0
  %221 = vmatpush2.msra.mxu0 %v73
  %222 = vmatprep.subr.mxu0 0.0
  %223 = vmatpush2.msra.mxu0 %v72
  %224 = vmatprep.subr.mxu0 0.0
  %225 = vmatpush2.msra.mxu0 %v71
  %226 = vmatprep.subr.mxu0 0.0
  %227 = vmatpush2.msra.mxu0 %v70
  %228 = vmatprep.subr.mxu0 0.0
  %229 = vmatpush2.msra.mxu0 %v69
  %230 = vmatprep.subr.mxu0 0.0
  %231 = vmatpush2.msra.mxu0 %v68
  %232 = vmatprep.subr.mxu0 0.0
  %233 = vmatpush2.msra.mxu0 %v67
  %234 = vmatprep.subr.mxu0 0.0
  %235 = vmatpush2.msra.mxu0 %v66
  %236 = vmatprep.subr.mxu0 0.0
  %237 = vmatpush2.msra.mxu0 %v65
  %238 = vmatprep.subr.mxu0 0.0
  %239 = vmatpush2.msra.mxu0 %v64
  %240 = vmatprep.subr.mxu0 0.0
  %241 = vmatpush2.msra.mxu0 %v63
  %242 = vmatprep.mubr.f32.mxu0 %v103
  %243 = vmatmul.mubr.f32.gmra.mxu0 %v101
  %v244 = vpop.f32.mrf.mxu0
  %v245 = vadd.f32 %v175, %v244
  %v246 = vpop.f32.mrf.mxu0
  %247 = vdwg.mxu0
  %v248 = vsub.f32 0.0, %v245
  %v249 = vmul.f32 %v248, 1.442695
  %v250 = vpow.pop %v249
  %v251 = vadd.f32 %v250, 1.0
  %v252 = vrcp.pop %v251
  %v253 = vmul.f32 1.0, %v252
  %254 = vst [vmem:[%s3] sm:$0x3] %v253
  // Predicated region
  $region14: #{discriminator_forward.19} parent=0 // pred_check
    _
  $region15: #{discriminator_forward.19} parent=0 // pred_check_branch
    %256 = sbr.rel (0) target = $region17
  $region16: #{discriminator_forward.19} parent=0 // pred_region
    _
  $region17: #{discriminator_forward.19} parent=0 // pred_fallthru
    _
  // Predicated region
  $region18: #{discriminator_forward.19} parent=0 // pred_check
    _
  $region19: #{discriminator_forward.19} parent=0 // pred_check_branch
    %258 = sbr.rel (0) target = $region21
  $region20: #{discriminator_forward.19} parent=0 // pred_region
    _
  $region21: #{discriminator_forward.19} parent=0 // pred_fallthru
    _

</llo_original>
